<compile_context>
chip_gen: v7x
topology: tpu7x:2x2x1
jax: 0.10.0
libtpu: 0.0.40
codegen_flags: <defaults>
</compile_context>

<pallas_src>
import functools

import numpy as np
import jax
import jax.numpy as jnp
from jax import lax
from jax.experimental import pallas as pl
from jax.experimental.pallas import tpu as pltpu


# ---------------------------------------------------------------------------
# Fused kernel: one grid step processes BB batches end-to-end, streaming the point axis.
# ---------------------------------------------------------------------------
def _pointnet_fused_kernel(x_ref,
                           sw1, sb1, sw2, sb2, sw3, sb3,
                           f1w, f1b, f2w, f2b, f3w, f3bi,
                           mw1, mb1, mw2, mb2, mw3, mb3,
                           feat_ref, trans_ref, *, nt):
    BB, N, n = x_ref.shape
    C3 = feat_ref.shape[-1]
    num_tiles = N // nt
    bf16 = jnp.bfloat16

    def dot(a, b):
        return jnp.dot(a, b, preferred_element_type=jnp.float32)

    def x_tile(ti):
        start = ti * nt if isinstance(ti, int) else pl.multiple_of(ti * nt, nt)
        return x_ref[:, pl.ds(start, nt), :]                              # (BB, nt, n) f32

    # ---- pass 1: STN conv1x1 chain (bf16 MXU operands / f32 acc), running max over tiles ----
    def stn_tile(ti):
        xf = x_tile(ti).reshape(BB * nt, n)
        h = jnp.maximum(dot(xf, sw1[...]) + sb1[...], 0.0)                # K=n: keep f32 (tiny)
        h = jnp.maximum(dot(h.astype(bf16), sw2[...]) + sb2[...], 0.0)
        h = jnp.maximum(dot(h.astype(bf16), sw3[...]) + sb3[...], 0.0)    # (BB*nt, 1024) f32
        return jnp.max(h.reshape(BB, nt, C3), axis=1)                     # (BB, 1024)

    g = stn_tile(0)
    if num_tiles > 1:
        g = lax.fori_loop(1, num_tiles,
                          lambda ti, acc: jnp.maximum(acc, stn_tile(ti)), g)

    # ---- STN FC head (f32, protects trans accuracy); fc3 is pre-padded to a lane-dense width,
    #      identity already folded into its bias ----
    t = jnp.maximum(dot(g, f1w[...]) + f1b[...], 0.0)
    t = jnp.maximum(dot(t, f2w[...]) + f2b[...], 0.0)
    trans_pad = dot(t, f3w[...]) + f3bi[...]                              # (BB, PAD_T)
    trans_ref[...] = trans_pad.reshape(BB, 1, trans_pad.shape[-1])

    # rows of the per-batch transform, ready for VPU broadcast: t_rows[k][b, 0, :] = trans[b, k, :]
    t_rows = [trans_pad[:, k * n:(k + 1) * n][:, None, :] for k in range(n)]

    # ---- pass 2: bmm(x, trans) on the VPU + main conv1x1 chain, running max over tiles ----
    def main_tile(ti):
        xt = x_tile(ti)                                                   # (BB, nt, n)
        xtr = t_rows[0] * xt[:, :, 0:1]
        for k in range(1, n):                                             # n-1 broadcast FMAs
            xtr = xtr + t_rows[k] * xt[:, :, k:k + 1]                     # == bmm(x, trans), f32
        xf = xtr.reshape(BB * nt, n)
        h = jnp.maximum(dot(xf, mw1[...]) + mb1[...], 0.0)
        h = jnp.maximum(dot(h.astype(bf16), mw2[...]) + mb2[...], 0.0)
        h = jnp.maximum(dot(h.astype(bf16), mw3[...]) + mb3[...], 0.0)    # (BB*nt, 1024) f32
        return jnp.max(h.reshape(BB, nt, C3), axis=1)                     # (BB, 1024)

    feat = main_tile(0)
    if num_tiles > 1:
        feat = lax.fori_loop(1, num_tiles,
                             lambda ti, acc: jnp.maximum(acc, main_tile(ti)), feat)

    feat_ref[...] = feat.reshape(BB, 1, C3)


# ---------------------------------------------------------------------------
# Wrapper: single pallas_call over the batch, generation-aware blocking.
# ---------------------------------------------------------------------------
def _vmem_budget_bytes():
    try:
        cap = int(pltpu.get_tpu_info().vmem_capacity_bytes)
    except Exception:
        cap = 64 * 1024 * 1024            # conservative (v7x-sized) fallback
    # ~75% of physical VMEM, capped at 100 MiB (v5e/v6e: ~96 MiB, v7x: ~48 MiB).
    return max(32 * 2**20, min(100 * 2**20, cap * 3 // 4))


def pointnet_feature_forward(params, x, block_b=None, point_tile=None):
    """x: (B, N, n) float32 (same layout the PyTorch module receives)."""
    B, N, n = x.shape
    assert N % 8 == 0, "point count must be a multiple of 8 (sublane alignment)"
    C3 = params["w3"].shape[1]
    nn = n * n
    pad_t = ((nn + 127) // 128) * 128     # lane-dense width for the trans output
    bf16 = jnp.bfloat16

    # --- weight prep (once, outside the kernel): bf16 conv2/conv3 weights, padded fc3 ---
    iden = jnp.eye(n, dtype=jnp.float32).reshape(1, nn)
    f3w_pad = jnp.zeros((params["stn_fc3_w"].shape[0], pad_t), jnp.float32
                        ).at[:, :nn].set(params["stn_fc3_w"])
    f3bi_pad = jnp.zeros((1, pad_t), jnp.float32).at[:, :nn].set(params["stn_fc3_b"] + iden)

    weights = (
        params["stn_w1"], params["stn_b1"],
        params["stn_w2"].astype(bf16), params["stn_b2"],
        params["stn_w3"].astype(bf16), params["stn_b3"],
        params["stn_fc1_w"], params["stn_fc1_b"],
        params["stn_fc2_w"], params["stn_fc2_b"],
        f3w_pad, f3bi_pad,
        params["w1"], params["b1"],
        params["w2"].astype(bf16), params["b2"],
        params["w3"].astype(bf16), params["b3"],
    )

    vmem_limit = _vmem_budget_bytes()

    # --- point tile (streamed with a running max inside the kernel) ---
    if point_tile is None:
        if N <= 512:
            nt = N
        else:
            divs = [d for d in range(8, 513, 8) if N % d == 0]
            nt = max(divs) if divs else N
    else:
        nt = point_tile
    assert N % nt == 0 and nt % 8 == 0

    # --- batch block: fill the MXU M-dim but stay inside the per-generation VMEM budget and
    #     keep >= 2 grid steps so both v7x TensorCores get work ---
    if block_b is None:
        w_bytes = sum(int(np.prod(w.shape)) * w.dtype.itemsize for w in weights)
        act_bytes_per_row = 10 * 1024     # h3 f32 + bf16 copies + reduction temps (generous)
        budget_rows = max(nt, (vmem_limit - 2 * w_bytes - 6 * 2**20) // act_bytes_per_row)
        bb_vmem = max(1, int(budget_rows // nt))
        bb_rows = max(1, 2048 // nt)      # ~2k rows per step is plenty of MXU M
        bb_steps = max(1, B // 2)         # >= 2 grid steps
        bb_cap = max(1, min(bb_vmem, bb_rows, bb_steps, B))
        block_b = max(d for d in range(1, bb_cap + 1) if B % d == 0)
    BB = block_b
    assert B % BB == 0, "block_b must divide the batch size"

    kernel = functools.partial(_pointnet_fused_kernel, nt=nt)

    # Weights have constant index maps (stay VMEM-resident across grid steps).
    # TODO(synk): single-buffer them (pipeline_mode=pl.Buffered(1)) to reclaim ~3 MiB of VMEM.
    def full_spec(arr):
        nd = arr.ndim
        return pl.BlockSpec(arr.shape, lambda i, _nd=nd: (0,) * _nd)

    feat3, trans3 = pl.pallas_call(
        kernel,
        out_shape=(jax.ShapeDtypeStruct((B, 1, C3), jnp.float32),
                   jax.ShapeDtypeStruct((B, 1, pad_t), jnp.float32)),
        grid_spec=pltpu.PrefetchScalarGridSpec(
            num_scalar_prefetch=0,
            grid=(B // BB,),
            in_specs=[pl.BlockSpec((BB, N, n), lambda i: (i, 0, 0))]
                     + [full_spec(w) for w in weights],
            out_specs=[pl.BlockSpec((BB, 1, C3), lambda i: (i, 0, 0)),
                       pl.BlockSpec((BB, 1, pad_t), lambda i: (i, 0, 0))],
        ),
        compiler_params=pltpu.CompilerParams(
            dimension_semantics=("parallel",),      # batches are independent (v7x: 2 TCs)
            vmem_limit_bytes=int(vmem_limit)),
    )(x, *weights)

    feat = feat3.reshape(B, C3)
    trans = trans3.reshape(B, pad_t)[:, :nn].reshape(B, n, n)
    return feat, trans, None


# ---------------------------------------------------------------------------
# Deterministic parameter init (PyTorch-like uniform(-1/sqrt(fan_in), 1/sqrt(fan_in)))
# ---------------------------------------------------------------------------
def init_params(key, n=3):
    keys = iter(jax.random.split(key, 32))

    def lin(cin, cout):
        bound = 1.0 / np.sqrt(cin)
        w = jax.random.uniform(next(keys), (cin, cout), jnp.float32, -bound, bound)
        b = jax.random.uniform(next(keys), (1, cout), jnp.float32, -bound, bound)
        return w, b

    p = {}
    p["stn_w1"], p["stn_b1"] = lin(n, 64)
    p["stn_w2"], p["stn_b2"] = lin(64, 128)
    p["stn_w3"], p["stn_b3"] = lin(128, 1024)
    p["stn_fc1_w"], p["stn_fc1_b"] = lin(1024, 512)
    p["stn_fc2_w"], p["stn_fc2_b"] = lin(512, 256)
    p["stn_fc3_w"], p["stn_fc3_b"] = lin(256, n * n)
    p["w1"], p["b1"] = lin(n, 64)
    p["w2"], p["b2"] = lin(64, 128)
    p["w3"], p["b3"] = lin(128, 1024)
    return p


# ---------------------------------------------------------------------------
# Pure-JAX reference (for correctness check)
# ---------------------------------------------------------------------------
def reference_forward(params, x):
    P = jax.lax.Precision.HIGHEST
    B, N, n = x.shape

    def mlp_max_ref(h, w1, b1, w2, b2, w3, b3):
        h = jax.nn.relu(jnp.einsum("bnc,cd->bnd", h, w1, precision=P) + b1)
        h = jax.nn.relu(jnp.einsum("bnc,cd->bnd", h, w2, precision=P) + b2)
        h = jax.nn.relu(jnp.einsum("bnc,cd->bnd", h, w3, precision=P) + b3)
        return jnp.max(h, axis=1)

    g = mlp_max_ref(x, params["stn_w1"], params["stn_b1"],
                    params["stn_w2"], params["stn_b2"],
                    params["stn_w3"], params["stn_b3"])
    h = jax.nn.relu(jnp.dot(g, params["stn_fc1_w"], precision=P) + params["stn_fc1_b"])
    h = jax.nn.relu(jnp.dot(h, params["stn_fc2_w"], precision=P) + params["stn_fc2_b"])
    h = jnp.dot(h, params["stn_fc3_w"], precision=P) + params["stn_fc3_b"]
    trans = (h + jnp.eye(n, dtype=jnp.float32).reshape(1, n * n)).reshape(B, n, n)

    xt = jnp.einsum("bnc,bcd->bnd", x, trans, precision=P)
    feat = mlp_max_ref(xt, params["w1"], params["b1"],
                       params["w2"], params["b2"],
                       params["w3"], params["b3"])
    return feat, trans


if __name__ == "__main__":
    B, N, n = 2, 128, 3           # N == vertices_num (MaxPool1d pools over all N points)
    key = jax.random.PRNGKey(0)
    pkey, xkey = jax.random.split(key)
    params = init_params(pkey, n=n)
    x = jax.random.normal(xkey, (B, N, n), jnp.float32)

    feat_ref, trans_ref = reference_forward(params, x)

    # Default blocking (single point tile at this small N, >=2 grid steps).
    feat, trans, trans_feat = pointnet_feature_forward(params, x)
    jax.block_until_ready((feat, trans))
    assert feat.shape == (B, 1024) and trans.shape == (B, n, n) and trans_feat is None
    # bf16 MXU operands (f32 accumulation) in the conv chains -> bf16-level tolerance.
    assert jnp.allclose(trans, trans_ref, rtol=2e-2, atol=2e-2), "trans mismatch"
    assert jnp.allclose(feat, feat_ref, rtol=2e-2, atol=2e-2), "feat mismatch"

    # Exercise the streamed point-tile (running-max) path as well.
    feat2, trans2, _ = pointnet_feature_forward(params, x, block_b=1, point_tile=64)
    jax.block_until_ready((feat2, trans2))
    assert jnp.allclose(trans2, trans_ref, rtol=2e-2, atol=2e-2), "trans (streamed) mismatch"
    assert jnp.allclose(feat2, feat_ref, rtol=2e-2, atol=2e-2), "feat (streamed) mismatch"

    print("KERNEL_OK")
</pallas_src>

<mosaic_0001>
module attributes {stable_mosaic.version = 11 : i64} {
  func.func @_pointnet_fused_kernel(%arg0: i32, %arg1: memref<1x128x3xf32, #tpu.memory_space<vmem>>, %arg2: memref<3x64xf32, #tpu.memory_space<vmem>>, %arg3: memref<1x64xf32, #tpu.memory_space<vmem>>, %arg4: memref<64x128xbf16, #tpu.memory_space<vmem>>, %arg5: memref<1x128xf32, #tpu.memory_space<vmem>>, %arg6: memref<128x1024xbf16, #tpu.memory_space<vmem>>, %arg7: memref<1x1024xf32, #tpu.memory_space<vmem>>, %arg8: memref<1024x512xf32, #tpu.memory_space<vmem>>, %arg9: memref<1x512xf32, #tpu.memory_space<vmem>>, %arg10: memref<512x256xf32, #tpu.memory_space<vmem>>, %arg11: memref<1x256xf32, #tpu.memory_space<vmem>>, %arg12: memref<256x128xf32, #tpu.memory_space<vmem>>, %arg13: memref<1x128xf32, #tpu.memory_space<vmem>>, %arg14: memref<3x64xf32, #tpu.memory_space<vmem>>, %arg15: memref<1x64xf32, #tpu.memory_space<vmem>>, %arg16: memref<64x128xbf16, #tpu.memory_space<vmem>>, %arg17: memref<1x128xf32, #tpu.memory_space<vmem>>, %arg18: memref<128x1024xbf16, #tpu.memory_space<vmem>>, %arg19: memref<1x1024xf32, #tpu.memory_space<vmem>>, %arg20: memref<1x1x1024xf32, #tpu.memory_space<vmem>>, %arg21: memref<1x1x128xf32, #tpu.memory_space<vmem>>) attributes {dimension_semantics = [#tpu.dimension_semantics<parallel>], iteration_bounds = array<i64: 2>, scalar_prefetch = 0 : i64, scratch_operands = 0 : i64, tpu.core_type = #tpu.core_type<tc>, window_params = [{transform_indices = @transform_0, window_bounds = array<i64: 1, 128, 3>}, {pipeline_mode = #tpu.pipeline_mode<synchronous>, transform_indices = @transform_1, window_bounds = array<i64: 3, 64>}, {pipeline_mode = #tpu.pipeline_mode<synchronous>, transform_indices = @transform_2, window_bounds = array<i64: 1, 64>}, {pipeline_mode = #tpu.pipeline_mode<synchronous>, transform_indices = @transform_3, window_bounds = array<i64: 64, 128>}, {pipeline_mode = #tpu.pipeline_mode<synchronous>, transform_indices = @transform_4, window_bounds = array<i64: 1, 128>}, {pipeline_mode = #tpu.pipeline_mode<synchronous>, transform_indices = @transform_5, window_bounds = array<i64: 128, 1024>}, {pipeline_mode = #tpu.pipeline_mode<synchronous>, transform_indices = @transform_6, window_bounds = array<i64: 1, 1024>}, {pipeline_mode = #tpu.pipeline_mode<synchronous>, transform_indices = @transform_7, window_bounds = array<i64: 1024, 512>}, {pipeline_mode = #tpu.pipeline_mode<synchronous>, transform_indices = @transform_8, window_bounds = array<i64: 1, 512>}, {pipeline_mode = #tpu.pipeline_mode<synchronous>, transform_indices = @transform_9, window_bounds = array<i64: 512, 256>}, {pipeline_mode = #tpu.pipeline_mode<synchronous>, transform_indices = @transform_10, window_bounds = array<i64: 1, 256>}, {pipeline_mode = #tpu.pipeline_mode<synchronous>, transform_indices = @transform_11, window_bounds = array<i64: 256, 128>}, {pipeline_mode = #tpu.pipeline_mode<synchronous>, transform_indices = @transform_12, window_bounds = array<i64: 1, 128>}, {pipeline_mode = #tpu.pipeline_mode<synchronous>, transform_indices = @transform_13, window_bounds = array<i64: 3, 64>}, {pipeline_mode = #tpu.pipeline_mode<synchronous>, transform_indices = @transform_14, window_bounds = array<i64: 1, 64>}, {pipeline_mode = #tpu.pipeline_mode<synchronous>, transform_indices = @transform_15, window_bounds = array<i64: 64, 128>}, {pipeline_mode = #tpu.pipeline_mode<synchronous>, transform_indices = @transform_16, window_bounds = array<i64: 1, 128>}, {pipeline_mode = #tpu.pipeline_mode<synchronous>, transform_indices = @transform_17, window_bounds = array<i64: 128, 1024>}, {pipeline_mode = #tpu.pipeline_mode<synchronous>, transform_indices = @transform_18, window_bounds = array<i64: 1, 1024>}, {transform_indices = @transform_19, window_bounds = array<i64: 1, 1, 1024>}, {transform_indices = @transform_20, window_bounds = array<i64: 1, 1, 128>}]} {
    %c0 = arith.constant 0 : index
    %c0_0 = arith.constant 0 : index
    %c0_1 = arith.constant 0 : index
    %0 = vector.load %arg1[%c0, %c0_0, %c0_1] : memref<1x128x3xf32, #tpu.memory_space<vmem>>, vector<1x128x3xf32>
    %1 = vector.shape_cast %0 : vector<1x128x3xf32> to vector<128x3xf32>
    %c0_2 = arith.constant 0 : index
    %c0_3 = arith.constant 0 : index
    %2 = vector.load %arg2[%c0_2, %c0_3] : memref<3x64xf32, #tpu.memory_space<vmem>>, vector<3x64xf32>
    %cst = arith.constant dense<0.000000e+00> : vector<128x64xf32>
    %3 = tpu.matmul %1, %2, %cst {dimension_numbers = #tpu.dot_dimension_numbers<[1], [0], [0], [1], [0, 0, 1, 1], [], []>} : vector<128x3xf32>, vector<3x64xf32>, vector<128x64xf32> -> vector<128x64xf32>
    %c0_4 = arith.constant 0 : index
    %c0_5 = arith.constant 0 : index
    %4 = vector.load %arg3[%c0_4, %c0_5] : memref<1x64xf32, #tpu.memory_space<vmem>>, vector<1x64xf32>
    %5 = vector.broadcast %4 : vector<1x64xf32> to vector<128x64xf32>
    %6 = arith.addf %3, %5 : vector<128x64xf32>
    %cst_6 = arith.constant 0.000000e+00 : f32
    %7 = vector.broadcast %cst_6 : f32 to vector<128x64xf32>
    %8 = arith.maximumf %6, %7 : vector<128x64xf32>
    %9 = arith.truncf %8 : vector<128x64xf32> to vector<128x64xbf16>
    %c0_7 = arith.constant 0 : index
    %c0_8 = arith.constant 0 : index
    %10 = vector.load %arg4[%c0_7, %c0_8] : memref<64x128xbf16, #tpu.memory_space<vmem>>, vector<64x128xbf16>
    %cst_9 = arith.constant dense<0.000000e+00> : vector<128x128xf32>
    %11 = tpu.matmul %9, %10, %cst_9 {dimension_numbers = #tpu.dot_dimension_numbers<[1], [0], [0], [1], [0, 0, 1, 1], [], []>} : vector<128x64xbf16>, vector<64x128xbf16>, vector<128x128xf32> -> vector<128x128xf32>
    %c0_10 = arith.constant 0 : index
    %c0_11 = arith.constant 0 : index
    %12 = vector.load %arg5[%c0_10, %c0_11] : memref<1x128xf32, #tpu.memory_space<vmem>>, vector<1x128xf32>
    %13 = vector.broadcast %12 : vector<1x128xf32> to vector<128x128xf32>
    %14 = arith.addf %11, %13 : vector<128x128xf32>
    %cst_12 = arith.constant 0.000000e+00 : f32
    %15 = vector.broadcast %cst_12 : f32 to vector<128x128xf32>
    %16 = arith.maximumf %14, %15 : vector<128x128xf32>
    %17 = arith.truncf %16 : vector<128x128xf32> to vector<128x128xbf16>
    %c0_13 = arith.constant 0 : index
    %c0_14 = arith.constant 0 : index
    %18 = vector.load %arg6[%c0_13, %c0_14] : memref<128x1024xbf16, #tpu.memory_space<vmem>>, vector<128x1024xbf16>
    %cst_15 = arith.constant dense<0.000000e+00> : vector<128x1024xf32>
    %19 = tpu.matmul %17, %18, %cst_15 {dimension_numbers = #tpu.dot_dimension_numbers<[1], [0], [0], [1], [0, 0, 1, 1], [], []>} : vector<128x128xbf16>, vector<128x1024xbf16>, vector<128x1024xf32> -> vector<128x1024xf32>
    %c0_16 = arith.constant 0 : index
    %c0_17 = arith.constant 0 : index
    %20 = vector.load %arg7[%c0_16, %c0_17] : memref<1x1024xf32, #tpu.memory_space<vmem>>, vector<1x1024xf32>
    %21 = vector.broadcast %20 : vector<1x1024xf32> to vector<128x1024xf32>
    %22 = arith.addf %19, %21 : vector<128x1024xf32>
    %cst_18 = arith.constant 0.000000e+00 : f32
    %23 = vector.broadcast %cst_18 : f32 to vector<128x1024xf32>
    %24 = arith.maximumf %22, %23 : vector<128x1024xf32>
    %25 = vector.shape_cast %24 : vector<128x1024xf32> to vector<1x128x1024xf32>
    %cst_19 = arith.constant dense<0xFF800000> : vector<1x1024xf32>
    %26 = vector.multi_reduction <maximumf>, %25, %cst_19 [1] : vector<1x128x1024xf32> to vector<1x1024xf32>
    %c0_20 = arith.constant 0 : index
    %c0_21 = arith.constant 0 : index
    %27 = vector.load %arg8[%c0_20, %c0_21] : memref<1024x512xf32, #tpu.memory_space<vmem>>, vector<1024x512xf32>
    %cst_22 = arith.constant dense<0.000000e+00> : vector<1x512xf32>
    %28 = tpu.matmul %26, %27, %cst_22 {dimension_numbers = #tpu.dot_dimension_numbers<[1], [0], [0], [1], [0, 0, 1, 1], [], []>} : vector<1x1024xf32>, vector<1024x512xf32>, vector<1x512xf32> -> vector<1x512xf32>
    %c0_23 = arith.constant 0 : index
    %c0_24 = arith.constant 0 : index
    %29 = vector.load %arg9[%c0_23, %c0_24] : memref<1x512xf32, #tpu.memory_space<vmem>>, vector<1x512xf32>
    %30 = arith.addf %28, %29 : vector<1x512xf32>
    %cst_25 = arith.constant 0.000000e+00 : f32
    %31 = vector.broadcast %cst_25 : f32 to vector<1x512xf32>
    %32 = arith.maximumf %30, %31 : vector<1x512xf32>
    %c0_26 = arith.constant 0 : index
    %c0_27 = arith.constant 0 : index
    %33 = vector.load %arg10[%c0_26, %c0_27] : memref<512x256xf32, #tpu.memory_space<vmem>>, vector<512x256xf32>
    %cst_28 = arith.constant dense<0.000000e+00> : vector<1x256xf32>
    %34 = tpu.matmul %32, %33, %cst_28 {dimension_numbers = #tpu.dot_dimension_numbers<[1], [0], [0], [1], [0, 0, 1, 1], [], []>} : vector<1x512xf32>, vector<512x256xf32>, vector<1x256xf32> -> vector<1x256xf32>
    %c0_29 = arith.constant 0 : index
    %c0_30 = arith.constant 0 : index
    %35 = vector.load %arg11[%c0_29, %c0_30] : memref<1x256xf32, #tpu.memory_space<vmem>>, vector<1x256xf32>
    %36 = arith.addf %34, %35 : vector<1x256xf32>
    %cst_31 = arith.constant 0.000000e+00 : f32
    %37 = vector.broadcast %cst_31 : f32 to vector<1x256xf32>
    %38 = arith.maximumf %36, %37 : vector<1x256xf32>
    %c0_32 = arith.constant 0 : index
    %c0_33 = arith.constant 0 : index
    %39 = vector.load %arg12[%c0_32, %c0_33] : memref<256x128xf32, #tpu.memory_space<vmem>>, vector<256x128xf32>
    %cst_34 = arith.constant dense<0.000000e+00> : vector<1x128xf32>
    %40 = tpu.matmul %38, %39, %cst_34 {dimension_numbers = #tpu.dot_dimension_numbers<[1], [0], [0], [1], [0, 0, 1, 1], [], []>} : vector<1x256xf32>, vector<256x128xf32>, vector<1x128xf32> -> vector<1x128xf32>
    %c0_35 = arith.constant 0 : index
    %c0_36 = arith.constant 0 : index
    %41 = vector.load %arg13[%c0_35, %c0_36] : memref<1x128xf32, #tpu.memory_space<vmem>>, vector<1x128xf32>
    %42 = arith.addf %40, %41 : vector<1x128xf32>
    %43 = vector.shape_cast %42 : vector<1x128xf32> to vector<1x1x128xf32>
    %c0_37 = arith.constant 0 : index
    %c0_38 = arith.constant 0 : index
    %c0_39 = arith.constant 0 : index
    %44 = vector.load %arg21[%c0_37, %c0_38, %c0_39] : memref<1x1x128xf32, #tpu.memory_space<vmem>>, vector<1x1x128xf32>
    tpu.vector_store %arg21[%c0_37, %c0_38, %c0_39], %43 {strides = array<i32>} : memref<1x1x128xf32, #tpu.memory_space<vmem>>, vector<1x1x128xf32>,
    %45 = vector.extract_strided_slice %42 {offsets = [0, 0], sizes = [1, 3], strides = [1, 1]} : vector<1x128xf32> to vector<1x3xf32>
    %46 = vector.shape_cast %45 : vector<1x3xf32> to vector<1x1x3xf32>
    %47 = vector.extract_strided_slice %42 {offsets = [0, 3], sizes = [1, 3], strides = [1, 1]} : vector<1x128xf32> to vector<1x3xf32>
    %48 = vector.shape_cast %47 : vector<1x3xf32> to vector<1x1x3xf32>
    %49 = vector.extract_strided_slice %42 {offsets = [0, 6], sizes = [1, 3], strides = [1, 1]} : vector<1x128xf32> to vector<1x3xf32>
    %50 = vector.shape_cast %49 : vector<1x3xf32> to vector<1x1x3xf32>
    %c0_40 = arith.constant 0 : index
    %c0_41 = arith.constant 0 : index
    %c0_42 = arith.constant 0 : index
    %51 = vector.load %arg1[%c0_40, %c0_41, %c0_42] : memref<1x128x3xf32, #tpu.memory_space<vmem>>, vector<1x128x3xf32>
    %52 = vector.extract_strided_slice %51 {offsets = [0, 0, 0], sizes = [1, 128, 1], strides = [1, 1, 1]} : vector<1x128x3xf32> to vector<1x128x1xf32>
    %53 = vector.broadcast %46 : vector<1x1x3xf32> to vector<1x128x3xf32>
    %54 = vector.broadcast %52 : vector<1x128x1xf32> to vector<1x128x3xf32>
    %55 = arith.mulf %53, %54 : vector<1x128x3xf32>
    %56 = vector.extract_strided_slice %51 {offsets = [0, 0, 1], sizes = [1, 128, 1], strides = [1, 1, 1]} : vector<1x128x3xf32> to vector<1x128x1xf32>
    %57 = vector.broadcast %48 : vector<1x1x3xf32> to vector<1x128x3xf32>
    %58 = vector.broadcast %56 : vector<1x128x1xf32> to vector<1x128x3xf32>
    %59 = arith.mulf %57, %58 : vector<1x128x3xf32>
    %60 = arith.addf %55, %59 : vector<1x128x3xf32>
    %61 = vector.extract_strided_slice %51 {offsets = [0, 0, 2], sizes = [1, 128, 1], strides = [1, 1, 1]} : vector<1x128x3xf32> to vector<1x128x1xf32>
    %62 = vector.broadcast %50 : vector<1x1x3xf32> to vector<1x128x3xf32>
    %63 = vector.broadcast %61 : vector<1x128x1xf32> to vector<1x128x3xf32>
    %64 = arith.mulf %62, %63 : vector<1x128x3xf32>
    %65 = arith.addf %60, %64 : vector<1x128x3xf32>
    %66 = vector.shape_cast %65 : vector<1x128x3xf32> to vector<128x3xf32>
    %c0_43 = arith.constant 0 : index
    %c0_44 = arith.constant 0 : index
    %67 = vector.load %arg14[%c0_43, %c0_44] : memref<3x64xf32, #tpu.memory_space<vmem>>, vector<3x64xf32>
    %cst_45 = arith.constant dense<0.000000e+00> : vector<128x64xf32>
    %68 = tpu.matmul %66, %67, %cst_45 {dimension_numbers = #tpu.dot_dimension_numbers<[1], [0], [0], [1], [0, 0, 1, 1], [], []>} : vector<128x3xf32>, vector<3x64xf32>, vector<128x64xf32> -> vector<128x64xf32>
    %c0_46 = arith.constant 0 : index
    %c0_47 = arith.constant 0 : index
    %69 = vector.load %arg15[%c0_46, %c0_47] : memref<1x64xf32, #tpu.memory_space<vmem>>, vector<1x64xf32>
    %70 = vector.broadcast %69 : vector<1x64xf32> to vector<128x64xf32>
    %71 = arith.addf %68, %70 : vector<128x64xf32>
    %cst_48 = arith.constant 0.000000e+00 : f32
    %72 = vector.broadcast %cst_48 : f32 to vector<128x64xf32>
    %73 = arith.maximumf %71, %72 : vector<128x64xf32>
    %74 = arith.truncf %73 : vector<128x64xf32> to vector<128x64xbf16>
    %c0_49 = arith.constant 0 : index
    %c0_50 = arith.constant 0 : index
    %75 = vector.load %arg16[%c0_49, %c0_50] : memref<64x128xbf16, #tpu.memory_space<vmem>>, vector<64x128xbf16>
    %cst_51 = arith.constant dense<0.000000e+00> : vector<128x128xf32>
    %76 = tpu.matmul %74, %75, %cst_51 {dimension_numbers = #tpu.dot_dimension_numbers<[1], [0], [0], [1], [0, 0, 1, 1], [], []>} : vector<128x64xbf16>, vector<64x128xbf16>, vector<128x128xf32> -> vector<128x128xf32>
    %c0_52 = arith.constant 0 : index
    %c0_53 = arith.constant 0 : index
    %77 = vector.load %arg17[%c0_52, %c0_53] : memref<1x128xf32, #tpu.memory_space<vmem>>, vector<1x128xf32>
    %78 = vector.broadcast %77 : vector<1x128xf32> to vector<128x128xf32>
    %79 = arith.addf %76, %78 : vector<128x128xf32>
    %cst_54 = arith.constant 0.000000e+00 : f32
    %80 = vector.broadcast %cst_54 : f32 to vector<128x128xf32>
    %81 = arith.maximumf %79, %80 : vector<128x128xf32>
    %82 = arith.truncf %81 : vector<128x128xf32> to vector<128x128xbf16>
    %c0_55 = arith.constant 0 : index
    %c0_56 = arith.constant 0 : index
    %83 = vector.load %arg18[%c0_55, %c0_56] : memref<128x1024xbf16, #tpu.memory_space<vmem>>, vector<128x1024xbf16>
    %cst_57 = arith.constant dense<0.000000e+00> : vector<128x1024xf32>
    %84 = tpu.matmul %82, %83, %cst_57 {dimension_numbers = #tpu.dot_dimension_numbers<[1], [0], [0], [1], [0, 0, 1, 1], [], []>} : vector<128x128xbf16>, vector<128x1024xbf16>, vector<128x1024xf32> -> vector<128x1024xf32>
    %c0_58 = arith.constant 0 : index
    %c0_59 = arith.constant 0 : index
    %85 = vector.load %arg19[%c0_58, %c0_59] : memref<1x1024xf32, #tpu.memory_space<vmem>>, vector<1x1024xf32>
    %86 = vector.broadcast %85 : vector<1x1024xf32> to vector<128x1024xf32>
    %87 = arith.addf %84, %86 : vector<128x1024xf32>
    %cst_60 = arith.constant 0.000000e+00 : f32
    %88 = vector.broadcast %cst_60 : f32 to vector<128x1024xf32>
    %89 = arith.maximumf %87, %88 : vector<128x1024xf32>
    %90 = vector.shape_cast %89 : vector<128x1024xf32> to vector<1x128x1024xf32>
    %cst_61 = arith.constant dense<0xFF800000> : vector<1x1024xf32>
    %91 = vector.multi_reduction <maximumf>, %90, %cst_61 [1] : vector<1x128x1024xf32> to vector<1x1024xf32>
    %92 = vector.shape_cast %91 : vector<1x1024xf32> to vector<1x1x1024xf32>
    %c0_62 = arith.constant 0 : index
    %c0_63 = arith.constant 0 : index
    %c0_64 = arith.constant 0 : index
    %93 = vector.load %arg20[%c0_62, %c0_63, %c0_64] : memref<1x1x1024xf32, #tpu.memory_space<vmem>>, vector<1x1x1024xf32>
    tpu.vector_store %arg20[%c0_62, %c0_63, %c0_64], %92 {strides = array<i32>} : memref<1x1x1024xf32, #tpu.memory_space<vmem>>, vector<1x1x1024xf32>,
    return
  }
  func.func @transform_0(%arg0: i32) -> (i32, i32, i32) {
    %c0_i32 = arith.constant 0 : i32
    %c0_i32_0 = arith.constant 0 : i32
    %c0_i32_1 = arith.constant 0 : i32
    return %arg0, %c0_i32, %c0_i32_0 : i32, i32, i32
  }
  func.func @transform_1(%arg0: i32) -> (i32, i32) {
    %c0_i32 = arith.constant 0 : i32
    %c0_i32_0 = arith.constant 0 : i32
    %c0_i32_1 = arith.constant 0 : i32
    return %c0_i32, %c0_i32_0 : i32, i32
  }
  func.func @transform_2(%arg0: i32) -> (i32, i32) {
    %c0_i32 = arith.constant 0 : i32
    %c0_i32_0 = arith.constant 0 : i32
    %c0_i32_1 = arith.constant 0 : i32
    return %c0_i32, %c0_i32_0 : i32, i32
  }
  func.func @transform_3(%arg0: i32) -> (i32, i32) {
    %c0_i32 = arith.constant 0 : i32
    %c0_i32_0 = arith.constant 0 : i32
    %c0_i32_1 = arith.constant 0 : i32
    return %c0_i32, %c0_i32_0 : i32, i32
  }
  func.func @transform_4(%arg0: i32) -> (i32, i32) {
    %c0_i32 = arith.constant 0 : i32
    %c0_i32_0 = arith.constant 0 : i32
    %c0_i32_1 = arith.constant 0 : i32
    return %c0_i32, %c0_i32_0 : i32, i32
  }
  func.func @transform_5(%arg0: i32) -> (i32, i32) {
    %c0_i32 = arith.constant 0 : i32
    %c0_i32_0 = arith.constant 0 : i32
    %c0_i32_1 = arith.constant 0 : i32
    return %c0_i32, %c0_i32_0 : i32, i32
  }
  func.func @transform_6(%arg0: i32) -> (i32, i32) {
    %c0_i32 = arith.constant 0 : i32
    %c0_i32_0 = arith.constant 0 : i32
    %c0_i32_1 = arith.constant 0 : i32
    return %c0_i32, %c0_i32_0 : i32, i32
  }
  func.func @transform_7(%arg0: i32) -> (i32, i32) {
    %c0_i32 = arith.constant 0 : i32
    %c0_i32_0 = arith.constant 0 : i32
    %c0_i32_1 = arith.constant 0 : i32
    return %c0_i32, %c0_i32_0 : i32, i32
  }
  func.func @transform_8(%arg0: i32) -> (i32, i32) {
    %c0_i32 = arith.constant 0 : i32
    %c0_i32_0 = arith.constant 0 : i32
    %c0_i32_1 = arith.constant 0 : i32
    return %c0_i32, %c0_i32_0 : i32, i32
  }
  func.func @transform_9(%arg0: i32) -> (i32, i32) {
    %c0_i32 = arith.constant 0 : i32
    %c0_i32_0 = arith.constant 0 : i32
    %c0_i32_1 = arith.constant 0 : i32
    return %c0_i32, %c0_i32_0 : i32, i32
  }
  func.func @transform_10(%arg0: i32) -> (i32, i32) {
    %c0_i32 = arith.constant 0 : i32
    %c0_i32_0 = arith.constant 0 : i32
    %c0_i32_1 = arith.constant 0 : i32
    return %c0_i32, %c0_i32_0 : i32, i32
  }
  func.func @transform_11(%arg0: i32) -> (i32, i32) {
    %c0_i32 = arith.constant 0 : i32
    %c0_i32_0 = arith.constant 0 : i32
    %c0_i32_1 = arith.constant 0 : i32
    return %c0_i32, %c0_i32_0 : i32, i32
  }
  func.func @transform_12(%arg0: i32) -> (i32, i32) {
    %c0_i32 = arith.constant 0 : i32
    %c0_i32_0 = arith.constant 0 : i32
    %c0_i32_1 = arith.constant 0 : i32
    return %c0_i32, %c0_i32_0 : i32, i32
  }
  func.func @transform_13(%arg0: i32) -> (i32, i32) {
    %c0_i32 = arith.constant 0 : i32
    %c0_i32_0 = arith.constant 0 : i32
    %c0_i32_1 = arith.constant 0 : i32
    return %c0_i32, %c0_i32_0 : i32, i32
  }
  func.func @transform_14(%arg0: i32) -> (i32, i32) {
    %c0_i32 = arith.constant 0 : i32
    %c0_i32_0 = arith.constant 0 : i32
    %c0_i32_1 = arith.constant 0 : i32
    return %c0_i32, %c0_i32_0 : i32, i32
  }
  func.func @transform_15(%arg0: i32) -> (i32, i32) {
    %c0_i32 = arith.constant 0 : i32
    %c0_i32_0 = arith.constant 0 : i32
    %c0_i32_1 = arith.constant 0 : i32
    return %c0_i32, %c0_i32_0 : i32, i32
  }
  func.func @transform_16(%arg0: i32) -> (i32, i32) {
    %c0_i32 = arith.constant 0 : i32
    %c0_i32_0 = arith.constant 0 : i32
    %c0_i32_1 = arith.constant 0 : i32
    return %c0_i32, %c0_i32_0 : i32, i32
  }
  func.func @transform_17(%arg0: i32) -> (i32, i32) {
    %c0_i32 = arith.constant 0 : i32
    %c0_i32_0 = arith.constant 0 : i32
    %c0_i32_1 = arith.constant 0 : i32
    return %c0_i32, %c0_i32_0 : i32, i32
  }
  func.func @transform_18(%arg0: i32) -> (i32, i32) {
    %c0_i32 = arith.constant 0 : i32
    %c0_i32_0 = arith.constant 0 : i32
    %c0_i32_1 = arith.constant 0 : i32
    return %c0_i32, %c0_i32_0 : i32, i32
  }
  func.func @transform_19(%arg0: i32) -> (i32, i32, i32) {
    %c0_i32 = arith.constant 0 : i32
    %c0_i32_0 = arith.constant 0 : i32
    %c0_i32_1 = arith.constant 0 : i32
    return %arg0, %c0_i32, %c0_i32_0 : i32, i32, i32
  }
  func.func @transform_20(%arg0: i32) -> (i32, i32, i32) {
    %c0_i32 = arith.constant 0 : i32
    %c0_i32_0 = arith.constant 0 : i32
    %c0_i32_1 = arith.constant 0 : i32
    return %arg0, %c0_i32, %c0_i32_0 : i32, i32, i32
  }
}

</mosaic_0001>

<llo_original>
// kernel: tpu_custom_call.1
$region0: #{tpu_custom_call.1}
  #allocation0 [shape = 'u32[]', space=smem, size = 0x4, offset = 0x4, fixed_abs, tag = 'smem constant byte address 0x4 - core index']
  #allocation1 [shape = 'u32[144,128]{1,0:T(1,128)}', space=vmem, size = 0x12000, scoped, tag = 'internal scratch']
  %s0 = inlined_call_operand.vmem [shape: f32[2,128,3], index: 0, kind: input, shape index: {}]
  %s1 = inlined_call_operand.hbm [shape: f32[3,64], index: 1, kind: input, shape index: {}]
  %s2 = inlined_call_operand.hbm [shape: f32[1,64], index: 2, kind: input, shape index: {}]
  %s3 = inlined_call_operand.hbm [shape: bf16[64,128], index: 3, kind: input, shape index: {}]
  %s4 = inlined_call_operand.hbm [shape: f32[1,128], index: 4, kind: input, shape index: {}]
  %s5 = inlined_call_operand.hbm [shape: bf16[128,1024], index: 5, kind: input, shape index: {}]
  %s6 = inlined_call_operand.hbm [shape: f32[1,1024], index: 6, kind: input, shape index: {}]
  %s7 = inlined_call_operand.hbm [shape: f32[1024,512], index: 7, kind: input, shape index: {}]
  %s8 = inlined_call_operand.hbm [shape: f32[1,512], index: 8, kind: input, shape index: {}]
  %s9 = inlined_call_operand.hbm [shape: f32[512,256], index: 9, kind: input, shape index: {}]
  %s10 = inlined_call_operand.hbm [shape: f32[1,256], index: 10, kind: input, shape index: {}]
  %s11 = inlined_call_operand.hbm [shape: f32[256,128], index: 11, kind: input, shape index: {}]
  %s12 = inlined_call_operand.hbm [shape: f32[1,128], index: 12, kind: input, shape index: {}]
  %s13 = inlined_call_operand.hbm [shape: f32[3,64], index: 13, kind: input, shape index: {}]
  %s14 = inlined_call_operand.hbm [shape: f32[1,64], index: 14, kind: input, shape index: {}]
  %s15 = inlined_call_operand.hbm [shape: bf16[64,128], index: 15, kind: input, shape index: {}]
  %s16 = inlined_call_operand.hbm [shape: f32[1,128], index: 16, kind: input, shape index: {}]
  %s17 = inlined_call_operand.hbm [shape: bf16[128,1024], index: 17, kind: input, shape index: {}]
  %s18 = inlined_call_operand.hbm [shape: f32[1,1024], index: 18, kind: input, shape index: {}]
  %s19 = inlined_call_operand.hbm [shape: f32[2,1,1024], index: 19, kind: output, shape index: {0}]
  %s20 = inlined_call_operand.hbm [shape: f32[2,1,128], index: 20, kind: output, shape index: {1}]
  %21 = xla_tuple %s19, %s20
  %s22 = sld [smem:[#allocation0]]
  $region189: #{tpu_custom_call.1} parent=0
    _
  %s24 = ssub.s32 1, %s22
  %s25 = scalar_select 0, %s24, %s22
  $region1: #{tpu_custom_call.1} parent=0
    #allocation2 [shape = 'u8[2048]{0}', space=vmem, size = 0x800, scoped, tag = 'input window, operand 1, single buffered']
    #allocation3 [shape = 's32[2]{0}', space=sflag, size = 0x8, scoped, tag = 'scoped memory for tpu_custom_call.1']
    #allocation4 [shape = 's32[2]{0}', space=sflag, size = 0x8, scoped, tag = 'scoped memory for tpu_custom_call.1']
    #allocation5 [shape = 'u8[512]{0}', space=vmem, size = 0x400, scoped, tag = 'input window, operand 2, single buffered']
    #allocation6 [shape = 's32[1]{0}', space=sflag, size = 0x4, scoped, tag = 'scoped memory for tpu_custom_call.1']
    #allocation7 [shape = 'u8[16384]{0}', space=vmem, size = 0x4000, scoped, tag = 'input window, operand 3, single buffered']
    #allocation8 [shape = 'u8[512]{0}', space=vmem, size = 0x400, scoped, tag = 'input window, operand 4, single buffered']
    #allocation9 [shape = 's32[1]{0}', space=sflag, size = 0x4, scoped, tag = 'scoped memory for tpu_custom_call.1']
    #allocation10 [shape = 'u8[262144]{0}', space=vmem, size = 0x40000, scoped, tag = 'input window, operand 5, single buffered']
    #allocation11 [shape = 'u8[4096]{0}', space=vmem, size = 0x1000, scoped, tag = 'input window, operand 6, single buffered']
    #allocation12 [shape = 's32[1]{0}', space=sflag, size = 0x4, scoped, tag = 'scoped memory for tpu_custom_call.1']
    #allocation13 [shape = 'u8[2097152]{0}', space=vmem, size = 0x200000, scoped, tag = 'input window, operand 7, single buffered']
    #allocation14 [shape = 'u8[2048]{0}', space=vmem, size = 0x800, scoped, tag = 'input window, operand 8, single buffered']
    #allocation15 [shape = 's32[1]{0}', space=sflag, size = 0x4, scoped, tag = 'scoped memory for tpu_custom_call.1']
    #allocation16 [shape = 'u8[524288]{0}', space=vmem, size = 0x80000, scoped, tag = 'input window, operand 9, single buffered']
    #allocation17 [shape = 'u8[1024]{0}', space=vmem, size = 0x400, scoped, tag = 'input window, operand 10, single buffered']
    #allocation18 [shape = 's32[1]{0}', space=sflag, size = 0x4, scoped, tag = 'scoped memory for tpu_custom_call.1']
    #allocation19 [shape = 'u8[131072]{0}', space=vmem, size = 0x20000, scoped, tag = 'input window, operand 11, single buffered']
    #allocation20 [shape = 'u8[512]{0}', space=vmem, size = 0x400, scoped, tag = 'input window, operand 12, single buffered']
    #allocation21 [shape = 's32[1]{0}', space=sflag, size = 0x4, scoped, tag = 'scoped memory for tpu_custom_call.1']
    #allocation22 [shape = 'u8[2048]{0}', space=vmem, size = 0x800, scoped, tag = 'input window, operand 13, single buffered']
    #allocation23 [shape = 'u8[512]{0}', space=vmem, size = 0x400, scoped, tag = 'input window, operand 14, single buffered']
    #allocation24 [shape = 's32[1]{0}', space=sflag, size = 0x4, scoped, tag = 'scoped memory for tpu_custom_call.1']
    #allocation25 [shape = 'u8[16384]{0}', space=vmem, size = 0x4000, scoped, tag = 'input window, operand 15, single buffered']
    #allocation26 [shape = 'u8[512]{0}', space=vmem, size = 0x400, scoped, tag = 'input window, operand 16, single buffered']
    #allocation27 [shape = 's32[1]{0}', space=sflag, size = 0x4, scoped, tag = 'scoped memory for tpu_custom_call.1']
    #allocation28 [shape = 'u8[262144]{0}', space=vmem, size = 0x40000, scoped, tag = 'input window, operand 17, single buffered']
    #allocation29 [shape = 'u8[4096]{0}', space=vmem, size = 0x1000, scoped, tag = 'input window, operand 18, single buffered']
    #allocation30 [shape = 's32[1]{0}', space=sflag, size = 0x4, scoped, tag = 'scoped memory for tpu_custom_call.1']
    #allocation31 [shape = 'u8[8192]{0}', space=vmem, size = 0x2000, scoped, tag = 'output window, operand 0']
    #allocation32 [shape = 'u8[1024]{0}', space=vmem, size = 0x400, scoped, tag = 'output window, operand 1']
    #allocation33 [shape = 's32[2]{0}', space=sflag, size = 0x8, scoped, tag = 'scoped memory for tpu_custom_call.1']
    %26 = vsyncpa [#allocation3], 0
    %27 = vsyncpa [#allocation6], 0
    %28 = vsyncpa [#allocation9], 0
    %29 = vsyncpa [#allocation12], 0
    %30 = vsyncpa [#allocation15], 0
    %31 = vsyncpa [#allocation18], 0
    %32 = vsyncpa [#allocation21], 0
    %33 = vsyncpa [#allocation24], 0
    %34 = vsyncpa [#allocation27], 0
    %35 = vsyncpa [#allocation30], 0
    %36 = vsyncpa [#allocation4], 0
    %s37 = scalar_lea.sflag [#allocation4], 1
    %38 = vsyncpa %s37, 0
    %39 = vsyncpa [#allocation33], 0
    %s40 = scalar_lea.sflag [#allocation33], 1
    %41 = vsyncpa %s40, 0
    loop: start=0, step=1, limit=4
    $region2: #{tpu_custom_call.1} parent=1 // loop_pre_header
      _
    $region3: #{tpu_custom_call.1} parent=1 // loop_header
      %s43 = sphi 0, %s47
      %p44 = scmp.ge.s32.totalorder %s43, 4
      %s53 = sphi 0, %s55
      %s56 = sphi 0, %s53
      %s57 = sphi 0, %s56
      %s73 = sphi 0, %s57
      %s77 = sphi 0, %s77
      %s79 = sphi 0, %s77
      %s80 = sphi 0, %s79
      %s94 = sphi 0, %s80
      %s98 = sphi 0, %s98
      %s100 = sphi 0, %s98
      %s101 = sphi 0, %s100
      %s115 = sphi 0, %s101
      %s119 = sphi 0, %s119
      %s121 = sphi 0, %s119
      %s122 = sphi 0, %s121
      %s136 = sphi 0, %s122
      %s140 = sphi 0, %s140
      %s142 = sphi 0, %s140
      %s143 = sphi 0, %s142
      %s157 = sphi 0, %s143
      %s161 = sphi 0, %s161
      %s163 = sphi 0, %s161
      %s164 = sphi 0, %s163
      %s178 = sphi 0, %s164
      %s182 = sphi 0, %s182
      %s184 = sphi 0, %s182
      %s185 = sphi 0, %s184
      %s199 = sphi 0, %s185
      %s203 = sphi 0, %s203
      %s205 = sphi 0, %s203
      %s206 = sphi 0, %s205
      %s220 = sphi 0, %s206
      %s224 = sphi 0, %s224
      %s226 = sphi 0, %s224
      %s227 = sphi 0, %s226
      %s241 = sphi 0, %s227
      %s245 = sphi 0, %s245
      %s247 = sphi 0, %s245
      %s248 = sphi 0, %s247
      %s262 = sphi 0, %s248
      %s266 = sphi 0, %s266
      %s268 = sphi 0, %s266
      %s269 = sphi 0, %s268
      %s283 = sphi 0, %s269
      %s287 = sphi 0, %s287
      %s289 = sphi 0, %s287
      %s290 = sphi 0, %s289
      %s304 = sphi 0, %s290
      %s308 = sphi 0, %s308
      %s310 = sphi 0, %s308
      %s311 = sphi 0, %s310
      %s325 = sphi 0, %s311
      %s329 = sphi 0, %s329
      %s331 = sphi 0, %s329
      %s332 = sphi 0, %s331
      %s346 = sphi 0, %s332
      %s350 = sphi 0, %s350
      %s352 = sphi 0, %s350
      %s353 = sphi 0, %s352
      %s367 = sphi 0, %s353
      %s371 = sphi 0, %s371
      %s373 = sphi 0, %s371
      %s374 = sphi 0, %s373
      %s388 = sphi 0, %s374
      %s392 = sphi 0, %s392
      %s394 = sphi 0, %s392
      %s395 = sphi 0, %s394
      %s409 = sphi 0, %s395
      %s413 = sphi 0, %s413
      %s415 = sphi 0, %s413
      %s416 = sphi 0, %s415
      %s430 = sphi 0, %s416
      %s434 = sphi 0, %s434
      %s436 = sphi 0, %s434
      %s437 = sphi 0, %s436
      %s451 = sphi 0, %s437
      %s457 = sphi 0, %s459
      %s460 = sphi 0, %s457
      %s461 = sphi 0, %s460
      %s477 = sphi 0, %s461
      %s483 = sphi 0, %s485
      %s486 = sphi 0, %s483
      %s487 = sphi 0, %s486
      %s503 = sphi 0, %s487
    $region4: #{tpu_custom_call.1} parent=1 // loop_header_branch
      %46 = sbr.rel (%p44) target = $region8
    $region5: #{tpu_custom_call.1} parent=1 // loop_body
      %s48 = ssub.s32 %s43, 1
      %s49 = ssub.s32 %s43, 2
      %s50 = sadd.s32 %s43, 1
      %s51 = ssub.s32 %s43, %s50
      %p52 = scmp.eq.s32.totalorder %s51, 0
      %s54 = sadd.s32 %s53, 1
      %s55 = scalar_select %p52, %s53, %s54
      %p58 = pneg %p52
      %p59 = scmp.eq.s32.totalorder %s43, 1
      %p60 = por %p58, %p59
      %p61 = scmp.ne.s32.totalorder %s53, %s56
      %p62 = scmp.eq.s32.totalorder %s43, 0
      %p63 = por %p61, %p62
      %p64 = scmp.ne.s32.totalorder %s53, %s56
      %p65 = scmp.eq.s32.totalorder %s48, 1
      %p66 = por %p64, %p65
      %p67 = scmp.ne.s32.totalorder %s56, %s57
      %p68 = scmp.eq.s32.totalorder %s48, 0
      %p69 = por %p67, %p68
      %p70 = scmp.ne.s32.totalorder %s56, %s57
      %p71 = scmp.eq.s32.totalorder %s49, 1
      %p72 = por %p70, %p71
      %p74 = scmp.ne.s32.totalorder %s57, %s73
      %p75 = scmp.eq.s32.totalorder %s49, 0
      %p76 = por %p74, %p75
      %s78 = sadd.s32 %s77, 1
      %p81 = scmp.eq.s32.totalorder %s43, 1
      %p82 = scmp.ne.s32.totalorder %s77, %s79
      %p83 = scmp.eq.s32.totalorder %s43, 0
      %p84 = por %p82, %p83
      %p85 = scmp.ne.s32.totalorder %s77, %s79
      %p86 = scmp.eq.s32.totalorder %s48, 1
      %p87 = por %p85, %p86
      %p88 = scmp.ne.s32.totalorder %s79, %s80
      %p89 = scmp.eq.s32.totalorder %s48, 0
      %p90 = por %p88, %p89
      %p91 = scmp.ne.s32.totalorder %s79, %s80
      %p92 = scmp.eq.s32.totalorder %s49, 1
      %p93 = por %p91, %p92
      %p95 = scmp.ne.s32.totalorder %s80, %s94
      %p96 = scmp.eq.s32.totalorder %s49, 0
      %p97 = por %p95, %p96
      %s99 = sadd.s32 %s98, 1
      %p102 = scmp.eq.s32.totalorder %s43, 1
      %p103 = scmp.ne.s32.totalorder %s98, %s100
      %p104 = scmp.eq.s32.totalorder %s43, 0
      %p105 = por %p103, %p104
      %p106 = scmp.ne.s32.totalorder %s98, %s100
      %p107 = scmp.eq.s32.totalorder %s48, 1
      %p108 = por %p106, %p107
      %p109 = scmp.ne.s32.totalorder %s100, %s101
      %p110 = scmp.eq.s32.totalorder %s48, 0
      %p111 = por %p109, %p110
      %p112 = scmp.ne.s32.totalorder %s100, %s101
      %p113 = scmp.eq.s32.totalorder %s49, 1
      %p114 = por %p112, %p113
      %p116 = scmp.ne.s32.totalorder %s101, %s115
      %p117 = scmp.eq.s32.totalorder %s49, 0
      %p118 = por %p116, %p117
      %s120 = sadd.s32 %s119, 1
      %p123 = scmp.eq.s32.totalorder %s43, 1
      %p124 = scmp.ne.s32.totalorder %s119, %s121
      %p125 = scmp.eq.s32.totalorder %s43, 0
      %p126 = por %p124, %p125
      %p127 = scmp.ne.s32.totalorder %s119, %s121
      %p128 = scmp.eq.s32.totalorder %s48, 1
      %p129 = por %p127, %p128
      %p130 = scmp.ne.s32.totalorder %s121, %s122
      %p131 = scmp.eq.s32.totalorder %s48, 0
      %p132 = por %p130, %p131
      %p133 = scmp.ne.s32.totalorder %s121, %s122
      %p134 = scmp.eq.s32.totalorder %s49, 1
      %p135 = por %p133, %p134
      %p137 = scmp.ne.s32.totalorder %s122, %s136
      %p138 = scmp.eq.s32.totalorder %s49, 0
      %p139 = por %p137, %p138
      %s141 = sadd.s32 %s140, 1
      %p144 = scmp.eq.s32.totalorder %s43, 1
      %p145 = scmp.ne.s32.totalorder %s140, %s142
      %p146 = scmp.eq.s32.totalorder %s43, 0
      %p147 = por %p145, %p146
      %p148 = scmp.ne.s32.totalorder %s140, %s142
      %p149 = scmp.eq.s32.totalorder %s48, 1
      %p150 = por %p148, %p149
      %p151 = scmp.ne.s32.totalorder %s142, %s143
      %p152 = scmp.eq.s32.totalorder %s48, 0
      %p153 = por %p151, %p152
      %p154 = scmp.ne.s32.totalorder %s142, %s143
      %p155 = scmp.eq.s32.totalorder %s49, 1
      %p156 = por %p154, %p155
      %p158 = scmp.ne.s32.totalorder %s143, %s157
      %p159 = scmp.eq.s32.totalorder %s49, 0
      %p160 = por %p158, %p159
      %s162 = sadd.s32 %s161, 1
      %p165 = scmp.eq.s32.totalorder %s43, 1
      %p166 = scmp.ne.s32.totalorder %s161, %s163
      %p167 = scmp.eq.s32.totalorder %s43, 0
      %p168 = por %p166, %p167
      %p169 = scmp.ne.s32.totalorder %s161, %s163
      %p170 = scmp.eq.s32.totalorder %s48, 1
      %p171 = por %p169, %p170
      %p172 = scmp.ne.s32.totalorder %s163, %s164
      %p173 = scmp.eq.s32.totalorder %s48, 0
      %p174 = por %p172, %p173
      %p175 = scmp.ne.s32.totalorder %s163, %s164
      %p176 = scmp.eq.s32.totalorder %s49, 1
      %p177 = por %p175, %p176
      %p179 = scmp.ne.s32.totalorder %s164, %s178
      %p180 = scmp.eq.s32.totalorder %s49, 0
      %p181 = por %p179, %p180
      %s183 = sadd.s32 %s182, 1
      %p186 = scmp.eq.s32.totalorder %s43, 1
      %p187 = scmp.ne.s32.totalorder %s182, %s184
      %p188 = scmp.eq.s32.totalorder %s43, 0
      %p189 = por %p187, %p188
      %p190 = scmp.ne.s32.totalorder %s182, %s184
      %p191 = scmp.eq.s32.totalorder %s48, 1
      %p192 = por %p190, %p191
      %p193 = scmp.ne.s32.totalorder %s184, %s185
      %p194 = scmp.eq.s32.totalorder %s48, 0
      %p195 = por %p193, %p194
      %p196 = scmp.ne.s32.totalorder %s184, %s185
      %p197 = scmp.eq.s32.totalorder %s49, 1
      %p198 = por %p196, %p197
      %p200 = scmp.ne.s32.totalorder %s185, %s199
      %p201 = scmp.eq.s32.totalorder %s49, 0
      %p202 = por %p200, %p201
      %s204 = sadd.s32 %s203, 1
      %p207 = scmp.eq.s32.totalorder %s43, 1
      %p208 = scmp.ne.s32.totalorder %s203, %s205
      %p209 = scmp.eq.s32.totalorder %s43, 0
      %p210 = por %p208, %p209
      %p211 = scmp.ne.s32.totalorder %s203, %s205
      %p212 = scmp.eq.s32.totalorder %s48, 1
      %p213 = por %p211, %p212
      %p214 = scmp.ne.s32.totalorder %s205, %s206
      %p215 = scmp.eq.s32.totalorder %s48, 0
      %p216 = por %p214, %p215
      %p217 = scmp.ne.s32.totalorder %s205, %s206
      %p218 = scmp.eq.s32.totalorder %s49, 1
      %p219 = por %p217, %p218
      %p221 = scmp.ne.s32.totalorder %s206, %s220
      %p222 = scmp.eq.s32.totalorder %s49, 0
      %p223 = por %p221, %p222
      %s225 = sadd.s32 %s224, 1
      %p228 = scmp.eq.s32.totalorder %s43, 1
      %p229 = scmp.ne.s32.totalorder %s224, %s226
      %p230 = scmp.eq.s32.totalorder %s43, 0
      %p231 = por %p229, %p230
      %p232 = scmp.ne.s32.totalorder %s224, %s226
      %p233 = scmp.eq.s32.totalorder %s48, 1
      %p234 = por %p232, %p233
      %p235 = scmp.ne.s32.totalorder %s226, %s227
      %p236 = scmp.eq.s32.totalorder %s48, 0
      %p237 = por %p235, %p236
      %p238 = scmp.ne.s32.totalorder %s226, %s227
      %p239 = scmp.eq.s32.totalorder %s49, 1
      %p240 = por %p238, %p239
      %p242 = scmp.ne.s32.totalorder %s227, %s241
      %p243 = scmp.eq.s32.totalorder %s49, 0
      %p244 = por %p242, %p243
      %s246 = sadd.s32 %s245, 1
      %p249 = scmp.eq.s32.totalorder %s43, 1
      %p250 = scmp.ne.s32.totalorder %s245, %s247
      %p251 = scmp.eq.s32.totalorder %s43, 0
      %p252 = por %p250, %p251
      %p253 = scmp.ne.s32.totalorder %s245, %s247
      %p254 = scmp.eq.s32.totalorder %s48, 1
      %p255 = por %p253, %p254
      %p256 = scmp.ne.s32.totalorder %s247, %s248
      %p257 = scmp.eq.s32.totalorder %s48, 0
      %p258 = por %p256, %p257
      %p259 = scmp.ne.s32.totalorder %s247, %s248
      %p260 = scmp.eq.s32.totalorder %s49, 1
      %p261 = por %p259, %p260
      %p263 = scmp.ne.s32.totalorder %s248, %s262
      %p264 = scmp.eq.s32.totalorder %s49, 0
      %p265 = por %p263, %p264
      %s267 = sadd.s32 %s266, 1
      %p270 = scmp.eq.s32.totalorder %s43, 1
      %p271 = scmp.ne.s32.totalorder %s266, %s268
      %p272 = scmp.eq.s32.totalorder %s43, 0
      %p273 = por %p271, %p272
      %p274 = scmp.ne.s32.totalorder %s266, %s268
      %p275 = scmp.eq.s32.totalorder %s48, 1
      %p276 = por %p274, %p275
      %p277 = scmp.ne.s32.totalorder %s268, %s269
      %p278 = scmp.eq.s32.totalorder %s48, 0
      %p279 = por %p277, %p278
      %p280 = scmp.ne.s32.totalorder %s268, %s269
      %p281 = scmp.eq.s32.totalorder %s49, 1
      %p282 = por %p280, %p281
      %p284 = scmp.ne.s32.totalorder %s269, %s283
      %p285 = scmp.eq.s32.totalorder %s49, 0
      %p286 = por %p284, %p285
      %s288 = sadd.s32 %s287, 1
      %p291 = scmp.eq.s32.totalorder %s43, 1
      %p292 = scmp.ne.s32.totalorder %s287, %s289
      %p293 = scmp.eq.s32.totalorder %s43, 0
      %p294 = por %p292, %p293
      %p295 = scmp.ne.s32.totalorder %s287, %s289
      %p296 = scmp.eq.s32.totalorder %s48, 1
      %p297 = por %p295, %p296
      %p298 = scmp.ne.s32.totalorder %s289, %s290
      %p299 = scmp.eq.s32.totalorder %s48, 0
      %p300 = por %p298, %p299
      %p301 = scmp.ne.s32.totalorder %s289, %s290
      %p302 = scmp.eq.s32.totalorder %s49, 1
      %p303 = por %p301, %p302
      %p305 = scmp.ne.s32.totalorder %s290, %s304
      %p306 = scmp.eq.s32.totalorder %s49, 0
      %p307 = por %p305, %p306
      %s309 = sadd.s32 %s308, 1
      %p312 = scmp.eq.s32.totalorder %s43, 1
      %p313 = scmp.ne.s32.totalorder %s308, %s310
      %p314 = scmp.eq.s32.totalorder %s43, 0
      %p315 = por %p313, %p314
      %p316 = scmp.ne.s32.totalorder %s308, %s310
      %p317 = scmp.eq.s32.totalorder %s48, 1
      %p318 = por %p316, %p317
      %p319 = scmp.ne.s32.totalorder %s310, %s311
      %p320 = scmp.eq.s32.totalorder %s48, 0
      %p321 = por %p319, %p320
      %p322 = scmp.ne.s32.totalorder %s310, %s311
      %p323 = scmp.eq.s32.totalorder %s49, 1
      %p324 = por %p322, %p323
      %p326 = scmp.ne.s32.totalorder %s311, %s325
      %p327 = scmp.eq.s32.totalorder %s49, 0
      %p328 = por %p326, %p327
      %s330 = sadd.s32 %s329, 1
      %p333 = scmp.eq.s32.totalorder %s43, 1
      %p334 = scmp.ne.s32.totalorder %s329, %s331
      %p335 = scmp.eq.s32.totalorder %s43, 0
      %p336 = por %p334, %p335
      %p337 = scmp.ne.s32.totalorder %s329, %s331
      %p338 = scmp.eq.s32.totalorder %s48, 1
      %p339 = por %p337, %p338
      %p340 = scmp.ne.s32.totalorder %s331, %s332
      %p341 = scmp.eq.s32.totalorder %s48, 0
      %p342 = por %p340, %p341
      %p343 = scmp.ne.s32.totalorder %s331, %s332
      %p344 = scmp.eq.s32.totalorder %s49, 1
      %p345 = por %p343, %p344
      %p347 = scmp.ne.s32.totalorder %s332, %s346
      %p348 = scmp.eq.s32.totalorder %s49, 0
      %p349 = por %p347, %p348
      %s351 = sadd.s32 %s350, 1
      %p354 = scmp.eq.s32.totalorder %s43, 1
      %p355 = scmp.ne.s32.totalorder %s350, %s352
      %p356 = scmp.eq.s32.totalorder %s43, 0
      %p357 = por %p355, %p356
      %p358 = scmp.ne.s32.totalorder %s350, %s352
      %p359 = scmp.eq.s32.totalorder %s48, 1
      %p360 = por %p358, %p359
      %p361 = scmp.ne.s32.totalorder %s352, %s353
      %p362 = scmp.eq.s32.totalorder %s48, 0
      %p363 = por %p361, %p362
      %p364 = scmp.ne.s32.totalorder %s352, %s353
      %p365 = scmp.eq.s32.totalorder %s49, 1
      %p366 = por %p364, %p365
      %p368 = scmp.ne.s32.totalorder %s353, %s367
      %p369 = scmp.eq.s32.totalorder %s49, 0
      %p370 = por %p368, %p369
      %s372 = sadd.s32 %s371, 1
      %p375 = scmp.eq.s32.totalorder %s43, 1
      %p376 = scmp.ne.s32.totalorder %s371, %s373
      %p377 = scmp.eq.s32.totalorder %s43, 0
      %p378 = por %p376, %p377
      %p379 = scmp.ne.s32.totalorder %s371, %s373
      %p380 = scmp.eq.s32.totalorder %s48, 1
      %p381 = por %p379, %p380
      %p382 = scmp.ne.s32.totalorder %s373, %s374
      %p383 = scmp.eq.s32.totalorder %s48, 0
      %p384 = por %p382, %p383
      %p385 = scmp.ne.s32.totalorder %s373, %s374
      %p386 = scmp.eq.s32.totalorder %s49, 1
      %p387 = por %p385, %p386
      %p389 = scmp.ne.s32.totalorder %s374, %s388
      %p390 = scmp.eq.s32.totalorder %s49, 0
      %p391 = por %p389, %p390
      %s393 = sadd.s32 %s392, 1
      %p396 = scmp.eq.s32.totalorder %s43, 1
      %p397 = scmp.ne.s32.totalorder %s392, %s394
      %p398 = scmp.eq.s32.totalorder %s43, 0
      %p399 = por %p397, %p398
      %p400 = scmp.ne.s32.totalorder %s392, %s394
      %p401 = scmp.eq.s32.totalorder %s48, 1
      %p402 = por %p400, %p401
      %p403 = scmp.ne.s32.totalorder %s394, %s395
      %p404 = scmp.eq.s32.totalorder %s48, 0
      %p405 = por %p403, %p404
      %p406 = scmp.ne.s32.totalorder %s394, %s395
      %p407 = scmp.eq.s32.totalorder %s49, 1
      %p408 = por %p406, %p407
      %p410 = scmp.ne.s32.totalorder %s395, %s409
      %p411 = scmp.eq.s32.totalorder %s49, 0
      %p412 = por %p410, %p411
      %s414 = sadd.s32 %s413, 1
      %p417 = scmp.eq.s32.totalorder %s43, 1
      %p418 = scmp.ne.s32.totalorder %s413, %s415
      %p419 = scmp.eq.s32.totalorder %s43, 0
      %p420 = por %p418, %p419
      %p421 = scmp.ne.s32.totalorder %s413, %s415
      %p422 = scmp.eq.s32.totalorder %s48, 1
      %p423 = por %p421, %p422
      %p424 = scmp.ne.s32.totalorder %s415, %s416
      %p425 = scmp.eq.s32.totalorder %s48, 0
      %p426 = por %p424, %p425
      %p427 = scmp.ne.s32.totalorder %s415, %s416
      %p428 = scmp.eq.s32.totalorder %s49, 1
      %p429 = por %p427, %p428
      %p431 = scmp.ne.s32.totalorder %s416, %s430
      %p432 = scmp.eq.s32.totalorder %s49, 0
      %p433 = por %p431, %p432
      %s435 = sadd.s32 %s434, 1
      %p438 = scmp.eq.s32.totalorder %s43, 1
      %p439 = scmp.ne.s32.totalorder %s434, %s436
      %p440 = scmp.eq.s32.totalorder %s43, 0
      %p441 = por %p439, %p440
      %p442 = scmp.ne.s32.totalorder %s434, %s436
      %p443 = scmp.eq.s32.totalorder %s48, 1
      %p444 = por %p442, %p443
      %p445 = scmp.ne.s32.totalorder %s436, %s437
      %p446 = scmp.eq.s32.totalorder %s48, 0
      %p447 = por %p445, %p446
      %p448 = scmp.ne.s32.totalorder %s436, %s437
      %p449 = scmp.eq.s32.totalorder %s49, 1
      %p450 = por %p448, %p449
      %p452 = scmp.ne.s32.totalorder %s437, %s451
      %p453 = scmp.eq.s32.totalorder %s49, 0
      %p454 = por %p452, %p453
      %s455 = ssub.s32 %s43, %s50
      %p456 = scmp.eq.s32.totalorder %s455, 0
      %s458 = sadd.s32 %s457, 1
      %s459 = scalar_select %p456, %s457, %s458
      %p462 = pneg %p456
      %p463 = scmp.eq.s32.totalorder %s43, 1
      %p464 = por %p462, %p463
      %p465 = scmp.ne.s32.totalorder %s457, %s460
      %p466 = scmp.eq.s32.totalorder %s43, 0
      %p467 = por %p465, %p466
      %p468 = scmp.ne.s32.totalorder %s457, %s460
      %p469 = scmp.eq.s32.totalorder %s48, 1
      %p470 = por %p468, %p469
      %p471 = scmp.ne.s32.totalorder %s460, %s461
      %p472 = scmp.eq.s32.totalorder %s48, 0
      %p473 = por %p471, %p472
      %p474 = scmp.ne.s32.totalorder %s460, %s461
      %p475 = scmp.eq.s32.totalorder %s49, 1
      %p476 = por %p474, %p475
      %p478 = scmp.ne.s32.totalorder %s461, %s477
      %p479 = scmp.eq.s32.totalorder %s49, 0
      %p480 = por %p478, %p479
      %s481 = ssub.s32 %s43, %s50
      %p482 = scmp.eq.s32.totalorder %s481, 0
      %s484 = sadd.s32 %s483, 1
      %s485 = scalar_select %p482, %s483, %s484
      %p488 = pneg %p482
      %p489 = scmp.eq.s32.totalorder %s43, 1
      %p490 = por %p488, %p489
      %p491 = scmp.ne.s32.totalorder %s483, %s486
      %p492 = scmp.eq.s32.totalorder %s43, 0
      %p493 = por %p491, %p492
      %p494 = scmp.ne.s32.totalorder %s483, %s486
      %p495 = scmp.eq.s32.totalorder %s48, 1
      %p496 = por %p494, %p495
      %p497 = scmp.ne.s32.totalorder %s486, %s487
      %p498 = scmp.eq.s32.totalorder %s48, 0
      %p499 = por %p497, %p498
      %p500 = scmp.ne.s32.totalorder %s486, %s487
      %p501 = scmp.eq.s32.totalorder %s49, 1
      %p502 = por %p500, %p501
      %p504 = scmp.ne.s32.totalorder %s487, %s503
      %p505 = scmp.eq.s32.totalorder %s49, 0
      %p506 = por %p504, %p505
      %p507 = scmp.le.s32.totalorder 1, %s43
      %p508 = scmp.lt.s32.totalorder %s43, 3
      %p509 = pnand %p507, %p508
      %p510 = pneg %p509
      // Predicated region
      $region9: #{tpu_custom_call.1} parent=5 // pred_check
        _
      $region10: #{tpu_custom_call.1} parent=5 // pred_check_branch
        %512 = sbr.rel (%p509) target = $region12
      $region11: #{tpu_custom_call.1} parent=5 // pred_region
        %s513 = ssub.s32 %s43, 1
        // Predicated region
        $region13: #{tpu_custom_call.1} parent=11 // pred_check
          %p514 = pneg %p90
        $region14: #{tpu_custom_call.1} parent=11 // pred_check_branch
          %516 = sbr.rel (%p514) target = $region16
        $region15: #{tpu_custom_call.1} parent=11 // pred_region
          %s518 = ssub.s32 64, 64
          %519 = vsyncadd [#allocation3], %s518
          %s521 = sshll.u32 [#allocation2], 4
          %s522 = int_to_ptr.vmem [resolvable:$true] %s521
          %524 = dma.hbm_to_vmem [thread:$0]  %s1, 64, %s522, [#allocation3]
        $region16: #{tpu_custom_call.1} parent=11 // pred_fallthru
          _
        // Predicated region
        $region17: #{tpu_custom_call.1} parent=11 // pred_check
          %p525 = pneg %p111
        $region18: #{tpu_custom_call.1} parent=11 // pred_check_branch
          %527 = sbr.rel (%p525) target = $region20
        $region19: #{tpu_custom_call.1} parent=11 // pred_region
          %s529 = ssub.s32 16, 16
          %530 = vsyncadd [#allocation6], %s529
          %s532 = sshll.u32 [#allocation5], 4
          %s533 = int_to_ptr.vmem [resolvable:$true] %s532
          %535 = dma.hbm_to_vmem [thread:$0]  %s2, 16, %s533, [#allocation6]
        $region20: #{tpu_custom_call.1} parent=11 // pred_fallthru
          _
        // Predicated region
        $region21: #{tpu_custom_call.1} parent=11 // pred_check
          %p536 = pneg %p132
        $region22: #{tpu_custom_call.1} parent=11 // pred_check_branch
          %538 = sbr.rel (%p536) target = $region24
        $region23: #{tpu_custom_call.1} parent=11 // pred_region
          %s540 = ssub.s32 512, 512
          %541 = vsyncadd [#allocation6], %s540
          %s542 = sshll.u32 [#allocation7], 4
          %s543 = int_to_ptr.vmem [resolvable:$true] %s542
          %548 = dma.hbm_to_vmem [thread:$0]  %s3, 512, %s543, [#allocation6], 64, 64, 4
        $region24: #{tpu_custom_call.1} parent=11 // pred_fallthru
          _
        // Predicated region
        $region25: #{tpu_custom_call.1} parent=11 // pred_check
          %p549 = pneg %p153
        $region26: #{tpu_custom_call.1} parent=11 // pred_check_branch
          %551 = sbr.rel (%p549) target = $region28
        $region27: #{tpu_custom_call.1} parent=11 // pred_region
          %s553 = ssub.s32 16, 16
          %554 = vsyncadd [#allocation9], %s553
          %s556 = sshll.u32 [#allocation8], 4
          %s557 = int_to_ptr.vmem [resolvable:$true] %s556
          %559 = dma.hbm_to_vmem [thread:$0]  %s4, 16, %s557, [#allocation9]
        $region28: #{tpu_custom_call.1} parent=11 // pred_fallthru
          _
        // Predicated region
        $region29: #{tpu_custom_call.1} parent=11 // pred_check
          %p560 = pneg %p174
        $region30: #{tpu_custom_call.1} parent=11 // pred_check_branch
          %562 = sbr.rel (%p560) target = $region32
        $region31: #{tpu_custom_call.1} parent=11 // pred_region
          %s564 = ssub.s32 8192, 8192
          %565 = vsyncadd [#allocation9], %s564
          %s566 = sshll.u32 [#allocation10], 4
          %s567 = int_to_ptr.vmem [resolvable:$true] %s566
          %572 = dma.hbm_to_vmem [thread:$0]  %s5, 8192, %s567, [#allocation9], 512, 512, 32
        $region32: #{tpu_custom_call.1} parent=11 // pred_fallthru
          _
        // Predicated region
        $region33: #{tpu_custom_call.1} parent=11 // pred_check
          %p573 = pneg %p195
        $region34: #{tpu_custom_call.1} parent=11 // pred_check_branch
          %575 = sbr.rel (%p573) target = $region36
        $region35: #{tpu_custom_call.1} parent=11 // pred_region
          %s577 = ssub.s32 128, 128
          %578 = vsyncadd [#allocation12], %s577
          %s580 = sshll.u32 [#allocation11], 4
          %s581 = int_to_ptr.vmem [resolvable:$true] %s580
          %583 = dma.hbm_to_vmem [thread:$0]  %s6, 128, %s581, [#allocation12]
        $region36: #{tpu_custom_call.1} parent=11 // pred_fallthru
          _
        // Predicated region
        $region37: #{tpu_custom_call.1} parent=11 // pred_check
          %p584 = pneg %p216
        $region38: #{tpu_custom_call.1} parent=11 // pred_check_branch
          %586 = sbr.rel (%p584) target = $region40
        $region39: #{tpu_custom_call.1} parent=11 // pred_region
          %s588 = ssub.s32 65536, 65536
          %589 = vsyncadd [#allocation12], %s588
          %s590 = sshll.u32 [#allocation13], 4
          %s591 = int_to_ptr.vmem [resolvable:$true] %s590
          %596 = dma.hbm_to_vmem [thread:$0]  %s7, 65536, %s591, [#allocation12], 512, 512, 32
        $region40: #{tpu_custom_call.1} parent=11 // pred_fallthru
          _
        // Predicated region
        $region41: #{tpu_custom_call.1} parent=11 // pred_check
          %p597 = pneg %p237
        $region42: #{tpu_custom_call.1} parent=11 // pred_check_branch
          %599 = sbr.rel (%p597) target = $region44
        $region43: #{tpu_custom_call.1} parent=11 // pred_region
          %s601 = ssub.s32 64, 64
          %602 = vsyncadd [#allocation15], %s601
          %s604 = sshll.u32 [#allocation14], 4
          %s605 = int_to_ptr.vmem [resolvable:$true] %s604
          %607 = dma.hbm_to_vmem [thread:$0]  %s8, 64, %s605, [#allocation15]
        $region44: #{tpu_custom_call.1} parent=11 // pred_fallthru
          _
        // Predicated region
        $region45: #{tpu_custom_call.1} parent=11 // pred_check
          %p608 = pneg %p258
        $region46: #{tpu_custom_call.1} parent=11 // pred_check_branch
          %610 = sbr.rel (%p608) target = $region48
        $region47: #{tpu_custom_call.1} parent=11 // pred_region
          %s612 = ssub.s32 16384, 16384
          %613 = vsyncadd [#allocation15], %s612
          %s614 = sshll.u32 [#allocation16], 4
          %s615 = int_to_ptr.vmem [resolvable:$true] %s614
          %620 = dma.hbm_to_vmem [thread:$0]  %s9, 16384, %s615, [#allocation15], 256, 256, 16
        $region48: #{tpu_custom_call.1} parent=11 // pred_fallthru
          _
        // Predicated region
        $region49: #{tpu_custom_call.1} parent=11 // pred_check
          %p621 = pneg %p279
        $region50: #{tpu_custom_call.1} parent=11 // pred_check_branch
          %623 = sbr.rel (%p621) target = $region52
        $region51: #{tpu_custom_call.1} parent=11 // pred_region
          %s625 = ssub.s32 32, 32
          %626 = vsyncadd [#allocation18], %s625
          %s628 = sshll.u32 [#allocation17], 4
          %s629 = int_to_ptr.vmem [resolvable:$true] %s628
          %631 = dma.hbm_to_vmem [thread:$0]  %s10, 32, %s629, [#allocation18]
        $region52: #{tpu_custom_call.1} parent=11 // pred_fallthru
          _
        // Predicated region
        $region53: #{tpu_custom_call.1} parent=11 // pred_check
          %p632 = pneg %p300
        $region54: #{tpu_custom_call.1} parent=11 // pred_check_branch
          %634 = sbr.rel (%p632) target = $region56
        $region55: #{tpu_custom_call.1} parent=11 // pred_region
          %s636 = ssub.s32 4096, 4096
          %637 = vsyncadd [#allocation18], %s636
          %s638 = sshll.u32 [#allocation19], 4
          %s639 = int_to_ptr.vmem [resolvable:$true] %s638
          %644 = dma.hbm_to_vmem [thread:$0]  %s11, 4096, %s639, [#allocation18], 128, 128, 8
        $region56: #{tpu_custom_call.1} parent=11 // pred_fallthru
          _
        // Predicated region
        $region57: #{tpu_custom_call.1} parent=11 // pred_check
          %p645 = pneg %p321
        $region58: #{tpu_custom_call.1} parent=11 // pred_check_branch
          %647 = sbr.rel (%p645) target = $region60
        $region59: #{tpu_custom_call.1} parent=11 // pred_region
          %s649 = ssub.s32 16, 16
          %650 = vsyncadd [#allocation21], %s649
          %s652 = sshll.u32 [#allocation20], 4
          %s653 = int_to_ptr.vmem [resolvable:$true] %s652
          %655 = dma.hbm_to_vmem [thread:$0]  %s12, 16, %s653, [#allocation21]
        $region60: #{tpu_custom_call.1} parent=11 // pred_fallthru
          _
        // Predicated region
        $region61: #{tpu_custom_call.1} parent=11 // pred_check
          %p656 = pneg %p342
        $region62: #{tpu_custom_call.1} parent=11 // pred_check_branch
          %658 = sbr.rel (%p656) target = $region64
        $region63: #{tpu_custom_call.1} parent=11 // pred_region
          %s660 = ssub.s32 64, 64
          %661 = vsyncadd [#allocation21], %s660
          %s663 = sshll.u32 [#allocation22], 4
          %s664 = int_to_ptr.vmem [resolvable:$true] %s663
          %666 = dma.hbm_to_vmem [thread:$0]  %s13, 64, %s664, [#allocation21]
        $region64: #{tpu_custom_call.1} parent=11 // pred_fallthru
          _
        // Predicated region
        $region65: #{tpu_custom_call.1} parent=11 // pred_check
          %p667 = pneg %p363
        $region66: #{tpu_custom_call.1} parent=11 // pred_check_branch
          %669 = sbr.rel (%p667) target = $region68
        $region67: #{tpu_custom_call.1} parent=11 // pred_region
          %s671 = ssub.s32 16, 16
          %672 = vsyncadd [#allocation24], %s671
          %s674 = sshll.u32 [#allocation23], 4
          %s675 = int_to_ptr.vmem [resolvable:$true] %s674
          %677 = dma.hbm_to_vmem [thread:$0]  %s14, 16, %s675, [#allocation24]
        $region68: #{tpu_custom_call.1} parent=11 // pred_fallthru
          _
        // Predicated region
        $region69: #{tpu_custom_call.1} parent=11 // pred_check
          %p678 = pneg %p384
        $region70: #{tpu_custom_call.1} parent=11 // pred_check_branch
          %680 = sbr.rel (%p678) target = $region72
        $region71: #{tpu_custom_call.1} parent=11 // pred_region
          %s682 = ssub.s32 512, 512
          %683 = vsyncadd [#allocation24], %s682
          %s684 = sshll.u32 [#allocation25], 4
          %s685 = int_to_ptr.vmem [resolvable:$true] %s684
          %690 = dma.hbm_to_vmem [thread:$0]  %s15, 512, %s685, [#allocation24], 64, 64, 4
        $region72: #{tpu_custom_call.1} parent=11 // pred_fallthru
          _
        // Predicated region
        $region73: #{tpu_custom_call.1} parent=11 // pred_check
          %p691 = pneg %p405
        $region74: #{tpu_custom_call.1} parent=11 // pred_check_branch
          %693 = sbr.rel (%p691) target = $region76
        $region75: #{tpu_custom_call.1} parent=11 // pred_region
          %s695 = ssub.s32 16, 16
          %696 = vsyncadd [#allocation27], %s695
          %s698 = sshll.u32 [#allocation26], 4
          %s699 = int_to_ptr.vmem [resolvable:$true] %s698
          %701 = dma.hbm_to_vmem [thread:$0]  %s16, 16, %s699, [#allocation27]
        $region76: #{tpu_custom_call.1} parent=11 // pred_fallthru
          _
        // Predicated region
        $region77: #{tpu_custom_call.1} parent=11 // pred_check
          %p702 = pneg %p426
        $region78: #{tpu_custom_call.1} parent=11 // pred_check_branch
          %704 = sbr.rel (%p702) target = $region80
        $region79: #{tpu_custom_call.1} parent=11 // pred_region
          %s706 = ssub.s32 8192, 8192
          %707 = vsyncadd [#allocation27], %s706
          %s708 = sshll.u32 [#allocation28], 4
          %s709 = int_to_ptr.vmem [resolvable:$true] %s708
          %714 = dma.hbm_to_vmem [thread:$0]  %s17, 8192, %s709, [#allocation27], 512, 512, 32
        $region80: #{tpu_custom_call.1} parent=11 // pred_fallthru
          _
        // Predicated region
        $region81: #{tpu_custom_call.1} parent=11 // pred_check
          %p715 = pneg %p447
        $region82: #{tpu_custom_call.1} parent=11 // pred_check_branch
          %717 = sbr.rel (%p715) target = $region84
        $region83: #{tpu_custom_call.1} parent=11 // pred_region
          %s719 = ssub.s32 128, 128
          %720 = vsyncadd [#allocation30], %s719
          %s722 = sshll.u32 [#allocation29], 4
          %s723 = int_to_ptr.vmem [resolvable:$true] %s722
          %725 = dma.hbm_to_vmem [thread:$0]  %s18, 128, %s723, [#allocation30]
        $region84: #{tpu_custom_call.1} parent=11 // pred_fallthru
          _
      $region12: #{tpu_custom_call.1} parent=5 // pred_fallthru
        _
      %p726 = scmp.lt.s32.totalorder %s43, 2
      // Predicated region
      $region85: #{tpu_custom_call.1} parent=5 // pred_check
        %p727 = pneg %p726
      $region86: #{tpu_custom_call.1} parent=5 // pred_check_branch
        %729 = sbr.rel (%p727) target = $region88
      $region87: #{tpu_custom_call.1} parent=5 // pred_region
        // Predicated region
        $region89: #{tpu_custom_call.1} parent=87 // pred_check
          %p730 = pneg %p63
        $region90: #{tpu_custom_call.1} parent=87 // pred_check_branch
          %732 = sbr.rel (%p730) target = $region92
        $region91: #{tpu_custom_call.1} parent=87 // pred_region
          %p733 = scmp.lt.s32.totalorder %s43, 1
          %s734 = scalar_select %p733, %s43, 1
          %s735 = smul.addr %s734, 16
          %s736 = smul.addr %s735, 8
          %s737 = scalar_lea.vmem %s0, %s736
        $region92: #{tpu_custom_call.1} parent=87 // pred_fallthru
          _
      $region88: #{tpu_custom_call.1} parent=5 // pred_fallthru
        _
      %p738 = scmp.le.s32.totalorder 1, %s43
      %p739 = scmp.lt.s32.totalorder %s43, 3
      %p740 = pnand %p738, %p739
      %p741 = pneg %p740
      // Predicated region
      $region93: #{tpu_custom_call.1} parent=5 // pred_check
        _
      $region94: #{tpu_custom_call.1} parent=5 // pred_check_branch
        %743 = sbr.rel (%p740) target = $region96
      $region95: #{tpu_custom_call.1} parent=5 // pred_region
        %s744 = ssub.s32 %s43, 1
        // Predicated region
        $region97: #{tpu_custom_call.1} parent=95 // pred_check
          %p745 = pneg %p90
        $region98: #{tpu_custom_call.1} parent=95 // pred_check_branch
          %747 = sbr.rel (%p745) target = $region100
        $region99: #{tpu_custom_call.1} parent=95 // pred_region
          %748 = dma.done [#allocation3], 64
        $region100: #{tpu_custom_call.1} parent=95 // pred_fallthru
          _
        // Predicated region
        $region101: #{tpu_custom_call.1} parent=95 // pred_check
          %p749 = pneg %p111
        $region102: #{tpu_custom_call.1} parent=95 // pred_check_branch
          %751 = sbr.rel (%p749) target = $region104
        $region103: #{tpu_custom_call.1} parent=95 // pred_region
          %752 = dma.done [#allocation6], 16
        $region104: #{tpu_custom_call.1} parent=95 // pred_fallthru
          _
        // Predicated region
        $region105: #{tpu_custom_call.1} parent=95 // pred_check
          %p753 = pneg %p132
        $region106: #{tpu_custom_call.1} parent=95 // pred_check_branch
          %755 = sbr.rel (%p753) target = $region108
        $region107: #{tpu_custom_call.1} parent=95 // pred_region
          %756 = dma.done [#allocation6], 512
        $region108: #{tpu_custom_call.1} parent=95 // pred_fallthru
          _
        // Predicated region
        $region109: #{tpu_custom_call.1} parent=95 // pred_check
          %p757 = pneg %p153
        $region110: #{tpu_custom_call.1} parent=95 // pred_check_branch
          %759 = sbr.rel (%p757) target = $region112
        $region111: #{tpu_custom_call.1} parent=95 // pred_region
          %760 = dma.done [#allocation9], 16
        $region112: #{tpu_custom_call.1} parent=95 // pred_fallthru
          _
        // Predicated region
        $region113: #{tpu_custom_call.1} parent=95 // pred_check
          %p761 = pneg %p174
        $region114: #{tpu_custom_call.1} parent=95 // pred_check_branch
          %763 = sbr.rel (%p761) target = $region116
        $region115: #{tpu_custom_call.1} parent=95 // pred_region
          %764 = dma.done [#allocation9], 8192
        $region116: #{tpu_custom_call.1} parent=95 // pred_fallthru
          _
        // Predicated region
        $region117: #{tpu_custom_call.1} parent=95 // pred_check
          %p765 = pneg %p195
        $region118: #{tpu_custom_call.1} parent=95 // pred_check_branch
          %767 = sbr.rel (%p765) target = $region120
        $region119: #{tpu_custom_call.1} parent=95 // pred_region
          %768 = dma.done [#allocation12], 128
        $region120: #{tpu_custom_call.1} parent=95 // pred_fallthru
          _
        // Predicated region
        $region121: #{tpu_custom_call.1} parent=95 // pred_check
          %p769 = pneg %p216
        $region122: #{tpu_custom_call.1} parent=95 // pred_check_branch
          %771 = sbr.rel (%p769) target = $region124
        $region123: #{tpu_custom_call.1} parent=95 // pred_region
          %772 = dma.done [#allocation12], 65536
        $region124: #{tpu_custom_call.1} parent=95 // pred_fallthru
          _
        // Predicated region
        $region125: #{tpu_custom_call.1} parent=95 // pred_check
          %p773 = pneg %p237
        $region126: #{tpu_custom_call.1} parent=95 // pred_check_branch
          %775 = sbr.rel (%p773) target = $region128
        $region127: #{tpu_custom_call.1} parent=95 // pred_region
          %776 = dma.done [#allocation15], 64
        $region128: #{tpu_custom_call.1} parent=95 // pred_fallthru
          _
        // Predicated region
        $region129: #{tpu_custom_call.1} parent=95 // pred_check
          %p777 = pneg %p258
        $region130: #{tpu_custom_call.1} parent=95 // pred_check_branch
          %779 = sbr.rel (%p777) target = $region132
        $region131: #{tpu_custom_call.1} parent=95 // pred_region
          %780 = dma.done [#allocation15], 16384
        $region132: #{tpu_custom_call.1} parent=95 // pred_fallthru
          _
        // Predicated region
        $region133: #{tpu_custom_call.1} parent=95 // pred_check
          %p781 = pneg %p279
        $region134: #{tpu_custom_call.1} parent=95 // pred_check_branch
          %783 = sbr.rel (%p781) target = $region136
        $region135: #{tpu_custom_call.1} parent=95 // pred_region
          %784 = dma.done [#allocation18], 32
        $region136: #{tpu_custom_call.1} parent=95 // pred_fallthru
          _
        // Predicated region
        $region137: #{tpu_custom_call.1} parent=95 // pred_check
          %p785 = pneg %p300
        $region138: #{tpu_custom_call.1} parent=95 // pred_check_branch
          %787 = sbr.rel (%p785) target = $region140
        $region139: #{tpu_custom_call.1} parent=95 // pred_region
          %788 = dma.done [#allocation18], 4096
        $region140: #{tpu_custom_call.1} parent=95 // pred_fallthru
          _
        // Predicated region
        $region141: #{tpu_custom_call.1} parent=95 // pred_check
          %p789 = pneg %p321
        $region142: #{tpu_custom_call.1} parent=95 // pred_check_branch
          %791 = sbr.rel (%p789) target = $region144
        $region143: #{tpu_custom_call.1} parent=95 // pred_region
          %792 = dma.done [#allocation21], 16
        $region144: #{tpu_custom_call.1} parent=95 // pred_fallthru
          _
        // Predicated region
        $region145: #{tpu_custom_call.1} parent=95 // pred_check
          %p793 = pneg %p342
        $region146: #{tpu_custom_call.1} parent=95 // pred_check_branch
          %795 = sbr.rel (%p793) target = $region148
        $region147: #{tpu_custom_call.1} parent=95 // pred_region
          %796 = dma.done [#allocation21], 64
        $region148: #{tpu_custom_call.1} parent=95 // pred_fallthru
          _
        // Predicated region
        $region149: #{tpu_custom_call.1} parent=95 // pred_check
          %p797 = pneg %p363
        $region150: #{tpu_custom_call.1} parent=95 // pred_check_branch
          %799 = sbr.rel (%p797) target = $region152
        $region151: #{tpu_custom_call.1} parent=95 // pred_region
          %800 = dma.done [#allocation24], 16
        $region152: #{tpu_custom_call.1} parent=95 // pred_fallthru
          _
        // Predicated region
        $region153: #{tpu_custom_call.1} parent=95 // pred_check
          %p801 = pneg %p384
        $region154: #{tpu_custom_call.1} parent=95 // pred_check_branch
          %803 = sbr.rel (%p801) target = $region156
        $region155: #{tpu_custom_call.1} parent=95 // pred_region
          %804 = dma.done [#allocation24], 512
        $region156: #{tpu_custom_call.1} parent=95 // pred_fallthru
          _
        // Predicated region
        $region157: #{tpu_custom_call.1} parent=95 // pred_check
          %p805 = pneg %p405
        $region158: #{tpu_custom_call.1} parent=95 // pred_check_branch
          %807 = sbr.rel (%p805) target = $region160
        $region159: #{tpu_custom_call.1} parent=95 // pred_region
          %808 = dma.done [#allocation27], 16
        $region160: #{tpu_custom_call.1} parent=95 // pred_fallthru
          _
        // Predicated region
        $region161: #{tpu_custom_call.1} parent=95 // pred_check
          %p809 = pneg %p426
        $region162: #{tpu_custom_call.1} parent=95 // pred_check_branch
          %811 = sbr.rel (%p809) target = $region164
        $region163: #{tpu_custom_call.1} parent=95 // pred_region
          %812 = dma.done [#allocation27], 8192
        $region164: #{tpu_custom_call.1} parent=95 // pred_fallthru
          _
        // Predicated region
        $region165: #{tpu_custom_call.1} parent=95 // pred_check
          %p813 = pneg %p447
        $region166: #{tpu_custom_call.1} parent=95 // pred_check_branch
          %815 = sbr.rel (%p813) target = $region168
        $region167: #{tpu_custom_call.1} parent=95 // pred_region
          %816 = dma.done [#allocation30], 128
        $region168: #{tpu_custom_call.1} parent=95 // pred_fallthru
          _
        %p817 = scmp.lt.s32.totalorder %s48, 1
        %s818 = scalar_select %p817, %s48, 1
        %s819 = smul.addr %s818, 16
        %s820 = smul.addr %s819, 8
        %s821 = scalar_lea.vmem %s0, %s820
        %p822 = pneg %p69
        %p823 = pneg %p66
        %p824 = pneg %p90
        %p825 = pneg %p87
        %p826 = pneg %p111
        %p827 = pneg %p108
        %p828 = pneg %p132
        %p829 = pneg %p129
        %p830 = pneg %p153
        %p831 = pneg %p150
        %p832 = pneg %p174
        %p833 = pneg %p171
        %p834 = pneg %p195
        %p835 = pneg %p192
        %p836 = pneg %p216
        %p837 = pneg %p213
        %p838 = pneg %p237
        %p839 = pneg %p234
        %p840 = pneg %p258
        %p841 = pneg %p255
        %p842 = pneg %p279
        %p843 = pneg %p276
        %p844 = pneg %p300
        %p845 = pneg %p297
        %p846 = pneg %p321
        %p847 = pneg %p318
        %p848 = pneg %p342
        %p849 = pneg %p339
        %p850 = pneg %p363
        %p851 = pneg %p360
        %p852 = pneg %p384
        %p853 = pneg %p381
        %p854 = pneg %p405
        %p855 = pneg %p402
        %p856 = pneg %p426
        %p857 = pneg %p423
        %p858 = pneg %p447
        %p859 = pneg %p444
        %p860 = pneg %p473
        %p861 = pneg %p470
        %s862 = sand.u32 %s460, 1
        %s863 = scalar_lea.sflag [#allocation4], %s862
        %s864 = sand.u32 %s460, 1
        %s865 = smul.addr %s864, 8
        %s866 = scalar_lea.vmem [#allocation31], %s865
        %p867 = pneg %p499
        %p868 = pneg %p496
        %s869 = sand.u32 %s486, 1
        %s870 = scalar_lea.sflag [#allocation33], %s869
        %s871 = sand.u32 %s486, 1
        %s872 = scalar_lea.vmem [#allocation32], %s871
        %p873 = scmp.lt.s32.totalorder %s48, 1
        %s874 = scalar_select %p873, %s48, 1
        %s875 = smul.addr %s874, 16
        %s876 = smul.addr %s875, 8
        %s877 = scalar_lea.vmem %s0, %s876
        %v879 = vld [vmem:[%s877] sm:$0xff]
        %v880 = vld [vmem:[%s877 + $0x8] sm:$0xff]
        %v881 = vld [vmem:[%s877 + $0x10] sm:$0xff]
        %v882 = vld [vmem:[%s877 + $0x18] sm:$0xff]
        %v883 = vld [vmem:[%s877 + $0x20] sm:$0xff]
        %v884 = vld [vmem:[%s877 + $0x28] sm:$0xff]
        %v885 = vld [vmem:[%s877 + $0x30] sm:$0xff]
        %v886 = vld [vmem:[%s877 + $0x38] sm:$0xff]
        %v887 = vld [vmem:[%s877 + $0x40] sm:$0xff]
        %v888 = vld [vmem:[%s877 + $0x48] sm:$0xff]
        %v889 = vld [vmem:[%s877 + $0x50] sm:$0xff]
        %v890 = vld [vmem:[%s877 + $0x58] sm:$0xff]
        %v891 = vld [vmem:[%s877 + $0x60] sm:$0xff]
        %v892 = vld [vmem:[%s877 + $0x68] sm:$0xff]
        %v893 = vld [vmem:[%s877 + $0x70] sm:$0xff]
        %v894 = vld [vmem:[%s877 + $0x78] sm:$0xff]
        %v895 = vld [vmem:[#allocation2] sm:$0x7]
        %v896 = vld [vmem:[#allocation5] sm:$0x1]
        %v898 = vlaneseq
        %v899 = vshrl.u32 %v898, 7
        %v900 = vsub.s32 0, %v899
        %v901 = vrot.slane %v896, %v900
        %vm903 = vcmask 23552
        %v905 = vsel %vm903, %v879, 0
        %v908 = vsel %vm903, %v880, 0
        %v911 = vsel %vm903, %v881, 0
        %v914 = vsel %vm903, %v882, 0
        %v917 = vsel %vm903, %v883, 0
        %v920 = vsel %vm903, %v884, 0
        %v923 = vsel %vm903, %v885, 0
        %v926 = vsel %vm903, %v886, 0
        %v929 = vsel %vm903, %v887, 0
        %v932 = vsel %vm903, %v888, 0
        %v935 = vsel %vm903, %v889, 0
        %v938 = vsel %vm903, %v890, 0
        %v941 = vsel %vm903, %v891, 0
        %v944 = vsel %vm903, %v892, 0
        %v947 = vsel %vm903, %v893, 0
        %v950 = vsel %vm903, %v894, 0
        %vm952 = vcmask 1042432
        %v954 = vsel %vm952, %v895, 0
        %956 = vmatprep.subr.mxu0 0.0
        %957 = vmatpush1.msra.mxu0 %v954
        %958 = vmatprep.subr.mxu0 0.0
        %959 = vmatpush1.msra.mxu0 0.0
        %960 = vmatprep.subr.mxu0 0.0
        %961 = vmatpush1.msra.mxu0 0.0
        %962 = vmatprep.subr.mxu0 0.0
        %963 = vmatpush1.msra.mxu0 0.0
        %964 = vmatprep.subr.mxu0 0.0
        %965 = vmatpush1.msra.mxu0 0.0
        %966 = vmatprep.subr.mxu0 0.0
        %967 = vmatpush1.msra.mxu0 0.0
        %968 = vmatprep.subr.mxu0 0.0
        %969 = vmatpush1.msra.mxu0 0.0
        %970 = vmatprep.subr.mxu0 0.0
        %971 = vmatpush1.msra.mxu0 0.0
        %972 = vmatprep.subr.mxu0 0.0
        %973 = vmatpush1.msra.mxu0 0.0
        %974 = vmatprep.subr.mxu0 0.0
        %975 = vmatpush1.msra.mxu0 0.0
        %976 = vmatprep.subr.mxu0 0.0
        %977 = vmatpush1.msra.mxu0 0.0
        %978 = vmatprep.subr.mxu0 0.0
        %979 = vmatpush1.msra.mxu0 0.0
        %980 = vmatprep.subr.mxu0 0.0
        %981 = vmatpush1.msra.mxu0 0.0
        %982 = vmatprep.subr.mxu0 0.0
        %983 = vmatpush1.msra.mxu0 0.0
        %984 = vmatprep.subr.mxu0 0.0
        %985 = vmatpush1.msra.mxu0 0.0
        %986 = vmatprep.subr.mxu0 0.0
        %987 = vmatpush1.msra.mxu0 0.0
        %988 = vmatprep.subr.mxu0 0.0
        %989 = vmatpush1.msra.mxu0 0.0
        %990 = vmatprep.subr.mxu0 0.0
        %991 = vmatpush1.msra.mxu0 0.0
        %992 = vmatprep.subr.mxu0 0.0
        %993 = vmatpush1.msra.mxu0 0.0
        %994 = vmatprep.subr.mxu0 0.0
        %995 = vmatpush1.msra.mxu0 0.0
        %996 = vmatprep.subr.mxu0 0.0
        %997 = vmatpush1.msra.mxu0 0.0
        %998 = vmatprep.subr.mxu0 0.0
        %999 = vmatpush1.msra.mxu0 0.0
        %1000 = vmatprep.subr.mxu0 0.0
        %1001 = vmatpush1.msra.mxu0 0.0
        %1002 = vmatprep.subr.mxu0 0.0
        %1003 = vmatpush1.msra.mxu0 0.0
        %1004 = vmatprep.subr.mxu0 0.0
        %1005 = vmatpush1.msra.mxu0 0.0
        %1006 = vmatprep.subr.mxu0 0.0
        %1007 = vmatpush1.msra.mxu0 0.0
        %1008 = vmatprep.subr.mxu0 0.0
        %1009 = vmatpush1.msra.mxu0 0.0
        %1010 = vmatprep.subr.mxu0 0.0
        %1011 = vmatpush1.msra.mxu0 0.0
        %1012 = vmatprep.subr.mxu0 0.0
        %1013 = vmatpush1.msra.mxu0 0.0
        %1014 = vmatprep.subr.mxu0 0.0
        %1015 = vmatpush1.msra.mxu0 0.0
        %1016 = vmatprep.subr.mxu0 0.0
        %1017 = vmatpush1.msra.mxu0 0.0
        %1018 = vmatprep.subr.mxu0 0.0
        %1019 = vmatpush1.msra.mxu0 0.0
        %1020 = vmatprep.mubr.f32.mxu0 0.0
        %1021 = vmatmul.mubr.f32.gmra.mrb[0].mxu0 %v905
        %v1022 = vpop.f32.mrb[0].mxu0
        %v1023 = vadd.f32 %v901, %v1022
        %v1024 = vpop.f32.mrb[0].mxu0
        %1025 = vmatprep.mubr.f32.mxu0 0.0
        %1026 = vmatmul.mubr.f32.gmra.mrb[0].mxu0 %v908
        %v1027 = vpop.f32.mrb[0].mxu0
        %v1028 = vadd.f32 %v901, %v1027
        %v1029 = vpop.f32.mrb[0].mxu0
        %1030 = vmatprep.mubr.f32.mxu0 0.0
        %1031 = vmatmul.mubr.f32.gmra.mrb[0].mxu0 %v911
        %v1032 = vpop.f32.mrb[0].mxu0
        %v1033 = vadd.f32 %v901, %v1032
        %v1034 = vpop.f32.mrb[0].mxu0
        %1035 = vmatprep.mubr.f32.mxu0 0.0
        %1036 = vmatmul.mubr.f32.gmra.mrb[0].mxu0 %v914
        %v1037 = vpop.f32.mrb[0].mxu0
        %v1038 = vadd.f32 %v901, %v1037
        %v1039 = vpop.f32.mrb[0].mxu0
        %1040 = vmatprep.mubr.f32.mxu0 0.0
        %1041 = vmatmul.mubr.f32.gmra.mrb[0].mxu0 %v917
        %v1042 = vpop.f32.mrb[0].mxu0
        %v1043 = vadd.f32 %v901, %v1042
        %v1044 = vpop.f32.mrb[0].mxu0
        %1045 = vmatprep.mubr.f32.mxu0 0.0
        %1046 = vmatmul.mubr.f32.gmra.mrb[0].mxu0 %v920
        %v1047 = vpop.f32.mrb[0].mxu0
        %v1048 = vadd.f32 %v901, %v1047
        %v1049 = vpop.f32.mrb[0].mxu0
        %1050 = vmatprep.mubr.f32.mxu0 0.0
        %1051 = vmatmul.mubr.f32.gmra.mrb[0].mxu0 %v923
        %v1052 = vpop.f32.mrb[0].mxu0
        %v1053 = vadd.f32 %v901, %v1052
        %v1054 = vpop.f32.mrb[0].mxu0
        %1055 = vmatprep.mubr.f32.mxu0 0.0
        %1056 = vmatmul.mubr.f32.gmra.mrb[0].mxu0 %v926
        %v1057 = vpop.f32.mrb[0].mxu0
        %v1058 = vadd.f32 %v901, %v1057
        %v1059 = vpop.f32.mrb[0].mxu0
        %1060 = vmatprep.mubr.f32.mxu0 0.0
        %1061 = vmatmul.mubr.f32.gmra.mrb[0].mxu0 %v929
        %v1062 = vpop.f32.mrb[0].mxu0
        %v1063 = vadd.f32 %v901, %v1062
        %v1064 = vpop.f32.mrb[0].mxu0
        %1065 = vmatprep.mubr.f32.mxu0 0.0
        %1066 = vmatmul.mubr.f32.gmra.mrb[0].mxu0 %v932
        %v1067 = vpop.f32.mrb[0].mxu0
        %v1068 = vadd.f32 %v901, %v1067
        %v1069 = vpop.f32.mrb[0].mxu0
        %1070 = vmatprep.mubr.f32.mxu0 0.0
        %1071 = vmatmul.mubr.f32.gmra.mrb[0].mxu0 %v935
        %v1072 = vpop.f32.mrb[0].mxu0
        %v1073 = vadd.f32 %v901, %v1072
        %v1074 = vpop.f32.mrb[0].mxu0
        %1075 = vmatprep.mubr.f32.mxu0 0.0
        %1076 = vmatmul.mubr.f32.gmra.mrb[0].mxu0 %v938
        %v1077 = vpop.f32.mrb[0].mxu0
        %v1078 = vadd.f32 %v901, %v1077
        %v1079 = vpop.f32.mrb[0].mxu0
        %1080 = vmatprep.mubr.f32.mxu0 0.0
        %1081 = vmatmul.mubr.f32.gmra.mrb[0].mxu0 %v941
        %v1082 = vpop.f32.mrb[0].mxu0
        %v1083 = vadd.f32 %v901, %v1082
        %v1084 = vpop.f32.mrb[0].mxu0
        %1085 = vmatprep.mubr.f32.mxu0 0.0
        %1086 = vmatmul.mubr.f32.gmra.mrb[0].mxu0 %v944
        %v1087 = vpop.f32.mrb[0].mxu0
        %v1088 = vadd.f32 %v901, %v1087
        %v1089 = vpop.f32.mrb[0].mxu0
        %1090 = vmatprep.mubr.f32.mxu0 0.0
        %1091 = vmatmul.mubr.f32.gmra.mrb[0].mxu0 %v947
        %v1092 = vpop.f32.mrb[0].mxu0
        %v1093 = vadd.f32 %v901, %v1092
        %v1094 = vpop.f32.mrb[0].mxu0
        %1095 = vmatprep.mubr.f32.mxu0 0.0
        %1096 = vmatmul.mubr.f32.gmra.mrb[0].mxu0 %v950
        %v1097 = vpop.f32.mrb[0].mxu0
        %v1098 = vadd.f32 %v901, %v1097
        %v1099 = vpop.f32.mrb[0].mxu0
        %1100 = vdwg.mxu0
        %v1101 = vmax.f32 %v1023, 0.0
        %v1102 = vmax.f32 %v1028, 0.0
        %v1103 = vmax.f32 %v1033, 0.0
        %v1104 = vmax.f32 %v1038, 0.0
        %v1105 = vmax.f32 %v1043, 0.0
        %v1106 = vmax.f32 %v1048, 0.0
        %v1107 = vmax.f32 %v1053, 0.0
        %v1108 = vmax.f32 %v1058, 0.0
        %v1109 = vmax.f32 %v1063, 0.0
        %v1110 = vmax.f32 %v1068, 0.0
        %v1111 = vmax.f32 %v1073, 0.0
        %v1112 = vmax.f32 %v1078, 0.0
        %v1113 = vmax.f32 %v1083, 0.0
        %v1114 = vmax.f32 %v1088, 0.0
        %v1115 = vmax.f32 %v1093, 0.0
        %v1116 = vmax.f32 %v1098, 0.0
        %v1117 = vpack.c.bf16 %v1102, %v1101
        %v1118 = vpack.c.bf16 %v1104, %v1103
        %v1119 = vpack.c.bf16 %v1106, %v1105
        %v1120 = vpack.c.bf16 %v1108, %v1107
        %v1121 = vpack.c.bf16 %v1110, %v1109
        %v1122 = vpack.c.bf16 %v1112, %v1111
        %v1123 = vpack.c.bf16 %v1114, %v1113
        %v1124 = vpack.c.bf16 %v1116, %v1115
        %v1125 = vld [vmem:[#allocation7] sm:$0xf]
        %v1126 = vld [vmem:[#allocation7 + $0x4] sm:$0xf]
        %v1127 = vld [vmem:[#allocation7 + $0x8] sm:$0xf]
        %v1128 = vld [vmem:[#allocation7 + $0xc] sm:$0xf]
        %v1129 = vld [vmem:[#allocation7 + $0x10] sm:$0xf]
        %v1130 = vld [vmem:[#allocation7 + $0x14] sm:$0xf]
        %v1131 = vld [vmem:[#allocation7 + $0x18] sm:$0xf]
        %v1132 = vld [vmem:[#allocation7 + $0x1c] sm:$0xf]
        %v1133 = vld [vmem:[#allocation8] sm:$0x1]
        %v1135 = vlaneseq
        %v1136 = vshrl.u32 %v1135, 7
        %v1137 = vsub.s32 0, %v1136
        %v1138 = vrot.slane %v1133, %v1137
        %v1148 = vunpack.c.l.b16 %v1125
        %v1149 = vunpack.c.l.b16 %v1126
        %v1150 = vunpack.c.l.b16 %v1127
        %v1151 = vunpack.c.l.b16 %v1128
        %v1152 = vunpack.c.l.b16 %v1129
        %v1153 = vunpack.c.l.b16 %v1130
        %v1154 = vunpack.c.l.b16 %v1131
        %v1155 = vunpack.c.l.b16 %v1132
        %v1156 = vpack.c.b16 %v1149, %v1148
        %v1157 = vpack.c.b16 %v1151, %v1150
        %v1158 = vpack.c.b16 %v1153, %v1152
        %v1159 = vpack.c.b16 %v1155, %v1154
        %vm1164 = vcmask 523264
        %v1166 = vsel %vm1164, %v1117, 0
        %v1169 = vsel %vm1164, %v1118, 0
        %v1172 = vsel %vm1164, %v1119, 0
        %v1175 = vsel %vm1164, %v1120, 0
        %v1178 = vsel %vm1164, %v1121, 0
        %v1181 = vsel %vm1164, %v1122, 0
        %v1184 = vsel %vm1164, %v1123, 0
        %v1187 = vsel %vm1164, %v1124, 0
        %1189 = vmatprep.subr.bf16.mxu0 0
        %1190 = vmatpush1.bf16.msra.mxu0 %v1156
        %1191 = vmatprep.subr.bf16.mxu0 0
        %1192 = vmatpush1.bf16.msra.mxu0 %v1157
        %1193 = vmatprep.subr.bf16.mxu0 0
        %1194 = vmatpush1.bf16.msra.mxu0 %v1158
        %1195 = vmatprep.subr.bf16.mxu0 0
        %1196 = vmatpush1.bf16.msra.mxu0 %v1159
        %1197 = vmatprep.subr.bf16.mxu0 0
        %1198 = vmatpush1.bf16.msra.mxu0 0
        %1199 = vmatprep.subr.bf16.mxu0 0
        %1200 = vmatpush1.bf16.msra.mxu0 0
        %1201 = vmatprep.subr.bf16.mxu0 0
        %1202 = vmatpush1.bf16.msra.mxu0 0
        %1203 = vmatprep.subr.bf16.mxu0 0
        %1204 = vmatpush1.bf16.msra.mxu0 0
        %1205 = vmatprep.subr.bf16.mxu0 0
        %1206 = vmatpush1.bf16.msra.mxu0 0
        %1207 = vmatprep.subr.bf16.mxu0 0
        %1208 = vmatpush1.bf16.msra.mxu0 0
        %1209 = vmatprep.subr.bf16.mxu0 0
        %1210 = vmatpush1.bf16.msra.mxu0 0
        %1211 = vmatprep.subr.bf16.mxu0 0
        %1212 = vmatpush1.bf16.msra.mxu0 0
        %1213 = vmatprep.subr.bf16.mxu0 0
        %1214 = vmatpush1.bf16.msra.mxu0 0
        %1215 = vmatprep.subr.bf16.mxu0 0
        %1216 = vmatpush1.bf16.msra.mxu0 0
        %1217 = vmatprep.subr.bf16.mxu0 0
        %1218 = vmatpush1.bf16.msra.mxu0 0
        %1219 = vmatprep.subr.bf16.mxu0 0
        %1220 = vmatpush1.bf16.msra.mxu0 0
        %1221 = vmatprep.mubr.bf16.mxu0 0
        %1222 = vmatmul.mubr.bf16.gmra.mrb[0].mxu0 %v1166
        %v1223 = vpop.f32.mrb[0].mxu0
        %v1224 = vadd.f32 %v1138, %v1223
        %v1225 = vpop.f32.mrb[0].mxu0
        %v1226 = vpop.f32.mrb[0].mxu0
        %v1227 = vadd.f32 %v1138, %v1226
        %v1228 = vpop.f32.mrb[0].mxu0
        %1229 = vmatprep.mubr.bf16.mxu0 0
        %1230 = vmatmul.mubr.bf16.gmra.mrb[0].mxu0 %v1169
        %v1231 = vpop.f32.mrb[0].mxu0
        %v1232 = vadd.f32 %v1138, %v1231
        %v1233 = vpop.f32.mrb[0].mxu0
        %v1234 = vpop.f32.mrb[0].mxu0
        %v1235 = vadd.f32 %v1138, %v1234
        %v1236 = vpop.f32.mrb[0].mxu0
        %1237 = vmatprep.mubr.bf16.mxu0 0
        %1238 = vmatmul.mubr.bf16.gmra.mrb[0].mxu0 %v1172
        %v1239 = vpop.f32.mrb[0].mxu0
        %v1240 = vadd.f32 %v1138, %v1239
        %v1241 = vpop.f32.mrb[0].mxu0
        %v1242 = vpop.f32.mrb[0].mxu0
        %v1243 = vadd.f32 %v1138, %v1242
        %v1244 = vpop.f32.mrb[0].mxu0
        %1245 = vmatprep.mubr.bf16.mxu0 0
        %1246 = vmatmul.mubr.bf16.gmra.mrb[0].mxu0 %v1175
        %v1247 = vpop.f32.mrb[0].mxu0
        %v1248 = vadd.f32 %v1138, %v1247
        %v1249 = vpop.f32.mrb[0].mxu0
        %v1250 = vpop.f32.mrb[0].mxu0
        %v1251 = vadd.f32 %v1138, %v1250
        %v1252 = vpop.f32.mrb[0].mxu0
        %1253 = vmatprep.mubr.bf16.mxu0 0
        %1254 = vmatmul.mubr.bf16.gmra.mrb[0].mxu0 %v1178
        %v1255 = vpop.f32.mrb[0].mxu0
        %v1256 = vadd.f32 %v1138, %v1255
        %v1257 = vpop.f32.mrb[0].mxu0
        %v1258 = vpop.f32.mrb[0].mxu0
        %v1259 = vadd.f32 %v1138, %v1258
        %v1260 = vpop.f32.mrb[0].mxu0
        %1261 = vmatprep.mubr.bf16.mxu0 0
        %1262 = vmatmul.mubr.bf16.gmra.mrb[0].mxu0 %v1181
        %v1263 = vpop.f32.mrb[0].mxu0
        %v1264 = vadd.f32 %v1138, %v1263
        %v1265 = vpop.f32.mrb[0].mxu0
        %v1266 = vpop.f32.mrb[0].mxu0
        %v1267 = vadd.f32 %v1138, %v1266
        %v1268 = vpop.f32.mrb[0].mxu0
        %1269 = vmatprep.mubr.bf16.mxu0 0
        %1270 = vmatmul.mubr.bf16.gmra.mrb[0].mxu0 %v1184
        %v1271 = vpop.f32.mrb[0].mxu0
        %v1272 = vadd.f32 %v1138, %v1271
        %v1273 = vpop.f32.mrb[0].mxu0
        %v1274 = vpop.f32.mrb[0].mxu0
        %v1275 = vadd.f32 %v1138, %v1274
        %v1276 = vpop.f32.mrb[0].mxu0
        %1277 = vmatprep.mubr.bf16.mxu0 0
        %1278 = vmatmul.mubr.bf16.gmra.mrb[0].mxu0 %v1187
        %v1279 = vpop.f32.mrb[0].mxu0
        %v1280 = vadd.f32 %v1138, %v1279
        %v1281 = vpop.f32.mrb[0].mxu0
        %v1282 = vpop.f32.mrb[0].mxu0
        %v1283 = vadd.f32 %v1138, %v1282
        %v1284 = vpop.f32.mrb[0].mxu0
        %1285 = vdwg.mxu0
        %v1286 = vmax.f32 %v1224, 0.0
        %v1287 = vmax.f32 %v1227, 0.0
        %v1288 = vmax.f32 %v1232, 0.0
        %v1289 = vmax.f32 %v1235, 0.0
        %v1290 = vmax.f32 %v1240, 0.0
        %v1291 = vmax.f32 %v1243, 0.0
        %v1292 = vmax.f32 %v1248, 0.0
        %v1293 = vmax.f32 %v1251, 0.0
        %v1294 = vmax.f32 %v1256, 0.0
        %v1295 = vmax.f32 %v1259, 0.0
        %v1296 = vmax.f32 %v1264, 0.0
        %v1297 = vmax.f32 %v1267, 0.0
        %v1298 = vmax.f32 %v1272, 0.0
        %v1299 = vmax.f32 %v1275, 0.0
        %v1300 = vmax.f32 %v1280, 0.0
        %v1301 = vmax.f32 %v1283, 0.0
        %v1302 = vpack.c.bf16 %v1287, %v1286
        %v1303 = vpack.c.bf16 %v1289, %v1288
        %v1304 = vpack.c.bf16 %v1291, %v1290
        %v1305 = vpack.c.bf16 %v1293, %v1292
        %v1306 = vpack.c.bf16 %v1295, %v1294
        %v1307 = vpack.c.bf16 %v1297, %v1296
        %v1308 = vpack.c.bf16 %v1299, %v1298
        %v1309 = vpack.c.bf16 %v1301, %v1300
        %v1310 = vld [vmem:[#allocation10] sm:$0xff]
        %v1311 = vld [vmem:[#allocation10 + $0x8] sm:$0xff]
        %v1312 = vld [vmem:[#allocation10 + $0x10] sm:$0xff]
        %v1313 = vld [vmem:[#allocation10 + $0x18] sm:$0xff]
        %v1314 = vld [vmem:[#allocation10 + $0x20] sm:$0xff]
        %v1315 = vld [vmem:[#allocation10 + $0x28] sm:$0xff]
        %v1316 = vld [vmem:[#allocation10 + $0x30] sm:$0xff]
        %v1317 = vld [vmem:[#allocation10 + $0x38] sm:$0xff]
        %v1318 = vld [vmem:[#allocation10 + $0x40] sm:$0xff]
        %v1319 = vld [vmem:[#allocation10 + $0x48] sm:$0xff]
        %v1320 = vld [vmem:[#allocation10 + $0x50] sm:$0xff]
        %v1321 = vld [vmem:[#allocation10 + $0x58] sm:$0xff]
        %v1322 = vld [vmem:[#allocation10 + $0x60] sm:$0xff]
        %v1323 = vld [vmem:[#allocation10 + $0x68] sm:$0xff]
        %v1324 = vld [vmem:[#allocation10 + $0x70] sm:$0xff]
        %v1325 = vld [vmem:[#allocation10 + $0x78] sm:$0xff]
        %v1326 = vld [vmem:[#allocation10 + $0x80] sm:$0xff]
        %v1327 = vld [vmem:[#allocation10 + $0x88] sm:$0xff]
        %v1328 = vld [vmem:[#allocation10 + $0x90] sm:$0xff]
        %v1329 = vld [vmem:[#allocation10 + $0x98] sm:$0xff]
        %v1330 = vld [vmem:[#allocation10 + $0xa0] sm:$0xff]
        %v1331 = vld [vmem:[#allocation10 + $0xa8] sm:$0xff]
        %v1332 = vld [vmem:[#allocation10 + $0xb0] sm:$0xff]
        %v1333 = vld [vmem:[#allocation10 + $0xb8] sm:$0xff]
        %v1334 = vld [vmem:[#allocation10 + $0xc0] sm:$0xff]
        %v1335 = vld [vmem:[#allocation10 + $0xc8] sm:$0xff]
        %v1336 = vld [vmem:[#allocation10 + $0xd0] sm:$0xff]
        %v1337 = vld [vmem:[#allocation10 + $0xd8] sm:$0xff]
        %v1338 = vld [vmem:[#allocation10 + $0xe0] sm:$0xff]
        %v1339 = vld [vmem:[#allocation10 + $0xe8] sm:$0xff]
        %v1340 = vld [vmem:[#allocation10 + $0xf0] sm:$0xff]
        %v1341 = vld [vmem:[#allocation10 + $0xf8] sm:$0xff]
        %v1342 = vld [vmem:[#allocation10 + $0x100] sm:$0xff]
        %v1343 = vld [vmem:[#allocation10 + $0x108] sm:$0xff]
        %v1344 = vld [vmem:[#allocation10 + $0x110] sm:$0xff]
        %v1345 = vld [vmem:[#allocation10 + $0x118] sm:$0xff]
        %v1346 = vld [vmem:[#allocation10 + $0x120] sm:$0xff]
        %v1347 = vld [vmem:[#allocation10 + $0x128] sm:$0xff]
        %v1348 = vld [vmem:[#allocation10 + $0x130] sm:$0xff]
        %v1349 = vld [vmem:[#allocation10 + $0x138] sm:$0xff]
        %v1350 = vld [vmem:[#allocation10 + $0x140] sm:$0xff]
        %v1351 = vld [vmem:[#allocation10 + $0x148] sm:$0xff]
        %v1352 = vld [vmem:[#allocation10 + $0x150] sm:$0xff]
        %v1353 = vld [vmem:[#allocation10 + $0x158] sm:$0xff]
        %v1354 = vld [vmem:[#allocation10 + $0x160] sm:$0xff]
        %v1355 = vld [vmem:[#allocation10 + $0x168] sm:$0xff]
        %v1356 = vld [vmem:[#allocation10 + $0x170] sm:$0xff]
        %v1357 = vld [vmem:[#allocation10 + $0x178] sm:$0xff]
        %v1358 = vld [vmem:[#allocation10 + $0x180] sm:$0xff]
        %v1359 = vld [vmem:[#allocation10 + $0x188] sm:$0xff]
        %v1360 = vld [vmem:[#allocation10 + $0x190] sm:$0xff]
        %v1361 = vld [vmem:[#allocation10 + $0x198] sm:$0xff]
        %v1362 = vld [vmem:[#allocation10 + $0x1a0] sm:$0xff]
        %v1363 = vld [vmem:[#allocation10 + $0x1a8] sm:$0xff]
        %v1364 = vld [vmem:[#allocation10 + $0x1b0] sm:$0xff]
        %v1365 = vld [vmem:[#allocation10 + $0x1b8] sm:$0xff]
        %v1366 = vld [vmem:[#allocation10 + $0x1c0] sm:$0xff]
        %v1367 = vld [vmem:[#allocation10 + $0x1c8] sm:$0xff]
        %v1368 = vld [vmem:[#allocation10 + $0x1d0] sm:$0xff]
        %v1369 = vld [vmem:[#allocation10 + $0x1d8] sm:$0xff]
        %v1370 = vld [vmem:[#allocation10 + $0x1e0] sm:$0xff]
        %v1371 = vld [vmem:[#allocation10 + $0x1e8] sm:$0xff]
        %v1372 = vld [vmem:[#allocation10 + $0x1f0] sm:$0xff]
        %v1373 = vld [vmem:[#allocation10 + $0x1f8] sm:$0xff]
        %v1374 = vld [vmem:[#allocation11] sm:$0xff]
        %v1376 = vlaneseq
        %v1377 = vshrl.u32 %v1376, 7
        %v1378 = vsub.s32 0, %v1377
        %v1379 = vrot.slane %v1374, %v1378
        %v1380 = vlaneseq
        %v1381 = vshrl.u32 %v1380, 7
        %v1382 = vsub.s32 1, %v1381
        %v1383 = vrot.slane %v1374, %v1382
        %v1384 = vlaneseq
        %v1385 = vshrl.u32 %v1384, 7
        %v1386 = vsub.s32 2, %v1385
        %v1387 = vrot.slane %v1374, %v1386
        %v1388 = vlaneseq
        %v1389 = vshrl.u32 %v1388, 7
        %v1390 = vsub.s32 3, %v1389
        %v1391 = vrot.slane %v1374, %v1390
        %v1392 = vlaneseq
        %v1393 = vshrl.u32 %v1392, 7
        %v1394 = vsub.s32 4, %v1393
        %v1395 = vrot.slane %v1374, %v1394
        %v1396 = vlaneseq
        %v1397 = vshrl.u32 %v1396, 7
        %v1398 = vsub.s32 5, %v1397
        %v1399 = vrot.slane %v1374, %v1398
        %v1400 = vlaneseq
        %v1401 = vshrl.u32 %v1400, 7
        %v1402 = vsub.s32 6, %v1401
        %v1403 = vrot.slane %v1374, %v1402
        %v1404 = vlaneseq
        %v1405 = vshrl.u32 %v1404, 7
        %v1406 = vsub.s32 7, %v1405
        %v1407 = vrot.slane %v1374, %v1406
        %v1480 = vunpack.c.l.b16 %v1310
        %v1481 = vunpack.c.h.b16 %v1310
        %v1482 = vunpack.c.l.b16 %v1311
        %v1483 = vunpack.c.h.b16 %v1311
        %v1484 = vunpack.c.l.b16 %v1312
        %v1485 = vunpack.c.h.b16 %v1312
        %v1486 = vunpack.c.l.b16 %v1313
        %v1487 = vunpack.c.h.b16 %v1313
        %v1488 = vunpack.c.l.b16 %v1314
        %v1489 = vunpack.c.h.b16 %v1314
        %v1490 = vunpack.c.l.b16 %v1315
        %v1491 = vunpack.c.h.b16 %v1315
        %v1492 = vunpack.c.l.b16 %v1316
        %v1493 = vunpack.c.h.b16 %v1316
        %v1494 = vunpack.c.l.b16 %v1317
        %v1495 = vunpack.c.h.b16 %v1317
        %v1496 = vunpack.c.l.b16 %v1318
        %v1497 = vunpack.c.h.b16 %v1318
        %v1498 = vunpack.c.l.b16 %v1319
        %v1499 = vunpack.c.h.b16 %v1319
        %v1500 = vunpack.c.l.b16 %v1320
        %v1501 = vunpack.c.h.b16 %v1320
        %v1502 = vunpack.c.l.b16 %v1321
        %v1503 = vunpack.c.h.b16 %v1321
        %v1504 = vunpack.c.l.b16 %v1322
        %v1505 = vunpack.c.h.b16 %v1322
        %v1506 = vunpack.c.l.b16 %v1323
        %v1507 = vunpack.c.h.b16 %v1323
        %v1508 = vunpack.c.l.b16 %v1324
        %v1509 = vunpack.c.h.b16 %v1324
        %v1510 = vunpack.c.l.b16 %v1325
        %v1511 = vunpack.c.h.b16 %v1325
        %v1512 = vunpack.c.l.b16 %v1326
        %v1513 = vunpack.c.h.b16 %v1326
        %v1514 = vunpack.c.l.b16 %v1327
        %v1515 = vunpack.c.h.b16 %v1327
        %v1516 = vunpack.c.l.b16 %v1328
        %v1517 = vunpack.c.h.b16 %v1328
        %v1518 = vunpack.c.l.b16 %v1329
        %v1519 = vunpack.c.h.b16 %v1329
        %v1520 = vunpack.c.l.b16 %v1330
        %v1521 = vunpack.c.h.b16 %v1330
        %v1522 = vunpack.c.l.b16 %v1331
        %v1523 = vunpack.c.h.b16 %v1331
        %v1524 = vunpack.c.l.b16 %v1332
        %v1525 = vunpack.c.h.b16 %v1332
        %v1526 = vunpack.c.l.b16 %v1333
        %v1527 = vunpack.c.h.b16 %v1333
        %v1528 = vunpack.c.l.b16 %v1334
        %v1529 = vunpack.c.h.b16 %v1334
        %v1530 = vunpack.c.l.b16 %v1335
        %v1531 = vunpack.c.h.b16 %v1335
        %v1532 = vunpack.c.l.b16 %v1336
        %v1533 = vunpack.c.h.b16 %v1336
        %v1534 = vunpack.c.l.b16 %v1337
        %v1535 = vunpack.c.h.b16 %v1337
        %v1536 = vunpack.c.l.b16 %v1338
        %v1537 = vunpack.c.h.b16 %v1338
        %v1538 = vunpack.c.l.b16 %v1339
        %v1539 = vunpack.c.h.b16 %v1339
        %v1540 = vunpack.c.l.b16 %v1340
        %v1541 = vunpack.c.h.b16 %v1340
        %v1542 = vunpack.c.l.b16 %v1341
        %v1543 = vunpack.c.h.b16 %v1341
        %v1544 = vunpack.c.l.b16 %v1342
        %v1545 = vunpack.c.h.b16 %v1342
        %v1546 = vunpack.c.l.b16 %v1343
        %v1547 = vunpack.c.h.b16 %v1343
        %v1548 = vunpack.c.l.b16 %v1344
        %v1549 = vunpack.c.h.b16 %v1344
        %v1550 = vunpack.c.l.b16 %v1345
        %v1551 = vunpack.c.h.b16 %v1345
        %v1552 = vunpack.c.l.b16 %v1346
        %v1553 = vunpack.c.h.b16 %v1346
        %v1554 = vunpack.c.l.b16 %v1347
        %v1555 = vunpack.c.h.b16 %v1347
        %v1556 = vunpack.c.l.b16 %v1348
        %v1557 = vunpack.c.h.b16 %v1348
        %v1558 = vunpack.c.l.b16 %v1349
        %v1559 = vunpack.c.h.b16 %v1349
        %v1560 = vunpack.c.l.b16 %v1350
        %v1561 = vunpack.c.h.b16 %v1350
        %v1562 = vunpack.c.l.b16 %v1351
        %v1563 = vunpack.c.h.b16 %v1351
        %v1564 = vunpack.c.l.b16 %v1352
        %v1565 = vunpack.c.h.b16 %v1352
        %v1566 = vunpack.c.l.b16 %v1353
        %v1567 = vunpack.c.h.b16 %v1353
        %v1568 = vunpack.c.l.b16 %v1354
        %v1569 = vunpack.c.h.b16 %v1354
        %v1570 = vunpack.c.l.b16 %v1355
        %v1571 = vunpack.c.h.b16 %v1355
        %v1572 = vunpack.c.l.b16 %v1356
        %v1573 = vunpack.c.h.b16 %v1356
        %v1574 = vunpack.c.l.b16 %v1357
        %v1575 = vunpack.c.h.b16 %v1357
        %v1576 = vunpack.c.l.b16 %v1358
        %v1577 = vunpack.c.h.b16 %v1358
        %v1578 = vunpack.c.l.b16 %v1359
        %v1579 = vunpack.c.h.b16 %v1359
        %v1580 = vunpack.c.l.b16 %v1360
        %v1581 = vunpack.c.h.b16 %v1360
        %v1582 = vunpack.c.l.b16 %v1361
        %v1583 = vunpack.c.h.b16 %v1361
        %v1584 = vunpack.c.l.b16 %v1362
        %v1585 = vunpack.c.h.b16 %v1362
        %v1586 = vunpack.c.l.b16 %v1363
        %v1587 = vunpack.c.h.b16 %v1363
        %v1588 = vunpack.c.l.b16 %v1364
        %v1589 = vunpack.c.h.b16 %v1364
        %v1590 = vunpack.c.l.b16 %v1365
        %v1591 = vunpack.c.h.b16 %v1365
        %v1592 = vunpack.c.l.b16 %v1366
        %v1593 = vunpack.c.h.b16 %v1366
        %v1594 = vunpack.c.l.b16 %v1367
        %v1595 = vunpack.c.h.b16 %v1367
        %v1596 = vunpack.c.l.b16 %v1368
        %v1597 = vunpack.c.h.b16 %v1368
        %v1598 = vunpack.c.l.b16 %v1369
        %v1599 = vunpack.c.h.b16 %v1369
        %v1600 = vunpack.c.l.b16 %v1370
        %v1601 = vunpack.c.h.b16 %v1370
        %v1602 = vunpack.c.l.b16 %v1371
        %v1603 = vunpack.c.h.b16 %v1371
        %v1604 = vunpack.c.l.b16 %v1372
        %v1605 = vunpack.c.h.b16 %v1372
        %v1606 = vunpack.c.l.b16 %v1373
        %v1607 = vunpack.c.h.b16 %v1373
        %v1608 = vpack.c.b16 %v1488, %v1480
        %v1609 = vpack.c.b16 %v1489, %v1481
        %v1610 = vpack.c.b16 %v1490, %v1482
        %v1611 = vpack.c.b16 %v1491, %v1483
        %v1612 = vpack.c.b16 %v1492, %v1484
        %v1613 = vpack.c.b16 %v1493, %v1485
        %v1614 = vpack.c.b16 %v1494, %v1486
        %v1615 = vpack.c.b16 %v1495, %v1487
        %v1616 = vpack.c.b16 %v1504, %v1496
        %v1617 = vpack.c.b16 %v1505, %v1497
        %v1618 = vpack.c.b16 %v1506, %v1498
        %v1619 = vpack.c.b16 %v1507, %v1499
        %v1620 = vpack.c.b16 %v1508, %v1500
        %v1621 = vpack.c.b16 %v1509, %v1501
        %v1622 = vpack.c.b16 %v1510, %v1502
        %v1623 = vpack.c.b16 %v1511, %v1503
        %v1624 = vpack.c.b16 %v1520, %v1512
        %v1625 = vpack.c.b16 %v1521, %v1513
        %v1626 = vpack.c.b16 %v1522, %v1514
        %v1627 = vpack.c.b16 %v1523, %v1515
        %v1628 = vpack.c.b16 %v1524, %v1516
        %v1629 = vpack.c.b16 %v1525, %v1517
        %v1630 = vpack.c.b16 %v1526, %v1518
        %v1631 = vpack.c.b16 %v1527, %v1519
        %v1632 = vpack.c.b16 %v1536, %v1528
        %v1633 = vpack.c.b16 %v1537, %v1529
        %v1634 = vpack.c.b16 %v1538, %v1530
        %v1635 = vpack.c.b16 %v1539, %v1531
        %v1636 = vpack.c.b16 %v1540, %v1532
        %v1637 = vpack.c.b16 %v1541, %v1533
        %v1638 = vpack.c.b16 %v1542, %v1534
        %v1639 = vpack.c.b16 %v1543, %v1535
        %v1640 = vpack.c.b16 %v1552, %v1544
        %v1641 = vpack.c.b16 %v1553, %v1545
        %v1642 = vpack.c.b16 %v1554, %v1546
        %v1643 = vpack.c.b16 %v1555, %v1547
        %v1644 = vpack.c.b16 %v1556, %v1548
        %v1645 = vpack.c.b16 %v1557, %v1549
        %v1646 = vpack.c.b16 %v1558, %v1550
        %v1647 = vpack.c.b16 %v1559, %v1551
        %v1648 = vpack.c.b16 %v1568, %v1560
        %v1649 = vpack.c.b16 %v1569, %v1561
        %v1650 = vpack.c.b16 %v1570, %v1562
        %v1651 = vpack.c.b16 %v1571, %v1563
        %v1652 = vpack.c.b16 %v1572, %v1564
        %v1653 = vpack.c.b16 %v1573, %v1565
        %v1654 = vpack.c.b16 %v1574, %v1566
        %v1655 = vpack.c.b16 %v1575, %v1567
        %v1656 = vpack.c.b16 %v1584, %v1576
        %v1657 = vpack.c.b16 %v1585, %v1577
        %v1658 = vpack.c.b16 %v1586, %v1578
        %v1659 = vpack.c.b16 %v1587, %v1579
        %v1660 = vpack.c.b16 %v1588, %v1580
        %v1661 = vpack.c.b16 %v1589, %v1581
        %v1662 = vpack.c.b16 %v1590, %v1582
        %v1663 = vpack.c.b16 %v1591, %v1583
        %v1664 = vpack.c.b16 %v1600, %v1592
        %v1665 = vpack.c.b16 %v1601, %v1593
        %v1666 = vpack.c.b16 %v1602, %v1594
        %v1667 = vpack.c.b16 %v1603, %v1595
        %v1668 = vpack.c.b16 %v1604, %v1596
        %v1669 = vpack.c.b16 %v1605, %v1597
        %v1670 = vpack.c.b16 %v1606, %v1598
        %v1671 = vpack.c.b16 %v1607, %v1599
        %1736 = vmatprep.subr.bf16.mxu0 %v1609
        %1737 = vmatpush1.bf16.msra.mxu0 %v1608
        %1738 = vmatprep.subr.bf16.mxu0 %v1617
        %1739 = vmatpush1.bf16.msra.mxu0 %v1616
        %1740 = vmatprep.subr.bf16.mxu0 %v1625
        %1741 = vmatpush1.bf16.msra.mxu0 %v1624
        %1742 = vmatprep.subr.bf16.mxu0 %v1633
        %1743 = vmatpush1.bf16.msra.mxu0 %v1632
        %1744 = vmatprep.subr.bf16.mxu0 %v1641
        %1745 = vmatpush1.bf16.msra.mxu0 %v1640
        %1746 = vmatprep.subr.bf16.mxu0 %v1649
        %1747 = vmatpush1.bf16.msra.mxu0 %v1648
        %1748 = vmatprep.subr.bf16.mxu0 %v1657
        %1749 = vmatpush1.bf16.msra.mxu0 %v1656
        %1750 = vmatprep.subr.bf16.mxu0 %v1665
        %1751 = vmatpush1.bf16.msra.mxu0 %v1664
        %1752 = vmatprep.subr.bf16.mxu0 0
        %1753 = vmatpush1.bf16.msra.mxu0 0
        %1754 = vmatprep.subr.bf16.mxu0 0
        %1755 = vmatpush1.bf16.msra.mxu0 0
        %1756 = vmatprep.subr.bf16.mxu0 0
        %1757 = vmatpush1.bf16.msra.mxu0 0
        %1758 = vmatprep.subr.bf16.mxu0 0
        %1759 = vmatpush1.bf16.msra.mxu0 0
        %1760 = vmatprep.subr.bf16.mxu0 0
        %1761 = vmatpush1.bf16.msra.mxu0 0
        %1762 = vmatprep.subr.bf16.mxu0 0
        %1763 = vmatpush1.bf16.msra.mxu0 0
        %1764 = vmatprep.subr.bf16.mxu0 0
        %1765 = vmatpush1.bf16.msra.mxu0 0
        %1766 = vmatprep.subr.bf16.mxu0 0
        %1767 = vmatpush1.bf16.msra.mxu0 0
        %1768 = vmatprep.mubr.bf16.mxu0 0
        %1769 = vmatmul.mubr.bf16.gmra.mrb[0].mxu0 %v1302
        %v1770 = vpop.f32.mrb[0].mxu0
        %v1771 = vadd.f32 %v1379, %v1770
        %v1772 = vpop.f32.mrb[0].mxu0
        %v1773 = vadd.f32 %v1383, %v1772
        %v1774 = vpop.f32.mrb[0].mxu0
        %v1775 = vadd.f32 %v1379, %v1774
        %v1776 = vpop.f32.mrb[0].mxu0
        %v1777 = vadd.f32 %v1383, %v1776
        %1778 = vmatprep.mubr.bf16.mxu0 0
        %1779 = vmatmul.mubr.bf16.gmra.mrb[0].mxu0 %v1303
        %v1780 = vpop.f32.mrb[0].mxu0
        %v1781 = vadd.f32 %v1379, %v1780
        %v1782 = vpop.f32.mrb[0].mxu0
        %v1783 = vadd.f32 %v1383, %v1782
        %v1784 = vpop.f32.mrb[0].mxu0
        %v1785 = vadd.f32 %v1379, %v1784
        %v1786 = vpop.f32.mrb[0].mxu0
        %v1787 = vadd.f32 %v1383, %v1786
        %1788 = vmatprep.mubr.bf16.mxu0 0
        %1789 = vmatmul.mubr.bf16.gmra.mrb[0].mxu0 %v1304
        %v1790 = vpop.f32.mrb[0].mxu0
        %v1791 = vadd.f32 %v1379, %v1790
        %v1792 = vpop.f32.mrb[0].mxu0
        %v1793 = vadd.f32 %v1383, %v1792
        %v1794 = vpop.f32.mrb[0].mxu0
        %v1795 = vadd.f32 %v1379, %v1794
        %v1796 = vpop.f32.mrb[0].mxu0
        %v1797 = vadd.f32 %v1383, %v1796
        %1798 = vmatprep.mubr.bf16.mxu0 0
        %1799 = vmatmul.mubr.bf16.gmra.mrb[0].mxu0 %v1305
        %v1800 = vpop.f32.mrb[0].mxu0
        %v1801 = vadd.f32 %v1379, %v1800
        %v1802 = vpop.f32.mrb[0].mxu0
        %v1803 = vadd.f32 %v1383, %v1802
        %v1804 = vpop.f32.mrb[0].mxu0
        %v1805 = vadd.f32 %v1379, %v1804
        %v1806 = vpop.f32.mrb[0].mxu0
        %v1807 = vadd.f32 %v1383, %v1806
        %1808 = vmatprep.mubr.bf16.mxu0 0
        %1809 = vmatmul.mubr.bf16.gmra.mrb[0].mxu0 %v1306
        %v1810 = vpop.f32.mrb[0].mxu0
        %v1811 = vadd.f32 %v1379, %v1810
        %v1812 = vpop.f32.mrb[0].mxu0
        %v1813 = vadd.f32 %v1383, %v1812
        %v1814 = vpop.f32.mrb[0].mxu0
        %v1815 = vadd.f32 %v1379, %v1814
        %v1816 = vpop.f32.mrb[0].mxu0
        %v1817 = vadd.f32 %v1383, %v1816
        %1818 = vmatprep.mubr.bf16.mxu0 0
        %1819 = vmatmul.mubr.bf16.gmra.mrb[0].mxu0 %v1307
        %v1820 = vpop.f32.mrb[0].mxu0
        %v1821 = vadd.f32 %v1379, %v1820
        %v1822 = vpop.f32.mrb[0].mxu0
        %v1823 = vadd.f32 %v1383, %v1822
        %v1824 = vpop.f32.mrb[0].mxu0
        %v1825 = vadd.f32 %v1379, %v1824
        %v1826 = vpop.f32.mrb[0].mxu0
        %v1827 = vadd.f32 %v1383, %v1826
        %1828 = vmatprep.mubr.bf16.mxu0 0
        %1829 = vmatmul.mubr.bf16.gmra.mrb[0].mxu0 %v1308
        %v1830 = vpop.f32.mrb[0].mxu0
        %v1831 = vadd.f32 %v1379, %v1830
        %v1832 = vpop.f32.mrb[0].mxu0
        %v1833 = vadd.f32 %v1383, %v1832
        %v1834 = vpop.f32.mrb[0].mxu0
        %v1835 = vadd.f32 %v1379, %v1834
        %v1836 = vpop.f32.mrb[0].mxu0
        %v1837 = vadd.f32 %v1383, %v1836
        %1838 = vmatprep.mubr.bf16.mxu0 0
        %1839 = vmatmul.mubr.bf16.gmra.mrb[0].mxu0 %v1309
        %v1840 = vpop.f32.mrb[0].mxu0
        %v1841 = vadd.f32 %v1379, %v1840
        %v1842 = vpop.f32.mrb[0].mxu0
        %v1843 = vadd.f32 %v1383, %v1842
        %v1844 = vpop.f32.mrb[0].mxu0
        %v1845 = vadd.f32 %v1379, %v1844
        %v1846 = vpop.f32.mrb[0].mxu0
        %v1847 = vadd.f32 %v1383, %v1846
        %1848 = vdwg.mxu0
        %1849 = vmatprep.subr.bf16.mxu0 %v1611
        %1850 = vmatpush1.bf16.msra.mxu0 %v1610
        %1851 = vmatprep.subr.bf16.mxu0 %v1619
        %1852 = vmatpush1.bf16.msra.mxu0 %v1618
        %1853 = vmatprep.subr.bf16.mxu0 %v1627
        %1854 = vmatpush1.bf16.msra.mxu0 %v1626
        %1855 = vmatprep.subr.bf16.mxu0 %v1635
        %1856 = vmatpush1.bf16.msra.mxu0 %v1634
        %1857 = vmatprep.subr.bf16.mxu0 %v1643
        %1858 = vmatpush1.bf16.msra.mxu0 %v1642
        %1859 = vmatprep.subr.bf16.mxu0 %v1651
        %1860 = vmatpush1.bf16.msra.mxu0 %v1650
        %1861 = vmatprep.subr.bf16.mxu0 %v1659
        %1862 = vmatpush1.bf16.msra.mxu0 %v1658
        %1863 = vmatprep.subr.bf16.mxu0 %v1667
        %1864 = vmatpush1.bf16.msra.mxu0 %v1666
        %1865 = vmatprep.subr.bf16.mxu0 0
        %1866 = vmatpush1.bf16.msra.mxu0 0
        %1867 = vmatprep.subr.bf16.mxu0 0
        %1868 = vmatpush1.bf16.msra.mxu0 0
        %1869 = vmatprep.subr.bf16.mxu0 0
        %1870 = vmatpush1.bf16.msra.mxu0 0
        %1871 = vmatprep.subr.bf16.mxu0 0
        %1872 = vmatpush1.bf16.msra.mxu0 0
        %1873 = vmatprep.subr.bf16.mxu0 0
        %1874 = vmatpush1.bf16.msra.mxu0 0
        %1875 = vmatprep.subr.bf16.mxu0 0
        %1876 = vmatpush1.bf16.msra.mxu0 0
        %1877 = vmatprep.subr.bf16.mxu0 0
        %1878 = vmatpush1.bf16.msra.mxu0 0
        %1879 = vmatprep.subr.bf16.mxu0 0
        %1880 = vmatpush1.bf16.msra.mxu0 0
        %1881 = vmatprep.mubr.bf16.mxu0 0
        %1882 = vmatmul.mubr.bf16.gmra.mrb[0].mxu0 %v1302
        %v1883 = vpop.f32.mrb[0].mxu0
        %v1884 = vadd.f32 %v1387, %v1883
        %v1885 = vpop.f32.mrb[0].mxu0
        %v1886 = vadd.f32 %v1391, %v1885
        %v1887 = vpop.f32.mrb[0].mxu0
        %v1888 = vadd.f32 %v1387, %v1887
        %v1889 = vpop.f32.mrb[0].mxu0
        %v1890 = vadd.f32 %v1391, %v1889
        %1891 = vmatprep.mubr.bf16.mxu0 0
        %1892 = vmatmul.mubr.bf16.gmra.mrb[0].mxu0 %v1303
        %v1893 = vpop.f32.mrb[0].mxu0
        %v1894 = vadd.f32 %v1387, %v1893
        %v1895 = vpop.f32.mrb[0].mxu0
        %v1896 = vadd.f32 %v1391, %v1895
        %v1897 = vpop.f32.mrb[0].mxu0
        %v1898 = vadd.f32 %v1387, %v1897
        %v1899 = vpop.f32.mrb[0].mxu0
        %v1900 = vadd.f32 %v1391, %v1899
        %1901 = vmatprep.mubr.bf16.mxu0 0
        %1902 = vmatmul.mubr.bf16.gmra.mrb[0].mxu0 %v1304
        %v1903 = vpop.f32.mrb[0].mxu0
        %v1904 = vadd.f32 %v1387, %v1903
        %v1905 = vpop.f32.mrb[0].mxu0
        %v1906 = vadd.f32 %v1391, %v1905
        %v1907 = vpop.f32.mrb[0].mxu0
        %v1908 = vadd.f32 %v1387, %v1907
        %v1909 = vpop.f32.mrb[0].mxu0
        %v1910 = vadd.f32 %v1391, %v1909
        %1911 = vmatprep.mubr.bf16.mxu0 0
        %1912 = vmatmul.mubr.bf16.gmra.mrb[0].mxu0 %v1305
        %v1913 = vpop.f32.mrb[0].mxu0
        %v1914 = vadd.f32 %v1387, %v1913
        %v1915 = vpop.f32.mrb[0].mxu0
        %v1916 = vadd.f32 %v1391, %v1915
        %v1917 = vpop.f32.mrb[0].mxu0
        %v1918 = vadd.f32 %v1387, %v1917
        %v1919 = vpop.f32.mrb[0].mxu0
        %v1920 = vadd.f32 %v1391, %v1919
        %1921 = vmatprep.mubr.bf16.mxu0 0
        %1922 = vmatmul.mubr.bf16.gmra.mrb[0].mxu0 %v1306
        %v1923 = vpop.f32.mrb[0].mxu0
        %v1924 = vadd.f32 %v1387, %v1923
        %v1925 = vpop.f32.mrb[0].mxu0
        %v1926 = vadd.f32 %v1391, %v1925
        %v1927 = vpop.f32.mrb[0].mxu0
        %v1928 = vadd.f32 %v1387, %v1927
        %v1929 = vpop.f32.mrb[0].mxu0
        %v1930 = vadd.f32 %v1391, %v1929
        %1931 = vmatprep.mubr.bf16.mxu0 0
        %1932 = vmatmul.mubr.bf16.gmra.mrb[0].mxu0 %v1307
        %v1933 = vpop.f32.mrb[0].mxu0
        %v1934 = vadd.f32 %v1387, %v1933
        %v1935 = vpop.f32.mrb[0].mxu0
        %v1936 = vadd.f32 %v1391, %v1935
        %v1937 = vpop.f32.mrb[0].mxu0
        %v1938 = vadd.f32 %v1387, %v1937
        %v1939 = vpop.f32.mrb[0].mxu0
        %v1940 = vadd.f32 %v1391, %v1939
        %1941 = vmatprep.mubr.bf16.mxu0 0
        %1942 = vmatmul.mubr.bf16.gmra.mrb[0].mxu0 %v1308
        %v1943 = vpop.f32.mrb[0].mxu0
        %v1944 = vadd.f32 %v1387, %v1943
        %v1945 = vpop.f32.mrb[0].mxu0
        %v1946 = vadd.f32 %v1391, %v1945
        %v1947 = vpop.f32.mrb[0].mxu0
        %v1948 = vadd.f32 %v1387, %v1947
        %v1949 = vpop.f32.mrb[0].mxu0
        %v1950 = vadd.f32 %v1391, %v1949
        %1951 = vmatprep.mubr.bf16.mxu0 0
        %1952 = vmatmul.mubr.bf16.gmra.mrb[0].mxu0 %v1309
        %v1953 = vpop.f32.mrb[0].mxu0
        %v1954 = vadd.f32 %v1387, %v1953
        %v1955 = vpop.f32.mrb[0].mxu0
        %v1956 = vadd.f32 %v1391, %v1955
        %v1957 = vpop.f32.mrb[0].mxu0
        %v1958 = vadd.f32 %v1387, %v1957
        %v1959 = vpop.f32.mrb[0].mxu0
        %v1960 = vadd.f32 %v1391, %v1959
        %1961 = vdwg.mxu0
        %1962 = vmatprep.subr.bf16.mxu0 %v1613
        %1963 = vmatpush1.bf16.msra.mxu0 %v1612
        %1964 = vmatprep.subr.bf16.mxu0 %v1621
        %1965 = vmatpush1.bf16.msra.mxu0 %v1620
        %1966 = vmatprep.subr.bf16.mxu0 %v1629
        %1967 = vmatpush1.bf16.msra.mxu0 %v1628
        %1968 = vmatprep.subr.bf16.mxu0 %v1637
        %1969 = vmatpush1.bf16.msra.mxu0 %v1636
        %1970 = vmatprep.subr.bf16.mxu0 %v1645
        %1971 = vmatpush1.bf16.msra.mxu0 %v1644
        %1972 = vmatprep.subr.bf16.mxu0 %v1653
        %1973 = vmatpush1.bf16.msra.mxu0 %v1652
        %1974 = vmatprep.subr.bf16.mxu0 %v1661
        %1975 = vmatpush1.bf16.msra.mxu0 %v1660
        %1976 = vmatprep.subr.bf16.mxu0 %v1669
        %1977 = vmatpush1.bf16.msra.mxu0 %v1668
        %1978 = vmatprep.subr.bf16.mxu0 0
        %1979 = vmatpush1.bf16.msra.mxu0 0
        %1980 = vmatprep.subr.bf16.mxu0 0
        %1981 = vmatpush1.bf16.msra.mxu0 0
        %1982 = vmatprep.subr.bf16.mxu0 0
        %1983 = vmatpush1.bf16.msra.mxu0 0
        %1984 = vmatprep.subr.bf16.mxu0 0
        %1985 = vmatpush1.bf16.msra.mxu0 0
        %1986 = vmatprep.subr.bf16.mxu0 0
        %1987 = vmatpush1.bf16.msra.mxu0 0
        %1988 = vmatprep.subr.bf16.mxu0 0
        %1989 = vmatpush1.bf16.msra.mxu0 0
        %1990 = vmatprep.subr.bf16.mxu0 0
        %1991 = vmatpush1.bf16.msra.mxu0 0
        %1992 = vmatprep.subr.bf16.mxu0 0
        %1993 = vmatpush1.bf16.msra.mxu0 0
        %1994 = vmatprep.mubr.bf16.mxu0 0
        %1995 = vmatmul.mubr.bf16.gmra.mrb[0].mxu0 %v1302
        %v1996 = vpop.f32.mrb[0].mxu0
        %v1997 = vadd.f32 %v1395, %v1996
        %v1998 = vpop.f32.mrb[0].mxu0
        %v1999 = vadd.f32 %v1399, %v1998
        %v2000 = vpop.f32.mrb[0].mxu0
        %v2001 = vadd.f32 %v1395, %v2000
        %v2002 = vpop.f32.mrb[0].mxu0
        %v2003 = vadd.f32 %v1399, %v2002
        %2004 = vmatprep.mubr.bf16.mxu0 0
        %2005 = vmatmul.mubr.bf16.gmra.mrb[0].mxu0 %v1303
        %v2006 = vpop.f32.mrb[0].mxu0
        %v2007 = vadd.f32 %v1395, %v2006
        %v2008 = vpop.f32.mrb[0].mxu0
        %v2009 = vadd.f32 %v1399, %v2008
        %v2010 = vpop.f32.mrb[0].mxu0
        %v2011 = vadd.f32 %v1395, %v2010
        %v2012 = vpop.f32.mrb[0].mxu0
        %v2013 = vadd.f32 %v1399, %v2012
        %2014 = vmatprep.mubr.bf16.mxu0 0
        %2015 = vmatmul.mubr.bf16.gmra.mrb[0].mxu0 %v1304
        %v2016 = vpop.f32.mrb[0].mxu0
        %v2017 = vadd.f32 %v1395, %v2016
        %v2018 = vpop.f32.mrb[0].mxu0
        %v2019 = vadd.f32 %v1399, %v2018
        %v2020 = vpop.f32.mrb[0].mxu0
        %v2021 = vadd.f32 %v1395, %v2020
        %v2022 = vpop.f32.mrb[0].mxu0
        %v2023 = vadd.f32 %v1399, %v2022
        %2024 = vmatprep.mubr.bf16.mxu0 0
        %2025 = vmatmul.mubr.bf16.gmra.mrb[0].mxu0 %v1305
        %v2026 = vpop.f32.mrb[0].mxu0
        %v2027 = vadd.f32 %v1395, %v2026
        %v2028 = vpop.f32.mrb[0].mxu0
        %v2029 = vadd.f32 %v1399, %v2028
        %v2030 = vpop.f32.mrb[0].mxu0
        %v2031 = vadd.f32 %v1395, %v2030
        %v2032 = vpop.f32.mrb[0].mxu0
        %v2033 = vadd.f32 %v1399, %v2032
        %2034 = vmatprep.mubr.bf16.mxu0 0
        %2035 = vmatmul.mubr.bf16.gmra.mrb[0].mxu0 %v1306
        %v2036 = vpop.f32.mrb[0].mxu0
        %v2037 = vadd.f32 %v1395, %v2036
        %v2038 = vpop.f32.mrb[0].mxu0
        %v2039 = vadd.f32 %v1399, %v2038
        %v2040 = vpop.f32.mrb[0].mxu0
        %v2041 = vadd.f32 %v1395, %v2040
        %v2042 = vpop.f32.mrb[0].mxu0
        %v2043 = vadd.f32 %v1399, %v2042
        %2044 = vmatprep.mubr.bf16.mxu0 0
        %2045 = vmatmul.mubr.bf16.gmra.mrb[0].mxu0 %v1307
        %v2046 = vpop.f32.mrb[0].mxu0
        %v2047 = vadd.f32 %v1395, %v2046
        %v2048 = vpop.f32.mrb[0].mxu0
        %v2049 = vadd.f32 %v1399, %v2048
        %v2050 = vpop.f32.mrb[0].mxu0
        %v2051 = vadd.f32 %v1395, %v2050
        %v2052 = vpop.f32.mrb[0].mxu0
        %v2053 = vadd.f32 %v1399, %v2052
        %2054 = vmatprep.mubr.bf16.mxu0 0
        %2055 = vmatmul.mubr.bf16.gmra.mrb[0].mxu0 %v1308
        %v2056 = vpop.f32.mrb[0].mxu0
        %v2057 = vadd.f32 %v1395, %v2056
        %v2058 = vpop.f32.mrb[0].mxu0
        %v2059 = vadd.f32 %v1399, %v2058
        %v2060 = vpop.f32.mrb[0].mxu0
        %v2061 = vadd.f32 %v1395, %v2060
        %v2062 = vpop.f32.mrb[0].mxu0
        %v2063 = vadd.f32 %v1399, %v2062
        %2064 = vmatprep.mubr.bf16.mxu0 0
        %2065 = vmatmul.mubr.bf16.gmra.mrb[0].mxu0 %v1309
        %v2066 = vpop.f32.mrb[0].mxu0
        %v2067 = vadd.f32 %v1395, %v2066
        %v2068 = vpop.f32.mrb[0].mxu0
        %v2069 = vadd.f32 %v1399, %v2068
        %v2070 = vpop.f32.mrb[0].mxu0
        %v2071 = vadd.f32 %v1395, %v2070
        %v2072 = vpop.f32.mrb[0].mxu0
        %v2073 = vadd.f32 %v1399, %v2072
        %2074 = vdwg.mxu0
        %2075 = vmatprep.subr.bf16.mxu0 %v1615
        %2076 = vmatpush1.bf16.msra.mxu0 %v1614
        %2077 = vmatprep.subr.bf16.mxu0 %v1623
        %2078 = vmatpush1.bf16.msra.mxu0 %v1622
        %2079 = vmatprep.subr.bf16.mxu0 %v1631
        %2080 = vmatpush1.bf16.msra.mxu0 %v1630
        %2081 = vmatprep.subr.bf16.mxu0 %v1639
        %2082 = vmatpush1.bf16.msra.mxu0 %v1638
        %2083 = vmatprep.subr.bf16.mxu0 %v1647
        %2084 = vmatpush1.bf16.msra.mxu0 %v1646
        %2085 = vmatprep.subr.bf16.mxu0 %v1655
        %2086 = vmatpush1.bf16.msra.mxu0 %v1654
        %2087 = vmatprep.subr.bf16.mxu0 %v1663
        %2088 = vmatpush1.bf16.msra.mxu0 %v1662
        %2089 = vmatprep.subr.bf16.mxu0 %v1671
        %2090 = vmatpush1.bf16.msra.mxu0 %v1670
        %2091 = vmatprep.subr.bf16.mxu0 0
        %2092 = vmatpush1.bf16.msra.mxu0 0
        %2093 = vmatprep.subr.bf16.mxu0 0
        %2094 = vmatpush1.bf16.msra.mxu0 0
        %2095 = vmatprep.subr.bf16.mxu0 0
        %2096 = vmatpush1.bf16.msra.mxu0 0
        %2097 = vmatprep.subr.bf16.mxu0 0
        %2098 = vmatpush1.bf16.msra.mxu0 0
        %2099 = vmatprep.subr.bf16.mxu0 0
        %2100 = vmatpush1.bf16.msra.mxu0 0
        %2101 = vmatprep.subr.bf16.mxu0 0
        %2102 = vmatpush1.bf16.msra.mxu0 0
        %2103 = vmatprep.subr.bf16.mxu0 0
        %2104 = vmatpush1.bf16.msra.mxu0 0
        %2105 = vmatprep.subr.bf16.mxu0 0
        %2106 = vmatpush1.bf16.msra.mxu0 0
        %2107 = vmatprep.mubr.bf16.mxu0 0
        %2108 = vmatmul.mubr.bf16.gmra.mrb[0].mxu0 %v1302
        %v2109 = vpop.f32.mrb[0].mxu0
        %v2110 = vadd.f32 %v1403, %v2109
        %v2111 = vpop.f32.mrb[0].mxu0
        %v2112 = vadd.f32 %v1407, %v2111
        %v2113 = vpop.f32.mrb[0].mxu0
        %v2114 = vadd.f32 %v1403, %v2113
        %v2115 = vpop.f32.mrb[0].mxu0
        %v2116 = vadd.f32 %v1407, %v2115
        %2117 = vmatprep.mubr.bf16.mxu0 0
        %2118 = vmatmul.mubr.bf16.gmra.mrb[0].mxu0 %v1303
        %v2119 = vpop.f32.mrb[0].mxu0
        %v2120 = vadd.f32 %v1403, %v2119
        %v2121 = vpop.f32.mrb[0].mxu0
        %v2122 = vadd.f32 %v1407, %v2121
        %v2123 = vpop.f32.mrb[0].mxu0
        %v2124 = vadd.f32 %v1403, %v2123
        %v2125 = vpop.f32.mrb[0].mxu0
        %v2126 = vadd.f32 %v1407, %v2125
        %2127 = vmatprep.mubr.bf16.mxu0 0
        %2128 = vmatmul.mubr.bf16.gmra.mrb[0].mxu0 %v1304
        %v2129 = vpop.f32.mrb[0].mxu0
        %v2130 = vadd.f32 %v1403, %v2129
        %v2131 = vpop.f32.mrb[0].mxu0
        %v2132 = vadd.f32 %v1407, %v2131
        %v2133 = vpop.f32.mrb[0].mxu0
        %v2134 = vadd.f32 %v1403, %v2133
        %v2135 = vpop.f32.mrb[0].mxu0
        %v2136 = vadd.f32 %v1407, %v2135
        %2137 = vmatprep.mubr.bf16.mxu0 0
        %2138 = vmatmul.mubr.bf16.gmra.mrb[0].mxu0 %v1305
        %v2139 = vpop.f32.mrb[0].mxu0
        %v2140 = vadd.f32 %v1403, %v2139
        %v2141 = vpop.f32.mrb[0].mxu0
        %v2142 = vadd.f32 %v1407, %v2141
        %v2143 = vpop.f32.mrb[0].mxu0
        %v2144 = vadd.f32 %v1403, %v2143
        %v2145 = vpop.f32.mrb[0].mxu0
        %v2146 = vadd.f32 %v1407, %v2145
        %2147 = vmatprep.mubr.bf16.mxu0 0
        %2148 = vmatmul.mubr.bf16.gmra.mrb[0].mxu0 %v1306
        %v2149 = vpop.f32.mrb[0].mxu0
        %v2150 = vadd.f32 %v1403, %v2149
        %v2151 = vpop.f32.mrb[0].mxu0
        %v2152 = vadd.f32 %v1407, %v2151
        %v2153 = vpop.f32.mrb[0].mxu0
        %v2154 = vadd.f32 %v1403, %v2153
        %v2155 = vpop.f32.mrb[0].mxu0
        %v2156 = vadd.f32 %v1407, %v2155
        %2157 = vmatprep.mubr.bf16.mxu0 0
        %2158 = vmatmul.mubr.bf16.gmra.mrb[0].mxu0 %v1307
        %v2159 = vpop.f32.mrb[0].mxu0
        %v2160 = vadd.f32 %v1403, %v2159
        %v2161 = vpop.f32.mrb[0].mxu0
        %v2162 = vadd.f32 %v1407, %v2161
        %v2163 = vpop.f32.mrb[0].mxu0
        %v2164 = vadd.f32 %v1403, %v2163
        %v2165 = vpop.f32.mrb[0].mxu0
        %v2166 = vadd.f32 %v1407, %v2165
        %2167 = vmatprep.mubr.bf16.mxu0 0
        %2168 = vmatmul.mubr.bf16.gmra.mrb[0].mxu0 %v1308
        %v2169 = vpop.f32.mrb[0].mxu0
        %v2170 = vadd.f32 %v1403, %v2169
        %v2171 = vpop.f32.mrb[0].mxu0
        %v2172 = vadd.f32 %v1407, %v2171
        %v2173 = vpop.f32.mrb[0].mxu0
        %v2174 = vadd.f32 %v1403, %v2173
        %v2175 = vpop.f32.mrb[0].mxu0
        %v2176 = vadd.f32 %v1407, %v2175
        %2177 = vmatprep.mubr.bf16.mxu0 0
        %2178 = vmatmul.mubr.bf16.gmra.mrb[0].mxu0 %v1309
        %v2179 = vpop.f32.mrb[0].mxu0
        %v2180 = vadd.f32 %v1403, %v2179
        %v2181 = vpop.f32.mrb[0].mxu0
        %v2182 = vadd.f32 %v1407, %v2181
        %v2183 = vpop.f32.mrb[0].mxu0
        %v2184 = vadd.f32 %v1403, %v2183
        %v2185 = vpop.f32.mrb[0].mxu0
        %v2186 = vadd.f32 %v1407, %v2185
        %2187 = vdwg.mxu0
        %v2188 = vmax.f32 %v1771, 0.0
        %v2189 = vmax.f32 %v1773, 0.0
        %v2190 = vmax.f32 %v1884, 0.0
        %v2191 = vmax.f32 %v1886, 0.0
        %v2192 = vmax.f32 %v1997, 0.0
        %v2193 = vmax.f32 %v1999, 0.0
        %v2194 = vmax.f32 %v2110, 0.0
        %v2195 = vmax.f32 %v2112, 0.0
        %v2196 = vmax.f32 %v1775, 0.0
        %v2197 = vmax.f32 %v1777, 0.0
        %v2198 = vmax.f32 %v1888, 0.0
        %v2199 = vmax.f32 %v1890, 0.0
        %v2200 = vmax.f32 %v2001, 0.0
        %v2201 = vmax.f32 %v2003, 0.0
        %v2202 = vmax.f32 %v2114, 0.0
        %v2203 = vmax.f32 %v2116, 0.0
        %v2204 = vmax.f32 %v1781, 0.0
        %v2205 = vmax.f32 %v1783, 0.0
        %v2206 = vmax.f32 %v1894, 0.0
        %v2207 = vmax.f32 %v1896, 0.0
        %v2208 = vmax.f32 %v2007, 0.0
        %v2209 = vmax.f32 %v2009, 0.0
        %v2210 = vmax.f32 %v2120, 0.0
        %v2211 = vmax.f32 %v2122, 0.0
        %v2212 = vmax.f32 %v1785, 0.0
        %v2213 = vmax.f32 %v1787, 0.0
        %v2214 = vmax.f32 %v1898, 0.0
        %v2215 = vmax.f32 %v1900, 0.0
        %v2216 = vmax.f32 %v2011, 0.0
        %v2217 = vmax.f32 %v2013, 0.0
        %v2218 = vmax.f32 %v2124, 0.0
        %v2219 = vmax.f32 %v2126, 0.0
        %v2220 = vmax.f32 %v1791, 0.0
        %v2221 = vmax.f32 %v1793, 0.0
        %v2222 = vmax.f32 %v1904, 0.0
        %v2223 = vmax.f32 %v1906, 0.0
        %v2224 = vmax.f32 %v2017, 0.0
        %v2225 = vmax.f32 %v2019, 0.0
        %v2226 = vmax.f32 %v2130, 0.0
        %v2227 = vmax.f32 %v2132, 0.0
        %v2228 = vmax.f32 %v1795, 0.0
        %v2229 = vmax.f32 %v1797, 0.0
        %v2230 = vmax.f32 %v1908, 0.0
        %v2231 = vmax.f32 %v1910, 0.0
        %v2232 = vmax.f32 %v2021, 0.0
        %v2233 = vmax.f32 %v2023, 0.0
        %v2234 = vmax.f32 %v2134, 0.0
        %v2235 = vmax.f32 %v2136, 0.0
        %v2236 = vmax.f32 %v1801, 0.0
        %v2237 = vmax.f32 %v1803, 0.0
        %v2238 = vmax.f32 %v1914, 0.0
        %v2239 = vmax.f32 %v1916, 0.0
        %v2240 = vmax.f32 %v2027, 0.0
        %v2241 = vmax.f32 %v2029, 0.0
        %v2242 = vmax.f32 %v2140, 0.0
        %v2243 = vmax.f32 %v2142, 0.0
        %v2244 = vmax.f32 %v1805, 0.0
        %v2245 = vmax.f32 %v1807, 0.0
        %v2246 = vmax.f32 %v1918, 0.0
        %v2247 = vmax.f32 %v1920, 0.0
        %v2248 = vmax.f32 %v2031, 0.0
        %v2249 = vmax.f32 %v2033, 0.0
        %v2250 = vmax.f32 %v2144, 0.0
        %v2251 = vmax.f32 %v2146, 0.0
        %v2252 = vmax.f32 %v1811, 0.0
        %v2253 = vmax.f32 %v1813, 0.0
        %v2254 = vmax.f32 %v1924, 0.0
        %v2255 = vmax.f32 %v1926, 0.0
        %v2256 = vmax.f32 %v2037, 0.0
        %v2257 = vmax.f32 %v2039, 0.0
        %v2258 = vmax.f32 %v2150, 0.0
        %v2259 = vmax.f32 %v2152, 0.0
        %v2260 = vmax.f32 %v1815, 0.0
        %v2261 = vmax.f32 %v1817, 0.0
        %v2262 = vmax.f32 %v1928, 0.0
        %v2263 = vmax.f32 %v1930, 0.0
        %v2264 = vmax.f32 %v2041, 0.0
        %v2265 = vmax.f32 %v2043, 0.0
        %v2266 = vmax.f32 %v2154, 0.0
        %v2267 = vmax.f32 %v2156, 0.0
        %v2268 = vmax.f32 %v1821, 0.0
        %v2269 = vmax.f32 %v1823, 0.0
        %v2270 = vmax.f32 %v1934, 0.0
        %v2271 = vmax.f32 %v1936, 0.0
        %v2272 = vmax.f32 %v2047, 0.0
        %v2273 = vmax.f32 %v2049, 0.0
        %v2274 = vmax.f32 %v2160, 0.0
        %v2275 = vmax.f32 %v2162, 0.0
        %v2276 = vmax.f32 %v1825, 0.0
        %v2277 = vmax.f32 %v1827, 0.0
        %v2278 = vmax.f32 %v1938, 0.0
        %v2279 = vmax.f32 %v1940, 0.0
        %v2280 = vmax.f32 %v2051, 0.0
        %v2281 = vmax.f32 %v2053, 0.0
        %v2282 = vmax.f32 %v2164, 0.0
        %v2283 = vmax.f32 %v2166, 0.0
        %v2284 = vmax.f32 %v1831, 0.0
        %v2285 = vmax.f32 %v1833, 0.0
        %v2286 = vmax.f32 %v1944, 0.0
        %v2287 = vmax.f32 %v1946, 0.0
        %v2288 = vmax.f32 %v2057, 0.0
        %v2289 = vmax.f32 %v2059, 0.0
        %v2290 = vmax.f32 %v2170, 0.0
        %v2291 = vmax.f32 %v2172, 0.0
        %v2292 = vmax.f32 %v1835, 0.0
        %v2293 = vmax.f32 %v1837, 0.0
        %v2294 = vmax.f32 %v1948, 0.0
        %v2295 = vmax.f32 %v1950, 0.0
        %v2296 = vmax.f32 %v2061, 0.0
        %v2297 = vmax.f32 %v2063, 0.0
        %v2298 = vmax.f32 %v2174, 0.0
        %v2299 = vmax.f32 %v2176, 0.0
        %v2300 = vmax.f32 %v1841, 0.0
        %v2301 = vmax.f32 %v1843, 0.0
        %v2302 = vmax.f32 %v1954, 0.0
        %v2303 = vmax.f32 %v1956, 0.0
        %v2304 = vmax.f32 %v2067, 0.0
        %v2305 = vmax.f32 %v2069, 0.0
        %v2306 = vmax.f32 %v2180, 0.0
        %v2307 = vmax.f32 %v2182, 0.0
        %v2308 = vmax.f32 %v1845, 0.0
        %v2309 = vmax.f32 %v1847, 0.0
        %v2310 = vmax.f32 %v1958, 0.0
        %v2311 = vmax.f32 %v1960, 0.0
        %v2312 = vmax.f32 %v2071, 0.0
        %v2313 = vmax.f32 %v2073, 0.0
        %v2314 = vmax.f32 %v2184, 0.0
        %v2315 = vmax.f32 %v2186, 0.0
        %v2316 = vmax.f32 %v2188, %v2196
        %v2317 = vmax.f32 %v2316, %v2204
        %v2318 = vmax.f32 %v2317, %v2212
        %v2319 = vmax.f32 %v2318, %v2220
        %v2320 = vmax.f32 %v2319, %v2228
        %v2321 = vmax.f32 %v2320, %v2236
        %v2322 = vmax.f32 %v2321, %v2244
        %v2323 = vmax.f32 %v2322, %v2252
        %v2324 = vmax.f32 %v2323, %v2260
        %v2325 = vmax.f32 %v2324, %v2268
        %v2326 = vmax.f32 %v2325, %v2276
        %v2327 = vmax.f32 %v2326, %v2284
        %v2328 = vmax.f32 %v2327, %v2292
        %v2329 = vmax.f32 %v2328, %v2300
        %v2330 = vmax.f32 %v2329, %v2308
        %v2331 = vrot.slane %v2330, 4
        %v2332 = vmax.f32 %v2330, %v2331
        %v2333 = vrot.slane %v2332, 2
        %v2334 = vmax.f32 %v2332, %v2333
        %v2335 = vrot.slane %v2334, 1
        %v2336 = vmax.f32 %v2334, %v2335
        %v2337 = vmax.f32 %v2189, %v2197
        %v2338 = vmax.f32 %v2337, %v2205
        %v2339 = vmax.f32 %v2338, %v2213
        %v2340 = vmax.f32 %v2339, %v2221
        %v2341 = vmax.f32 %v2340, %v2229
        %v2342 = vmax.f32 %v2341, %v2237
        %v2343 = vmax.f32 %v2342, %v2245
        %v2344 = vmax.f32 %v2343, %v2253
        %v2345 = vmax.f32 %v2344, %v2261
        %v2346 = vmax.f32 %v2345, %v2269
        %v2347 = vmax.f32 %v2346, %v2277
        %v2348 = vmax.f32 %v2347, %v2285
        %v2349 = vmax.f32 %v2348, %v2293
        %v2350 = vmax.f32 %v2349, %v2301
        %v2351 = vmax.f32 %v2350, %v2309
        %v2352 = vrot.slane %v2351, 4
        %v2353 = vmax.f32 %v2351, %v2352
        %v2354 = vrot.slane %v2353, 2
        %v2355 = vmax.f32 %v2353, %v2354
        %v2356 = vrot.slane %v2355, 1
        %v2357 = vmax.f32 %v2355, %v2356
        %v2358 = vmax.f32 %v2190, %v2198
        %v2359 = vmax.f32 %v2358, %v2206
        %v2360 = vmax.f32 %v2359, %v2214
        %v2361 = vmax.f32 %v2360, %v2222
        %v2362 = vmax.f32 %v2361, %v2230
        %v2363 = vmax.f32 %v2362, %v2238
        %v2364 = vmax.f32 %v2363, %v2246
        %v2365 = vmax.f32 %v2364, %v2254
        %v2366 = vmax.f32 %v2365, %v2262
        %v2367 = vmax.f32 %v2366, %v2270
        %v2368 = vmax.f32 %v2367, %v2278
        %v2369 = vmax.f32 %v2368, %v2286
        %v2370 = vmax.f32 %v2369, %v2294
        %v2371 = vmax.f32 %v2370, %v2302
        %v2372 = vmax.f32 %v2371, %v2310
        %v2373 = vrot.slane %v2372, 4
        %v2374 = vmax.f32 %v2372, %v2373
        %v2375 = vrot.slane %v2374, 2
        %v2376 = vmax.f32 %v2374, %v2375
        %v2377 = vrot.slane %v2376, 1
        %v2378 = vmax.f32 %v2376, %v2377
        %v2379 = vmax.f32 %v2191, %v2199
        %v2380 = vmax.f32 %v2379, %v2207
        %v2381 = vmax.f32 %v2380, %v2215
        %v2382 = vmax.f32 %v2381, %v2223
        %v2383 = vmax.f32 %v2382, %v2231
        %v2384 = vmax.f32 %v2383, %v2239
        %v2385 = vmax.f32 %v2384, %v2247
        %v2386 = vmax.f32 %v2385, %v2255
        %v2387 = vmax.f32 %v2386, %v2263
        %v2388 = vmax.f32 %v2387, %v2271
        %v2389 = vmax.f32 %v2388, %v2279
        %v2390 = vmax.f32 %v2389, %v2287
        %v2391 = vmax.f32 %v2390, %v2295
        %v2392 = vmax.f32 %v2391, %v2303
        %v2393 = vmax.f32 %v2392, %v2311
        %v2394 = vrot.slane %v2393, 4
        %v2395 = vmax.f32 %v2393, %v2394
        %v2396 = vrot.slane %v2395, 2
        %v2397 = vmax.f32 %v2395, %v2396
        %v2398 = vrot.slane %v2397, 1
        %v2399 = vmax.f32 %v2397, %v2398
        %v2400 = vmax.f32 %v2192, %v2200
        %v2401 = vmax.f32 %v2400, %v2208
        %v2402 = vmax.f32 %v2401, %v2216
        %v2403 = vmax.f32 %v2402, %v2224
        %v2404 = vmax.f32 %v2403, %v2232
        %v2405 = vmax.f32 %v2404, %v2240
        %v2406 = vmax.f32 %v2405, %v2248
        %v2407 = vmax.f32 %v2406, %v2256
        %v2408 = vmax.f32 %v2407, %v2264
        %v2409 = vmax.f32 %v2408, %v2272
        %v2410 = vmax.f32 %v2409, %v2280
        %v2411 = vmax.f32 %v2410, %v2288
        %v2412 = vmax.f32 %v2411, %v2296
        %v2413 = vmax.f32 %v2412, %v2304
        %v2414 = vmax.f32 %v2413, %v2312
        %v2415 = vrot.slane %v2414, 4
        %v2416 = vmax.f32 %v2414, %v2415
        %v2417 = vrot.slane %v2416, 2
        %v2418 = vmax.f32 %v2416, %v2417
        %v2419 = vrot.slane %v2418, 1
        %v2420 = vmax.f32 %v2418, %v2419
        %v2421 = vmax.f32 %v2193, %v2201
        %v2422 = vmax.f32 %v2421, %v2209
        %v2423 = vmax.f32 %v2422, %v2217
        %v2424 = vmax.f32 %v2423, %v2225
        %v2425 = vmax.f32 %v2424, %v2233
        %v2426 = vmax.f32 %v2425, %v2241
        %v2427 = vmax.f32 %v2426, %v2249
        %v2428 = vmax.f32 %v2427, %v2257
        %v2429 = vmax.f32 %v2428, %v2265
        %v2430 = vmax.f32 %v2429, %v2273
        %v2431 = vmax.f32 %v2430, %v2281
        %v2432 = vmax.f32 %v2431, %v2289
        %v2433 = vmax.f32 %v2432, %v2297
        %v2434 = vmax.f32 %v2433, %v2305
        %v2435 = vmax.f32 %v2434, %v2313
        %v2436 = vrot.slane %v2435, 4
        %v2437 = vmax.f32 %v2435, %v2436
        %v2438 = vrot.slane %v2437, 2
        %v2439 = vmax.f32 %v2437, %v2438
        %v2440 = vrot.slane %v2439, 1
        %v2441 = vmax.f32 %v2439, %v2440
        %v2442 = vmax.f32 %v2194, %v2202
        %v2443 = vmax.f32 %v2442, %v2210
        %v2444 = vmax.f32 %v2443, %v2218
        %v2445 = vmax.f32 %v2444, %v2226
        %v2446 = vmax.f32 %v2445, %v2234
        %v2447 = vmax.f32 %v2446, %v2242
        %v2448 = vmax.f32 %v2447, %v2250
        %v2449 = vmax.f32 %v2448, %v2258
        %v2450 = vmax.f32 %v2449, %v2266
        %v2451 = vmax.f32 %v2450, %v2274
        %v2452 = vmax.f32 %v2451, %v2282
        %v2453 = vmax.f32 %v2452, %v2290
        %v2454 = vmax.f32 %v2453, %v2298
        %v2455 = vmax.f32 %v2454, %v2306
        %v2456 = vmax.f32 %v2455, %v2314
        %v2457 = vrot.slane %v2456, 4
        %v2458 = vmax.f32 %v2456, %v2457
        %v2459 = vrot.slane %v2458, 2
        %v2460 = vmax.f32 %v2458, %v2459
        %v2461 = vrot.slane %v2460, 1
        %v2462 = vmax.f32 %v2460, %v2461
        %v2463 = vmax.f32 %v2195, %v2203
        %v2464 = vmax.f32 %v2463, %v2211
        %v2465 = vmax.f32 %v2464, %v2219
        %v2466 = vmax.f32 %v2465, %v2227
        %v2467 = vmax.f32 %v2466, %v2235
        %v2468 = vmax.f32 %v2467, %v2243
        %v2469 = vmax.f32 %v2468, %v2251
        %v2470 = vmax.f32 %v2469, %v2259
        %v2471 = vmax.f32 %v2470, %v2267
        %v2472 = vmax.f32 %v2471, %v2275
        %v2473 = vmax.f32 %v2472, %v2283
        %v2474 = vmax.f32 %v2473, %v2291
        %v2475 = vmax.f32 %v2474, %v2299
        %v2476 = vmax.f32 %v2475, %v2307
        %v2477 = vmax.f32 %v2476, %v2315
        %v2478 = vrot.slane %v2477, 4
        %v2479 = vmax.f32 %v2477, %v2478
        %v2480 = vrot.slane %v2479, 2
        %v2481 = vmax.f32 %v2479, %v2480
        %v2482 = vrot.slane %v2481, 1
        %v2483 = vmax.f32 %v2481, %v2482
        %v2484 = vld [vmem:[#allocation13] sm:$0xff]
        %v2485 = vld [vmem:[#allocation13 + $0x8] sm:$0xff]
        %v2486 = vld [vmem:[#allocation13 + $0x10] sm:$0xff]
        %v2487 = vld [vmem:[#allocation13 + $0x18] sm:$0xff]
        %v2488 = vld [vmem:[#allocation13 + $0x20] sm:$0xff]
        %v2489 = vld [vmem:[#allocation13 + $0x28] sm:$0xff]
        %v2490 = vld [vmem:[#allocation13 + $0x30] sm:$0xff]
        %v2491 = vld [vmem:[#allocation13 + $0x38] sm:$0xff]
        %v2492 = vld [vmem:[#allocation13 + $0x40] sm:$0xff]
        %v2493 = vld [vmem:[#allocation13 + $0x48] sm:$0xff]
        %v2494 = vld [vmem:[#allocation13 + $0x50] sm:$0xff]
        %v2495 = vld [vmem:[#allocation13 + $0x58] sm:$0xff]
        %v2496 = vld [vmem:[#allocation13 + $0x60] sm:$0xff]
        %v2497 = vld [vmem:[#allocation13 + $0x68] sm:$0xff]
        %v2498 = vld [vmem:[#allocation13 + $0x70] sm:$0xff]
        %v2499 = vld [vmem:[#allocation13 + $0x78] sm:$0xff]
        %v2500 = vld [vmem:[#allocation13 + $0x80] sm:$0xff]
        %v2501 = vld [vmem:[#allocation13 + $0x88] sm:$0xff]
        %v2502 = vld [vmem:[#allocation13 + $0x90] sm:$0xff]
        %v2503 = vld [vmem:[#allocation13 + $0x98] sm:$0xff]
        %v2504 = vld [vmem:[#allocation13 + $0xa0] sm:$0xff]
        %v2505 = vld [vmem:[#allocation13 + $0xa8] sm:$0xff]
        %v2506 = vld [vmem:[#allocation13 + $0xb0] sm:$0xff]
        %v2507 = vld [vmem:[#allocation13 + $0xb8] sm:$0xff]
        %v2508 = vld [vmem:[#allocation13 + $0xc0] sm:$0xff]
        %v2509 = vld [vmem:[#allocation13 + $0xc8] sm:$0xff]
        %v2510 = vld [vmem:[#allocation13 + $0xd0] sm:$0xff]
        %v2511 = vld [vmem:[#allocation13 + $0xd8] sm:$0xff]
        %v2512 = vld [vmem:[#allocation13 + $0xe0] sm:$0xff]
        %v2513 = vld [vmem:[#allocation13 + $0xe8] sm:$0xff]
        %v2514 = vld [vmem:[#allocation13 + $0xf0] sm:$0xff]
        %v2515 = vld [vmem:[#allocation13 + $0xf8] sm:$0xff]
        %v2516 = vld [vmem:[#allocation13 + $0x100] sm:$0xff]
        %v2517 = vld [vmem:[#allocation13 + $0x108] sm:$0xff]
        %v2518 = vld [vmem:[#allocation13 + $0x110] sm:$0xff]
        %v2519 = vld [vmem:[#allocation13 + $0x118] sm:$0xff]
        %v2520 = vld [vmem:[#allocation13 + $0x120] sm:$0xff]
        %v2521 = vld [vmem:[#allocation13 + $0x128] sm:$0xff]
        %v2522 = vld [vmem:[#allocation13 + $0x130] sm:$0xff]
        %v2523 = vld [vmem:[#allocation13 + $0x138] sm:$0xff]
        %v2524 = vld [vmem:[#allocation13 + $0x140] sm:$0xff]
        %v2525 = vld [vmem:[#allocation13 + $0x148] sm:$0xff]
        %v2526 = vld [vmem:[#allocation13 + $0x150] sm:$0xff]
        %v2527 = vld [vmem:[#allocation13 + $0x158] sm:$0xff]
        %v2528 = vld [vmem:[#allocation13 + $0x160] sm:$0xff]
        %v2529 = vld [vmem:[#allocation13 + $0x168] sm:$0xff]
        %v2530 = vld [vmem:[#allocation13 + $0x170] sm:$0xff]
        %v2531 = vld [vmem:[#allocation13 + $0x178] sm:$0xff]
        %v2532 = vld [vmem:[#allocation13 + $0x180] sm:$0xff]
        %v2533 = vld [vmem:[#allocation13 + $0x188] sm:$0xff]
        %v2534 = vld [vmem:[#allocation13 + $0x190] sm:$0xff]
        %v2535 = vld [vmem:[#allocation13 + $0x198] sm:$0xff]
        %v2536 = vld [vmem:[#allocation13 + $0x1a0] sm:$0xff]
        %v2537 = vld [vmem:[#allocation13 + $0x1a8] sm:$0xff]
        %v2538 = vld [vmem:[#allocation13 + $0x1b0] sm:$0xff]
        %v2539 = vld [vmem:[#allocation13 + $0x1b8] sm:$0xff]
        %v2540 = vld [vmem:[#allocation13 + $0x1c0] sm:$0xff]
        %v2541 = vld [vmem:[#allocation13 + $0x1c8] sm:$0xff]
        %v2542 = vld [vmem:[#allocation13 + $0x1d0] sm:$0xff]
        %v2543 = vld [vmem:[#allocation13 + $0x1d8] sm:$0xff]
        %v2544 = vld [vmem:[#allocation13 + $0x1e0] sm:$0xff]
        %v2545 = vld [vmem:[#allocation13 + $0x1e8] sm:$0xff]
        %v2546 = vld [vmem:[#allocation13 + $0x1f0] sm:$0xff]
        %v2547 = vld [vmem:[#allocation13 + $0x1f8] sm:$0xff]
        %v2548 = vld [vmem:[#allocation13 + $0x200] sm:$0xff]
        %v2549 = vld [vmem:[#allocation13 + $0x208] sm:$0xff]
        %v2550 = vld [vmem:[#allocation13 + $0x210] sm:$0xff]
        %v2551 = vld [vmem:[#allocation13 + $0x218] sm:$0xff]
        %v2552 = vld [vmem:[#allocation13 + $0x220] sm:$0xff]
        %v2553 = vld [vmem:[#allocation13 + $0x228] sm:$0xff]
        %v2554 = vld [vmem:[#allocation13 + $0x230] sm:$0xff]
        %v2555 = vld [vmem:[#allocation13 + $0x238] sm:$0xff]
        %v2556 = vld [vmem:[#allocation13 + $0x240] sm:$0xff]
        %v2557 = vld [vmem:[#allocation13 + $0x248] sm:$0xff]
        %v2558 = vld [vmem:[#allocation13 + $0x250] sm:$0xff]
        %v2559 = vld [vmem:[#allocation13 + $0x258] sm:$0xff]
        %v2560 = vld [vmem:[#allocation13 + $0x260] sm:$0xff]
        %v2561 = vld [vmem:[#allocation13 + $0x268] sm:$0xff]
        %v2562 = vld [vmem:[#allocation13 + $0x270] sm:$0xff]
        %v2563 = vld [vmem:[#allocation13 + $0x278] sm:$0xff]
        %v2564 = vld [vmem:[#allocation13 + $0x280] sm:$0xff]
        %v2565 = vld [vmem:[#allocation13 + $0x288] sm:$0xff]
        %v2566 = vld [vmem:[#allocation13 + $0x290] sm:$0xff]
        %v2567 = vld [vmem:[#allocation13 + $0x298] sm:$0xff]
        %v2568 = vld [vmem:[#allocation13 + $0x2a0] sm:$0xff]
        %v2569 = vld [vmem:[#allocation13 + $0x2a8] sm:$0xff]
        %v2570 = vld [vmem:[#allocation13 + $0x2b0] sm:$0xff]
        %v2571 = vld [vmem:[#allocation13 + $0x2b8] sm:$0xff]
        %v2572 = vld [vmem:[#allocation13 + $0x2c0] sm:$0xff]
        %v2573 = vld [vmem:[#allocation13 + $0x2c8] sm:$0xff]
        %v2574 = vld [vmem:[#allocation13 + $0x2d0] sm:$0xff]
        %v2575 = vld [vmem:[#allocation13 + $0x2d8] sm:$0xff]
        %v2576 = vld [vmem:[#allocation13 + $0x2e0] sm:$0xff]
        %v2577 = vld [vmem:[#allocation13 + $0x2e8] sm:$0xff]
        %v2578 = vld [vmem:[#allocation13 + $0x2f0] sm:$0xff]
        %v2579 = vld [vmem:[#allocation13 + $0x2f8] sm:$0xff]
        %v2580 = vld [vmem:[#allocation13 + $0x300] sm:$0xff]
        %v2581 = vld [vmem:[#allocation13 + $0x308] sm:$0xff]
        %v2582 = vld [vmem:[#allocation13 + $0x310] sm:$0xff]
        %v2583 = vld [vmem:[#allocation13 + $0x318] sm:$0xff]
        %v2584 = vld [vmem:[#allocation13 + $0x320] sm:$0xff]
        %v2585 = vld [vmem:[#allocation13 + $0x328] sm:$0xff]
        %v2586 = vld [vmem:[#allocation13 + $0x330] sm:$0xff]
        %v2587 = vld [vmem:[#allocation13 + $0x338] sm:$0xff]
        %v2588 = vld [vmem:[#allocation13 + $0x340] sm:$0xff]
        %v2589 = vld [vmem:[#allocation13 + $0x348] sm:$0xff]
        %v2590 = vld [vmem:[#allocation13 + $0x350] sm:$0xff]
        %v2591 = vld [vmem:[#allocation13 + $0x358] sm:$0xff]
        %v2592 = vld [vmem:[#allocation13 + $0x360] sm:$0xff]
        %v2593 = vld [vmem:[#allocation13 + $0x368] sm:$0xff]
        %v2594 = vld [vmem:[#allocation13 + $0x370] sm:$0xff]
        %v2595 = vld [vmem:[#allocation13 + $0x378] sm:$0xff]
        %v2596 = vld [vmem:[#allocation13 + $0x380] sm:$0xff]
        %v2597 = vld [vmem:[#allocation13 + $0x388] sm:$0xff]
        %v2598 = vld [vmem:[#allocation13 + $0x390] sm:$0xff]
        %v2599 = vld [vmem:[#allocation13 + $0x398] sm:$0xff]
        %v2600 = vld [vmem:[#allocation13 + $0x3a0] sm:$0xff]
        %v2601 = vld [vmem:[#allocation13 + $0x3a8] sm:$0xff]
        %v2602 = vld [vmem:[#allocation13 + $0x3b0] sm:$0xff]
        %v2603 = vld [vmem:[#allocation13 + $0x3b8] sm:$0xff]
        %v2604 = vld [vmem:[#allocation13 + $0x3c0] sm:$0xff]
        %v2605 = vld [vmem:[#allocation13 + $0x3c8] sm:$0xff]
        %v2606 = vld [vmem:[#allocation13 + $0x3d0] sm:$0xff]
        %v2607 = vld [vmem:[#allocation13 + $0x3d8] sm:$0xff]
        %v2608 = vld [vmem:[#allocation13 + $0x3e0] sm:$0xff]
        %v2609 = vld [vmem:[#allocation13 + $0x3e8] sm:$0xff]
        %v2610 = vld [vmem:[#allocation13 + $0x3f0] sm:$0xff]
        %v2611 = vld [vmem:[#allocation13 + $0x3f8] sm:$0xff]
        %v2612 = vld [vmem:[#allocation13 + $0x400] sm:$0xff]
        %v2613 = vld [vmem:[#allocation13 + $0x408] sm:$0xff]
        %v2614 = vld [vmem:[#allocation13 + $0x410] sm:$0xff]
        %v2615 = vld [vmem:[#allocation13 + $0x418] sm:$0xff]
        %v2616 = vld [vmem:[#allocation13 + $0x420] sm:$0xff]
        %v2617 = vld [vmem:[#allocation13 + $0x428] sm:$0xff]
        %v2618 = vld [vmem:[#allocation13 + $0x430] sm:$0xff]
        %v2619 = vld [vmem:[#allocation13 + $0x438] sm:$0xff]
        %v2620 = vld [vmem:[#allocation13 + $0x440] sm:$0xff]
        %v2621 = vld [vmem:[#allocation13 + $0x448] sm:$0xff]
        %v2622 = vld [vmem:[#allocation13 + $0x450] sm:$0xff]
        %v2623 = vld [vmem:[#allocation13 + $0x458] sm:$0xff]
        %v2624 = vld [vmem:[#allocation13 + $0x460] sm:$0xff]
        %v2625 = vld [vmem:[#allocation13 + $0x468] sm:$0xff]
        %v2626 = vld [vmem:[#allocation13 + $0x470] sm:$0xff]
        %v2627 = vld [vmem:[#allocation13 + $0x478] sm:$0xff]
        %v2628 = vld [vmem:[#allocation13 + $0x480] sm:$0xff]
        %v2629 = vld [vmem:[#allocation13 + $0x488] sm:$0xff]
        %v2630 = vld [vmem:[#allocation13 + $0x490] sm:$0xff]
        %v2631 = vld [vmem:[#allocation13 + $0x498] sm:$0xff]
        %v2632 = vld [vmem:[#allocation13 + $0x4a0] sm:$0xff]
        %v2633 = vld [vmem:[#allocation13 + $0x4a8] sm:$0xff]
        %v2634 = vld [vmem:[#allocation13 + $0x4b0] sm:$0xff]
        %v2635 = vld [vmem:[#allocation13 + $0x4b8] sm:$0xff]
        %v2636 = vld [vmem:[#allocation13 + $0x4c0] sm:$0xff]
        %v2637 = vld [vmem:[#allocation13 + $0x4c8] sm:$0xff]
        %v2638 = vld [vmem:[#allocation13 + $0x4d0] sm:$0xff]
        %v2639 = vld [vmem:[#allocation13 + $0x4d8] sm:$0xff]
        %v2640 = vld [vmem:[#allocation13 + $0x4e0] sm:$0xff]
        %v2641 = vld [vmem:[#allocation13 + $0x4e8] sm:$0xff]
        %v2642 = vld [vmem:[#allocation13 + $0x4f0] sm:$0xff]
        %v2643 = vld [vmem:[#allocation13 + $0x4f8] sm:$0xff]
        %v2644 = vld [vmem:[#allocation13 + $0x500] sm:$0xff]
        %v2645 = vld [vmem:[#allocation13 + $0x508] sm:$0xff]
        %v2646 = vld [vmem:[#allocation13 + $0x510] sm:$0xff]
        %v2647 = vld [vmem:[#allocation13 + $0x518] sm:$0xff]
        %v2648 = vld [vmem:[#allocation13 + $0x520] sm:$0xff]
        %v2649 = vld [vmem:[#allocation13 + $0x528] sm:$0xff]
        %v2650 = vld [vmem:[#allocation13 + $0x530] sm:$0xff]
        %v2651 = vld [vmem:[#allocation13 + $0x538] sm:$0xff]
        %v2652 = vld [vmem:[#allocation13 + $0x540] sm:$0xff]
        %v2653 = vld [vmem:[#allocation13 + $0x548] sm:$0xff]
        %v2654 = vld [vmem:[#allocation13 + $0x550] sm:$0xff]
        %v2655 = vld [vmem:[#allocation13 + $0x558] sm:$0xff]
        %v2656 = vld [vmem:[#allocation13 + $0x560] sm:$0xff]
        %v2657 = vld [vmem:[#allocation13 + $0x568] sm:$0xff]
        %v2658 = vld [vmem:[#allocation13 + $0x570] sm:$0xff]
        %v2659 = vld [vmem:[#allocation13 + $0x578] sm:$0xff]
        %v2660 = vld [vmem:[#allocation13 + $0x580] sm:$0xff]
        %v2661 = vld [vmem:[#allocation13 + $0x588] sm:$0xff]
        %v2662 = vld [vmem:[#allocation13 + $0x590] sm:$0xff]
        %v2663 = vld [vmem:[#allocation13 + $0x598] sm:$0xff]
        %v2664 = vld [vmem:[#allocation13 + $0x5a0] sm:$0xff]
        %v2665 = vld [vmem:[#allocation13 + $0x5a8] sm:$0xff]
        %v2666 = vld [vmem:[#allocation13 + $0x5b0] sm:$0xff]
        %v2667 = vld [vmem:[#allocation13 + $0x5b8] sm:$0xff]
        %v2668 = vld [vmem:[#allocation13 + $0x5c0] sm:$0xff]
        %v2669 = vld [vmem:[#allocation13 + $0x5c8] sm:$0xff]
        %v2670 = vld [vmem:[#allocation13 + $0x5d0] sm:$0xff]
        %v2671 = vld [vmem:[#allocation13 + $0x5d8] sm:$0xff]
        %v2672 = vld [vmem:[#allocation13 + $0x5e0] sm:$0xff]
        %v2673 = vld [vmem:[#allocation13 + $0x5e8] sm:$0xff]
        %v2674 = vld [vmem:[#allocation13 + $0x5f0] sm:$0xff]
        %v2675 = vld [vmem:[#allocation13 + $0x5f8] sm:$0xff]
        %v2676 = vld [vmem:[#allocation13 + $0x600] sm:$0xff]
        %v2677 = vld [vmem:[#allocation13 + $0x608] sm:$0xff]
        %v2678 = vld [vmem:[#allocation13 + $0x610] sm:$0xff]
        %v2679 = vld [vmem:[#allocation13 + $0x618] sm:$0xff]
        %v2680 = vld [vmem:[#allocation13 + $0x620] sm:$0xff]
        %v2681 = vld [vmem:[#allocation13 + $0x628] sm:$0xff]
        %v2682 = vld [vmem:[#allocation13 + $0x630] sm:$0xff]
        %v2683 = vld [vmem:[#allocation13 + $0x638] sm:$0xff]
        %v2684 = vld [vmem:[#allocation13 + $0x640] sm:$0xff]
        %v2685 = vld [vmem:[#allocation13 + $0x648] sm:$0xff]
        %v2686 = vld [vmem:[#allocation13 + $0x650] sm:$0xff]
        %v2687 = vld [vmem:[#allocation13 + $0x658] sm:$0xff]
        %v2688 = vld [vmem:[#allocation13 + $0x660] sm:$0xff]
        %v2689 = vld [vmem:[#allocation13 + $0x668] sm:$0xff]
        %v2690 = vld [vmem:[#allocation13 + $0x670] sm:$0xff]
        %v2691 = vld [vmem:[#allocation13 + $0x678] sm:$0xff]
        %v2692 = vld [vmem:[#allocation13 + $0x680] sm:$0xff]
        %v2693 = vld [vmem:[#allocation13 + $0x688] sm:$0xff]
        %v2694 = vld [vmem:[#allocation13 + $0x690] sm:$0xff]
        %v2695 = vld [vmem:[#allocation13 + $0x698] sm:$0xff]
        %v2696 = vld [vmem:[#allocation13 + $0x6a0] sm:$0xff]
        %v2697 = vld [vmem:[#allocation13 + $0x6a8] sm:$0xff]
        %v2698 = vld [vmem:[#allocation13 + $0x6b0] sm:$0xff]
        %v2699 = vld [vmem:[#allocation13 + $0x6b8] sm:$0xff]
        %v2700 = vld [vmem:[#allocation13 + $0x6c0] sm:$0xff]
        %v2701 = vld [vmem:[#allocation13 + $0x6c8] sm:$0xff]
        %v2702 = vld [vmem:[#allocation13 + $0x6d0] sm:$0xff]
        %v2703 = vld [vmem:[#allocation13 + $0x6d8] sm:$0xff]
        %v2704 = vld [vmem:[#allocation13 + $0x6e0] sm:$0xff]
        %v2705 = vld [vmem:[#allocation13 + $0x6e8] sm:$0xff]
        %v2706 = vld [vmem:[#allocation13 + $0x6f0] sm:$0xff]
        %v2707 = vld [vmem:[#allocation13 + $0x6f8] sm:$0xff]
        %v2708 = vld [vmem:[#allocation13 + $0x700] sm:$0xff]
        %v2709 = vld [vmem:[#allocation13 + $0x708] sm:$0xff]
        %v2710 = vld [vmem:[#allocation13 + $0x710] sm:$0xff]
        %v2711 = vld [vmem:[#allocation13 + $0x718] sm:$0xff]
        %v2712 = vld [vmem:[#allocation13 + $0x720] sm:$0xff]
        %v2713 = vld [vmem:[#allocation13 + $0x728] sm:$0xff]
        %v2714 = vld [vmem:[#allocation13 + $0x730] sm:$0xff]
        %v2715 = vld [vmem:[#allocation13 + $0x738] sm:$0xff]
        %v2716 = vld [vmem:[#allocation13 + $0x740] sm:$0xff]
        %v2717 = vld [vmem:[#allocation13 + $0x748] sm:$0xff]
        %v2718 = vld [vmem:[#allocation13 + $0x750] sm:$0xff]
        %v2719 = vld [vmem:[#allocation13 + $0x758] sm:$0xff]
        %v2720 = vld [vmem:[#allocation13 + $0x760] sm:$0xff]
        %v2721 = vld [vmem:[#allocation13 + $0x768] sm:$0xff]
        %v2722 = vld [vmem:[#allocation13 + $0x770] sm:$0xff]
        %v2723 = vld [vmem:[#allocation13 + $0x778] sm:$0xff]
        %v2724 = vld [vmem:[#allocation13 + $0x780] sm:$0xff]
        %v2725 = vld [vmem:[#allocation13 + $0x788] sm:$0xff]
        %v2726 = vld [vmem:[#allocation13 + $0x790] sm:$0xff]
        %v2727 = vld [vmem:[#allocation13 + $0x798] sm:$0xff]
        %v2728 = vld [vmem:[#allocation13 + $0x7a0] sm:$0xff]
        %v2729 = vld [vmem:[#allocation13 + $0x7a8] sm:$0xff]
        %v2730 = vld [vmem:[#allocation13 + $0x7b0] sm:$0xff]
        %v2731 = vld [vmem:[#allocation13 + $0x7b8] sm:$0xff]
        %v2732 = vld [vmem:[#allocation13 + $0x7c0] sm:$0xff]
        %v2733 = vld [vmem:[#allocation13 + $0x7c8] sm:$0xff]
        %v2734 = vld [vmem:[#allocation13 + $0x7d0] sm:$0xff]
        %v2735 = vld [vmem:[#allocation13 + $0x7d8] sm:$0xff]
        %v2736 = vld [vmem:[#allocation13 + $0x7e0] sm:$0xff]
        %v2737 = vld [vmem:[#allocation13 + $0x7e8] sm:$0xff]
        %v2738 = vld [vmem:[#allocation13 + $0x7f0] sm:$0xff]
        %v2739 = vld [vmem:[#allocation13 + $0x7f8] sm:$0xff]
        %v2740 = vld [vmem:[#allocation13 + $0x800] sm:$0xff]
        %v2741 = vld [vmem:[#allocation13 + $0x808] sm:$0xff]
        %v2742 = vld [vmem:[#allocation13 + $0x810] sm:$0xff]
        %v2743 = vld [vmem:[#allocation13 + $0x818] sm:$0xff]
        %v2744 = vld [vmem:[#allocation13 + $0x820] sm:$0xff]
        %v2745 = vld [vmem:[#allocation13 + $0x828] sm:$0xff]
        %v2746 = vld [vmem:[#allocation13 + $0x830] sm:$0xff]
        %v2747 = vld [vmem:[#allocation13 + $0x838] sm:$0xff]
        %v2748 = vld [vmem:[#allocation13 + $0x840] sm:$0xff]
        %v2749 = vld [vmem:[#allocation13 + $0x848] sm:$0xff]
        %v2750 = vld [vmem:[#allocation13 + $0x850] sm:$0xff]
        %v2751 = vld [vmem:[#allocation13 + $0x858] sm:$0xff]
        %v2752 = vld [vmem:[#allocation13 + $0x860] sm:$0xff]
        %v2753 = vld [vmem:[#allocation13 + $0x868] sm:$0xff]
        %v2754 = vld [vmem:[#allocation13 + $0x870] sm:$0xff]
        %v2755 = vld [vmem:[#allocation13 + $0x878] sm:$0xff]
        %v2756 = vld [vmem:[#allocation13 + $0x880] sm:$0xff]
        %v2757 = vld [vmem:[#allocation13 + $0x888] sm:$0xff]
        %v2758 = vld [vmem:[#allocation13 + $0x890] sm:$0xff]
        %v2759 = vld [vmem:[#allocation13 + $0x898] sm:$0xff]
        %v2760 = vld [vmem:[#allocation13 + $0x8a0] sm:$0xff]
        %v2761 = vld [vmem:[#allocation13 + $0x8a8] sm:$0xff]
        %v2762 = vld [vmem:[#allocation13 + $0x8b0] sm:$0xff]
        %v2763 = vld [vmem:[#allocation13 + $0x8b8] sm:$0xff]
        %v2764 = vld [vmem:[#allocation13 + $0x8c0] sm:$0xff]
        %v2765 = vld [vmem:[#allocation13 + $0x8c8] sm:$0xff]
        %v2766 = vld [vmem:[#allocation13 + $0x8d0] sm:$0xff]
        %v2767 = vld [vmem:[#allocation13 + $0x8d8] sm:$0xff]
        %v2768 = vld [vmem:[#allocation13 + $0x8e0] sm:$0xff]
        %v2769 = vld [vmem:[#allocation13 + $0x8e8] sm:$0xff]
        %v2770 = vld [vmem:[#allocation13 + $0x8f0] sm:$0xff]
        %v2771 = vld [vmem:[#allocation13 + $0x8f8] sm:$0xff]
        %v2772 = vld [vmem:[#allocation13 + $0x900] sm:$0xff]
        %v2773 = vld [vmem:[#allocation13 + $0x908] sm:$0xff]
        %v2774 = vld [vmem:[#allocation13 + $0x910] sm:$0xff]
        %v2775 = vld [vmem:[#allocation13 + $0x918] sm:$0xff]
        %v2776 = vld [vmem:[#allocation13 + $0x920] sm:$0xff]
        %v2777 = vld [vmem:[#allocation13 + $0x928] sm:$0xff]
        %v2778 = vld [vmem:[#allocation13 + $0x930] sm:$0xff]
        %v2779 = vld [vmem:[#allocation13 + $0x938] sm:$0xff]
        %v2780 = vld [vmem:[#allocation13 + $0x940] sm:$0xff]
        %v2781 = vld [vmem:[#allocation13 + $0x948] sm:$0xff]
        %v2782 = vld [vmem:[#allocation13 + $0x950] sm:$0xff]
        %v2783 = vld [vmem:[#allocation13 + $0x958] sm:$0xff]
        %v2784 = vld [vmem:[#allocation13 + $0x960] sm:$0xff]
        %v2785 = vld [vmem:[#allocation13 + $0x968] sm:$0xff]
        %v2786 = vld [vmem:[#allocation13 + $0x970] sm:$0xff]
        %v2787 = vld [vmem:[#allocation13 + $0x978] sm:$0xff]
        %v2788 = vld [vmem:[#allocation13 + $0x980] sm:$0xff]
        %v2789 = vld [vmem:[#allocation13 + $0x988] sm:$0xff]
        %v2790 = vld [vmem:[#allocation13 + $0x990] sm:$0xff]
        %v2791 = vld [vmem:[#allocation13 + $0x998] sm:$0xff]
        %v2792 = vld [vmem:[#allocation13 + $0x9a0] sm:$0xff]
        %v2793 = vld [vmem:[#allocation13 + $0x9a8] sm:$0xff]
        %v2794 = vld [vmem:[#allocation13 + $0x9b0] sm:$0xff]
        %v2795 = vld [vmem:[#allocation13 + $0x9b8] sm:$0xff]
        %v2796 = vld [vmem:[#allocation13 + $0x9c0] sm:$0xff]
        %v2797 = vld [vmem:[#allocation13 + $0x9c8] sm:$0xff]
        %v2798 = vld [vmem:[#allocation13 + $0x9d0] sm:$0xff]
        %v2799 = vld [vmem:[#allocation13 + $0x9d8] sm:$0xff]
        %v2800 = vld [vmem:[#allocation13 + $0x9e0] sm:$0xff]
        %v2801 = vld [vmem:[#allocation13 + $0x9e8] sm:$0xff]
        %v2802 = vld [vmem:[#allocation13 + $0x9f0] sm:$0xff]
        %v2803 = vld [vmem:[#allocation13 + $0x9f8] sm:$0xff]
        %v2804 = vld [vmem:[#allocation13 + $0xa00] sm:$0xff]
        %v2805 = vld [vmem:[#allocation13 + $0xa08] sm:$0xff]
        %v2806 = vld [vmem:[#allocation13 + $0xa10] sm:$0xff]
        %v2807 = vld [vmem:[#allocation13 + $0xa18] sm:$0xff]
        %v2808 = vld [vmem:[#allocation13 + $0xa20] sm:$0xff]
        %v2809 = vld [vmem:[#allocation13 + $0xa28] sm:$0xff]
        %v2810 = vld [vmem:[#allocation13 + $0xa30] sm:$0xff]
        %v2811 = vld [vmem:[#allocation13 + $0xa38] sm:$0xff]
        %v2812 = vld [vmem:[#allocation13 + $0xa40] sm:$0xff]
        %v2813 = vld [vmem:[#allocation13 + $0xa48] sm:$0xff]
        %v2814 = vld [vmem:[#allocation13 + $0xa50] sm:$0xff]
        %v2815 = vld [vmem:[#allocation13 + $0xa58] sm:$0xff]
        %v2816 = vld [vmem:[#allocation13 + $0xa60] sm:$0xff]
        %v2817 = vld [vmem:[#allocation13 + $0xa68] sm:$0xff]
        %v2818 = vld [vmem:[#allocation13 + $0xa70] sm:$0xff]
        %v2819 = vld [vmem:[#allocation13 + $0xa78] sm:$0xff]
        %v2820 = vld [vmem:[#allocation13 + $0xa80] sm:$0xff]
        %v2821 = vld [vmem:[#allocation13 + $0xa88] sm:$0xff]
        %v2822 = vld [vmem:[#allocation13 + $0xa90] sm:$0xff]
        %v2823 = vld [vmem:[#allocation13 + $0xa98] sm:$0xff]
        %v2824 = vld [vmem:[#allocation13 + $0xaa0] sm:$0xff]
        %v2825 = vld [vmem:[#allocation13 + $0xaa8] sm:$0xff]
        %v2826 = vld [vmem:[#allocation13 + $0xab0] sm:$0xff]
        %v2827 = vld [vmem:[#allocation13 + $0xab8] sm:$0xff]
        %v2828 = vld [vmem:[#allocation13 + $0xac0] sm:$0xff]
        %v2829 = vld [vmem:[#allocation13 + $0xac8] sm:$0xff]
        %v2830 = vld [vmem:[#allocation13 + $0xad0] sm:$0xff]
        %v2831 = vld [vmem:[#allocation13 + $0xad8] sm:$0xff]
        %v2832 = vld [vmem:[#allocation13 + $0xae0] sm:$0xff]
        %v2833 = vld [vmem:[#allocation13 + $0xae8] sm:$0xff]
        %v2834 = vld [vmem:[#allocation13 + $0xaf0] sm:$0xff]
        %v2835 = vld [vmem:[#allocation13 + $0xaf8] sm:$0xff]
        %v2836 = vld [vmem:[#allocation13 + $0xb00] sm:$0xff]
        %v2837 = vld [vmem:[#allocation13 + $0xb08] sm:$0xff]
        %v2838 = vld [vmem:[#allocation13 + $0xb10] sm:$0xff]
        %v2839 = vld [vmem:[#allocation13 + $0xb18] sm:$0xff]
        %v2840 = vld [vmem:[#allocation13 + $0xb20] sm:$0xff]
        %v2841 = vld [vmem:[#allocation13 + $0xb28] sm:$0xff]
        %v2842 = vld [vmem:[#allocation13 + $0xb30] sm:$0xff]
        %v2843 = vld [vmem:[#allocation13 + $0xb38] sm:$0xff]
        %v2844 = vld [vmem:[#allocation13 + $0xb40] sm:$0xff]
        %v2845 = vld [vmem:[#allocation13 + $0xb48] sm:$0xff]
        %v2846 = vld [vmem:[#allocation13 + $0xb50] sm:$0xff]
        %v2847 = vld [vmem:[#allocation13 + $0xb58] sm:$0xff]
        %v2848 = vld [vmem:[#allocation13 + $0xb60] sm:$0xff]
        %v2849 = vld [vmem:[#allocation13 + $0xb68] sm:$0xff]
        %v2850 = vld [vmem:[#allocation13 + $0xb70] sm:$0xff]
        %v2851 = vld [vmem:[#allocation13 + $0xb78] sm:$0xff]
        %v2852 = vld [vmem:[#allocation13 + $0xb80] sm:$0xff]
        %v2853 = vld [vmem:[#allocation13 + $0xb88] sm:$0xff]
        %v2854 = vld [vmem:[#allocation13 + $0xb90] sm:$0xff]
        %v2855 = vld [vmem:[#allocation13 + $0xb98] sm:$0xff]
        %v2856 = vld [vmem:[#allocation13 + $0xba0] sm:$0xff]
        %v2857 = vld [vmem:[#allocation13 + $0xba8] sm:$0xff]
        %v2858 = vld [vmem:[#allocation13 + $0xbb0] sm:$0xff]
        %v2859 = vld [vmem:[#allocation13 + $0xbb8] sm:$0xff]
        %v2860 = vld [vmem:[#allocation13 + $0xbc0] sm:$0xff]
        %v2861 = vld [vmem:[#allocation13 + $0xbc8] sm:$0xff]
        %v2862 = vld [vmem:[#allocation13 + $0xbd0] sm:$0xff]
        %v2863 = vld [vmem:[#allocation13 + $0xbd8] sm:$0xff]
        %v2864 = vld [vmem:[#allocation13 + $0xbe0] sm:$0xff]
        %v2865 = vld [vmem:[#allocation13 + $0xbe8] sm:$0xff]
        %v2866 = vld [vmem:[#allocation13 + $0xbf0] sm:$0xff]
        %v2867 = vld [vmem:[#allocation13 + $0xbf8] sm:$0xff]
        %v2868 = vld [vmem:[#allocation13 + $0xc00] sm:$0xff]
        %v2869 = vld [vmem:[#allocation13 + $0xc08] sm:$0xff]
        %v2870 = vld [vmem:[#allocation13 + $0xc10] sm:$0xff]
        %v2871 = vld [vmem:[#allocation13 + $0xc18] sm:$0xff]
        %v2872 = vld [vmem:[#allocation13 + $0xc20] sm:$0xff]
        %v2873 = vld [vmem:[#allocation13 + $0xc28] sm:$0xff]
        %v2874 = vld [vmem:[#allocation13 + $0xc30] sm:$0xff]
        %v2875 = vld [vmem:[#allocation13 + $0xc38] sm:$0xff]
        %v2876 = vld [vmem:[#allocation13 + $0xc40] sm:$0xff]
        %v2877 = vld [vmem:[#allocation13 + $0xc48] sm:$0xff]
        %v2878 = vld [vmem:[#allocation13 + $0xc50] sm:$0xff]
        %v2879 = vld [vmem:[#allocation13 + $0xc58] sm:$0xff]
        %v2880 = vld [vmem:[#allocation13 + $0xc60] sm:$0xff]
        %v2881 = vld [vmem:[#allocation13 + $0xc68] sm:$0xff]
        %v2882 = vld [vmem:[#allocation13 + $0xc70] sm:$0xff]
        %v2883 = vld [vmem:[#allocation13 + $0xc78] sm:$0xff]
        %v2884 = vld [vmem:[#allocation13 + $0xc80] sm:$0xff]
        %v2885 = vld [vmem:[#allocation13 + $0xc88] sm:$0xff]
        %v2886 = vld [vmem:[#allocation13 + $0xc90] sm:$0xff]
        %v2887 = vld [vmem:[#allocation13 + $0xc98] sm:$0xff]
        %v2888 = vld [vmem:[#allocation13 + $0xca0] sm:$0xff]
        %v2889 = vld [vmem:[#allocation13 + $0xca8] sm:$0xff]
        %v2890 = vld [vmem:[#allocation13 + $0xcb0] sm:$0xff]
        %v2891 = vld [vmem:[#allocation13 + $0xcb8] sm:$0xff]
        %v2892 = vld [vmem:[#allocation13 + $0xcc0] sm:$0xff]
        %v2893 = vld [vmem:[#allocation13 + $0xcc8] sm:$0xff]
        %v2894 = vld [vmem:[#allocation13 + $0xcd0] sm:$0xff]
        %v2895 = vld [vmem:[#allocation13 + $0xcd8] sm:$0xff]
        %v2896 = vld [vmem:[#allocation13 + $0xce0] sm:$0xff]
        %v2897 = vld [vmem:[#allocation13 + $0xce8] sm:$0xff]
        %v2898 = vld [vmem:[#allocation13 + $0xcf0] sm:$0xff]
        %v2899 = vld [vmem:[#allocation13 + $0xcf8] sm:$0xff]
        %v2900 = vld [vmem:[#allocation13 + $0xd00] sm:$0xff]
        %v2901 = vld [vmem:[#allocation13 + $0xd08] sm:$0xff]
        %v2902 = vld [vmem:[#allocation13 + $0xd10] sm:$0xff]
        %v2903 = vld [vmem:[#allocation13 + $0xd18] sm:$0xff]
        %v2904 = vld [vmem:[#allocation13 + $0xd20] sm:$0xff]
        %v2905 = vld [vmem:[#allocation13 + $0xd28] sm:$0xff]
        %v2906 = vld [vmem:[#allocation13 + $0xd30] sm:$0xff]
        %v2907 = vld [vmem:[#allocation13 + $0xd38] sm:$0xff]
        %v2908 = vld [vmem:[#allocation13 + $0xd40] sm:$0xff]
        %v2909 = vld [vmem:[#allocation13 + $0xd48] sm:$0xff]
        %v2910 = vld [vmem:[#allocation13 + $0xd50] sm:$0xff]
        %v2911 = vld [vmem:[#allocation13 + $0xd58] sm:$0xff]
        %v2912 = vld [vmem:[#allocation13 + $0xd60] sm:$0xff]
        %v2913 = vld [vmem:[#allocation13 + $0xd68] sm:$0xff]
        %v2914 = vld [vmem:[#allocation13 + $0xd70] sm:$0xff]
        %v2915 = vld [vmem:[#allocation13 + $0xd78] sm:$0xff]
        %v2916 = vld [vmem:[#allocation13 + $0xd80] sm:$0xff]
        %v2917 = vld [vmem:[#allocation13 + $0xd88] sm:$0xff]
        %v2918 = vld [vmem:[#allocation13 + $0xd90] sm:$0xff]
        %v2919 = vld [vmem:[#allocation13 + $0xd98] sm:$0xff]
        %v2920 = vld [vmem:[#allocation13 + $0xda0] sm:$0xff]
        %v2921 = vld [vmem:[#allocation13 + $0xda8] sm:$0xff]
        %v2922 = vld [vmem:[#allocation13 + $0xdb0] sm:$0xff]
        %v2923 = vld [vmem:[#allocation13 + $0xdb8] sm:$0xff]
        %v2924 = vld [vmem:[#allocation13 + $0xdc0] sm:$0xff]
        %v2925 = vld [vmem:[#allocation13 + $0xdc8] sm:$0xff]
        %v2926 = vld [vmem:[#allocation13 + $0xdd0] sm:$0xff]
        %v2927 = vld [vmem:[#allocation13 + $0xdd8] sm:$0xff]
        %v2928 = vld [vmem:[#allocation13 + $0xde0] sm:$0xff]
        %v2929 = vld [vmem:[#allocation13 + $0xde8] sm:$0xff]
        %v2930 = vld [vmem:[#allocation13 + $0xdf0] sm:$0xff]
        %v2931 = vld [vmem:[#allocation13 + $0xdf8] sm:$0xff]
        %v2932 = vld [vmem:[#allocation13 + $0xe00] sm:$0xff]
        %v2933 = vld [vmem:[#allocation13 + $0xe08] sm:$0xff]
        %v2934 = vld [vmem:[#allocation13 + $0xe10] sm:$0xff]
        %v2935 = vld [vmem:[#allocation13 + $0xe18] sm:$0xff]
        %v2936 = vld [vmem:[#allocation13 + $0xe20] sm:$0xff]
        %v2937 = vld [vmem:[#allocation13 + $0xe28] sm:$0xff]
        %v2938 = vld [vmem:[#allocation13 + $0xe30] sm:$0xff]
        %v2939 = vld [vmem:[#allocation13 + $0xe38] sm:$0xff]
        %v2940 = vld [vmem:[#allocation13 + $0xe40] sm:$0xff]
        %v2941 = vld [vmem:[#allocation13 + $0xe48] sm:$0xff]
        %v2942 = vld [vmem:[#allocation13 + $0xe50] sm:$0xff]
        %v2943 = vld [vmem:[#allocation13 + $0xe58] sm:$0xff]
        %v2944 = vld [vmem:[#allocation13 + $0xe60] sm:$0xff]
        %v2945 = vld [vmem:[#allocation13 + $0xe68] sm:$0xff]
        %v2946 = vld [vmem:[#allocation13 + $0xe70] sm:$0xff]
        %v2947 = vld [vmem:[#allocation13 + $0xe78] sm:$0xff]
        %v2948 = vld [vmem:[#allocation13 + $0xe80] sm:$0xff]
        %v2949 = vld [vmem:[#allocation13 + $0xe88] sm:$0xff]
        %v2950 = vld [vmem:[#allocation13 + $0xe90] sm:$0xff]
        %v2951 = vld [vmem:[#allocation13 + $0xe98] sm:$0xff]
        %v2952 = vld [vmem:[#allocation13 + $0xea0] sm:$0xff]
        %v2953 = vld [vmem:[#allocation13 + $0xea8] sm:$0xff]
        %v2954 = vld [vmem:[#allocation13 + $0xeb0] sm:$0xff]
        %v2955 = vld [vmem:[#allocation13 + $0xeb8] sm:$0xff]
        %v2956 = vld [vmem:[#allocation13 + $0xec0] sm:$0xff]
        %v2957 = vld [vmem:[#allocation13 + $0xec8] sm:$0xff]
        %v2958 = vld [vmem:[#allocation13 + $0xed0] sm:$0xff]
        %v2959 = vld [vmem:[#allocation13 + $0xed8] sm:$0xff]
        %v2960 = vld [vmem:[#allocation13 + $0xee0] sm:$0xff]
        %v2961 = vld [vmem:[#allocation13 + $0xee8] sm:$0xff]
        %v2962 = vld [vmem:[#allocation13 + $0xef0] sm:$0xff]
        %v2963 = vld [vmem:[#allocation13 + $0xef8] sm:$0xff]
        %v2964 = vld [vmem:[#allocation13 + $0xf00] sm:$0xff]
        %v2965 = vld [vmem:[#allocation13 + $0xf08] sm:$0xff]
        %v2966 = vld [vmem:[#allocation13 + $0xf10] sm:$0xff]
        %v2967 = vld [vmem:[#allocation13 + $0xf18] sm:$0xff]
        %v2968 = vld [vmem:[#allocation13 + $0xf20] sm:$0xff]
        %v2969 = vld [vmem:[#allocation13 + $0xf28] sm:$0xff]
        %v2970 = vld [vmem:[#allocation13 + $0xf30] sm:$0xff]
        %v2971 = vld [vmem:[#allocation13 + $0xf38] sm:$0xff]
        %v2972 = vld [vmem:[#allocation13 + $0xf40] sm:$0xff]
        %v2973 = vld [vmem:[#allocation13 + $0xf48] sm:$0xff]
        %v2974 = vld [vmem:[#allocation13 + $0xf50] sm:$0xff]
        %v2975 = vld [vmem:[#allocation13 + $0xf58] sm:$0xff]
        %v2976 = vld [vmem:[#allocation13 + $0xf60] sm:$0xff]
        %v2977 = vld [vmem:[#allocation13 + $0xf68] sm:$0xff]
        %v2978 = vld [vmem:[#allocation13 + $0xf70] sm:$0xff]
        %v2979 = vld [vmem:[#allocation13 + $0xf78] sm:$0xff]
        %v2980 = vld [vmem:[#allocation13 + $0xf80] sm:$0xff]
        %v2981 = vld [vmem:[#allocation13 + $0xf88] sm:$0xff]
        %v2982 = vld [vmem:[#allocation13 + $0xf90] sm:$0xff]
        %v2983 = vld [vmem:[#allocation13 + $0xf98] sm:$0xff]
        %v2984 = vld [vmem:[#allocation13 + $0xfa0] sm:$0xff]
        %v2985 = vld [vmem:[#allocation13 + $0xfa8] sm:$0xff]
        %v2986 = vld [vmem:[#allocation13 + $0xfb0] sm:$0xff]
        %v2987 = vld [vmem:[#allocation13 + $0xfb8] sm:$0xff]
        %v2988 = vld [vmem:[#allocation13 + $0xfc0] sm:$0xff]
        %v2989 = vld [vmem:[#allocation13 + $0xfc8] sm:$0xff]
        %v2990 = vld [vmem:[#allocation13 + $0xfd0] sm:$0xff]
        %v2991 = vld [vmem:[#allocation13 + $0xfd8] sm:$0xff]
        %v2992 = vld [vmem:[#allocation13 + $0xfe0] sm:$0xff]
        %v2993 = vld [vmem:[#allocation13 + $0xfe8] sm:$0xff]
        %v2994 = vld [vmem:[#allocation13 + $0xff0] sm:$0xff]
        %v2995 = vld [vmem:[#allocation13 + $0xff8] sm:$0xff]
        %v2996 = vld [vmem:[#allocation14] sm:$0xf]
        %v2998 = vlaneseq
        %v2999 = vshrl.u32 %v2998, 7
        %v3000 = vsub.s32 0, %v2999
        %v3001 = vrot.slane %v2996, %v3000
        %v3002 = vlaneseq
        %v3003 = vshrl.u32 %v3002, 7
        %v3004 = vsub.s32 1, %v3003
        %v3005 = vrot.slane %v2996, %v3004
        %v3006 = vlaneseq
        %v3007 = vshrl.u32 %v3006, 7
        %v3008 = vsub.s32 2, %v3007
        %v3009 = vrot.slane %v2996, %v3008
        %v3010 = vlaneseq
        %v3011 = vshrl.u32 %v3010, 7
        %v3012 = vsub.s32 3, %v3011
        %v3013 = vrot.slane %v2996, %v3012
        %3018 = vmatprep.subr.mxu0 %v2485
        %3019 = vmatpush1.msra.mxu0 %v2484
        %3020 = vmatprep.subr.mxu0 %v2489
        %3021 = vmatpush1.msra.mxu0 %v2488
        %3022 = vmatprep.subr.mxu0 %v2493
        %3023 = vmatpush1.msra.mxu0 %v2492
        %3024 = vmatprep.subr.mxu0 %v2497
        %3025 = vmatpush1.msra.mxu0 %v2496
        %3026 = vmatprep.subr.mxu0 %v2501
        %3027 = vmatpush1.msra.mxu0 %v2500
        %3028 = vmatprep.subr.mxu0 %v2505
        %3029 = vmatpush1.msra.mxu0 %v2504
        %3030 = vmatprep.subr.mxu0 %v2509
        %3031 = vmatpush1.msra.mxu0 %v2508
        %3032 = vmatprep.subr.mxu0 %v2513
        %3033 = vmatpush1.msra.mxu0 %v2512
        %3034 = vmatprep.subr.mxu0 %v2517
        %3035 = vmatpush1.msra.mxu0 %v2516
        %3036 = vmatprep.subr.mxu0 %v2521
        %3037 = vmatpush1.msra.mxu0 %v2520
        %3038 = vmatprep.subr.mxu0 %v2525
        %3039 = vmatpush1.msra.mxu0 %v2524
        %3040 = vmatprep.subr.mxu0 %v2529
        %3041 = vmatpush1.msra.mxu0 %v2528
        %3042 = vmatprep.subr.mxu0 %v2533
        %3043 = vmatpush1.msra.mxu0 %v2532
        %3044 = vmatprep.subr.mxu0 %v2537
        %3045 = vmatpush1.msra.mxu0 %v2536
        %3046 = vmatprep.subr.mxu0 %v2541
        %3047 = vmatpush1.msra.mxu0 %v2540
        %3048 = vmatprep.subr.mxu0 %v2545
        %3049 = vmatpush1.msra.mxu0 %v2544
        %3050 = vmatprep.subr.mxu0 %v2549
        %3051 = vmatpush1.msra.mxu0 %v2548
        %3052 = vmatprep.subr.mxu0 %v2553
        %3053 = vmatpush1.msra.mxu0 %v2552
        %3054 = vmatprep.subr.mxu0 %v2557
        %3055 = vmatpush1.msra.mxu0 %v2556
        %3056 = vmatprep.subr.mxu0 %v2561
        %3057 = vmatpush1.msra.mxu0 %v2560
        %3058 = vmatprep.subr.mxu0 %v2565
        %3059 = vmatpush1.msra.mxu0 %v2564
        %3060 = vmatprep.subr.mxu0 %v2569
        %3061 = vmatpush1.msra.mxu0 %v2568
        %3062 = vmatprep.subr.mxu0 %v2573
        %3063 = vmatpush1.msra.mxu0 %v2572
        %3064 = vmatprep.subr.mxu0 %v2577
        %3065 = vmatpush1.msra.mxu0 %v2576
        %3066 = vmatprep.subr.mxu0 %v2581
        %3067 = vmatpush1.msra.mxu0 %v2580
        %3068 = vmatprep.subr.mxu0 %v2585
        %3069 = vmatpush1.msra.mxu0 %v2584
        %3070 = vmatprep.subr.mxu0 %v2589
        %3071 = vmatpush1.msra.mxu0 %v2588
        %3072 = vmatprep.subr.mxu0 %v2593
        %3073 = vmatpush1.msra.mxu0 %v2592
        %3074 = vmatprep.subr.mxu0 %v2597
        %3075 = vmatpush1.msra.mxu0 %v2596
        %3076 = vmatprep.subr.mxu0 %v2601
        %3077 = vmatpush1.msra.mxu0 %v2600
        %3078 = vmatprep.subr.mxu0 %v2605
        %3079 = vmatpush1.msra.mxu0 %v2604
        %3080 = vmatprep.subr.mxu0 %v2609
        %3081 = vmatpush1.msra.mxu0 %v2608
        %3082 = vmatprep.mubr.f32.mxu0 %v2357
        %3083 = vmatmul.mubr.f32.gmra.mrb[0].mxu0 %v2336
        %v3084 = vpop.f32.mrb[0].mxu0
        %v3085 = vadd.f32 %v3001, %v3084
        %v3086 = vpop.f32.mrb[0].mxu0
        %v3087 = vadd.f32 %v3005, %v3086
        %3088 = vdwg.mxu0
        %3089 = vmatprep.subr.mxu0 %v2613
        %3090 = vmatpush1.msra.mxu0 %v2612
        %3091 = vmatprep.subr.mxu0 %v2617
        %3092 = vmatpush1.msra.mxu0 %v2616
        %3093 = vmatprep.subr.mxu0 %v2621
        %3094 = vmatpush1.msra.mxu0 %v2620
        %3095 = vmatprep.subr.mxu0 %v2625
        %3096 = vmatpush1.msra.mxu0 %v2624
        %3097 = vmatprep.subr.mxu0 %v2629
        %3098 = vmatpush1.msra.mxu0 %v2628
        %3099 = vmatprep.subr.mxu0 %v2633
        %3100 = vmatpush1.msra.mxu0 %v2632
        %3101 = vmatprep.subr.mxu0 %v2637
        %3102 = vmatpush1.msra.mxu0 %v2636
        %3103 = vmatprep.subr.mxu0 %v2641
        %3104 = vmatpush1.msra.mxu0 %v2640
        %3105 = vmatprep.subr.mxu0 %v2645
        %3106 = vmatpush1.msra.mxu0 %v2644
        %3107 = vmatprep.subr.mxu0 %v2649
        %3108 = vmatpush1.msra.mxu0 %v2648
        %3109 = vmatprep.subr.mxu0 %v2653
        %3110 = vmatpush1.msra.mxu0 %v2652
        %3111 = vmatprep.subr.mxu0 %v2657
        %3112 = vmatpush1.msra.mxu0 %v2656
        %3113 = vmatprep.subr.mxu0 %v2661
        %3114 = vmatpush1.msra.mxu0 %v2660
        %3115 = vmatprep.subr.mxu0 %v2665
        %3116 = vmatpush1.msra.mxu0 %v2664
        %3117 = vmatprep.subr.mxu0 %v2669
        %3118 = vmatpush1.msra.mxu0 %v2668
        %3119 = vmatprep.subr.mxu0 %v2673
        %3120 = vmatpush1.msra.mxu0 %v2672
        %3121 = vmatprep.subr.mxu0 %v2677
        %3122 = vmatpush1.msra.mxu0 %v2676
        %3123 = vmatprep.subr.mxu0 %v2681
        %3124 = vmatpush1.msra.mxu0 %v2680
        %3125 = vmatprep.subr.mxu0 %v2685
        %3126 = vmatpush1.msra.mxu0 %v2684
        %3127 = vmatprep.subr.mxu0 %v2689
        %3128 = vmatpush1.msra.mxu0 %v2688
        %3129 = vmatprep.subr.mxu0 %v2693
        %3130 = vmatpush1.msra.mxu0 %v2692
        %3131 = vmatprep.subr.mxu0 %v2697
        %3132 = vmatpush1.msra.mxu0 %v2696
        %3133 = vmatprep.subr.mxu0 %v2701
        %3134 = vmatpush1.msra.mxu0 %v2700
        %3135 = vmatprep.subr.mxu0 %v2705
        %3136 = vmatpush1.msra.mxu0 %v2704
        %3137 = vmatprep.subr.mxu0 %v2709
        %3138 = vmatpush1.msra.mxu0 %v2708
        %3139 = vmatprep.subr.mxu0 %v2713
        %3140 = vmatpush1.msra.mxu0 %v2712
        %3141 = vmatprep.subr.mxu0 %v2717
        %3142 = vmatpush1.msra.mxu0 %v2716
        %3143 = vmatprep.subr.mxu0 %v2721
        %3144 = vmatpush1.msra.mxu0 %v2720
        %3145 = vmatprep.subr.mxu0 %v2725
        %3146 = vmatpush1.msra.mxu0 %v2724
        %3147 = vmatprep.subr.mxu0 %v2729
        %3148 = vmatpush1.msra.mxu0 %v2728
        %3149 = vmatprep.subr.mxu0 %v2733
        %3150 = vmatpush1.msra.mxu0 %v2732
        %3151 = vmatprep.subr.mxu0 %v2737
        %3152 = vmatpush1.msra.mxu0 %v2736
        %3153 = vmatprep.mubr.f32.mxu0 %v2399
        %3154 = vmatmul.mubr.f32.gmra.mrb[0].mxu0 %v2378
        %v3155 = vpop.f32.mrb[0].mxu0
        %v3156 = vadd.f32 %v3085, %v3155
        %v3157 = vpop.f32.mrb[0].mxu0
        %v3158 = vadd.f32 %v3087, %v3157
        %3159 = vdwg.mxu0
        %3160 = vmatprep.subr.mxu0 %v2741
        %3161 = vmatpush1.msra.mxu0 %v2740
        %3162 = vmatprep.subr.mxu0 %v2745
        %3163 = vmatpush1.msra.mxu0 %v2744
        %3164 = vmatprep.subr.mxu0 %v2749
        %3165 = vmatpush1.msra.mxu0 %v2748
        %3166 = vmatprep.subr.mxu0 %v2753
        %3167 = vmatpush1.msra.mxu0 %v2752
        %3168 = vmatprep.subr.mxu0 %v2757
        %3169 = vmatpush1.msra.mxu0 %v2756
        %3170 = vmatprep.subr.mxu0 %v2761
        %3171 = vmatpush1.msra.mxu0 %v2760
        %3172 = vmatprep.subr.mxu0 %v2765
        %3173 = vmatpush1.msra.mxu0 %v2764
        %3174 = vmatprep.subr.mxu0 %v2769
        %3175 = vmatpush1.msra.mxu0 %v2768
        %3176 = vmatprep.subr.mxu0 %v2773
        %3177 = vmatpush1.msra.mxu0 %v2772
        %3178 = vmatprep.subr.mxu0 %v2777
        %3179 = vmatpush1.msra.mxu0 %v2776
        %3180 = vmatprep.subr.mxu0 %v2781
        %3181 = vmatpush1.msra.mxu0 %v2780
        %3182 = vmatprep.subr.mxu0 %v2785
        %3183 = vmatpush1.msra.mxu0 %v2784
        %3184 = vmatprep.subr.mxu0 %v2789
        %3185 = vmatpush1.msra.mxu0 %v2788
        %3186 = vmatprep.subr.mxu0 %v2793
        %3187 = vmatpush1.msra.mxu0 %v2792
        %3188 = vmatprep.subr.mxu0 %v2797
        %3189 = vmatpush1.msra.mxu0 %v2796
        %3190 = vmatprep.subr.mxu0 %v2801
        %3191 = vmatpush1.msra.mxu0 %v2800
        %3192 = vmatprep.subr.mxu0 %v2805
        %3193 = vmatpush1.msra.mxu0 %v2804
        %3194 = vmatprep.subr.mxu0 %v2809
        %3195 = vmatpush1.msra.mxu0 %v2808
        %3196 = vmatprep.subr.mxu0 %v2813
        %3197 = vmatpush1.msra.mxu0 %v2812
        %3198 = vmatprep.subr.mxu0 %v2817
        %3199 = vmatpush1.msra.mxu0 %v2816
        %3200 = vmatprep.subr.mxu0 %v2821
        %3201 = vmatpush1.msra.mxu0 %v2820
        %3202 = vmatprep.subr.mxu0 %v2825
        %3203 = vmatpush1.msra.mxu0 %v2824
        %3204 = vmatprep.subr.mxu0 %v2829
        %3205 = vmatpush1.msra.mxu0 %v2828
        %3206 = vmatprep.subr.mxu0 %v2833
        %3207 = vmatpush1.msra.mxu0 %v2832
        %3208 = vmatprep.subr.mxu0 %v2837
        %3209 = vmatpush1.msra.mxu0 %v2836
        %3210 = vmatprep.subr.mxu0 %v2841
        %3211 = vmatpush1.msra.mxu0 %v2840
        %3212 = vmatprep.subr.mxu0 %v2845
        %3213 = vmatpush1.msra.mxu0 %v2844
        %3214 = vmatprep.subr.mxu0 %v2849
        %3215 = vmatpush1.msra.mxu0 %v2848
        %3216 = vmatprep.subr.mxu0 %v2853
        %3217 = vmatpush1.msra.mxu0 %v2852
        %3218 = vmatprep.subr.mxu0 %v2857
        %3219 = vmatpush1.msra.mxu0 %v2856
        %3220 = vmatprep.subr.mxu0 %v2861
        %3221 = vmatpush1.msra.mxu0 %v2860
        %3222 = vmatprep.subr.mxu0 %v2865
        %3223 = vmatpush1.msra.mxu0 %v2864
        %3224 = vmatprep.mubr.f32.mxu0 %v2441
        %3225 = vmatmul.mubr.f32.gmra.mrb[0].mxu0 %v2420
        %v3226 = vpop.f32.mrb[0].mxu0
        %v3227 = vadd.f32 %v3156, %v3226
        %v3228 = vpop.f32.mrb[0].mxu0
        %v3229 = vadd.f32 %v3158, %v3228
        %3230 = vdwg.mxu0
        %3231 = vmatprep.subr.mxu0 %v2869
        %3232 = vmatpush1.msra.mxu0 %v2868
        %3233 = vmatprep.subr.mxu0 %v2873
        %3234 = vmatpush1.msra.mxu0 %v2872
        %3235 = vmatprep.subr.mxu0 %v2877
        %3236 = vmatpush1.msra.mxu0 %v2876
        %3237 = vmatprep.subr.mxu0 %v2881
        %3238 = vmatpush1.msra.mxu0 %v2880
        %3239 = vmatprep.subr.mxu0 %v2885
        %3240 = vmatpush1.msra.mxu0 %v2884
        %3241 = vmatprep.subr.mxu0 %v2889
        %3242 = vmatpush1.msra.mxu0 %v2888
        %3243 = vmatprep.subr.mxu0 %v2893
        %3244 = vmatpush1.msra.mxu0 %v2892
        %3245 = vmatprep.subr.mxu0 %v2897
        %3246 = vmatpush1.msra.mxu0 %v2896
        %3247 = vmatprep.subr.mxu0 %v2901
        %3248 = vmatpush1.msra.mxu0 %v2900
        %3249 = vmatprep.subr.mxu0 %v2905
        %3250 = vmatpush1.msra.mxu0 %v2904
        %3251 = vmatprep.subr.mxu0 %v2909
        %3252 = vmatpush1.msra.mxu0 %v2908
        %3253 = vmatprep.subr.mxu0 %v2913
        %3254 = vmatpush1.msra.mxu0 %v2912
        %3255 = vmatprep.subr.mxu0 %v2917
        %3256 = vmatpush1.msra.mxu0 %v2916
        %3257 = vmatprep.subr.mxu0 %v2921
        %3258 = vmatpush1.msra.mxu0 %v2920
        %3259 = vmatprep.subr.mxu0 %v2925
        %3260 = vmatpush1.msra.mxu0 %v2924
        %3261 = vmatprep.subr.mxu0 %v2929
        %3262 = vmatpush1.msra.mxu0 %v2928
        %3263 = vmatprep.subr.mxu0 %v2933
        %3264 = vmatpush1.msra.mxu0 %v2932
        %3265 = vmatprep.subr.mxu0 %v2937
        %3266 = vmatpush1.msra.mxu0 %v2936
        %3267 = vmatprep.subr.mxu0 %v2941
        %3268 = vmatpush1.msra.mxu0 %v2940
        %3269 = vmatprep.subr.mxu0 %v2945
        %3270 = vmatpush1.msra.mxu0 %v2944
        %3271 = vmatprep.subr.mxu0 %v2949
        %3272 = vmatpush1.msra.mxu0 %v2948
        %3273 = vmatprep.subr.mxu0 %v2953
        %3274 = vmatpush1.msra.mxu0 %v2952
        %3275 = vmatprep.subr.mxu0 %v2957
        %3276 = vmatpush1.msra.mxu0 %v2956
        %3277 = vmatprep.subr.mxu0 %v2961
        %3278 = vmatpush1.msra.mxu0 %v2960
        %3279 = vmatprep.subr.mxu0 %v2965
        %3280 = vmatpush1.msra.mxu0 %v2964
        %3281 = vmatprep.subr.mxu0 %v2969
        %3282 = vmatpush1.msra.mxu0 %v2968
        %3283 = vmatprep.subr.mxu0 %v2973
        %3284 = vmatpush1.msra.mxu0 %v2972
        %3285 = vmatprep.subr.mxu0 %v2977
        %3286 = vmatpush1.msra.mxu0 %v2976
        %3287 = vmatprep.subr.mxu0 %v2981
        %3288 = vmatpush1.msra.mxu0 %v2980
        %3289 = vmatprep.subr.mxu0 %v2985
        %3290 = vmatpush1.msra.mxu0 %v2984
        %3291 = vmatprep.subr.mxu0 %v2989
        %3292 = vmatpush1.msra.mxu0 %v2988
        %3293 = vmatprep.subr.mxu0 %v2993
        %3294 = vmatpush1.msra.mxu0 %v2992
        %3295 = vmatprep.mubr.f32.mxu0 %v2483
        %3296 = vmatmul.mubr.f32.gmra.mrb[0].mxu0 %v2462
        %v3297 = vpop.f32.mrb[0].mxu0
        %v3298 = vadd.f32 %v3227, %v3297
        %v3299 = vpop.f32.mrb[0].mxu0
        %v3300 = vadd.f32 %v3229, %v3299
        %3301 = vdwg.mxu0
        %3302 = vmatprep.subr.mxu0 %v2487
        %3303 = vmatpush1.msra.mxu0 %v2486
        %3304 = vmatprep.subr.mxu0 %v2491
        %3305 = vmatpush1.msra.mxu0 %v2490
        %3306 = vmatprep.subr.mxu0 %v2495
        %3307 = vmatpush1.msra.mxu0 %v2494
        %3308 = vmatprep.subr.mxu0 %v2499
        %3309 = vmatpush1.msra.mxu0 %v2498
        %3310 = vmatprep.subr.mxu0 %v2503
        %3311 = vmatpush1.msra.mxu0 %v2502
        %3312 = vmatprep.subr.mxu0 %v2507
        %3313 = vmatpush1.msra.mxu0 %v2506
        %3314 = vmatprep.subr.mxu0 %v2511
        %3315 = vmatpush1.msra.mxu0 %v2510
        %3316 = vmatprep.subr.mxu0 %v2515
        %3317 = vmatpush1.msra.mxu0 %v2514
        %3318 = vmatprep.subr.mxu0 %v2519
        %3319 = vmatpush1.msra.mxu0 %v2518
        %3320 = vmatprep.subr.mxu0 %v2523
        %3321 = vmatpush1.msra.mxu0 %v2522
        %3322 = vmatprep.subr.mxu0 %v2527
        %3323 = vmatpush1.msra.mxu0 %v2526
        %3324 = vmatprep.subr.mxu0 %v2531
        %3325 = vmatpush1.msra.mxu0 %v2530
        %3326 = vmatprep.subr.mxu0 %v2535
        %3327 = vmatpush1.msra.mxu0 %v2534
        %3328 = vmatprep.subr.mxu0 %v2539
        %3329 = vmatpush1.msra.mxu0 %v2538
        %3330 = vmatprep.subr.mxu0 %v2543
        %3331 = vmatpush1.msra.mxu0 %v2542
        %3332 = vmatprep.subr.mxu0 %v2547
        %3333 = vmatpush1.msra.mxu0 %v2546
        %3334 = vmatprep.subr.mxu0 %v2551
        %3335 = vmatpush1.msra.mxu0 %v2550
        %3336 = vmatprep.subr.mxu0 %v2555
        %3337 = vmatpush1.msra.mxu0 %v2554
        %3338 = vmatprep.subr.mxu0 %v2559
        %3339 = vmatpush1.msra.mxu0 %v2558
        %3340 = vmatprep.subr.mxu0 %v2563
        %3341 = vmatpush1.msra.mxu0 %v2562
        %3342 = vmatprep.subr.mxu0 %v2567
        %3343 = vmatpush1.msra.mxu0 %v2566
        %3344 = vmatprep.subr.mxu0 %v2571
        %3345 = vmatpush1.msra.mxu0 %v2570
        %3346 = vmatprep.subr.mxu0 %v2575
        %3347 = vmatpush1.msra.mxu0 %v2574
        %3348 = vmatprep.subr.mxu0 %v2579
        %3349 = vmatpush1.msra.mxu0 %v2578
        %3350 = vmatprep.subr.mxu0 %v2583
        %3351 = vmatpush1.msra.mxu0 %v2582
        %3352 = vmatprep.subr.mxu0 %v2587
        %3353 = vmatpush1.msra.mxu0 %v2586
        %3354 = vmatprep.subr.mxu0 %v2591
        %3355 = vmatpush1.msra.mxu0 %v2590
        %3356 = vmatprep.subr.mxu0 %v2595
        %3357 = vmatpush1.msra.mxu0 %v2594
        %3358 = vmatprep.subr.mxu0 %v2599
        %3359 = vmatpush1.msra.mxu0 %v2598
        %3360 = vmatprep.subr.mxu0 %v2603
        %3361 = vmatpush1.msra.mxu0 %v2602
        %3362 = vmatprep.subr.mxu0 %v2607
        %3363 = vmatpush1.msra.mxu0 %v2606
        %3364 = vmatprep.subr.mxu0 %v2611
        %3365 = vmatpush1.msra.mxu0 %v2610
        %3366 = vmatprep.mubr.f32.mxu0 %v2357
        %3367 = vmatmul.mubr.f32.gmra.mrb[0].mxu0 %v2336
        %v3368 = vpop.f32.mrb[0].mxu0
        %v3369 = vadd.f32 %v3009, %v3368
        %v3370 = vpop.f32.mrb[0].mxu0
        %v3371 = vadd.f32 %v3013, %v3370
        %3372 = vdwg.mxu0
        %3373 = vmatprep.subr.mxu0 %v2615
        %3374 = vmatpush1.msra.mxu0 %v2614
        %3375 = vmatprep.subr.mxu0 %v2619
        %3376 = vmatpush1.msra.mxu0 %v2618
        %3377 = vmatprep.subr.mxu0 %v2623
        %3378 = vmatpush1.msra.mxu0 %v2622
        %3379 = vmatprep.subr.mxu0 %v2627
        %3380 = vmatpush1.msra.mxu0 %v2626
        %3381 = vmatprep.subr.mxu0 %v2631
        %3382 = vmatpush1.msra.mxu0 %v2630
        %3383 = vmatprep.subr.mxu0 %v2635
        %3384 = vmatpush1.msra.mxu0 %v2634
        %3385 = vmatprep.subr.mxu0 %v2639
        %3386 = vmatpush1.msra.mxu0 %v2638
        %3387 = vmatprep.subr.mxu0 %v2643
        %3388 = vmatpush1.msra.mxu0 %v2642
        %3389 = vmatprep.subr.mxu0 %v2647
        %3390 = vmatpush1.msra.mxu0 %v2646
        %3391 = vmatprep.subr.mxu0 %v2651
        %3392 = vmatpush1.msra.mxu0 %v2650
        %3393 = vmatprep.subr.mxu0 %v2655
        %3394 = vmatpush1.msra.mxu0 %v2654
        %3395 = vmatprep.subr.mxu0 %v2659
        %3396 = vmatpush1.msra.mxu0 %v2658
        %3397 = vmatprep.subr.mxu0 %v2663
        %3398 = vmatpush1.msra.mxu0 %v2662
        %3399 = vmatprep.subr.mxu0 %v2667
        %3400 = vmatpush1.msra.mxu0 %v2666
        %3401 = vmatprep.subr.mxu0 %v2671
        %3402 = vmatpush1.msra.mxu0 %v2670
        %3403 = vmatprep.subr.mxu0 %v2675
        %3404 = vmatpush1.msra.mxu0 %v2674
        %3405 = vmatprep.subr.mxu0 %v2679
        %3406 = vmatpush1.msra.mxu0 %v2678
        %3407 = vmatprep.subr.mxu0 %v2683
        %3408 = vmatpush1.msra.mxu0 %v2682
        %3409 = vmatprep.subr.mxu0 %v2687
        %3410 = vmatpush1.msra.mxu0 %v2686
        %3411 = vmatprep.subr.mxu0 %v2691
        %3412 = vmatpush1.msra.mxu0 %v2690
        %3413 = vmatprep.subr.mxu0 %v2695
        %3414 = vmatpush1.msra.mxu0 %v2694
        %3415 = vmatprep.subr.mxu0 %v2699
        %3416 = vmatpush1.msra.mxu0 %v2698
        %3417 = vmatprep.subr.mxu0 %v2703
        %3418 = vmatpush1.msra.mxu0 %v2702
        %3419 = vmatprep.subr.mxu0 %v2707
        %3420 = vmatpush1.msra.mxu0 %v2706
        %3421 = vmatprep.subr.mxu0 %v2711
        %3422 = vmatpush1.msra.mxu0 %v2710
        %3423 = vmatprep.subr.mxu0 %v2715
        %3424 = vmatpush1.msra.mxu0 %v2714
        %3425 = vmatprep.subr.mxu0 %v2719
        %3426 = vmatpush1.msra.mxu0 %v2718
        %3427 = vmatprep.subr.mxu0 %v2723
        %3428 = vmatpush1.msra.mxu0 %v2722
        %3429 = vmatprep.subr.mxu0 %v2727
        %3430 = vmatpush1.msra.mxu0 %v2726
        %3431 = vmatprep.subr.mxu0 %v2731
        %3432 = vmatpush1.msra.mxu0 %v2730
        %3433 = vmatprep.subr.mxu0 %v2735
        %3434 = vmatpush1.msra.mxu0 %v2734
        %3435 = vmatprep.subr.mxu0 %v2739
        %3436 = vmatpush1.msra.mxu0 %v2738
        %3437 = vmatprep.mubr.f32.mxu0 %v2399
        %3438 = vmatmul.mubr.f32.gmra.mrb[0].mxu0 %v2378
        %v3439 = vpop.f32.mrb[0].mxu0
        %v3440 = vadd.f32 %v3369, %v3439
        %v3441 = vpop.f32.mrb[0].mxu0
        %v3442 = vadd.f32 %v3371, %v3441
        %3443 = vdwg.mxu0
        %3444 = vmatprep.subr.mxu0 %v2743
        %3445 = vmatpush1.msra.mxu0 %v2742
        %3446 = vmatprep.subr.mxu0 %v2747
        %3447 = vmatpush1.msra.mxu0 %v2746
        %3448 = vmatprep.subr.mxu0 %v2751
        %3449 = vmatpush1.msra.mxu0 %v2750
        %3450 = vmatprep.subr.mxu0 %v2755
        %3451 = vmatpush1.msra.mxu0 %v2754
        %3452 = vmatprep.subr.mxu0 %v2759
        %3453 = vmatpush1.msra.mxu0 %v2758
        %3454 = vmatprep.subr.mxu0 %v2763
        %3455 = vmatpush1.msra.mxu0 %v2762
        %3456 = vmatprep.subr.mxu0 %v2767
        %3457 = vmatpush1.msra.mxu0 %v2766
        %3458 = vmatprep.subr.mxu0 %v2771
        %3459 = vmatpush1.msra.mxu0 %v2770
        %3460 = vmatprep.subr.mxu0 %v2775
        %3461 = vmatpush1.msra.mxu0 %v2774
        %3462 = vmatprep.subr.mxu0 %v2779
        %3463 = vmatpush1.msra.mxu0 %v2778
        %3464 = vmatprep.subr.mxu0 %v2783
        %3465 = vmatpush1.msra.mxu0 %v2782
        %3466 = vmatprep.subr.mxu0 %v2787
        %3467 = vmatpush1.msra.mxu0 %v2786
        %3468 = vmatprep.subr.mxu0 %v2791
        %3469 = vmatpush1.msra.mxu0 %v2790
        %3470 = vmatprep.subr.mxu0 %v2795
        %3471 = vmatpush1.msra.mxu0 %v2794
        %3472 = vmatprep.subr.mxu0 %v2799
        %3473 = vmatpush1.msra.mxu0 %v2798
        %3474 = vmatprep.subr.mxu0 %v2803
        %3475 = vmatpush1.msra.mxu0 %v2802
        %3476 = vmatprep.subr.mxu0 %v2807
        %3477 = vmatpush1.msra.mxu0 %v2806
        %3478 = vmatprep.subr.mxu0 %v2811
        %3479 = vmatpush1.msra.mxu0 %v2810
        %3480 = vmatprep.subr.mxu0 %v2815
        %3481 = vmatpush1.msra.mxu0 %v2814
        %3482 = vmatprep.subr.mxu0 %v2819
        %3483 = vmatpush1.msra.mxu0 %v2818
        %3484 = vmatprep.subr.mxu0 %v2823
        %3485 = vmatpush1.msra.mxu0 %v2822
        %3486 = vmatprep.subr.mxu0 %v2827
        %3487 = vmatpush1.msra.mxu0 %v2826
        %3488 = vmatprep.subr.mxu0 %v2831
        %3489 = vmatpush1.msra.mxu0 %v2830
        %3490 = vmatprep.subr.mxu0 %v2835
        %3491 = vmatpush1.msra.mxu0 %v2834
        %3492 = vmatprep.subr.mxu0 %v2839
        %3493 = vmatpush1.msra.mxu0 %v2838
        %3494 = vmatprep.subr.mxu0 %v2843
        %3495 = vmatpush1.msra.mxu0 %v2842
        %3496 = vmatprep.subr.mxu0 %v2847
        %3497 = vmatpush1.msra.mxu0 %v2846
        %3498 = vmatprep.subr.mxu0 %v2851
        %3499 = vmatpush1.msra.mxu0 %v2850
        %3500 = vmatprep.subr.mxu0 %v2855
        %3501 = vmatpush1.msra.mxu0 %v2854
        %3502 = vmatprep.subr.mxu0 %v2859
        %3503 = vmatpush1.msra.mxu0 %v2858
        %3504 = vmatprep.subr.mxu0 %v2863
        %3505 = vmatpush1.msra.mxu0 %v2862
        %3506 = vmatprep.subr.mxu0 %v2867
        %3507 = vmatpush1.msra.mxu0 %v2866
        %3508 = vmatprep.mubr.f32.mxu0 %v2441
        %3509 = vmatmul.mubr.f32.gmra.mrb[0].mxu0 %v2420
        %v3510 = vpop.f32.mrb[0].mxu0
        %v3511 = vadd.f32 %v3440, %v3510
        %v3512 = vpop.f32.mrb[0].mxu0
        %v3513 = vadd.f32 %v3442, %v3512
        %3514 = vdwg.mxu0
        %3515 = vmatprep.subr.mxu0 %v2871
        %3516 = vmatpush1.msra.mxu0 %v2870
        %3517 = vmatprep.subr.mxu0 %v2875
        %3518 = vmatpush1.msra.mxu0 %v2874
        %3519 = vmatprep.subr.mxu0 %v2879
        %3520 = vmatpush1.msra.mxu0 %v2878
        %3521 = vmatprep.subr.mxu0 %v2883
        %3522 = vmatpush1.msra.mxu0 %v2882
        %3523 = vmatprep.subr.mxu0 %v2887
        %3524 = vmatpush1.msra.mxu0 %v2886
        %3525 = vmatprep.subr.mxu0 %v2891
        %3526 = vmatpush1.msra.mxu0 %v2890
        %3527 = vmatprep.subr.mxu0 %v2895
        %3528 = vmatpush1.msra.mxu0 %v2894
        %3529 = vmatprep.subr.mxu0 %v2899
        %3530 = vmatpush1.msra.mxu0 %v2898
        %3531 = vmatprep.subr.mxu0 %v2903
        %3532 = vmatpush1.msra.mxu0 %v2902
        %3533 = vmatprep.subr.mxu0 %v2907
        %3534 = vmatpush1.msra.mxu0 %v2906
        %3535 = vmatprep.subr.mxu0 %v2911
        %3536 = vmatpush1.msra.mxu0 %v2910
        %3537 = vmatprep.subr.mxu0 %v2915
        %3538 = vmatpush1.msra.mxu0 %v2914
        %3539 = vmatprep.subr.mxu0 %v2919
        %3540 = vmatpush1.msra.mxu0 %v2918
        %3541 = vmatprep.subr.mxu0 %v2923
        %3542 = vmatpush1.msra.mxu0 %v2922
        %3543 = vmatprep.subr.mxu0 %v2927
        %3544 = vmatpush1.msra.mxu0 %v2926
        %3545 = vmatprep.subr.mxu0 %v2931
        %3546 = vmatpush1.msra.mxu0 %v2930
        %3547 = vmatprep.subr.mxu0 %v2935
        %3548 = vmatpush1.msra.mxu0 %v2934
        %3549 = vmatprep.subr.mxu0 %v2939
        %3550 = vmatpush1.msra.mxu0 %v2938
        %3551 = vmatprep.subr.mxu0 %v2943
        %3552 = vmatpush1.msra.mxu0 %v2942
        %3553 = vmatprep.subr.mxu0 %v2947
        %3554 = vmatpush1.msra.mxu0 %v2946
        %3555 = vmatprep.subr.mxu0 %v2951
        %3556 = vmatpush1.msra.mxu0 %v2950
        %3557 = vmatprep.subr.mxu0 %v2955
        %3558 = vmatpush1.msra.mxu0 %v2954
        %3559 = vmatprep.subr.mxu0 %v2959
        %3560 = vmatpush1.msra.mxu0 %v2958
        %3561 = vmatprep.subr.mxu0 %v2963
        %3562 = vmatpush1.msra.mxu0 %v2962
        %3563 = vmatprep.subr.mxu0 %v2967
        %3564 = vmatpush1.msra.mxu0 %v2966
        %3565 = vmatprep.subr.mxu0 %v2971
        %3566 = vmatpush1.msra.mxu0 %v2970
        %3567 = vmatprep.subr.mxu0 %v2975
        %3568 = vmatpush1.msra.mxu0 %v2974
        %3569 = vmatprep.subr.mxu0 %v2979
        %3570 = vmatpush1.msra.mxu0 %v2978
        %3571 = vmatprep.subr.mxu0 %v2983
        %3572 = vmatpush1.msra.mxu0 %v2982
        %3573 = vmatprep.subr.mxu0 %v2987
        %3574 = vmatpush1.msra.mxu0 %v2986
        %3575 = vmatprep.subr.mxu0 %v2991
        %3576 = vmatpush1.msra.mxu0 %v2990
        %3577 = vmatprep.subr.mxu0 %v2995
        %3578 = vmatpush1.msra.mxu0 %v2994
        %3579 = vmatprep.mubr.f32.mxu0 %v2483
        %3580 = vmatmul.mubr.f32.gmra.mrb[0].mxu0 %v2462
        %v3581 = vpop.f32.mrb[0].mxu0
        %v3582 = vadd.f32 %v3511, %v3581
        %v3583 = vpop.f32.mrb[0].mxu0
        %v3584 = vadd.f32 %v3513, %v3583
        %3585 = vdwg.mxu0
        %v3586 = vmax.f32 %v3298, 0.0
        %v3587 = vmax.f32 %v3300, 0.0
        %v3588 = vmax.f32 %v3582, 0.0
        %v3589 = vmax.f32 %v3584, 0.0
        %v3590 = vld [vmem:[#allocation16] sm:$0xff]
        %v3591 = vld [vmem:[#allocation16 + $0x8] sm:$0xff]
        %v3592 = vld [vmem:[#allocation16 + $0x10] sm:$0xff]
        %v3593 = vld [vmem:[#allocation16 + $0x18] sm:$0xff]
        %v3594 = vld [vmem:[#allocation16 + $0x20] sm:$0xff]
        %v3595 = vld [vmem:[#allocation16 + $0x28] sm:$0xff]
        %v3596 = vld [vmem:[#allocation16 + $0x30] sm:$0xff]
        %v3597 = vld [vmem:[#allocation16 + $0x38] sm:$0xff]
        %v3598 = vld [vmem:[#allocation16 + $0x40] sm:$0xff]
        %v3599 = vld [vmem:[#allocation16 + $0x48] sm:$0xff]
        %v3600 = vld [vmem:[#allocation16 + $0x50] sm:$0xff]
        %v3601 = vld [vmem:[#allocation16 + $0x58] sm:$0xff]
        %v3602 = vld [vmem:[#allocation16 + $0x60] sm:$0xff]
        %v3603 = vld [vmem:[#allocation16 + $0x68] sm:$0xff]
        %v3604 = vld [vmem:[#allocation16 + $0x70] sm:$0xff]
        %v3605 = vld [vmem:[#allocation16 + $0x78] sm:$0xff]
        %v3606 = vld [vmem:[#allocation16 + $0x80] sm:$0xff]
        %v3607 = vld [vmem:[#allocation16 + $0x88] sm:$0xff]
        %v3608 = vld [vmem:[#allocation16 + $0x90] sm:$0xff]
        %v3609 = vld [vmem:[#allocation16 + $0x98] sm:$0xff]
        %v3610 = vld [vmem:[#allocation16 + $0xa0] sm:$0xff]
        %v3611 = vld [vmem:[#allocation16 + $0xa8] sm:$0xff]
        %v3612 = vld [vmem:[#allocation16 + $0xb0] sm:$0xff]
        %v3613 = vld [vmem:[#allocation16 + $0xb8] sm:$0xff]
        %v3614 = vld [vmem:[#allocation16 + $0xc0] sm:$0xff]
        %v3615 = vld [vmem:[#allocation16 + $0xc8] sm:$0xff]
        %v3616 = vld [vmem:[#allocation16 + $0xd0] sm:$0xff]
        %v3617 = vld [vmem:[#allocation16 + $0xd8] sm:$0xff]
        %v3618 = vld [vmem:[#allocation16 + $0xe0] sm:$0xff]
        %v3619 = vld [vmem:[#allocation16 + $0xe8] sm:$0xff]
        %v3620 = vld [vmem:[#allocation16 + $0xf0] sm:$0xff]
        %v3621 = vld [vmem:[#allocation16 + $0xf8] sm:$0xff]
        %v3622 = vld [vmem:[#allocation16 + $0x100] sm:$0xff]
        %v3623 = vld [vmem:[#allocation16 + $0x108] sm:$0xff]
        %v3624 = vld [vmem:[#allocation16 + $0x110] sm:$0xff]
        %v3625 = vld [vmem:[#allocation16 + $0x118] sm:$0xff]
        %v3626 = vld [vmem:[#allocation16 + $0x120] sm:$0xff]
        %v3627 = vld [vmem:[#allocation16 + $0x128] sm:$0xff]
        %v3628 = vld [vmem:[#allocation16 + $0x130] sm:$0xff]
        %v3629 = vld [vmem:[#allocation16 + $0x138] sm:$0xff]
        %v3630 = vld [vmem:[#allocation16 + $0x140] sm:$0xff]
        %v3631 = vld [vmem:[#allocation16 + $0x148] sm:$0xff]
        %v3632 = vld [vmem:[#allocation16 + $0x150] sm:$0xff]
        %v3633 = vld [vmem:[#allocation16 + $0x158] sm:$0xff]
        %v3634 = vld [vmem:[#allocation16 + $0x160] sm:$0xff]
        %v3635 = vld [vmem:[#allocation16 + $0x168] sm:$0xff]
        %v3636 = vld [vmem:[#allocation16 + $0x170] sm:$0xff]
        %v3637 = vld [vmem:[#allocation16 + $0x178] sm:$0xff]
        %v3638 = vld [vmem:[#allocation16 + $0x180] sm:$0xff]
        %v3639 = vld [vmem:[#allocation16 + $0x188] sm:$0xff]
        %v3640 = vld [vmem:[#allocation16 + $0x190] sm:$0xff]
        %v3641 = vld [vmem:[#allocation16 + $0x198] sm:$0xff]
        %v3642 = vld [vmem:[#allocation16 + $0x1a0] sm:$0xff]
        %v3643 = vld [vmem:[#allocation16 + $0x1a8] sm:$0xff]
        %v3644 = vld [vmem:[#allocation16 + $0x1b0] sm:$0xff]
        %v3645 = vld [vmem:[#allocation16 + $0x1b8] sm:$0xff]
        %v3646 = vld [vmem:[#allocation16 + $0x1c0] sm:$0xff]
        %v3647 = vld [vmem:[#allocation16 + $0x1c8] sm:$0xff]
        %v3648 = vld [vmem:[#allocation16 + $0x1d0] sm:$0xff]
        %v3649 = vld [vmem:[#allocation16 + $0x1d8] sm:$0xff]
        %v3650 = vld [vmem:[#allocation16 + $0x1e0] sm:$0xff]
        %v3651 = vld [vmem:[#allocation16 + $0x1e8] sm:$0xff]
        %v3652 = vld [vmem:[#allocation16 + $0x1f0] sm:$0xff]
        %v3653 = vld [vmem:[#allocation16 + $0x1f8] sm:$0xff]
        %v3654 = vld [vmem:[#allocation16 + $0x200] sm:$0xff]
        %v3655 = vld [vmem:[#allocation16 + $0x208] sm:$0xff]
        %v3656 = vld [vmem:[#allocation16 + $0x210] sm:$0xff]
        %v3657 = vld [vmem:[#allocation16 + $0x218] sm:$0xff]
        %v3658 = vld [vmem:[#allocation16 + $0x220] sm:$0xff]
        %v3659 = vld [vmem:[#allocation16 + $0x228] sm:$0xff]
        %v3660 = vld [vmem:[#allocation16 + $0x230] sm:$0xff]
        %v3661 = vld [vmem:[#allocation16 + $0x238] sm:$0xff]
        %v3662 = vld [vmem:[#allocation16 + $0x240] sm:$0xff]
        %v3663 = vld [vmem:[#allocation16 + $0x248] sm:$0xff]
        %v3664 = vld [vmem:[#allocation16 + $0x250] sm:$0xff]
        %v3665 = vld [vmem:[#allocation16 + $0x258] sm:$0xff]
        %v3666 = vld [vmem:[#allocation16 + $0x260] sm:$0xff]
        %v3667 = vld [vmem:[#allocation16 + $0x268] sm:$0xff]
        %v3668 = vld [vmem:[#allocation16 + $0x270] sm:$0xff]
        %v3669 = vld [vmem:[#allocation16 + $0x278] sm:$0xff]
        %v3670 = vld [vmem:[#allocation16 + $0x280] sm:$0xff]
        %v3671 = vld [vmem:[#allocation16 + $0x288] sm:$0xff]
        %v3672 = vld [vmem:[#allocation16 + $0x290] sm:$0xff]
        %v3673 = vld [vmem:[#allocation16 + $0x298] sm:$0xff]
        %v3674 = vld [vmem:[#allocation16 + $0x2a0] sm:$0xff]
        %v3675 = vld [vmem:[#allocation16 + $0x2a8] sm:$0xff]
        %v3676 = vld [vmem:[#allocation16 + $0x2b0] sm:$0xff]
        %v3677 = vld [vmem:[#allocation16 + $0x2b8] sm:$0xff]
        %v3678 = vld [vmem:[#allocation16 + $0x2c0] sm:$0xff]
        %v3679 = vld [vmem:[#allocation16 + $0x2c8] sm:$0xff]
        %v3680 = vld [vmem:[#allocation16 + $0x2d0] sm:$0xff]
        %v3681 = vld [vmem:[#allocation16 + $0x2d8] sm:$0xff]
        %v3682 = vld [vmem:[#allocation16 + $0x2e0] sm:$0xff]
        %v3683 = vld [vmem:[#allocation16 + $0x2e8] sm:$0xff]
        %v3684 = vld [vmem:[#allocation16 + $0x2f0] sm:$0xff]
        %v3685 = vld [vmem:[#allocation16 + $0x2f8] sm:$0xff]
        %v3686 = vld [vmem:[#allocation16 + $0x300] sm:$0xff]
        %v3687 = vld [vmem:[#allocation16 + $0x308] sm:$0xff]
        %v3688 = vld [vmem:[#allocation16 + $0x310] sm:$0xff]
        %v3689 = vld [vmem:[#allocation16 + $0x318] sm:$0xff]
        %v3690 = vld [vmem:[#allocation16 + $0x320] sm:$0xff]
        %v3691 = vld [vmem:[#allocation16 + $0x328] sm:$0xff]
        %v3692 = vld [vmem:[#allocation16 + $0x330] sm:$0xff]
        %v3693 = vld [vmem:[#allocation16 + $0x338] sm:$0xff]
        %v3694 = vld [vmem:[#allocation16 + $0x340] sm:$0xff]
        %v3695 = vld [vmem:[#allocation16 + $0x348] sm:$0xff]
        %v3696 = vld [vmem:[#allocation16 + $0x350] sm:$0xff]
        %v3697 = vld [vmem:[#allocation16 + $0x358] sm:$0xff]
        %v3698 = vld [vmem:[#allocation16 + $0x360] sm:$0xff]
        %v3699 = vld [vmem:[#allocation16 + $0x368] sm:$0xff]
        %v3700 = vld [vmem:[#allocation16 + $0x370] sm:$0xff]
        %v3701 = vld [vmem:[#allocation16 + $0x378] sm:$0xff]
        %v3702 = vld [vmem:[#allocation16 + $0x380] sm:$0xff]
        %v3703 = vld [vmem:[#allocation16 + $0x388] sm:$0xff]
        %v3704 = vld [vmem:[#allocation16 + $0x390] sm:$0xff]
        %v3705 = vld [vmem:[#allocation16 + $0x398] sm:$0xff]
        %v3706 = vld [vmem:[#allocation16 + $0x3a0] sm:$0xff]
        %v3707 = vld [vmem:[#allocation16 + $0x3a8] sm:$0xff]
        %v3708 = vld [vmem:[#allocation16 + $0x3b0] sm:$0xff]
        %v3709 = vld [vmem:[#allocation16 + $0x3b8] sm:$0xff]
        %v3710 = vld [vmem:[#allocation16 + $0x3c0] sm:$0xff]
        %v3711 = vld [vmem:[#allocation16 + $0x3c8] sm:$0xff]
        %v3712 = vld [vmem:[#allocation16 + $0x3d0] sm:$0xff]
        %v3713 = vld [vmem:[#allocation16 + $0x3d8] sm:$0xff]
        %v3714 = vld [vmem:[#allocation16 + $0x3e0] sm:$0xff]
        %v3715 = vld [vmem:[#allocation16 + $0x3e8] sm:$0xff]
        %v3716 = vld [vmem:[#allocation16 + $0x3f0] sm:$0xff]
        %v3717 = vld [vmem:[#allocation16 + $0x3f8] sm:$0xff]
        %v3718 = vld [vmem:[#allocation17] sm:$0x3]
        %v3720 = vlaneseq
        %v3721 = vshrl.u32 %v3720, 7
        %v3722 = vsub.s32 0, %v3721
        %v3723 = vrot.slane %v3718, %v3722
        %v3724 = vlaneseq
        %v3725 = vshrl.u32 %v3724, 7
        %v3726 = vsub.s32 1, %v3725
        %v3727 = vrot.slane %v3718, %v3726
        %3730 = vmatprep.subr.mxu0 %v3591
        %3731 = vmatpush1.msra.mxu0 %v3590
        %3732 = vmatprep.subr.mxu0 %v3593
        %3733 = vmatpush1.msra.mxu0 %v3592
        %3734 = vmatprep.subr.mxu0 %v3595
        %3735 = vmatpush1.msra.mxu0 %v3594
        %3736 = vmatprep.subr.mxu0 %v3597
        %3737 = vmatpush1.msra.mxu0 %v3596
        %3738 = vmatprep.subr.mxu0 %v3599
        %3739 = vmatpush1.msra.mxu0 %v3598
        %3740 = vmatprep.subr.mxu0 %v3601
        %3741 = vmatpush1.msra.mxu0 %v3600
        %3742 = vmatprep.subr.mxu0 %v3603
        %3743 = vmatpush1.msra.mxu0 %v3602
        %3744 = vmatprep.subr.mxu0 %v3605
        %3745 = vmatpush1.msra.mxu0 %v3604
        %3746 = vmatprep.subr.mxu0 %v3607
        %3747 = vmatpush1.msra.mxu0 %v3606
        %3748 = vmatprep.subr.mxu0 %v3609
        %3749 = vmatpush1.msra.mxu0 %v3608
        %3750 = vmatprep.subr.mxu0 %v3611
        %3751 = vmatpush1.msra.mxu0 %v3610
        %3752 = vmatprep.subr.mxu0 %v3613
        %3753 = vmatpush1.msra.mxu0 %v3612
        %3754 = vmatprep.subr.mxu0 %v3615
        %3755 = vmatpush1.msra.mxu0 %v3614
        %3756 = vmatprep.subr.mxu0 %v3617
        %3757 = vmatpush1.msra.mxu0 %v3616
        %3758 = vmatprep.subr.mxu0 %v3619
        %3759 = vmatpush1.msra.mxu0 %v3618
        %3760 = vmatprep.subr.mxu0 %v3621
        %3761 = vmatpush1.msra.mxu0 %v3620
        %3762 = vmatprep.subr.mxu0 %v3623
        %3763 = vmatpush1.msra.mxu0 %v3622
        %3764 = vmatprep.subr.mxu0 %v3625
        %3765 = vmatpush1.msra.mxu0 %v3624
        %3766 = vmatprep.subr.mxu0 %v3627
        %3767 = vmatpush1.msra.mxu0 %v3626
        %3768 = vmatprep.subr.mxu0 %v3629
        %3769 = vmatpush1.msra.mxu0 %v3628
        %3770 = vmatprep.subr.mxu0 %v3631
        %3771 = vmatpush1.msra.mxu0 %v3630
        %3772 = vmatprep.subr.mxu0 %v3633
        %3773 = vmatpush1.msra.mxu0 %v3632
        %3774 = vmatprep.subr.mxu0 %v3635
        %3775 = vmatpush1.msra.mxu0 %v3634
        %3776 = vmatprep.subr.mxu0 %v3637
        %3777 = vmatpush1.msra.mxu0 %v3636
        %3778 = vmatprep.subr.mxu0 %v3639
        %3779 = vmatpush1.msra.mxu0 %v3638
        %3780 = vmatprep.subr.mxu0 %v3641
        %3781 = vmatpush1.msra.mxu0 %v3640
        %3782 = vmatprep.subr.mxu0 %v3643
        %3783 = vmatpush1.msra.mxu0 %v3642
        %3784 = vmatprep.subr.mxu0 %v3645
        %3785 = vmatpush1.msra.mxu0 %v3644
        %3786 = vmatprep.subr.mxu0 %v3647
        %3787 = vmatpush1.msra.mxu0 %v3646
        %3788 = vmatprep.subr.mxu0 %v3649
        %3789 = vmatpush1.msra.mxu0 %v3648
        %3790 = vmatprep.subr.mxu0 %v3651
        %3791 = vmatpush1.msra.mxu0 %v3650
        %3792 = vmatprep.subr.mxu0 %v3653
        %3793 = vmatpush1.msra.mxu0 %v3652
        %3794 = vmatprep.mubr.f32.mxu0 %v3587
        %3795 = vmatmul.mubr.f32.gmra.mrb[0].mxu0 %v3586
        %v3796 = vpop.f32.mrb[0].mxu0
        %v3797 = vadd.f32 %v3723, %v3796
        %v3798 = vpop.f32.mrb[0].mxu0
        %v3799 = vadd.f32 %v3727, %v3798
        %3800 = vdwg.mxu0
        %3801 = vmatprep.subr.mxu0 %v3655
        %3802 = vmatpush1.msra.mxu0 %v3654
        %3803 = vmatprep.subr.mxu0 %v3657
        %3804 = vmatpush1.msra.mxu0 %v3656
        %3805 = vmatprep.subr.mxu0 %v3659
        %3806 = vmatpush1.msra.mxu0 %v3658
        %3807 = vmatprep.subr.mxu0 %v3661
        %3808 = vmatpush1.msra.mxu0 %v3660
        %3809 = vmatprep.subr.mxu0 %v3663
        %3810 = vmatpush1.msra.mxu0 %v3662
        %3811 = vmatprep.subr.mxu0 %v3665
        %3812 = vmatpush1.msra.mxu0 %v3664
        %3813 = vmatprep.subr.mxu0 %v3667
        %3814 = vmatpush1.msra.mxu0 %v3666
        %3815 = vmatprep.subr.mxu0 %v3669
        %3816 = vmatpush1.msra.mxu0 %v3668
        %3817 = vmatprep.subr.mxu0 %v3671
        %3818 = vmatpush1.msra.mxu0 %v3670
        %3819 = vmatprep.subr.mxu0 %v3673
        %3820 = vmatpush1.msra.mxu0 %v3672
        %3821 = vmatprep.subr.mxu0 %v3675
        %3822 = vmatpush1.msra.mxu0 %v3674
        %3823 = vmatprep.subr.mxu0 %v3677
        %3824 = vmatpush1.msra.mxu0 %v3676
        %3825 = vmatprep.subr.mxu0 %v3679
        %3826 = vmatpush1.msra.mxu0 %v3678
        %3827 = vmatprep.subr.mxu0 %v3681
        %3828 = vmatpush1.msra.mxu0 %v3680
        %3829 = vmatprep.subr.mxu0 %v3683
        %3830 = vmatpush1.msra.mxu0 %v3682
        %3831 = vmatprep.subr.mxu0 %v3685
        %3832 = vmatpush1.msra.mxu0 %v3684
        %3833 = vmatprep.subr.mxu0 %v3687
        %3834 = vmatpush1.msra.mxu0 %v3686
        %3835 = vmatprep.subr.mxu0 %v3689
        %3836 = vmatpush1.msra.mxu0 %v3688
        %3837 = vmatprep.subr.mxu0 %v3691
        %3838 = vmatpush1.msra.mxu0 %v3690
        %3839 = vmatprep.subr.mxu0 %v3693
        %3840 = vmatpush1.msra.mxu0 %v3692
        %3841 = vmatprep.subr.mxu0 %v3695
        %3842 = vmatpush1.msra.mxu0 %v3694
        %3843 = vmatprep.subr.mxu0 %v3697
        %3844 = vmatpush1.msra.mxu0 %v3696
        %3845 = vmatprep.subr.mxu0 %v3699
        %3846 = vmatpush1.msra.mxu0 %v3698
        %3847 = vmatprep.subr.mxu0 %v3701
        %3848 = vmatpush1.msra.mxu0 %v3700
        %3849 = vmatprep.subr.mxu0 %v3703
        %3850 = vmatpush1.msra.mxu0 %v3702
        %3851 = vmatprep.subr.mxu0 %v3705
        %3852 = vmatpush1.msra.mxu0 %v3704
        %3853 = vmatprep.subr.mxu0 %v3707
        %3854 = vmatpush1.msra.mxu0 %v3706
        %3855 = vmatprep.subr.mxu0 %v3709
        %3856 = vmatpush1.msra.mxu0 %v3708
        %3857 = vmatprep.subr.mxu0 %v3711
        %3858 = vmatpush1.msra.mxu0 %v3710
        %3859 = vmatprep.subr.mxu0 %v3713
        %3860 = vmatpush1.msra.mxu0 %v3712
        %3861 = vmatprep.subr.mxu0 %v3715
        %3862 = vmatpush1.msra.mxu0 %v3714
        %3863 = vmatprep.subr.mxu0 %v3717
        %3864 = vmatpush1.msra.mxu0 %v3716
        %3865 = vmatprep.mubr.f32.mxu0 %v3589
        %3866 = vmatmul.mubr.f32.gmra.mrb[0].mxu0 %v3588
        %v3867 = vpop.f32.mrb[0].mxu0
        %v3868 = vadd.f32 %v3797, %v3867
        %v3869 = vpop.f32.mrb[0].mxu0
        %v3870 = vadd.f32 %v3799, %v3869
        %3871 = vdwg.mxu0
        %v3872 = vmax.f32 %v3868, 0.0
        %v3873 = vmax.f32 %v3870, 0.0
        %v3874 = vld [vmem:[#allocation19] sm:$0xff]
        %v3875 = vld [vmem:[#allocation19 + $0x8] sm:$0xff]
        %v3876 = vld [vmem:[#allocation19 + $0x10] sm:$0xff]
        %v3877 = vld [vmem:[#allocation19 + $0x18] sm:$0xff]
        %v3878 = vld [vmem:[#allocation19 + $0x20] sm:$0xff]
        %v3879 = vld [vmem:[#allocation19 + $0x28] sm:$0xff]
        %v3880 = vld [vmem:[#allocation19 + $0x30] sm:$0xff]
        %v3881 = vld [vmem:[#allocation19 + $0x38] sm:$0xff]
        %v3882 = vld [vmem:[#allocation19 + $0x40] sm:$0xff]
        %v3883 = vld [vmem:[#allocation19 + $0x48] sm:$0xff]
        %v3884 = vld [vmem:[#allocation19 + $0x50] sm:$0xff]
        %v3885 = vld [vmem:[#allocation19 + $0x58] sm:$0xff]
        %v3886 = vld [vmem:[#allocation19 + $0x60] sm:$0xff]
        %v3887 = vld [vmem:[#allocation19 + $0x68] sm:$0xff]
        %v3888 = vld [vmem:[#allocation19 + $0x70] sm:$0xff]
        %v3889 = vld [vmem:[#allocation19 + $0x78] sm:$0xff]
        %v3890 = vld [vmem:[#allocation19 + $0x80] sm:$0xff]
        %v3891 = vld [vmem:[#allocation19 + $0x88] sm:$0xff]
        %v3892 = vld [vmem:[#allocation19 + $0x90] sm:$0xff]
        %v3893 = vld [vmem:[#allocation19 + $0x98] sm:$0xff]
        %v3894 = vld [vmem:[#allocation19 + $0xa0] sm:$0xff]
        %v3895 = vld [vmem:[#allocation19 + $0xa8] sm:$0xff]
        %v3896 = vld [vmem:[#allocation19 + $0xb0] sm:$0xff]
        %v3897 = vld [vmem:[#allocation19 + $0xb8] sm:$0xff]
        %v3898 = vld [vmem:[#allocation19 + $0xc0] sm:$0xff]
        %v3899 = vld [vmem:[#allocation19 + $0xc8] sm:$0xff]
        %v3900 = vld [vmem:[#allocation19 + $0xd0] sm:$0xff]
        %v3901 = vld [vmem:[#allocation19 + $0xd8] sm:$0xff]
        %v3902 = vld [vmem:[#allocation19 + $0xe0] sm:$0xff]
        %v3903 = vld [vmem:[#allocation19 + $0xe8] sm:$0xff]
        %v3904 = vld [vmem:[#allocation19 + $0xf0] sm:$0xff]
        %v3905 = vld [vmem:[#allocation19 + $0xf8] sm:$0xff]
        %v3906 = vld [vmem:[#allocation20] sm:$0x1]
        %3907 = vmatprep.subr.mxu0 0.0
        %3908 = vmatpush1.msra.mxu0 %v3874
        %3909 = vmatprep.subr.mxu0 0.0
        %3910 = vmatpush1.msra.mxu0 %v3875
        %3911 = vmatprep.subr.mxu0 0.0
        %3912 = vmatpush1.msra.mxu0 %v3876
        %3913 = vmatprep.subr.mxu0 0.0
        %3914 = vmatpush1.msra.mxu0 %v3877
        %3915 = vmatprep.subr.mxu0 0.0
        %3916 = vmatpush1.msra.mxu0 %v3878
        %3917 = vmatprep.subr.mxu0 0.0
        %3918 = vmatpush1.msra.mxu0 %v3879
        %3919 = vmatprep.subr.mxu0 0.0
        %3920 = vmatpush1.msra.mxu0 %v3880
        %3921 = vmatprep.subr.mxu0 0.0
        %3922 = vmatpush1.msra.mxu0 %v3881
        %3923 = vmatprep.subr.mxu0 0.0
        %3924 = vmatpush1.msra.mxu0 %v3882
        %3925 = vmatprep.subr.mxu0 0.0
        %3926 = vmatpush1.msra.mxu0 %v3883
        %3927 = vmatprep.subr.mxu0 0.0
        %3928 = vmatpush1.msra.mxu0 %v3884
        %3929 = vmatprep.subr.mxu0 0.0
        %3930 = vmatpush1.msra.mxu0 %v3885
        %3931 = vmatprep.subr.mxu0 0.0
        %3932 = vmatpush1.msra.mxu0 %v3886
        %3933 = vmatprep.subr.mxu0 0.0
        %3934 = vmatpush1.msra.mxu0 %v3887
        %3935 = vmatprep.subr.mxu0 0.0
        %3936 = vmatpush1.msra.mxu0 %v3888
        %3937 = vmatprep.subr.mxu0 0.0
        %3938 = vmatpush1.msra.mxu0 %v3889
        %3939 = vmatprep.subr.mxu0 0.0
        %3940 = vmatpush1.msra.mxu0 %v3890
        %3941 = vmatprep.subr.mxu0 0.0
        %3942 = vmatpush1.msra.mxu0 %v3891
        %3943 = vmatprep.subr.mxu0 0.0
        %3944 = vmatpush1.msra.mxu0 %v3892
        %3945 = vmatprep.subr.mxu0 0.0
        %3946 = vmatpush1.msra.mxu0 %v3893
        %3947 = vmatprep.subr.mxu0 0.0
        %3948 = vmatpush1.msra.mxu0 %v3894
        %3949 = vmatprep.subr.mxu0 0.0
        %3950 = vmatpush1.msra.mxu0 %v3895
        %3951 = vmatprep.subr.mxu0 0.0
        %3952 = vmatpush1.msra.mxu0 %v3896
        %3953 = vmatprep.subr.mxu0 0.0
        %3954 = vmatpush1.msra.mxu0 %v3897
        %3955 = vmatprep.subr.mxu0 0.0
        %3956 = vmatpush1.msra.mxu0 %v3898
        %3957 = vmatprep.subr.mxu0 0.0
        %3958 = vmatpush1.msra.mxu0 %v3899
        %3959 = vmatprep.subr.mxu0 0.0
        %3960 = vmatpush1.msra.mxu0 %v3900
        %3961 = vmatprep.subr.mxu0 0.0
        %3962 = vmatpush1.msra.mxu0 %v3901
        %3963 = vmatprep.subr.mxu0 0.0
        %3964 = vmatpush1.msra.mxu0 %v3902
        %3965 = vmatprep.subr.mxu0 0.0
        %3966 = vmatpush1.msra.mxu0 %v3903
        %3967 = vmatprep.subr.mxu0 0.0
        %3968 = vmatpush1.msra.mxu0 %v3904
        %3969 = vmatprep.subr.mxu0 0.0
        %3970 = vmatpush1.msra.mxu0 %v3905
        %3971 = vmatprep.mubr.f32.mxu0 %v3873
        %3972 = vmatmul.mubr.f32.gmra.mrb[0].mxu0 %v3872
        %v3973 = vpop.f32.mrb[0].mxu0
        %v3974 = vadd.f32 %v3906, %v3973
        %v3975 = vpop.f32.mrb[0].mxu0
        %3976 = vdwg.mxu0
        %3977 = vst [vmem:[%s872] sm:$0x1] %v3974
        %v3978 = vld [vmem:[%s877] sm:$0xff]
        %v3979 = vld [vmem:[%s877 + $0x8] sm:$0xff]
        %v3980 = vld [vmem:[%s877 + $0x10] sm:$0xff]
        %v3981 = vld [vmem:[%s877 + $0x18] sm:$0xff]
        %v3982 = vld [vmem:[%s877 + $0x20] sm:$0xff]
        %v3983 = vld [vmem:[%s877 + $0x28] sm:$0xff]
        %v3984 = vld [vmem:[%s877 + $0x30] sm:$0xff]
        %v3985 = vld [vmem:[%s877 + $0x38] sm:$0xff]
        %v3986 = vld [vmem:[%s877 + $0x40] sm:$0xff]
        %v3987 = vld [vmem:[%s877 + $0x48] sm:$0xff]
        %v3988 = vld [vmem:[%s877 + $0x50] sm:$0xff]
        %v3989 = vld [vmem:[%s877 + $0x58] sm:$0xff]
        %v3990 = vld [vmem:[%s877 + $0x60] sm:$0xff]
        %v3991 = vld [vmem:[%s877 + $0x68] sm:$0xff]
        %v3992 = vld [vmem:[%s877 + $0x70] sm:$0xff]
        %v3993 = vld [vmem:[%s877 + $0x78] sm:$0xff]
        %v3994 = vlaneseq
        %v3995 = vshrl.u32 %v3994, 7
        %v3996 = vsub.s32 0, %v3995
        %v3997 = vrot.slane %v3974, %v3996
        %3999 = vset.pattern.permute.xlu0 0
        %4000 = vperm.xlu0 %3999, %v3978
        %v4001 = vpop.permute.xlu0 %4000
        %4004 = vset.pattern.permute.xlu0 0
        %4005 = vperm.xlu0 %4004, %v3979
        %v4006 = vpop.permute.xlu0 %4005
        %4009 = vset.pattern.permute.xlu0 0
        %4010 = vperm.xlu0 %4009, %v3980
        %v4011 = vpop.permute.xlu0 %4010
        %4014 = vset.pattern.permute.xlu0 0
        %4015 = vperm.xlu0 %4014, %v3981
        %v4016 = vpop.permute.xlu0 %4015
        %4019 = vset.pattern.permute.xlu0 0
        %4020 = vperm.xlu0 %4019, %v3982
        %v4021 = vpop.permute.xlu0 %4020
        %4024 = vset.pattern.permute.xlu0 0
        %4025 = vperm.xlu0 %4024, %v3983
        %v4026 = vpop.permute.xlu0 %4025
        %4029 = vset.pattern.permute.xlu0 0
        %4030 = vperm.xlu0 %4029, %v3984
        %v4031 = vpop.permute.xlu0 %4030
        %4034 = vset.pattern.permute.xlu0 0
        %4035 = vperm.xlu0 %4034, %v3985
        %v4036 = vpop.permute.xlu0 %4035
        %4039 = vset.pattern.permute.xlu0 0
        %4040 = vperm.xlu0 %4039, %v3986
        %v4041 = vpop.permute.xlu0 %4040
        %4044 = vset.pattern.permute.xlu0 0
        %4045 = vperm.xlu0 %4044, %v3987
        %v4046 = vpop.permute.xlu0 %4045
        %4049 = vset.pattern.permute.xlu0 0
        %4050 = vperm.xlu0 %4049, %v3988
        %v4051 = vpop.permute.xlu0 %4050
        %4054 = vset.pattern.permute.xlu0 0
        %4055 = vperm.xlu0 %4054, %v3989
        %v4056 = vpop.permute.xlu0 %4055
        %4059 = vset.pattern.permute.xlu0 0
        %4060 = vperm.xlu0 %4059, %v3990
        %v4061 = vpop.permute.xlu0 %4060
        %4064 = vset.pattern.permute.xlu0 0
        %4065 = vperm.xlu0 %4064, %v3991
        %v4066 = vpop.permute.xlu0 %4065
        %4069 = vset.pattern.permute.xlu0 0
        %4070 = vperm.xlu0 %4069, %v3992
        %v4071 = vpop.permute.xlu0 %4070
        %4074 = vset.pattern.permute.xlu0 0
        %4075 = vperm.xlu0 %4074, %v3993
        %v4076 = vpop.permute.xlu0 %4075
        %v4078 = vmul.f32 %v3997, %v4001
        %v4079 = vmul.f32 %v3997, %v4006
        %v4080 = vmul.f32 %v3997, %v4011
        %v4081 = vmul.f32 %v3997, %v4016
        %v4082 = vmul.f32 %v3997, %v4021
        %v4083 = vmul.f32 %v3997, %v4026
        %v4084 = vmul.f32 %v3997, %v4031
        %v4085 = vmul.f32 %v3997, %v4036
        %v4086 = vmul.f32 %v3997, %v4041
        %v4087 = vmul.f32 %v3997, %v4046
        %v4088 = vmul.f32 %v3997, %v4051
        %v4089 = vmul.f32 %v3997, %v4056
        %v4090 = vmul.f32 %v3997, %v4061
        %v4091 = vmul.f32 %v3997, %v4066
        %v4092 = vmul.f32 %v3997, %v4071
        %v4093 = vmul.f32 %v3997, %v4076
        %4094 = vset.pattern.permute.xlu0 1
        %4095 = vperm.xlu0 %4094, %v3978
        %v4096 = vpop.permute.xlu0 %4095
        %4098 = vset.pattern.permute.xlu0 1
        %4099 = vperm.xlu0 %4098, %v3979
        %v4100 = vpop.permute.xlu0 %4099
        %4102 = vset.pattern.permute.xlu0 1
        %4103 = vperm.xlu0 %4102, %v3980
        %v4104 = vpop.permute.xlu0 %4103
        %4106 = vset.pattern.permute.xlu0 1
        %4107 = vperm.xlu0 %4106, %v3981
        %v4108 = vpop.permute.xlu0 %4107
        %4110 = vset.pattern.permute.xlu0 1
        %4111 = vperm.xlu0 %4110, %v3982
        %v4112 = vpop.permute.xlu0 %4111
        %4114 = vset.pattern.permute.xlu0 1
        %4115 = vperm.xlu0 %4114, %v3983
        %v4116 = vpop.permute.xlu0 %4115
        %4118 = vset.pattern.permute.xlu0 1
        %4119 = vperm.xlu0 %4118, %v3984
        %v4120 = vpop.permute.xlu0 %4119
        %4122 = vset.pattern.permute.xlu0 1
        %4123 = vperm.xlu0 %4122, %v3985
        %v4124 = vpop.permute.xlu0 %4123
        %4126 = vset.pattern.permute.xlu0 1
        %4127 = vperm.xlu0 %4126, %v3986
        %v4128 = vpop.permute.xlu0 %4127
        %4130 = vset.pattern.permute.xlu0 1
        %4131 = vperm.xlu0 %4130, %v3987
        %v4132 = vpop.permute.xlu0 %4131
        %4134 = vset.pattern.permute.xlu0 1
        %4135 = vperm.xlu0 %4134, %v3988
        %v4136 = vpop.permute.xlu0 %4135
        %4138 = vset.pattern.permute.xlu0 1
        %4139 = vperm.xlu0 %4138, %v3989
        %v4140 = vpop.permute.xlu0 %4139
        %4142 = vset.pattern.permute.xlu0 1
        %4143 = vperm.xlu0 %4142, %v3990
        %v4144 = vpop.permute.xlu0 %4143
        %4146 = vset.pattern.permute.xlu0 1
        %4147 = vperm.xlu0 %4146, %v3991
        %v4148 = vpop.permute.xlu0 %4147
        %4150 = vset.pattern.permute.xlu0 1
        %4151 = vperm.xlu0 %4150, %v3992
        %v4152 = vpop.permute.xlu0 %4151
        %4154 = vset.pattern.permute.xlu0 1
        %4155 = vperm.xlu0 %4154, %v3993
        %v4156 = vpop.permute.xlu0 %4155
        %v4158 = vmul.f32 %v3997, %v4096
        %v4159 = vmul.f32 %v3997, %v4100
        %v4160 = vmul.f32 %v3997, %v4104
        %v4161 = vmul.f32 %v3997, %v4108
        %v4162 = vmul.f32 %v3997, %v4112
        %v4163 = vmul.f32 %v3997, %v4116
        %v4164 = vmul.f32 %v3997, %v4120
        %v4165 = vmul.f32 %v3997, %v4124
        %v4166 = vmul.f32 %v3997, %v4128
        %v4167 = vmul.f32 %v3997, %v4132
        %v4168 = vmul.f32 %v3997, %v4136
        %v4169 = vmul.f32 %v3997, %v4140
        %v4170 = vmul.f32 %v3997, %v4144
        %v4171 = vmul.f32 %v3997, %v4148
        %v4172 = vmul.f32 %v3997, %v4152
        %v4173 = vmul.f32 %v3997, %v4156
        %4190 = vrot.lane.b32.xlu0 %v4158, 125
        %v4191 = vpop.permute.xlu0 %4190
        %4192 = vrot.lane.b32.xlu0 %v4159, 125
        %v4193 = vpop.permute.xlu0 %4192
        %4194 = vrot.lane.b32.xlu0 %v4160, 125
        %v4195 = vpop.permute.xlu0 %4194
        %4196 = vrot.lane.b32.xlu0 %v4161, 125
        %v4197 = vpop.permute.xlu0 %4196
        %4198 = vrot.lane.b32.xlu0 %v4162, 125
        %v4199 = vpop.permute.xlu0 %4198
        %4200 = vrot.lane.b32.xlu0 %v4163, 125
        %v4201 = vpop.permute.xlu0 %4200
        %4202 = vrot.lane.b32.xlu0 %v4164, 125
        %v4203 = vpop.permute.xlu0 %4202
        %4204 = vrot.lane.b32.xlu0 %v4165, 125
        %v4205 = vpop.permute.xlu0 %4204
        %4206 = vrot.lane.b32.xlu0 %v4166, 125
        %v4207 = vpop.permute.xlu0 %4206
        %4208 = vrot.lane.b32.xlu0 %v4167, 125
        %v4209 = vpop.permute.xlu0 %4208
        %4210 = vrot.lane.b32.xlu0 %v4168, 125
        %v4211 = vpop.permute.xlu0 %4210
        %4212 = vrot.lane.b32.xlu0 %v4169, 125
        %v4213 = vpop.permute.xlu0 %4212
        %4214 = vrot.lane.b32.xlu0 %v4170, 125
        %v4215 = vpop.permute.xlu0 %4214
        %4216 = vrot.lane.b32.xlu0 %v4171, 125
        %v4217 = vpop.permute.xlu0 %4216
        %4218 = vrot.lane.b32.xlu0 %v4172, 125
        %v4219 = vpop.permute.xlu0 %4218
        %4220 = vrot.lane.b32.xlu0 %v4173, 125
        %v4221 = vpop.permute.xlu0 %4220
        %v4238 = vadd.f32 %v4078, %v4191
        %v4239 = vadd.f32 %v4079, %v4193
        %v4240 = vadd.f32 %v4080, %v4195
        %v4241 = vadd.f32 %v4081, %v4197
        %v4242 = vadd.f32 %v4082, %v4199
        %v4243 = vadd.f32 %v4083, %v4201
        %v4244 = vadd.f32 %v4084, %v4203
        %v4245 = vadd.f32 %v4085, %v4205
        %v4246 = vadd.f32 %v4086, %v4207
        %v4247 = vadd.f32 %v4087, %v4209
        %v4248 = vadd.f32 %v4088, %v4211
        %v4249 = vadd.f32 %v4089, %v4213
        %v4250 = vadd.f32 %v4090, %v4215
        %v4251 = vadd.f32 %v4091, %v4217
        %v4252 = vadd.f32 %v4092, %v4219
        %v4253 = vadd.f32 %v4093, %v4221
        %4254 = vset.pattern.permute.xlu0 2
        %4255 = vperm.xlu0 %4254, %v3978
        %v4256 = vpop.permute.xlu0 %4255
        %4258 = vset.pattern.permute.xlu0 2
        %4259 = vperm.xlu0 %4258, %v3979
        %v4260 = vpop.permute.xlu0 %4259
        %4262 = vset.pattern.permute.xlu0 2
        %4263 = vperm.xlu0 %4262, %v3980
        %v4264 = vpop.permute.xlu0 %4263
        %4266 = vset.pattern.permute.xlu0 2
        %4267 = vperm.xlu0 %4266, %v3981
        %v4268 = vpop.permute.xlu0 %4267
        %4270 = vset.pattern.permute.xlu0 2
        %4271 = vperm.xlu0 %4270, %v3982
        %v4272 = vpop.permute.xlu0 %4271
        %4274 = vset.pattern.permute.xlu0 2
        %4275 = vperm.xlu0 %4274, %v3983
        %v4276 = vpop.permute.xlu0 %4275
        %4278 = vset.pattern.permute.xlu0 2
        %4279 = vperm.xlu0 %4278, %v3984
        %v4280 = vpop.permute.xlu0 %4279
        %4282 = vset.pattern.permute.xlu0 2
        %4283 = vperm.xlu0 %4282, %v3985
        %v4284 = vpop.permute.xlu0 %4283
        %4286 = vset.pattern.permute.xlu0 2
        %4287 = vperm.xlu0 %4286, %v3986
        %v4288 = vpop.permute.xlu0 %4287
        %4290 = vset.pattern.permute.xlu0 2
        %4291 = vperm.xlu0 %4290, %v3987
        %v4292 = vpop.permute.xlu0 %4291
        %4294 = vset.pattern.permute.xlu0 2
        %4295 = vperm.xlu0 %4294, %v3988
        %v4296 = vpop.permute.xlu0 %4295
        %4298 = vset.pattern.permute.xlu0 2
        %4299 = vperm.xlu0 %4298, %v3989
        %v4300 = vpop.permute.xlu0 %4299
        %4302 = vset.pattern.permute.xlu0 2
        %4303 = vperm.xlu0 %4302, %v3990
        %v4304 = vpop.permute.xlu0 %4303
        %4306 = vset.pattern.permute.xlu0 2
        %4307 = vperm.xlu0 %4306, %v3991
        %v4308 = vpop.permute.xlu0 %4307
        %4310 = vset.pattern.permute.xlu0 2
        %4311 = vperm.xlu0 %4310, %v3992
        %v4312 = vpop.permute.xlu0 %4311
        %4314 = vset.pattern.permute.xlu0 2
        %4315 = vperm.xlu0 %4314, %v3993
        %v4316 = vpop.permute.xlu0 %4315
        %v4318 = vmul.f32 %v3997, %v4256
        %v4319 = vmul.f32 %v3997, %v4260
        %v4320 = vmul.f32 %v3997, %v4264
        %v4321 = vmul.f32 %v3997, %v4268
        %v4322 = vmul.f32 %v3997, %v4272
        %v4323 = vmul.f32 %v3997, %v4276
        %v4324 = vmul.f32 %v3997, %v4280
        %v4325 = vmul.f32 %v3997, %v4284
        %v4326 = vmul.f32 %v3997, %v4288
        %v4327 = vmul.f32 %v3997, %v4292
        %v4328 = vmul.f32 %v3997, %v4296
        %v4329 = vmul.f32 %v3997, %v4300
        %v4330 = vmul.f32 %v3997, %v4304
        %v4331 = vmul.f32 %v3997, %v4308
        %v4332 = vmul.f32 %v3997, %v4312
        %v4333 = vmul.f32 %v3997, %v4316
        %4350 = vrot.lane.b32.xlu0 %v4318, 122
        %v4351 = vpop.permute.xlu0 %4350
        %4352 = vrot.lane.b32.xlu0 %v4319, 122
        %v4353 = vpop.permute.xlu0 %4352
        %4354 = vrot.lane.b32.xlu0 %v4320, 122
        %v4355 = vpop.permute.xlu0 %4354
        %4356 = vrot.lane.b32.xlu0 %v4321, 122
        %v4357 = vpop.permute.xlu0 %4356
        %4358 = vrot.lane.b32.xlu0 %v4322, 122
        %v4359 = vpop.permute.xlu0 %4358
        %4360 = vrot.lane.b32.xlu0 %v4323, 122
        %v4361 = vpop.permute.xlu0 %4360
        %4362 = vrot.lane.b32.xlu0 %v4324, 122
        %v4363 = vpop.permute.xlu0 %4362
        %4364 = vrot.lane.b32.xlu0 %v4325, 122
        %v4365 = vpop.permute.xlu0 %4364
        %4366 = vrot.lane.b32.xlu0 %v4326, 122
        %v4367 = vpop.permute.xlu0 %4366
        %4368 = vrot.lane.b32.xlu0 %v4327, 122
        %v4369 = vpop.permute.xlu0 %4368
        %4370 = vrot.lane.b32.xlu0 %v4328, 122
        %v4371 = vpop.permute.xlu0 %4370
        %4372 = vrot.lane.b32.xlu0 %v4329, 122
        %v4373 = vpop.permute.xlu0 %4372
        %4374 = vrot.lane.b32.xlu0 %v4330, 122
        %v4375 = vpop.permute.xlu0 %4374
        %4376 = vrot.lane.b32.xlu0 %v4331, 122
        %v4377 = vpop.permute.xlu0 %4376
        %4378 = vrot.lane.b32.xlu0 %v4332, 122
        %v4379 = vpop.permute.xlu0 %4378
        %4380 = vrot.lane.b32.xlu0 %v4333, 122
        %v4381 = vpop.permute.xlu0 %4380
        %v4398 = vadd.f32 %v4238, %v4351
        %v4399 = vadd.f32 %v4239, %v4353
        %v4400 = vadd.f32 %v4240, %v4355
        %v4401 = vadd.f32 %v4241, %v4357
        %v4402 = vadd.f32 %v4242, %v4359
        %v4403 = vadd.f32 %v4243, %v4361
        %v4404 = vadd.f32 %v4244, %v4363
        %v4405 = vadd.f32 %v4245, %v4365
        %v4406 = vadd.f32 %v4246, %v4367
        %v4407 = vadd.f32 %v4247, %v4369
        %v4408 = vadd.f32 %v4248, %v4371
        %v4409 = vadd.f32 %v4249, %v4373
        %v4410 = vadd.f32 %v4250, %v4375
        %v4411 = vadd.f32 %v4251, %v4377
        %v4412 = vadd.f32 %v4252, %v4379
        %v4413 = vadd.f32 %v4253, %v4381
        %v4414 = vld [vmem:[#allocation22] sm:$0x7]
        %v4415 = vld [vmem:[#allocation23] sm:$0x1]
        %v4417 = vlaneseq
        %v4418 = vshrl.u32 %v4417, 7
        %v4419 = vsub.s32 0, %v4418
        %v4420 = vrot.slane %v4415, %v4419
        %v4423 = vsel %vm903, %v4398, 0
        %v4426 = vsel %vm903, %v4399, 0
        %v4429 = vsel %vm903, %v4400, 0
        %v4432 = vsel %vm903, %v4401, 0
        %v4435 = vsel %vm903, %v4402, 0
        %v4438 = vsel %vm903, %v4403, 0
        %v4441 = vsel %vm903, %v4404, 0
        %v4444 = vsel %vm903, %v4405, 0
        %v4447 = vsel %vm903, %v4406, 0
        %v4450 = vsel %vm903, %v4407, 0
        %v4453 = vsel %vm903, %v4408, 0
        %v4456 = vsel %vm903, %v4409, 0
        %v4459 = vsel %vm903, %v4410, 0
        %v4462 = vsel %vm903, %v4411, 0
        %v4465 = vsel %vm903, %v4412, 0
        %v4468 = vsel %vm903, %v4413, 0
        %v4471 = vsel %vm952, %v4414, 0
        %4473 = vmatprep.subr.mxu0 0.0
        %4474 = vmatpush1.msra.mxu0 %v4471
        %4475 = vmatprep.subr.mxu0 0.0
        %4476 = vmatpush1.msra.mxu0 0.0
        %4477 = vmatprep.subr.mxu0 0.0
        %4478 = vmatpush1.msra.mxu0 0.0
        %4479 = vmatprep.subr.mxu0 0.0
        %4480 = vmatpush1.msra.mxu0 0.0
        %4481 = vmatprep.subr.mxu0 0.0
        %4482 = vmatpush1.msra.mxu0 0.0
        %4483 = vmatprep.subr.mxu0 0.0
        %4484 = vmatpush1.msra.mxu0 0.0
        %4485 = vmatprep.subr.mxu0 0.0
        %4486 = vmatpush1.msra.mxu0 0.0
        %4487 = vmatprep.subr.mxu0 0.0
        %4488 = vmatpush1.msra.mxu0 0.0
        %4489 = vmatprep.subr.mxu0 0.0
        %4490 = vmatpush1.msra.mxu0 0.0
        %4491 = vmatprep.subr.mxu0 0.0
        %4492 = vmatpush1.msra.mxu0 0.0
        %4493 = vmatprep.subr.mxu0 0.0
        %4494 = vmatpush1.msra.mxu0 0.0
        %4495 = vmatprep.subr.mxu0 0.0
        %4496 = vmatpush1.msra.mxu0 0.0
        %4497 = vmatprep.subr.mxu0 0.0
        %4498 = vmatpush1.msra.mxu0 0.0
        %4499 = vmatprep.subr.mxu0 0.0
        %4500 = vmatpush1.msra.mxu0 0.0
        %4501 = vmatprep.subr.mxu0 0.0
        %4502 = vmatpush1.msra.mxu0 0.0
        %4503 = vmatprep.subr.mxu0 0.0
        %4504 = vmatpush1.msra.mxu0 0.0
        %4505 = vmatprep.subr.mxu0 0.0
        %4506 = vmatpush1.msra.mxu0 0.0
        %4507 = vmatprep.subr.mxu0 0.0
        %4508 = vmatpush1.msra.mxu0 0.0
        %4509 = vmatprep.subr.mxu0 0.0
        %4510 = vmatpush1.msra.mxu0 0.0
        %4511 = vmatprep.subr.mxu0 0.0
        %4512 = vmatpush1.msra.mxu0 0.0
        %4513 = vmatprep.subr.mxu0 0.0
        %4514 = vmatpush1.msra.mxu0 0.0
        %4515 = vmatprep.subr.mxu0 0.0
        %4516 = vmatpush1.msra.mxu0 0.0
        %4517 = vmatprep.subr.mxu0 0.0
        %4518 = vmatpush1.msra.mxu0 0.0
        %4519 = vmatprep.subr.mxu0 0.0
        %4520 = vmatpush1.msra.mxu0 0.0
        %4521 = vmatprep.subr.mxu0 0.0
        %4522 = vmatpush1.msra.mxu0 0.0
        %4523 = vmatprep.subr.mxu0 0.0
        %4524 = vmatpush1.msra.mxu0 0.0
        %4525 = vmatprep.subr.mxu0 0.0
        %4526 = vmatpush1.msra.mxu0 0.0
        %4527 = vmatprep.subr.mxu0 0.0
        %4528 = vmatpush1.msra.mxu0 0.0
        %4529 = vmatprep.subr.mxu0 0.0
        %4530 = vmatpush1.msra.mxu0 0.0
        %4531 = vmatprep.subr.mxu0 0.0
        %4532 = vmatpush1.msra.mxu0 0.0
        %4533 = vmatprep.subr.mxu0 0.0
        %4534 = vmatpush1.msra.mxu0 0.0
        %4535 = vmatprep.subr.mxu0 0.0
        %4536 = vmatpush1.msra.mxu0 0.0
        %4537 = vmatprep.mubr.f32.mxu0 0.0
        %4538 = vmatmul.mubr.f32.gmra.mrb[0].mxu0 %v4423
        %v4539 = vpop.f32.mrb[0].mxu0
        %v4540 = vadd.f32 %v4420, %v4539
        %v4541 = vpop.f32.mrb[0].mxu0
        %4542 = vmatprep.mubr.f32.mxu0 0.0
        %4543 = vmatmul.mubr.f32.gmra.mrb[0].mxu0 %v4426
        %v4544 = vpop.f32.mrb[0].mxu0
        %v4545 = vadd.f32 %v4420, %v4544
        %v4546 = vpop.f32.mrb[0].mxu0
        %4547 = vmatprep.mubr.f32.mxu0 0.0
        %4548 = vmatmul.mubr.f32.gmra.mrb[0].mxu0 %v4429
        %v4549 = vpop.f32.mrb[0].mxu0
        %v4550 = vadd.f32 %v4420, %v4549
        %v4551 = vpop.f32.mrb[0].mxu0
        %4552 = vmatprep.mubr.f32.mxu0 0.0
        %4553 = vmatmul.mubr.f32.gmra.mrb[0].mxu0 %v4432
        %v4554 = vpop.f32.mrb[0].mxu0
        %v4555 = vadd.f32 %v4420, %v4554
        %v4556 = vpop.f32.mrb[0].mxu0
        %4557 = vmatprep.mubr.f32.mxu0 0.0
        %4558 = vmatmul.mubr.f32.gmra.mrb[0].mxu0 %v4435
        %v4559 = vpop.f32.mrb[0].mxu0
        %v4560 = vadd.f32 %v4420, %v4559
        %v4561 = vpop.f32.mrb[0].mxu0
        %4562 = vmatprep.mubr.f32.mxu0 0.0
        %4563 = vmatmul.mubr.f32.gmra.mrb[0].mxu0 %v4438
        %v4564 = vpop.f32.mrb[0].mxu0
        %v4565 = vadd.f32 %v4420, %v4564
        %v4566 = vpop.f32.mrb[0].mxu0
        %4567 = vmatprep.mubr.f32.mxu0 0.0
        %4568 = vmatmul.mubr.f32.gmra.mrb[0].mxu0 %v4441
        %v4569 = vpop.f32.mrb[0].mxu0
        %v4570 = vadd.f32 %v4420, %v4569
        %v4571 = vpop.f32.mrb[0].mxu0
        %4572 = vmatprep.mubr.f32.mxu0 0.0
        %4573 = vmatmul.mubr.f32.gmra.mrb[0].mxu0 %v4444
        %v4574 = vpop.f32.mrb[0].mxu0
        %v4575 = vadd.f32 %v4420, %v4574
        %v4576 = vpop.f32.mrb[0].mxu0
        %4577 = vmatprep.mubr.f32.mxu0 0.0
        %4578 = vmatmul.mubr.f32.gmra.mrb[0].mxu0 %v4447
        %v4579 = vpop.f32.mrb[0].mxu0
        %v4580 = vadd.f32 %v4420, %v4579
        %v4581 = vpop.f32.mrb[0].mxu0
        %4582 = vmatprep.mubr.f32.mxu0 0.0
        %4583 = vmatmul.mubr.f32.gmra.mrb[0].mxu0 %v4450
        %v4584 = vpop.f32.mrb[0].mxu0
        %v4585 = vadd.f32 %v4420, %v4584
        %v4586 = vpop.f32.mrb[0].mxu0
        %4587 = vmatprep.mubr.f32.mxu0 0.0
        %4588 = vmatmul.mubr.f32.gmra.mrb[0].mxu0 %v4453
        %v4589 = vpop.f32.mrb[0].mxu0
        %v4590 = vadd.f32 %v4420, %v4589
        %v4591 = vpop.f32.mrb[0].mxu0
        %4592 = vmatprep.mubr.f32.mxu0 0.0
        %4593 = vmatmul.mubr.f32.gmra.mrb[0].mxu0 %v4456
        %v4594 = vpop.f32.mrb[0].mxu0
        %v4595 = vadd.f32 %v4420, %v4594
        %v4596 = vpop.f32.mrb[0].mxu0
        %4597 = vmatprep.mubr.f32.mxu0 0.0
        %4598 = vmatmul.mubr.f32.gmra.mrb[0].mxu0 %v4459
        %v4599 = vpop.f32.mrb[0].mxu0
        %v4600 = vadd.f32 %v4420, %v4599
        %v4601 = vpop.f32.mrb[0].mxu0
        %4602 = vmatprep.mubr.f32.mxu0 0.0
        %4603 = vmatmul.mubr.f32.gmra.mrb[0].mxu0 %v4462
        %v4604 = vpop.f32.mrb[0].mxu0
        %v4605 = vadd.f32 %v4420, %v4604
        %v4606 = vpop.f32.mrb[0].mxu0
        %4607 = vmatprep.mubr.f32.mxu0 0.0
        %4608 = vmatmul.mubr.f32.gmra.mrb[0].mxu0 %v4465
        %v4609 = vpop.f32.mrb[0].mxu0
        %v4610 = vadd.f32 %v4420, %v4609
        %v4611 = vpop.f32.mrb[0].mxu0
        %4612 = vmatprep.mubr.f32.mxu0 0.0
        %4613 = vmatmul.mubr.f32.gmra.mrb[0].mxu0 %v4468
        %v4614 = vpop.f32.mrb[0].mxu0
        %v4615 = vadd.f32 %v4420, %v4614
        %v4616 = vpop.f32.mrb[0].mxu0
        %4617 = vdwg.mxu0
        %v4618 = vmax.f32 %v4540, 0.0
        %v4619 = vmax.f32 %v4545, 0.0
        %v4620 = vmax.f32 %v4550, 0.0
        %v4621 = vmax.f32 %v4555, 0.0
        %v4622 = vmax.f32 %v4560, 0.0
        %v4623 = vmax.f32 %v4565, 0.0
        %v4624 = vmax.f32 %v4570, 0.0
        %v4625 = vmax.f32 %v4575, 0.0
        %v4626 = vmax.f32 %v4580, 0.0
        %v4627 = vmax.f32 %v4585, 0.0
        %v4628 = vmax.f32 %v4590, 0.0
        %v4629 = vmax.f32 %v4595, 0.0
        %v4630 = vmax.f32 %v4600, 0.0
        %v4631 = vmax.f32 %v4605, 0.0
        %v4632 = vmax.f32 %v4610, 0.0
        %v4633 = vmax.f32 %v4615, 0.0
        %v4634 = vpack.c.bf16 %v4619, %v4618
        %v4635 = vpack.c.bf16 %v4621, %v4620
        %v4636 = vpack.c.bf16 %v4623, %v4622
        %v4637 = vpack.c.bf16 %v4625, %v4624
        %v4638 = vpack.c.bf16 %v4627, %v4626
        %v4639 = vpack.c.bf16 %v4629, %v4628
        %v4640 = vpack.c.bf16 %v4631, %v4630
        %v4641 = vpack.c.bf16 %v4633, %v4632
        %v4642 = vld [vmem:[#allocation25] sm:$0xf]
        %v4643 = vld [vmem:[#allocation25 + $0x4] sm:$0xf]
        %v4644 = vld [vmem:[#allocation25 + $0x8] sm:$0xf]
        %v4645 = vld [vmem:[#allocation25 + $0xc] sm:$0xf]
        %v4646 = vld [vmem:[#allocation25 + $0x10] sm:$0xf]
        %v4647 = vld [vmem:[#allocation25 + $0x14] sm:$0xf]
        %v4648 = vld [vmem:[#allocation25 + $0x18] sm:$0xf]
        %v4649 = vld [vmem:[#allocation25 + $0x1c] sm:$0xf]
        %v4650 = vld [vmem:[#allocation26] sm:$0x1]
        %v4652 = vlaneseq
        %v4653 = vshrl.u32 %v4652, 7
        %v4654 = vsub.s32 0, %v4653
        %v4655 = vrot.slane %v4650, %v4654
        %v4665 = vunpack.c.l.b16 %v4642
        %v4666 = vunpack.c.l.b16 %v4643
        %v4667 = vunpack.c.l.b16 %v4644
        %v4668 = vunpack.c.l.b16 %v4645
        %v4669 = vunpack.c.l.b16 %v4646
        %v4670 = vunpack.c.l.b16 %v4647
        %v4671 = vunpack.c.l.b16 %v4648
        %v4672 = vunpack.c.l.b16 %v4649
        %v4673 = vpack.c.b16 %v4666, %v4665
        %v4674 = vpack.c.b16 %v4668, %v4667
        %v4675 = vpack.c.b16 %v4670, %v4669
        %v4676 = vpack.c.b16 %v4672, %v4671
        %v4682 = vsel %vm1164, %v4634, 0
        %v4685 = vsel %vm1164, %v4635, 0
        %v4688 = vsel %vm1164, %v4636, 0
        %v4691 = vsel %vm1164, %v4637, 0
        %v4694 = vsel %vm1164, %v4638, 0
        %v4697 = vsel %vm1164, %v4639, 0
        %v4700 = vsel %vm1164, %v4640, 0
        %v4703 = vsel %vm1164, %v4641, 0
        %4705 = vmatprep.subr.bf16.mxu0 0
        %4706 = vmatpush1.bf16.msra.mxu0 %v4673
        %4707 = vmatprep.subr.bf16.mxu0 0
        %4708 = vmatpush1.bf16.msra.mxu0 %v4674
        %4709 = vmatprep.subr.bf16.mxu0 0
        %4710 = vmatpush1.bf16.msra.mxu0 %v4675
        %4711 = vmatprep.subr.bf16.mxu0 0
        %4712 = vmatpush1.bf16.msra.mxu0 %v4676
        %4713 = vmatprep.subr.bf16.mxu0 0
        %4714 = vmatpush1.bf16.msra.mxu0 0
        %4715 = vmatprep.subr.bf16.mxu0 0
        %4716 = vmatpush1.bf16.msra.mxu0 0
        %4717 = vmatprep.subr.bf16.mxu0 0
        %4718 = vmatpush1.bf16.msra.mxu0 0
        %4719 = vmatprep.subr.bf16.mxu0 0
        %4720 = vmatpush1.bf16.msra.mxu0 0
        %4721 = vmatprep.subr.bf16.mxu0 0
        %4722 = vmatpush1.bf16.msra.mxu0 0
        %4723 = vmatprep.subr.bf16.mxu0 0
        %4724 = vmatpush1.bf16.msra.mxu0 0
        %4725 = vmatprep.subr.bf16.mxu0 0
        %4726 = vmatpush1.bf16.msra.mxu0 0
        %4727 = vmatprep.subr.bf16.mxu0 0
        %4728 = vmatpush1.bf16.msra.mxu0 0
        %4729 = vmatprep.subr.bf16.mxu0 0
        %4730 = vmatpush1.bf16.msra.mxu0 0
        %4731 = vmatprep.subr.bf16.mxu0 0
        %4732 = vmatpush1.bf16.msra.mxu0 0
        %4733 = vmatprep.subr.bf16.mxu0 0
        %4734 = vmatpush1.bf16.msra.mxu0 0
        %4735 = vmatprep.subr.bf16.mxu0 0
        %4736 = vmatpush1.bf16.msra.mxu0 0
        %4737 = vmatprep.mubr.bf16.mxu0 0
        %4738 = vmatmul.mubr.bf16.gmra.mrb[0].mxu0 %v4682
        %v4739 = vpop.f32.mrb[0].mxu0
        %v4740 = vadd.f32 %v4655, %v4739
        %v4741 = vpop.f32.mrb[0].mxu0
        %v4742 = vpop.f32.mrb[0].mxu0
        %v4743 = vadd.f32 %v4655, %v4742
        %v4744 = vpop.f32.mrb[0].mxu0
        %4745 = vmatprep.mubr.bf16.mxu0 0
        %4746 = vmatmul.mubr.bf16.gmra.mrb[0].mxu0 %v4685
        %v4747 = vpop.f32.mrb[0].mxu0
        %v4748 = vadd.f32 %v4655, %v4747
        %v4749 = vpop.f32.mrb[0].mxu0
        %v4750 = vpop.f32.mrb[0].mxu0
        %v4751 = vadd.f32 %v4655, %v4750
        %v4752 = vpop.f32.mrb[0].mxu0
        %4753 = vmatprep.mubr.bf16.mxu0 0
        %4754 = vmatmul.mubr.bf16.gmra.mrb[0].mxu0 %v4688
        %v4755 = vpop.f32.mrb[0].mxu0
        %v4756 = vadd.f32 %v4655, %v4755
        %v4757 = vpop.f32.mrb[0].mxu0
        %v4758 = vpop.f32.mrb[0].mxu0
        %v4759 = vadd.f32 %v4655, %v4758
        %v4760 = vpop.f32.mrb[0].mxu0
        %4761 = vmatprep.mubr.bf16.mxu0 0
        %4762 = vmatmul.mubr.bf16.gmra.mrb[0].mxu0 %v4691
        %v4763 = vpop.f32.mrb[0].mxu0
        %v4764 = vadd.f32 %v4655, %v4763
        %v4765 = vpop.f32.mrb[0].mxu0
        %v4766 = vpop.f32.mrb[0].mxu0
        %v4767 = vadd.f32 %v4655, %v4766
        %v4768 = vpop.f32.mrb[0].mxu0
        %4769 = vmatprep.mubr.bf16.mxu0 0
        %4770 = vmatmul.mubr.bf16.gmra.mrb[0].mxu0 %v4694
        %v4771 = vpop.f32.mrb[0].mxu0
        %v4772 = vadd.f32 %v4655, %v4771
        %v4773 = vpop.f32.mrb[0].mxu0
        %v4774 = vpop.f32.mrb[0].mxu0
        %v4775 = vadd.f32 %v4655, %v4774
        %v4776 = vpop.f32.mrb[0].mxu0
        %4777 = vmatprep.mubr.bf16.mxu0 0
        %4778 = vmatmul.mubr.bf16.gmra.mrb[0].mxu0 %v4697
        %v4779 = vpop.f32.mrb[0].mxu0
        %v4780 = vadd.f32 %v4655, %v4779
        %v4781 = vpop.f32.mrb[0].mxu0
        %v4782 = vpop.f32.mrb[0].mxu0
        %v4783 = vadd.f32 %v4655, %v4782
        %v4784 = vpop.f32.mrb[0].mxu0
        %4785 = vmatprep.mubr.bf16.mxu0 0
        %4786 = vmatmul.mubr.bf16.gmra.mrb[0].mxu0 %v4700
        %v4787 = vpop.f32.mrb[0].mxu0
        %v4788 = vadd.f32 %v4655, %v4787
        %v4789 = vpop.f32.mrb[0].mxu0
        %v4790 = vpop.f32.mrb[0].mxu0
        %v4791 = vadd.f32 %v4655, %v4790
        %v4792 = vpop.f32.mrb[0].mxu0
        %4793 = vmatprep.mubr.bf16.mxu0 0
        %4794 = vmatmul.mubr.bf16.gmra.mrb[0].mxu0 %v4703
        %v4795 = vpop.f32.mrb[0].mxu0
        %v4796 = vadd.f32 %v4655, %v4795
        %v4797 = vpop.f32.mrb[0].mxu0
        %v4798 = vpop.f32.mrb[0].mxu0
        %v4799 = vadd.f32 %v4655, %v4798
        %v4800 = vpop.f32.mrb[0].mxu0
        %4801 = vdwg.mxu0
        %v4802 = vmax.f32 %v4740, 0.0
        %v4803 = vmax.f32 %v4743, 0.0
        %v4804 = vmax.f32 %v4748, 0.0
        %v4805 = vmax.f32 %v4751, 0.0
        %v4806 = vmax.f32 %v4756, 0.0
        %v4807 = vmax.f32 %v4759, 0.0
        %v4808 = vmax.f32 %v4764, 0.0
        %v4809 = vmax.f32 %v4767, 0.0
        %v4810 = vmax.f32 %v4772, 0.0
        %v4811 = vmax.f32 %v4775, 0.0
        %v4812 = vmax.f32 %v4780, 0.0
        %v4813 = vmax.f32 %v4783, 0.0
        %v4814 = vmax.f32 %v4788, 0.0
        %v4815 = vmax.f32 %v4791, 0.0
        %v4816 = vmax.f32 %v4796, 0.0
        %v4817 = vmax.f32 %v4799, 0.0
        %v4818 = vpack.c.bf16 %v4803, %v4802
        %v4819 = vpack.c.bf16 %v4805, %v4804
        %v4820 = vpack.c.bf16 %v4807, %v4806
        %v4821 = vpack.c.bf16 %v4809, %v4808
        %v4822 = vpack.c.bf16 %v4811, %v4810
        %v4823 = vpack.c.bf16 %v4813, %v4812
        %v4824 = vpack.c.bf16 %v4815, %v4814
        %v4825 = vpack.c.bf16 %v4817, %v4816
        %v4826 = vld [vmem:[#allocation28] sm:$0xff]
        %v4827 = vld [vmem:[#allocation28 + $0x8] sm:$0xff]
        %v4828 = vld [vmem:[#allocation28 + $0x10] sm:$0xff]
        %v4829 = vld [vmem:[#allocation28 + $0x18] sm:$0xff]
        %v4830 = vld [vmem:[#allocation28 + $0x20] sm:$0xff]
        %v4831 = vld [vmem:[#allocation28 + $0x28] sm:$0xff]
        %v4832 = vld [vmem:[#allocation28 + $0x30] sm:$0xff]
        %v4833 = vld [vmem:[#allocation28 + $0x38] sm:$0xff]
        %v4834 = vld [vmem:[#allocation28 + $0x40] sm:$0xff]
        %v4835 = vld [vmem:[#allocation28 + $0x48] sm:$0xff]
        %v4836 = vld [vmem:[#allocation28 + $0x50] sm:$0xff]
        %v4837 = vld [vmem:[#allocation28 + $0x58] sm:$0xff]
        %v4838 = vld [vmem:[#allocation28 + $0x60] sm:$0xff]
        %v4839 = vld [vmem:[#allocation28 + $0x68] sm:$0xff]
        %v4840 = vld [vmem:[#allocation28 + $0x70] sm:$0xff]
        %v4841 = vld [vmem:[#allocation28 + $0x78] sm:$0xff]
        %v4842 = vld [vmem:[#allocation28 + $0x80] sm:$0xff]
        %v4843 = vld [vmem:[#allocation28 + $0x88] sm:$0xff]
        %v4844 = vld [vmem:[#allocation28 + $0x90] sm:$0xff]
        %v4845 = vld [vmem:[#allocation28 + $0x98] sm:$0xff]
        %v4846 = vld [vmem:[#allocation28 + $0xa0] sm:$0xff]
        %v4847 = vld [vmem:[#allocation28 + $0xa8] sm:$0xff]
        %v4848 = vld [vmem:[#allocation28 + $0xb0] sm:$0xff]
        %v4849 = vld [vmem:[#allocation28 + $0xb8] sm:$0xff]
        %v4850 = vld [vmem:[#allocation28 + $0xc0] sm:$0xff]
        %v4851 = vld [vmem:[#allocation28 + $0xc8] sm:$0xff]
        %v4852 = vld [vmem:[#allocation28 + $0xd0] sm:$0xff]
        %v4853 = vld [vmem:[#allocation28 + $0xd8] sm:$0xff]
        %v4854 = vld [vmem:[#allocation28 + $0xe0] sm:$0xff]
        %v4855 = vld [vmem:[#allocation28 + $0xe8] sm:$0xff]
        %v4856 = vld [vmem:[#allocation28 + $0xf0] sm:$0xff]
        %v4857 = vld [vmem:[#allocation28 + $0xf8] sm:$0xff]
        %v4858 = vld [vmem:[#allocation28 + $0x100] sm:$0xff]
        %v4859 = vld [vmem:[#allocation28 + $0x108] sm:$0xff]
        %v4860 = vld [vmem:[#allocation28 + $0x110] sm:$0xff]
        %v4861 = vld [vmem:[#allocation28 + $0x118] sm:$0xff]
        %v4862 = vld [vmem:[#allocation28 + $0x120] sm:$0xff]
        %v4863 = vld [vmem:[#allocation28 + $0x128] sm:$0xff]
        %v4864 = vld [vmem:[#allocation28 + $0x130] sm:$0xff]
        %v4865 = vld [vmem:[#allocation28 + $0x138] sm:$0xff]
        %v4866 = vld [vmem:[#allocation28 + $0x140] sm:$0xff]
        %v4867 = vld [vmem:[#allocation28 + $0x148] sm:$0xff]
        %v4868 = vld [vmem:[#allocation28 + $0x150] sm:$0xff]
        %v4869 = vld [vmem:[#allocation28 + $0x158] sm:$0xff]
        %v4870 = vld [vmem:[#allocation28 + $0x160] sm:$0xff]
        %v4871 = vld [vmem:[#allocation28 + $0x168] sm:$0xff]
        %v4872 = vld [vmem:[#allocation28 + $0x170] sm:$0xff]
        %v4873 = vld [vmem:[#allocation28 + $0x178] sm:$0xff]
        %v4874 = vld [vmem:[#allocation28 + $0x180] sm:$0xff]
        %v4875 = vld [vmem:[#allocation28 + $0x188] sm:$0xff]
        %v4876 = vld [vmem:[#allocation28 + $0x190] sm:$0xff]
        %v4877 = vld [vmem:[#allocation28 + $0x198] sm:$0xff]
        %v4878 = vld [vmem:[#allocation28 + $0x1a0] sm:$0xff]
        %v4879 = vld [vmem:[#allocation28 + $0x1a8] sm:$0xff]
        %v4880 = vld [vmem:[#allocation28 + $0x1b0] sm:$0xff]
        %v4881 = vld [vmem:[#allocation28 + $0x1b8] sm:$0xff]
        %v4882 = vld [vmem:[#allocation28 + $0x1c0] sm:$0xff]
        %v4883 = vld [vmem:[#allocation28 + $0x1c8] sm:$0xff]
        %v4884 = vld [vmem:[#allocation28 + $0x1d0] sm:$0xff]
        %v4885 = vld [vmem:[#allocation28 + $0x1d8] sm:$0xff]
        %v4886 = vld [vmem:[#allocation28 + $0x1e0] sm:$0xff]
        %v4887 = vld [vmem:[#allocation28 + $0x1e8] sm:$0xff]
        %v4888 = vld [vmem:[#allocation28 + $0x1f0] sm:$0xff]
        %v4889 = vld [vmem:[#allocation28 + $0x1f8] sm:$0xff]
        %v4890 = vld [vmem:[#allocation29] sm:$0xff]
        %v4892 = vlaneseq
        %v4893 = vshrl.u32 %v4892, 7
        %v4894 = vsub.s32 0, %v4893
        %v4895 = vrot.slane %v4890, %v4894
        %v4896 = vlaneseq
        %v4897 = vshrl.u32 %v4896, 7
        %v4898 = vsub.s32 1, %v4897
        %v4899 = vrot.slane %v4890, %v4898
        %v4900 = vlaneseq
        %v4901 = vshrl.u32 %v4900, 7
        %v4902 = vsub.s32 2, %v4901
        %v4903 = vrot.slane %v4890, %v4902
        %v4904 = vlaneseq
        %v4905 = vshrl.u32 %v4904, 7
        %v4906 = vsub.s32 3, %v4905
        %v4907 = vrot.slane %v4890, %v4906
        %v4908 = vlaneseq
        %v4909 = vshrl.u32 %v4908, 7
        %v4910 = vsub.s32 4, %v4909
        %v4911 = vrot.slane %v4890, %v4910
        %v4912 = vlaneseq
        %v4913 = vshrl.u32 %v4912, 7
        %v4914 = vsub.s32 5, %v4913
        %v4915 = vrot.slane %v4890, %v4914
        %v4916 = vlaneseq
        %v4917 = vshrl.u32 %v4916, 7
        %v4918 = vsub.s32 6, %v4917
        %v4919 = vrot.slane %v4890, %v4918
        %v4920 = vlaneseq
        %v4921 = vshrl.u32 %v4920, 7
        %v4922 = vsub.s32 7, %v4921
        %v4923 = vrot.slane %v4890, %v4922
        %v4996 = vunpack.c.l.b16 %v4826
        %v4997 = vunpack.c.h.b16 %v4826
        %v4998 = vunpack.c.l.b16 %v4827
        %v4999 = vunpack.c.h.b16 %v4827
        %v5000 = vunpack.c.l.b16 %v4828
        %v5001 = vunpack.c.h.b16 %v4828
        %v5002 = vunpack.c.l.b16 %v4829
        %v5003 = vunpack.c.h.b16 %v4829
        %v5004 = vunpack.c.l.b16 %v4830
        %v5005 = vunpack.c.h.b16 %v4830
        %v5006 = vunpack.c.l.b16 %v4831
        %v5007 = vunpack.c.h.b16 %v4831
        %v5008 = vunpack.c.l.b16 %v4832
        %v5009 = vunpack.c.h.b16 %v4832
        %v5010 = vunpack.c.l.b16 %v4833
        %v5011 = vunpack.c.h.b16 %v4833
        %v5012 = vunpack.c.l.b16 %v4834
        %v5013 = vunpack.c.h.b16 %v4834
        %v5014 = vunpack.c.l.b16 %v4835
        %v5015 = vunpack.c.h.b16 %v4835
        %v5016 = vunpack.c.l.b16 %v4836
        %v5017 = vunpack.c.h.b16 %v4836
        %v5018 = vunpack.c.l.b16 %v4837
        %v5019 = vunpack.c.h.b16 %v4837
        %v5020 = vunpack.c.l.b16 %v4838
        %v5021 = vunpack.c.h.b16 %v4838
        %v5022 = vunpack.c.l.b16 %v4839
        %v5023 = vunpack.c.h.b16 %v4839
        %v5024 = vunpack.c.l.b16 %v4840
        %v5025 = vunpack.c.h.b16 %v4840
        %v5026 = vunpack.c.l.b16 %v4841
        %v5027 = vunpack.c.h.b16 %v4841
        %v5028 = vunpack.c.l.b16 %v4842
        %v5029 = vunpack.c.h.b16 %v4842
        %v5030 = vunpack.c.l.b16 %v4843
        %v5031 = vunpack.c.h.b16 %v4843
        %v5032 = vunpack.c.l.b16 %v4844
        %v5033 = vunpack.c.h.b16 %v4844
        %v5034 = vunpack.c.l.b16 %v4845
        %v5035 = vunpack.c.h.b16 %v4845
        %v5036 = vunpack.c.l.b16 %v4846
        %v5037 = vunpack.c.h.b16 %v4846
        %v5038 = vunpack.c.l.b16 %v4847
        %v5039 = vunpack.c.h.b16 %v4847
        %v5040 = vunpack.c.l.b16 %v4848
        %v5041 = vunpack.c.h.b16 %v4848
        %v5042 = vunpack.c.l.b16 %v4849
        %v5043 = vunpack.c.h.b16 %v4849
        %v5044 = vunpack.c.l.b16 %v4850
        %v5045 = vunpack.c.h.b16 %v4850
        %v5046 = vunpack.c.l.b16 %v4851
        %v5047 = vunpack.c.h.b16 %v4851
        %v5048 = vunpack.c.l.b16 %v4852
        %v5049 = vunpack.c.h.b16 %v4852
        %v5050 = vunpack.c.l.b16 %v4853
        %v5051 = vunpack.c.h.b16 %v4853
        %v5052 = vunpack.c.l.b16 %v4854
        %v5053 = vunpack.c.h.b16 %v4854
        %v5054 = vunpack.c.l.b16 %v4855
        %v5055 = vunpack.c.h.b16 %v4855
        %v5056 = vunpack.c.l.b16 %v4856
        %v5057 = vunpack.c.h.b16 %v4856
        %v5058 = vunpack.c.l.b16 %v4857
        %v5059 = vunpack.c.h.b16 %v4857
        %v5060 = vunpack.c.l.b16 %v4858
        %v5061 = vunpack.c.h.b16 %v4858
        %v5062 = vunpack.c.l.b16 %v4859
        %v5063 = vunpack.c.h.b16 %v4859
        %v5064 = vunpack.c.l.b16 %v4860
        %v5065 = vunpack.c.h.b16 %v4860
        %v5066 = vunpack.c.l.b16 %v4861
        %v5067 = vunpack.c.h.b16 %v4861
        %v5068 = vunpack.c.l.b16 %v4862
        %v5069 = vunpack.c.h.b16 %v4862
        %v5070 = vunpack.c.l.b16 %v4863
        %v5071 = vunpack.c.h.b16 %v4863
        %v5072 = vunpack.c.l.b16 %v4864
        %v5073 = vunpack.c.h.b16 %v4864
        %v5074 = vunpack.c.l.b16 %v4865
        %v5075 = vunpack.c.h.b16 %v4865
        %v5076 = vunpack.c.l.b16 %v4866
        %v5077 = vunpack.c.h.b16 %v4866
        %v5078 = vunpack.c.l.b16 %v4867
        %v5079 = vunpack.c.h.b16 %v4867
        %v5080 = vunpack.c.l.b16 %v4868
        %v5081 = vunpack.c.h.b16 %v4868
        %v5082 = vunpack.c.l.b16 %v4869
        %v5083 = vunpack.c.h.b16 %v4869
        %v5084 = vunpack.c.l.b16 %v4870
        %v5085 = vunpack.c.h.b16 %v4870
        %v5086 = vunpack.c.l.b16 %v4871
        %v5087 = vunpack.c.h.b16 %v4871
        %v5088 = vunpack.c.l.b16 %v4872
        %v5089 = vunpack.c.h.b16 %v4872
        %v5090 = vunpack.c.l.b16 %v4873
        %v5091 = vunpack.c.h.b16 %v4873
        %v5092 = vunpack.c.l.b16 %v4874
        %v5093 = vunpack.c.h.b16 %v4874
        %v5094 = vunpack.c.l.b16 %v4875
        %v5095 = vunpack.c.h.b16 %v4875
        %v5096 = vunpack.c.l.b16 %v4876
        %v5097 = vunpack.c.h.b16 %v4876
        %v5098 = vunpack.c.l.b16 %v4877
        %v5099 = vunpack.c.h.b16 %v4877
        %v5100 = vunpack.c.l.b16 %v4878
        %v5101 = vunpack.c.h.b16 %v4878
        %v5102 = vunpack.c.l.b16 %v4879
        %v5103 = vunpack.c.h.b16 %v4879
        %v5104 = vunpack.c.l.b16 %v4880
        %v5105 = vunpack.c.h.b16 %v4880
        %v5106 = vunpack.c.l.b16 %v4881
        %v5107 = vunpack.c.h.b16 %v4881
        %v5108 = vunpack.c.l.b16 %v4882
        %v5109 = vunpack.c.h.b16 %v4882
        %v5110 = vunpack.c.l.b16 %v4883
        %v5111 = vunpack.c.h.b16 %v4883
        %v5112 = vunpack.c.l.b16 %v4884
        %v5113 = vunpack.c.h.b16 %v4884
        %v5114 = vunpack.c.l.b16 %v4885
        %v5115 = vunpack.c.h.b16 %v4885
        %v5116 = vunpack.c.l.b16 %v4886
        %v5117 = vunpack.c.h.b16 %v4886
        %v5118 = vunpack.c.l.b16 %v4887
        %v5119 = vunpack.c.h.b16 %v4887
        %v5120 = vunpack.c.l.b16 %v4888
        %v5121 = vunpack.c.h.b16 %v4888
        %v5122 = vunpack.c.l.b16 %v4889
        %v5123 = vunpack.c.h.b16 %v4889
        %v5124 = vpack.c.b16 %v5004, %v4996
        %v5125 = vpack.c.b16 %v5005, %v4997
        %v5126 = vpack.c.b16 %v5006, %v4998
        %v5127 = vpack.c.b16 %v5007, %v4999
        %v5128 = vpack.c.b16 %v5008, %v5000
        %v5129 = vpack.c.b16 %v5009, %v5001
        %v5130 = vpack.c.b16 %v5010, %v5002
        %v5131 = vpack.c.b16 %v5011, %v5003
        %v5132 = vpack.c.b16 %v5020, %v5012
        %v5133 = vpack.c.b16 %v5021, %v5013
        %v5134 = vpack.c.b16 %v5022, %v5014
        %v5135 = vpack.c.b16 %v5023, %v5015
        %v5136 = vpack.c.b16 %v5024, %v5016
        %v5137 = vpack.c.b16 %v5025, %v5017
        %v5138 = vpack.c.b16 %v5026, %v5018
        %v5139 = vpack.c.b16 %v5027, %v5019
        %v5140 = vpack.c.b16 %v5036, %v5028
        %v5141 = vpack.c.b16 %v5037, %v5029
        %v5142 = vpack.c.b16 %v5038, %v5030
        %v5143 = vpack.c.b16 %v5039, %v5031
        %v5144 = vpack.c.b16 %v5040, %v5032
        %v5145 = vpack.c.b16 %v5041, %v5033
        %v5146 = vpack.c.b16 %v5042, %v5034
        %v5147 = vpack.c.b16 %v5043, %v5035
        %v5148 = vpack.c.b16 %v5052, %v5044
        %v5149 = vpack.c.b16 %v5053, %v5045
        %v5150 = vpack.c.b16 %v5054, %v5046
        %v5151 = vpack.c.b16 %v5055, %v5047
        %v5152 = vpack.c.b16 %v5056, %v5048
        %v5153 = vpack.c.b16 %v5057, %v5049
        %v5154 = vpack.c.b16 %v5058, %v5050
        %v5155 = vpack.c.b16 %v5059, %v5051
        %v5156 = vpack.c.b16 %v5068, %v5060
        %v5157 = vpack.c.b16 %v5069, %v5061
        %v5158 = vpack.c.b16 %v5070, %v5062
        %v5159 = vpack.c.b16 %v5071, %v5063
        %v5160 = vpack.c.b16 %v5072, %v5064
        %v5161 = vpack.c.b16 %v5073, %v5065
        %v5162 = vpack.c.b16 %v5074, %v5066
        %v5163 = vpack.c.b16 %v5075, %v5067
        %v5164 = vpack.c.b16 %v5084, %v5076
        %v5165 = vpack.c.b16 %v5085, %v5077
        %v5166 = vpack.c.b16 %v5086, %v5078
        %v5167 = vpack.c.b16 %v5087, %v5079
        %v5168 = vpack.c.b16 %v5088, %v5080
        %v5169 = vpack.c.b16 %v5089, %v5081
        %v5170 = vpack.c.b16 %v5090, %v5082
        %v5171 = vpack.c.b16 %v5091, %v5083
        %v5172 = vpack.c.b16 %v5100, %v5092
        %v5173 = vpack.c.b16 %v5101, %v5093
        %v5174 = vpack.c.b16 %v5102, %v5094
        %v5175 = vpack.c.b16 %v5103, %v5095
        %v5176 = vpack.c.b16 %v5104, %v5096
        %v5177 = vpack.c.b16 %v5105, %v5097
        %v5178 = vpack.c.b16 %v5106, %v5098
        %v5179 = vpack.c.b16 %v5107, %v5099
        %v5180 = vpack.c.b16 %v5116, %v5108
        %v5181 = vpack.c.b16 %v5117, %v5109
        %v5182 = vpack.c.b16 %v5118, %v5110
        %v5183 = vpack.c.b16 %v5119, %v5111
        %v5184 = vpack.c.b16 %v5120, %v5112
        %v5185 = vpack.c.b16 %v5121, %v5113
        %v5186 = vpack.c.b16 %v5122, %v5114
        %v5187 = vpack.c.b16 %v5123, %v5115
        %5252 = vmatprep.subr.bf16.mxu0 %v5125
        %5253 = vmatpush1.bf16.msra.mxu0 %v5124
        %5254 = vmatprep.subr.bf16.mxu0 %v5133
        %5255 = vmatpush1.bf16.msra.mxu0 %v5132
        %5256 = vmatprep.subr.bf16.mxu0 %v5141
        %5257 = vmatpush1.bf16.msra.mxu0 %v5140
        %5258 = vmatprep.subr.bf16.mxu0 %v5149
        %5259 = vmatpush1.bf16.msra.mxu0 %v5148
        %5260 = vmatprep.subr.bf16.mxu0 %v5157
        %5261 = vmatpush1.bf16.msra.mxu0 %v5156
        %5262 = vmatprep.subr.bf16.mxu0 %v5165
        %5263 = vmatpush1.bf16.msra.mxu0 %v5164
        %5264 = vmatprep.subr.bf16.mxu0 %v5173
        %5265 = vmatpush1.bf16.msra.mxu0 %v5172
        %5266 = vmatprep.subr.bf16.mxu0 %v5181
        %5267 = vmatpush1.bf16.msra.mxu0 %v5180
        %5268 = vmatprep.subr.bf16.mxu0 0
        %5269 = vmatpush1.bf16.msra.mxu0 0
        %5270 = vmatprep.subr.bf16.mxu0 0
        %5271 = vmatpush1.bf16.msra.mxu0 0
        %5272 = vmatprep.subr.bf16.mxu0 0
        %5273 = vmatpush1.bf16.msra.mxu0 0
        %5274 = vmatprep.subr.bf16.mxu0 0
        %5275 = vmatpush1.bf16.msra.mxu0 0
        %5276 = vmatprep.subr.bf16.mxu0 0
        %5277 = vmatpush1.bf16.msra.mxu0 0
        %5278 = vmatprep.subr.bf16.mxu0 0
        %5279 = vmatpush1.bf16.msra.mxu0 0
        %5280 = vmatprep.subr.bf16.mxu0 0
        %5281 = vmatpush1.bf16.msra.mxu0 0
        %5282 = vmatprep.subr.bf16.mxu0 0
        %5283 = vmatpush1.bf16.msra.mxu0 0
        %5284 = vmatprep.mubr.bf16.mxu0 0
        %5285 = vmatmul.mubr.bf16.gmra.mrb[0].mxu0 %v4818
        %v5286 = vpop.f32.mrb[0].mxu0
        %v5287 = vadd.f32 %v4895, %v5286
        %v5288 = vpop.f32.mrb[0].mxu0
        %v5289 = vadd.f32 %v4899, %v5288
        %v5290 = vpop.f32.mrb[0].mxu0
        %v5291 = vadd.f32 %v4895, %v5290
        %v5292 = vpop.f32.mrb[0].mxu0
        %v5293 = vadd.f32 %v4899, %v5292
        %5294 = vmatprep.mubr.bf16.mxu0 0
        %5295 = vmatmul.mubr.bf16.gmra.mrb[0].mxu0 %v4819
        %v5296 = vpop.f32.mrb[0].mxu0
        %v5297 = vadd.f32 %v4895, %v5296
        %v5298 = vpop.f32.mrb[0].mxu0
        %v5299 = vadd.f32 %v4899, %v5298
        %v5300 = vpop.f32.mrb[0].mxu0
        %v5301 = vadd.f32 %v4895, %v5300
        %v5302 = vpop.f32.mrb[0].mxu0
        %v5303 = vadd.f32 %v4899, %v5302
        %5304 = vmatprep.mubr.bf16.mxu0 0
        %5305 = vmatmul.mubr.bf16.gmra.mrb[0].mxu0 %v4820
        %v5306 = vpop.f32.mrb[0].mxu0
        %v5307 = vadd.f32 %v4895, %v5306
        %v5308 = vpop.f32.mrb[0].mxu0
        %v5309 = vadd.f32 %v4899, %v5308
        %v5310 = vpop.f32.mrb[0].mxu0
        %v5311 = vadd.f32 %v4895, %v5310
        %v5312 = vpop.f32.mrb[0].mxu0
        %v5313 = vadd.f32 %v4899, %v5312
        %5314 = vmatprep.mubr.bf16.mxu0 0
        %5315 = vmatmul.mubr.bf16.gmra.mrb[0].mxu0 %v4821
        %v5316 = vpop.f32.mrb[0].mxu0
        %v5317 = vadd.f32 %v4895, %v5316
        %v5318 = vpop.f32.mrb[0].mxu0
        %v5319 = vadd.f32 %v4899, %v5318
        %v5320 = vpop.f32.mrb[0].mxu0
        %v5321 = vadd.f32 %v4895, %v5320
        %v5322 = vpop.f32.mrb[0].mxu0
        %v5323 = vadd.f32 %v4899, %v5322
        %5324 = vmatprep.mubr.bf16.mxu0 0
        %5325 = vmatmul.mubr.bf16.gmra.mrb[0].mxu0 %v4822
        %v5326 = vpop.f32.mrb[0].mxu0
        %v5327 = vadd.f32 %v4895, %v5326
        %v5328 = vpop.f32.mrb[0].mxu0
        %v5329 = vadd.f32 %v4899, %v5328
        %v5330 = vpop.f32.mrb[0].mxu0
        %v5331 = vadd.f32 %v4895, %v5330
        %v5332 = vpop.f32.mrb[0].mxu0
        %v5333 = vadd.f32 %v4899, %v5332
        %5334 = vmatprep.mubr.bf16.mxu0 0
        %5335 = vmatmul.mubr.bf16.gmra.mrb[0].mxu0 %v4823
        %v5336 = vpop.f32.mrb[0].mxu0
        %v5337 = vadd.f32 %v4895, %v5336
        %v5338 = vpop.f32.mrb[0].mxu0
        %v5339 = vadd.f32 %v4899, %v5338
        %v5340 = vpop.f32.mrb[0].mxu0
        %v5341 = vadd.f32 %v4895, %v5340
        %v5342 = vpop.f32.mrb[0].mxu0
        %v5343 = vadd.f32 %v4899, %v5342
        %5344 = vmatprep.mubr.bf16.mxu0 0
        %5345 = vmatmul.mubr.bf16.gmra.mrb[0].mxu0 %v4824
        %v5346 = vpop.f32.mrb[0].mxu0
        %v5347 = vadd.f32 %v4895, %v5346
        %v5348 = vpop.f32.mrb[0].mxu0
        %v5349 = vadd.f32 %v4899, %v5348
        %v5350 = vpop.f32.mrb[0].mxu0
        %v5351 = vadd.f32 %v4895, %v5350
        %v5352 = vpop.f32.mrb[0].mxu0
        %v5353 = vadd.f32 %v4899, %v5352
        %5354 = vmatprep.mubr.bf16.mxu0 0
        %5355 = vmatmul.mubr.bf16.gmra.mrb[0].mxu0 %v4825
        %v5356 = vpop.f32.mrb[0].mxu0
        %v5357 = vadd.f32 %v4895, %v5356
        %v5358 = vpop.f32.mrb[0].mxu0
        %v5359 = vadd.f32 %v4899, %v5358
        %v5360 = vpop.f32.mrb[0].mxu0
        %v5361 = vadd.f32 %v4895, %v5360
        %v5362 = vpop.f32.mrb[0].mxu0
        %v5363 = vadd.f32 %v4899, %v5362
        %5364 = vdwg.mxu0
        %5365 = vmatprep.subr.bf16.mxu0 %v5127
        %5366 = vmatpush1.bf16.msra.mxu0 %v5126
        %5367 = vmatprep.subr.bf16.mxu0 %v5135
        %5368 = vmatpush1.bf16.msra.mxu0 %v5134
        %5369 = vmatprep.subr.bf16.mxu0 %v5143
        %5370 = vmatpush1.bf16.msra.mxu0 %v5142
        %5371 = vmatprep.subr.bf16.mxu0 %v5151
        %5372 = vmatpush1.bf16.msra.mxu0 %v5150
        %5373 = vmatprep.subr.bf16.mxu0 %v5159
        %5374 = vmatpush1.bf16.msra.mxu0 %v5158
        %5375 = vmatprep.subr.bf16.mxu0 %v5167
        %5376 = vmatpush1.bf16.msra.mxu0 %v5166
        %5377 = vmatprep.subr.bf16.mxu0 %v5175
        %5378 = vmatpush1.bf16.msra.mxu0 %v5174
        %5379 = vmatprep.subr.bf16.mxu0 %v5183
        %5380 = vmatpush1.bf16.msra.mxu0 %v5182
        %5381 = vmatprep.subr.bf16.mxu0 0
        %5382 = vmatpush1.bf16.msra.mxu0 0
        %5383 = vmatprep.subr.bf16.mxu0 0
        %5384 = vmatpush1.bf16.msra.mxu0 0
        %5385 = vmatprep.subr.bf16.mxu0 0
        %5386 = vmatpush1.bf16.msra.mxu0 0
        %5387 = vmatprep.subr.bf16.mxu0 0
        %5388 = vmatpush1.bf16.msra.mxu0 0
        %5389 = vmatprep.subr.bf16.mxu0 0
        %5390 = vmatpush1.bf16.msra.mxu0 0
        %5391 = vmatprep.subr.bf16.mxu0 0
        %5392 = vmatpush1.bf16.msra.mxu0 0
        %5393 = vmatprep.subr.bf16.mxu0 0
        %5394 = vmatpush1.bf16.msra.mxu0 0
        %5395 = vmatprep.subr.bf16.mxu0 0
        %5396 = vmatpush1.bf16.msra.mxu0 0
        %5397 = vmatprep.mubr.bf16.mxu0 0
        %5398 = vmatmul.mubr.bf16.gmra.mrb[0].mxu0 %v4818
        %v5399 = vpop.f32.mrb[0].mxu0
        %v5400 = vadd.f32 %v4903, %v5399
        %v5401 = vpop.f32.mrb[0].mxu0
        %v5402 = vadd.f32 %v4907, %v5401
        %v5403 = vpop.f32.mrb[0].mxu0
        %v5404 = vadd.f32 %v4903, %v5403
        %v5405 = vpop.f32.mrb[0].mxu0
        %v5406 = vadd.f32 %v4907, %v5405
        %5407 = vmatprep.mubr.bf16.mxu0 0
        %5408 = vmatmul.mubr.bf16.gmra.mrb[0].mxu0 %v4819
        %v5409 = vpop.f32.mrb[0].mxu0
        %v5410 = vadd.f32 %v4903, %v5409
        %v5411 = vpop.f32.mrb[0].mxu0
        %v5412 = vadd.f32 %v4907, %v5411
        %v5413 = vpop.f32.mrb[0].mxu0
        %v5414 = vadd.f32 %v4903, %v5413
        %v5415 = vpop.f32.mrb[0].mxu0
        %v5416 = vadd.f32 %v4907, %v5415
        %5417 = vmatprep.mubr.bf16.mxu0 0
        %5418 = vmatmul.mubr.bf16.gmra.mrb[0].mxu0 %v4820
        %v5419 = vpop.f32.mrb[0].mxu0
        %v5420 = vadd.f32 %v4903, %v5419
        %v5421 = vpop.f32.mrb[0].mxu0
        %v5422 = vadd.f32 %v4907, %v5421
        %v5423 = vpop.f32.mrb[0].mxu0
        %v5424 = vadd.f32 %v4903, %v5423
        %v5425 = vpop.f32.mrb[0].mxu0
        %v5426 = vadd.f32 %v4907, %v5425
        %5427 = vmatprep.mubr.bf16.mxu0 0
        %5428 = vmatmul.mubr.bf16.gmra.mrb[0].mxu0 %v4821
        %v5429 = vpop.f32.mrb[0].mxu0
        %v5430 = vadd.f32 %v4903, %v5429
        %v5431 = vpop.f32.mrb[0].mxu0
        %v5432 = vadd.f32 %v4907, %v5431
        %v5433 = vpop.f32.mrb[0].mxu0
        %v5434 = vadd.f32 %v4903, %v5433
        %v5435 = vpop.f32.mrb[0].mxu0
        %v5436 = vadd.f32 %v4907, %v5435
        %5437 = vmatprep.mubr.bf16.mxu0 0
        %5438 = vmatmul.mubr.bf16.gmra.mrb[0].mxu0 %v4822
        %v5439 = vpop.f32.mrb[0].mxu0
        %v5440 = vadd.f32 %v4903, %v5439
        %v5441 = vpop.f32.mrb[0].mxu0
        %v5442 = vadd.f32 %v4907, %v5441
        %v5443 = vpop.f32.mrb[0].mxu0
        %v5444 = vadd.f32 %v4903, %v5443
        %v5445 = vpop.f32.mrb[0].mxu0
        %v5446 = vadd.f32 %v4907, %v5445
        %5447 = vmatprep.mubr.bf16.mxu0 0
        %5448 = vmatmul.mubr.bf16.gmra.mrb[0].mxu0 %v4823
        %v5449 = vpop.f32.mrb[0].mxu0
        %v5450 = vadd.f32 %v4903, %v5449
        %v5451 = vpop.f32.mrb[0].mxu0
        %v5452 = vadd.f32 %v4907, %v5451
        %v5453 = vpop.f32.mrb[0].mxu0
        %v5454 = vadd.f32 %v4903, %v5453
        %v5455 = vpop.f32.mrb[0].mxu0
        %v5456 = vadd.f32 %v4907, %v5455
        %5457 = vmatprep.mubr.bf16.mxu0 0
        %5458 = vmatmul.mubr.bf16.gmra.mrb[0].mxu0 %v4824
        %v5459 = vpop.f32.mrb[0].mxu0
        %v5460 = vadd.f32 %v4903, %v5459
        %v5461 = vpop.f32.mrb[0].mxu0
        %v5462 = vadd.f32 %v4907, %v5461
        %v5463 = vpop.f32.mrb[0].mxu0
        %v5464 = vadd.f32 %v4903, %v5463
        %v5465 = vpop.f32.mrb[0].mxu0
        %v5466 = vadd.f32 %v4907, %v5465
        %5467 = vmatprep.mubr.bf16.mxu0 0
        %5468 = vmatmul.mubr.bf16.gmra.mrb[0].mxu0 %v4825
        %v5469 = vpop.f32.mrb[0].mxu0
        %v5470 = vadd.f32 %v4903, %v5469
        %v5471 = vpop.f32.mrb[0].mxu0
        %v5472 = vadd.f32 %v4907, %v5471
        %v5473 = vpop.f32.mrb[0].mxu0
        %v5474 = vadd.f32 %v4903, %v5473
        %v5475 = vpop.f32.mrb[0].mxu0
        %v5476 = vadd.f32 %v4907, %v5475
        %5477 = vdwg.mxu0
        %5478 = vmatprep.subr.bf16.mxu0 %v5129
        %5479 = vmatpush1.bf16.msra.mxu0 %v5128
        %5480 = vmatprep.subr.bf16.mxu0 %v5137
        %5481 = vmatpush1.bf16.msra.mxu0 %v5136
        %5482 = vmatprep.subr.bf16.mxu0 %v5145
        %5483 = vmatpush1.bf16.msra.mxu0 %v5144
        %5484 = vmatprep.subr.bf16.mxu0 %v5153
        %5485 = vmatpush1.bf16.msra.mxu0 %v5152
        %5486 = vmatprep.subr.bf16.mxu0 %v5161
        %5487 = vmatpush1.bf16.msra.mxu0 %v5160
        %5488 = vmatprep.subr.bf16.mxu0 %v5169
        %5489 = vmatpush1.bf16.msra.mxu0 %v5168
        %5490 = vmatprep.subr.bf16.mxu0 %v5177
        %5491 = vmatpush1.bf16.msra.mxu0 %v5176
        %5492 = vmatprep.subr.bf16.mxu0 %v5185
        %5493 = vmatpush1.bf16.msra.mxu0 %v5184
        %5494 = vmatprep.subr.bf16.mxu0 0
        %5495 = vmatpush1.bf16.msra.mxu0 0
        %5496 = vmatprep.subr.bf16.mxu0 0
        %5497 = vmatpush1.bf16.msra.mxu0 0
        %5498 = vmatprep.subr.bf16.mxu0 0
        %5499 = vmatpush1.bf16.msra.mxu0 0
        %5500 = vmatprep.subr.bf16.mxu0 0
        %5501 = vmatpush1.bf16.msra.mxu0 0
        %5502 = vmatprep.subr.bf16.mxu0 0
        %5503 = vmatpush1.bf16.msra.mxu0 0
        %5504 = vmatprep.subr.bf16.mxu0 0
        %5505 = vmatpush1.bf16.msra.mxu0 0
        %5506 = vmatprep.subr.bf16.mxu0 0
        %5507 = vmatpush1.bf16.msra.mxu0 0
        %5508 = vmatprep.subr.bf16.mxu0 0
        %5509 = vmatpush1.bf16.msra.mxu0 0
        %5510 = vmatprep.mubr.bf16.mxu0 0
        %5511 = vmatmul.mubr.bf16.gmra.mrb[0].mxu0 %v4818
        %v5512 = vpop.f32.mrb[0].mxu0
        %v5513 = vadd.f32 %v4911, %v5512
        %v5514 = vpop.f32.mrb[0].mxu0
        %v5515 = vadd.f32 %v4915, %v5514
        %v5516 = vpop.f32.mrb[0].mxu0
        %v5517 = vadd.f32 %v4911, %v5516
        %v5518 = vpop.f32.mrb[0].mxu0
        %v5519 = vadd.f32 %v4915, %v5518
        %5520 = vmatprep.mubr.bf16.mxu0 0
        %5521 = vmatmul.mubr.bf16.gmra.mrb[0].mxu0 %v4819
        %v5522 = vpop.f32.mrb[0].mxu0
        %v5523 = vadd.f32 %v4911, %v5522
        %v5524 = vpop.f32.mrb[0].mxu0
        %v5525 = vadd.f32 %v4915, %v5524
        %v5526 = vpop.f32.mrb[0].mxu0
        %v5527 = vadd.f32 %v4911, %v5526
        %v5528 = vpop.f32.mrb[0].mxu0
        %v5529 = vadd.f32 %v4915, %v5528
        %5530 = vmatprep.mubr.bf16.mxu0 0
        %5531 = vmatmul.mubr.bf16.gmra.mrb[0].mxu0 %v4820
        %v5532 = vpop.f32.mrb[0].mxu0
        %v5533 = vadd.f32 %v4911, %v5532
        %v5534 = vpop.f32.mrb[0].mxu0
        %v5535 = vadd.f32 %v4915, %v5534
        %v5536 = vpop.f32.mrb[0].mxu0
        %v5537 = vadd.f32 %v4911, %v5536
        %v5538 = vpop.f32.mrb[0].mxu0
        %v5539 = vadd.f32 %v4915, %v5538
        %5540 = vmatprep.mubr.bf16.mxu0 0
        %5541 = vmatmul.mubr.bf16.gmra.mrb[0].mxu0 %v4821
        %v5542 = vpop.f32.mrb[0].mxu0
        %v5543 = vadd.f32 %v4911, %v5542
        %v5544 = vpop.f32.mrb[0].mxu0
        %v5545 = vadd.f32 %v4915, %v5544
        %v5546 = vpop.f32.mrb[0].mxu0
        %v5547 = vadd.f32 %v4911, %v5546
        %v5548 = vpop.f32.mrb[0].mxu0
        %v5549 = vadd.f32 %v4915, %v5548
        %5550 = vmatprep.mubr.bf16.mxu0 0
        %5551 = vmatmul.mubr.bf16.gmra.mrb[0].mxu0 %v4822
        %v5552 = vpop.f32.mrb[0].mxu0
        %v5553 = vadd.f32 %v4911, %v5552
        %v5554 = vpop.f32.mrb[0].mxu0
        %v5555 = vadd.f32 %v4915, %v5554
        %v5556 = vpop.f32.mrb[0].mxu0
        %v5557 = vadd.f32 %v4911, %v5556
        %v5558 = vpop.f32.mrb[0].mxu0
        %v5559 = vadd.f32 %v4915, %v5558
        %5560 = vmatprep.mubr.bf16.mxu0 0
        %5561 = vmatmul.mubr.bf16.gmra.mrb[0].mxu0 %v4823
        %v5562 = vpop.f32.mrb[0].mxu0
        %v5563 = vadd.f32 %v4911, %v5562
        %v5564 = vpop.f32.mrb[0].mxu0
        %v5565 = vadd.f32 %v4915, %v5564
        %v5566 = vpop.f32.mrb[0].mxu0
        %v5567 = vadd.f32 %v4911, %v5566
        %v5568 = vpop.f32.mrb[0].mxu0
        %v5569 = vadd.f32 %v4915, %v5568
        %5570 = vmatprep.mubr.bf16.mxu0 0
        %5571 = vmatmul.mubr.bf16.gmra.mrb[0].mxu0 %v4824
        %v5572 = vpop.f32.mrb[0].mxu0
        %v5573 = vadd.f32 %v4911, %v5572
        %v5574 = vpop.f32.mrb[0].mxu0
        %v5575 = vadd.f32 %v4915, %v5574
        %v5576 = vpop.f32.mrb[0].mxu0
        %v5577 = vadd.f32 %v4911, %v5576
        %v5578 = vpop.f32.mrb[0].mxu0
        %v5579 = vadd.f32 %v4915, %v5578
        %5580 = vmatprep.mubr.bf16.mxu0 0
        %5581 = vmatmul.mubr.bf16.gmra.mrb[0].mxu0 %v4825
        %v5582 = vpop.f32.mrb[0].mxu0
        %v5583 = vadd.f32 %v4911, %v5582
        %v5584 = vpop.f32.mrb[0].mxu0
        %v5585 = vadd.f32 %v4915, %v5584
        %v5586 = vpop.f32.mrb[0].mxu0
        %v5587 = vadd.f32 %v4911, %v5586
        %v5588 = vpop.f32.mrb[0].mxu0
        %v5589 = vadd.f32 %v4915, %v5588
        %5590 = vdwg.mxu0
        %5591 = vmatprep.subr.bf16.mxu0 %v5131
        %5592 = vmatpush1.bf16.msra.mxu0 %v5130
        %5593 = vmatprep.subr.bf16.mxu0 %v5139
        %5594 = vmatpush1.bf16.msra.mxu0 %v5138
        %5595 = vmatprep.subr.bf16.mxu0 %v5147
        %5596 = vmatpush1.bf16.msra.mxu0 %v5146
        %5597 = vmatprep.subr.bf16.mxu0 %v5155
        %5598 = vmatpush1.bf16.msra.mxu0 %v5154
        %5599 = vmatprep.subr.bf16.mxu0 %v5163
        %5600 = vmatpush1.bf16.msra.mxu0 %v5162
        %5601 = vmatprep.subr.bf16.mxu0 %v5171
        %5602 = vmatpush1.bf16.msra.mxu0 %v5170
        %5603 = vmatprep.subr.bf16.mxu0 %v5179
        %5604 = vmatpush1.bf16.msra.mxu0 %v5178
        %5605 = vmatprep.subr.bf16.mxu0 %v5187
        %5606 = vmatpush1.bf16.msra.mxu0 %v5186
        %5607 = vmatprep.subr.bf16.mxu0 0
        %5608 = vmatpush1.bf16.msra.mxu0 0
        %5609 = vmatprep.subr.bf16.mxu0 0
        %5610 = vmatpush1.bf16.msra.mxu0 0
        %5611 = vmatprep.subr.bf16.mxu0 0
        %5612 = vmatpush1.bf16.msra.mxu0 0
        %5613 = vmatprep.subr.bf16.mxu0 0
        %5614 = vmatpush1.bf16.msra.mxu0 0
        %5615 = vmatprep.subr.bf16.mxu0 0
        %5616 = vmatpush1.bf16.msra.mxu0 0
        %5617 = vmatprep.subr.bf16.mxu0 0
        %5618 = vmatpush1.bf16.msra.mxu0 0
        %5619 = vmatprep.subr.bf16.mxu0 0
        %5620 = vmatpush1.bf16.msra.mxu0 0
        %5621 = vmatprep.subr.bf16.mxu0 0
        %5622 = vmatpush1.bf16.msra.mxu0 0
        %5623 = vmatprep.mubr.bf16.mxu0 0
        %5624 = vmatmul.mubr.bf16.gmra.mrb[0].mxu0 %v4818
        %v5625 = vpop.f32.mrb[0].mxu0
        %v5626 = vadd.f32 %v4919, %v5625
        %v5627 = vpop.f32.mrb[0].mxu0
        %v5628 = vadd.f32 %v4923, %v5627
        %v5629 = vpop.f32.mrb[0].mxu0
        %v5630 = vadd.f32 %v4919, %v5629
        %v5631 = vpop.f32.mrb[0].mxu0
        %v5632 = vadd.f32 %v4923, %v5631
        %5633 = vmatprep.mubr.bf16.mxu0 0
        %5634 = vmatmul.mubr.bf16.gmra.mrb[0].mxu0 %v4819
        %v5635 = vpop.f32.mrb[0].mxu0
        %v5636 = vadd.f32 %v4919, %v5635
        %v5637 = vpop.f32.mrb[0].mxu0
        %v5638 = vadd.f32 %v4923, %v5637
        %v5639 = vpop.f32.mrb[0].mxu0
        %v5640 = vadd.f32 %v4919, %v5639
        %v5641 = vpop.f32.mrb[0].mxu0
        %v5642 = vadd.f32 %v4923, %v5641
        %5643 = vmatprep.mubr.bf16.mxu0 0
        %5644 = vmatmul.mubr.bf16.gmra.mrb[0].mxu0 %v4820
        %v5645 = vpop.f32.mrb[0].mxu0
        %v5646 = vadd.f32 %v4919, %v5645
        %v5647 = vpop.f32.mrb[0].mxu0
        %v5648 = vadd.f32 %v4923, %v5647
        %v5649 = vpop.f32.mrb[0].mxu0
        %v5650 = vadd.f32 %v4919, %v5649
        %v5651 = vpop.f32.mrb[0].mxu0
        %v5652 = vadd.f32 %v4923, %v5651
        %5653 = vmatprep.mubr.bf16.mxu0 0
        %5654 = vmatmul.mubr.bf16.gmra.mrb[0].mxu0 %v4821
        %v5655 = vpop.f32.mrb[0].mxu0
        %v5656 = vadd.f32 %v4919, %v5655
        %v5657 = vpop.f32.mrb[0].mxu0
        %v5658 = vadd.f32 %v4923, %v5657
        %v5659 = vpop.f32.mrb[0].mxu0
        %v5660 = vadd.f32 %v4919, %v5659
        %v5661 = vpop.f32.mrb[0].mxu0
        %v5662 = vadd.f32 %v4923, %v5661
        %5663 = vmatprep.mubr.bf16.mxu0 0
        %5664 = vmatmul.mubr.bf16.gmra.mrb[0].mxu0 %v4822
        %v5665 = vpop.f32.mrb[0].mxu0
        %v5666 = vadd.f32 %v4919, %v5665
        %v5667 = vpop.f32.mrb[0].mxu0
        %v5668 = vadd.f32 %v4923, %v5667
        %v5669 = vpop.f32.mrb[0].mxu0
        %v5670 = vadd.f32 %v4919, %v5669
        %v5671 = vpop.f32.mrb[0].mxu0
        %v5672 = vadd.f32 %v4923, %v5671
        %5673 = vmatprep.mubr.bf16.mxu0 0
        %5674 = vmatmul.mubr.bf16.gmra.mrb[0].mxu0 %v4823
        %v5675 = vpop.f32.mrb[0].mxu0
        %v5676 = vadd.f32 %v4919, %v5675
        %v5677 = vpop.f32.mrb[0].mxu0
        %v5678 = vadd.f32 %v4923, %v5677
        %v5679 = vpop.f32.mrb[0].mxu0
        %v5680 = vadd.f32 %v4919, %v5679
        %v5681 = vpop.f32.mrb[0].mxu0
        %v5682 = vadd.f32 %v4923, %v5681
        %5683 = vmatprep.mubr.bf16.mxu0 0
        %5684 = vmatmul.mubr.bf16.gmra.mrb[0].mxu0 %v4824
        %v5685 = vpop.f32.mrb[0].mxu0
        %v5686 = vadd.f32 %v4919, %v5685
        %v5687 = vpop.f32.mrb[0].mxu0
        %v5688 = vadd.f32 %v4923, %v5687
        %v5689 = vpop.f32.mrb[0].mxu0
        %v5690 = vadd.f32 %v4919, %v5689
        %v5691 = vpop.f32.mrb[0].mxu0
        %v5692 = vadd.f32 %v4923, %v5691
        %5693 = vmatprep.mubr.bf16.mxu0 0
        %5694 = vmatmul.mubr.bf16.gmra.mrb[0].mxu0 %v4825
        %v5695 = vpop.f32.mrb[0].mxu0
        %v5696 = vadd.f32 %v4919, %v5695
        %v5697 = vpop.f32.mrb[0].mxu0
        %v5698 = vadd.f32 %v4923, %v5697
        %v5699 = vpop.f32.mrb[0].mxu0
        %v5700 = vadd.f32 %v4919, %v5699
        %v5701 = vpop.f32.mrb[0].mxu0
        %v5702 = vadd.f32 %v4923, %v5701
        %5703 = vdwg.mxu0
        %v5704 = vmax.f32 %v5287, 0.0
        %v5705 = vmax.f32 %v5289, 0.0
        %v5706 = vmax.f32 %v5400, 0.0
        %v5707 = vmax.f32 %v5402, 0.0
        %v5708 = vmax.f32 %v5513, 0.0
        %v5709 = vmax.f32 %v5515, 0.0
        %v5710 = vmax.f32 %v5626, 0.0
        %v5711 = vmax.f32 %v5628, 0.0
        %v5712 = vmax.f32 %v5291, 0.0
        %v5713 = vmax.f32 %v5293, 0.0
        %v5714 = vmax.f32 %v5404, 0.0
        %v5715 = vmax.f32 %v5406, 0.0
        %v5716 = vmax.f32 %v5517, 0.0
        %v5717 = vmax.f32 %v5519, 0.0
        %v5718 = vmax.f32 %v5630, 0.0
        %v5719 = vmax.f32 %v5632, 0.0
        %v5720 = vmax.f32 %v5297, 0.0
        %v5721 = vmax.f32 %v5299, 0.0
        %v5722 = vmax.f32 %v5410, 0.0
        %v5723 = vmax.f32 %v5412, 0.0
        %v5724 = vmax.f32 %v5523, 0.0
        %v5725 = vmax.f32 %v5525, 0.0
        %v5726 = vmax.f32 %v5636, 0.0
        %v5727 = vmax.f32 %v5638, 0.0
        %v5728 = vmax.f32 %v5301, 0.0
        %v5729 = vmax.f32 %v5303, 0.0
        %v5730 = vmax.f32 %v5414, 0.0
        %v5731 = vmax.f32 %v5416, 0.0
        %v5732 = vmax.f32 %v5527, 0.0
        %v5733 = vmax.f32 %v5529, 0.0
        %v5734 = vmax.f32 %v5640, 0.0
        %v5735 = vmax.f32 %v5642, 0.0
        %v5736 = vmax.f32 %v5307, 0.0
        %v5737 = vmax.f32 %v5309, 0.0
        %v5738 = vmax.f32 %v5420, 0.0
        %v5739 = vmax.f32 %v5422, 0.0
        %v5740 = vmax.f32 %v5533, 0.0
        %v5741 = vmax.f32 %v5535, 0.0
        %v5742 = vmax.f32 %v5646, 0.0
        %v5743 = vmax.f32 %v5648, 0.0
        %v5744 = vmax.f32 %v5311, 0.0
        %v5745 = vmax.f32 %v5313, 0.0
        %v5746 = vmax.f32 %v5424, 0.0
        %v5747 = vmax.f32 %v5426, 0.0
        %v5748 = vmax.f32 %v5537, 0.0
        %v5749 = vmax.f32 %v5539, 0.0
        %v5750 = vmax.f32 %v5650, 0.0
        %v5751 = vmax.f32 %v5652, 0.0
        %v5752 = vmax.f32 %v5317, 0.0
        %v5753 = vmax.f32 %v5319, 0.0
        %v5754 = vmax.f32 %v5430, 0.0
        %v5755 = vmax.f32 %v5432, 0.0
        %v5756 = vmax.f32 %v5543, 0.0
        %v5757 = vmax.f32 %v5545, 0.0
        %v5758 = vmax.f32 %v5656, 0.0
        %v5759 = vmax.f32 %v5658, 0.0
        %v5760 = vmax.f32 %v5321, 0.0
        %v5761 = vmax.f32 %v5323, 0.0
        %v5762 = vmax.f32 %v5434, 0.0
        %v5763 = vmax.f32 %v5436, 0.0
        %v5764 = vmax.f32 %v5547, 0.0
        %v5765 = vmax.f32 %v5549, 0.0
        %v5766 = vmax.f32 %v5660, 0.0
        %v5767 = vmax.f32 %v5662, 0.0
        %v5768 = vmax.f32 %v5327, 0.0
        %v5769 = vmax.f32 %v5329, 0.0
        %v5770 = vmax.f32 %v5440, 0.0
        %v5771 = vmax.f32 %v5442, 0.0
        %v5772 = vmax.f32 %v5553, 0.0
        %v5773 = vmax.f32 %v5555, 0.0
        %v5774 = vmax.f32 %v5666, 0.0
        %v5775 = vmax.f32 %v5668, 0.0
        %v5776 = vmax.f32 %v5331, 0.0
        %v5777 = vmax.f32 %v5333, 0.0
        %v5778 = vmax.f32 %v5444, 0.0
        %v5779 = vmax.f32 %v5446, 0.0
        %v5780 = vmax.f32 %v5557, 0.0
        %v5781 = vmax.f32 %v5559, 0.0
        %v5782 = vmax.f32 %v5670, 0.0
        %v5783 = vmax.f32 %v5672, 0.0
        %v5784 = vmax.f32 %v5337, 0.0
        %v5785 = vmax.f32 %v5339, 0.0
        %v5786 = vmax.f32 %v5450, 0.0
        %v5787 = vmax.f32 %v5452, 0.0
        %v5788 = vmax.f32 %v5563, 0.0
        %v5789 = vmax.f32 %v5565, 0.0
        %v5790 = vmax.f32 %v5676, 0.0
        %v5791 = vmax.f32 %v5678, 0.0
        %v5792 = vmax.f32 %v5341, 0.0
        %v5793 = vmax.f32 %v5343, 0.0
        %v5794 = vmax.f32 %v5454, 0.0
        %v5795 = vmax.f32 %v5456, 0.0
        %v5796 = vmax.f32 %v5567, 0.0
        %v5797 = vmax.f32 %v5569, 0.0
        %v5798 = vmax.f32 %v5680, 0.0
        %v5799 = vmax.f32 %v5682, 0.0
        %v5800 = vmax.f32 %v5347, 0.0
        %v5801 = vmax.f32 %v5349, 0.0
        %v5802 = vmax.f32 %v5460, 0.0
        %v5803 = vmax.f32 %v5462, 0.0
        %v5804 = vmax.f32 %v5573, 0.0
        %v5805 = vmax.f32 %v5575, 0.0
        %v5806 = vmax.f32 %v5686, 0.0
        %v5807 = vmax.f32 %v5688, 0.0
        %v5808 = vmax.f32 %v5351, 0.0
        %v5809 = vmax.f32 %v5353, 0.0
        %v5810 = vmax.f32 %v5464, 0.0
        %v5811 = vmax.f32 %v5466, 0.0
        %v5812 = vmax.f32 %v5577, 0.0
        %v5813 = vmax.f32 %v5579, 0.0
        %v5814 = vmax.f32 %v5690, 0.0
        %v5815 = vmax.f32 %v5692, 0.0
        %v5816 = vmax.f32 %v5357, 0.0
        %v5817 = vmax.f32 %v5359, 0.0
        %v5818 = vmax.f32 %v5470, 0.0
        %v5819 = vmax.f32 %v5472, 0.0
        %v5820 = vmax.f32 %v5583, 0.0
        %v5821 = vmax.f32 %v5585, 0.0
        %v5822 = vmax.f32 %v5696, 0.0
        %v5823 = vmax.f32 %v5698, 0.0
        %v5824 = vmax.f32 %v5361, 0.0
        %v5825 = vmax.f32 %v5363, 0.0
        %v5826 = vmax.f32 %v5474, 0.0
        %v5827 = vmax.f32 %v5476, 0.0
        %v5828 = vmax.f32 %v5587, 0.0
        %v5829 = vmax.f32 %v5589, 0.0
        %v5830 = vmax.f32 %v5700, 0.0
        %v5831 = vmax.f32 %v5702, 0.0
        %v5832 = vmax.f32 %v5704, %v5712
        %v5833 = vmax.f32 %v5832, %v5720
        %v5834 = vmax.f32 %v5833, %v5728
        %v5835 = vmax.f32 %v5834, %v5736
        %v5836 = vmax.f32 %v5835, %v5744
        %v5837 = vmax.f32 %v5836, %v5752
        %v5838 = vmax.f32 %v5837, %v5760
        %v5839 = vmax.f32 %v5838, %v5768
        %v5840 = vmax.f32 %v5839, %v5776
        %v5841 = vmax.f32 %v5840, %v5784
        %v5842 = vmax.f32 %v5841, %v5792
        %v5843 = vmax.f32 %v5842, %v5800
        %v5844 = vmax.f32 %v5843, %v5808
        %v5845 = vmax.f32 %v5844, %v5816
        %v5846 = vmax.f32 %v5845, %v5824
        %v5847 = vrot.slane %v5846, 4
        %v5848 = vmax.f32 %v5846, %v5847
        %v5849 = vrot.slane %v5848, 2
        %v5850 = vmax.f32 %v5848, %v5849
        %v5851 = vrot.slane %v5850, 1
        %v5852 = vmax.f32 %v5850, %v5851
        %v5853 = vmax.f32 %v5705, %v5713
        %v5854 = vmax.f32 %v5853, %v5721
        %v5855 = vmax.f32 %v5854, %v5729
        %v5856 = vmax.f32 %v5855, %v5737
        %v5857 = vmax.f32 %v5856, %v5745
        %v5858 = vmax.f32 %v5857, %v5753
        %v5859 = vmax.f32 %v5858, %v5761
        %v5860 = vmax.f32 %v5859, %v5769
        %v5861 = vmax.f32 %v5860, %v5777
        %v5862 = vmax.f32 %v5861, %v5785
        %v5863 = vmax.f32 %v5862, %v5793
        %v5864 = vmax.f32 %v5863, %v5801
        %v5865 = vmax.f32 %v5864, %v5809
        %v5866 = vmax.f32 %v5865, %v5817
        %v5867 = vmax.f32 %v5866, %v5825
        %v5868 = vrot.slane %v5867, 4
        %v5869 = vmax.f32 %v5867, %v5868
        %v5870 = vrot.slane %v5869, 2
        %v5871 = vmax.f32 %v5869, %v5870
        %v5872 = vrot.slane %v5871, 1
        %v5873 = vmax.f32 %v5871, %v5872
        %v5874 = vmax.f32 %v5706, %v5714
        %v5875 = vmax.f32 %v5874, %v5722
        %v5876 = vmax.f32 %v5875, %v5730
        %v5877 = vmax.f32 %v5876, %v5738
        %v5878 = vmax.f32 %v5877, %v5746
        %v5879 = vmax.f32 %v5878, %v5754
        %v5880 = vmax.f32 %v5879, %v5762
        %v5881 = vmax.f32 %v5880, %v5770
        %v5882 = vmax.f32 %v5881, %v5778
        %v5883 = vmax.f32 %v5882, %v5786
        %v5884 = vmax.f32 %v5883, %v5794
        %v5885 = vmax.f32 %v5884, %v5802
        %v5886 = vmax.f32 %v5885, %v5810
        %v5887 = vmax.f32 %v5886, %v5818
        %v5888 = vmax.f32 %v5887, %v5826
        %v5889 = vrot.slane %v5888, 4
        %v5890 = vmax.f32 %v5888, %v5889
        %v5891 = vrot.slane %v5890, 2
        %v5892 = vmax.f32 %v5890, %v5891
        %v5893 = vrot.slane %v5892, 1
        %v5894 = vmax.f32 %v5892, %v5893
        %v5895 = vmax.f32 %v5707, %v5715
        %v5896 = vmax.f32 %v5895, %v5723
        %v5897 = vmax.f32 %v5896, %v5731
        %v5898 = vmax.f32 %v5897, %v5739
        %v5899 = vmax.f32 %v5898, %v5747
        %v5900 = vmax.f32 %v5899, %v5755
        %v5901 = vmax.f32 %v5900, %v5763
        %v5902 = vmax.f32 %v5901, %v5771
        %v5903 = vmax.f32 %v5902, %v5779
        %v5904 = vmax.f32 %v5903, %v5787
        %v5905 = vmax.f32 %v5904, %v5795
        %v5906 = vmax.f32 %v5905, %v5803
        %v5907 = vmax.f32 %v5906, %v5811
        %v5908 = vmax.f32 %v5907, %v5819
        %v5909 = vmax.f32 %v5908, %v5827
        %v5910 = vrot.slane %v5909, 4
        %v5911 = vmax.f32 %v5909, %v5910
        %v5912 = vrot.slane %v5911, 2
        %v5913 = vmax.f32 %v5911, %v5912
        %v5914 = vrot.slane %v5913, 1
        %v5915 = vmax.f32 %v5913, %v5914
        %v5916 = vmax.f32 %v5708, %v5716
        %v5917 = vmax.f32 %v5916, %v5724
        %v5918 = vmax.f32 %v5917, %v5732
        %v5919 = vmax.f32 %v5918, %v5740
        %v5920 = vmax.f32 %v5919, %v5748
        %v5921 = vmax.f32 %v5920, %v5756
        %v5922 = vmax.f32 %v5921, %v5764
        %v5923 = vmax.f32 %v5922, %v5772
        %v5924 = vmax.f32 %v5923, %v5780
        %v5925 = vmax.f32 %v5924, %v5788
        %v5926 = vmax.f32 %v5925, %v5796
        %v5927 = vmax.f32 %v5926, %v5804
        %v5928 = vmax.f32 %v5927, %v5812
        %v5929 = vmax.f32 %v5928, %v5820
        %v5930 = vmax.f32 %v5929, %v5828
        %v5931 = vrot.slane %v5930, 4
        %v5932 = vmax.f32 %v5930, %v5931
        %v5933 = vrot.slane %v5932, 2
        %v5934 = vmax.f32 %v5932, %v5933
        %v5935 = vrot.slane %v5934, 1
        %v5936 = vmax.f32 %v5934, %v5935
        %v5937 = vmax.f32 %v5709, %v5717
        %v5938 = vmax.f32 %v5937, %v5725
        %v5939 = vmax.f32 %v5938, %v5733
        %v5940 = vmax.f32 %v5939, %v5741
        %v5941 = vmax.f32 %v5940, %v5749
        %v5942 = vmax.f32 %v5941, %v5757
        %v5943 = vmax.f32 %v5942, %v5765
        %v5944 = vmax.f32 %v5943, %v5773
        %v5945 = vmax.f32 %v5944, %v5781
        %v5946 = vmax.f32 %v5945, %v5789
        %v5947 = vmax.f32 %v5946, %v5797
        %v5948 = vmax.f32 %v5947, %v5805
        %v5949 = vmax.f32 %v5948, %v5813
        %v5950 = vmax.f32 %v5949, %v5821
        %v5951 = vmax.f32 %v5950, %v5829
        %v5952 = vrot.slane %v5951, 4
        %v5953 = vmax.f32 %v5951, %v5952
        %v5954 = vrot.slane %v5953, 2
        %v5955 = vmax.f32 %v5953, %v5954
        %v5956 = vrot.slane %v5955, 1
        %v5957 = vmax.f32 %v5955, %v5956
        %v5958 = vmax.f32 %v5710, %v5718
        %v5959 = vmax.f32 %v5958, %v5726
        %v5960 = vmax.f32 %v5959, %v5734
        %v5961 = vmax.f32 %v5960, %v5742
        %v5962 = vmax.f32 %v5961, %v5750
        %v5963 = vmax.f32 %v5962, %v5758
        %v5964 = vmax.f32 %v5963, %v5766
        %v5965 = vmax.f32 %v5964, %v5774
        %v5966 = vmax.f32 %v5965, %v5782
        %v5967 = vmax.f32 %v5966, %v5790
        %v5968 = vmax.f32 %v5967, %v5798
        %v5969 = vmax.f32 %v5968, %v5806
        %v5970 = vmax.f32 %v5969, %v5814
        %v5971 = vmax.f32 %v5970, %v5822
        %v5972 = vmax.f32 %v5971, %v5830
        %v5973 = vrot.slane %v5972, 4
        %v5974 = vmax.f32 %v5972, %v5973
        %v5975 = vrot.slane %v5974, 2
        %v5976 = vmax.f32 %v5974, %v5975
        %v5977 = vrot.slane %v5976, 1
        %v5978 = vmax.f32 %v5976, %v5977
        %v5979 = vmax.f32 %v5711, %v5719
        %v5980 = vmax.f32 %v5979, %v5727
        %v5981 = vmax.f32 %v5980, %v5735
        %v5982 = vmax.f32 %v5981, %v5743
        %v5983 = vmax.f32 %v5982, %v5751
        %v5984 = vmax.f32 %v5983, %v5759
        %v5985 = vmax.f32 %v5984, %v5767
        %v5986 = vmax.f32 %v5985, %v5775
        %v5987 = vmax.f32 %v5986, %v5783
        %v5988 = vmax.f32 %v5987, %v5791
        %v5989 = vmax.f32 %v5988, %v5799
        %v5990 = vmax.f32 %v5989, %v5807
        %v5991 = vmax.f32 %v5990, %v5815
        %v5992 = vmax.f32 %v5991, %v5823
        %v5993 = vmax.f32 %v5992, %v5831
        %v5994 = vrot.slane %v5993, 4
        %v5995 = vmax.f32 %v5993, %v5994
        %v5996 = vrot.slane %v5995, 2
        %v5997 = vmax.f32 %v5995, %v5996
        %v5998 = vrot.slane %v5997, 1
        %v5999 = vmax.f32 %v5997, %v5998
        %v6008 = vcombine.low %v5852, %v5873
        %v6009 = vcombine.low %v5894, %v5915
        %v6010 = vcombine.low %v5936, %v5957
        %v6011 = vcombine.low %v5978, %v5999
        %v6013 = vunpack.c.l.s4 1966171168
        %v6014 = vunpack.c.0.s8 %v6013
        %v6015 = vlaneseq
        %v6016 = vshrl.u32 %v6015, 7
        %v6017 = vsub.s32 %v6014, %v6016
        %v6018 = vrot.slane %v6008, %v6017
        %v6020 = vunpack.c.l.s4 1966171168
        %v6021 = vunpack.c.0.s8 %v6020
        %v6022 = vlaneseq
        %v6023 = vshrl.u32 %v6022, 7
        %v6024 = vsub.s32 %v6021, %v6023
        %v6025 = vrot.slane %v6009, %v6024
        %v6027 = vunpack.c.l.s4 1966171168
        %v6028 = vunpack.c.0.s8 %v6027
        %v6029 = vlaneseq
        %v6030 = vshrl.u32 %v6029, 7
        %v6031 = vsub.s32 %v6028, %v6030
        %v6032 = vrot.slane %v6010, %v6031
        %v6034 = vunpack.c.l.s4 1966171168
        %v6035 = vunpack.c.0.s8 %v6034
        %v6036 = vlaneseq
        %v6037 = vshrl.u32 %v6036, 7
        %v6038 = vsub.s32 %v6035, %v6037
        %v6039 = vrot.slane %v6011, %v6038
        %v6040 = vcombine.low %v6018, %v6025
        %v6041 = vcombine.low %v6032, %v6039
        %v6043 = vunpack.c.l.s4 1966171168
        %v6044 = vunpack.c.0.s8 %v6043
        %v6045 = vlaneseq
        %v6046 = vshrl.u32 %v6045, 7
        %v6047 = vsub.s32 %v6044, %v6046
        %v6048 = vrot.slane %v6040, %v6047
        %v6050 = vunpack.c.l.s4 1966171168
        %v6051 = vunpack.c.0.s8 %v6050
        %v6052 = vlaneseq
        %v6053 = vshrl.u32 %v6052, 7
        %v6054 = vsub.s32 %v6051, %v6053
        %v6055 = vrot.slane %v6041, %v6054
        %v6056 = vcombine.low %v6048, %v6055
        %6058 = vst [vmem:[%s866] sm:$0xff] %v6056
        %s6059 = sand.u32 %s460, 1
        %s6060 = scalar_lea.sflag [#allocation4], %s6059
        %s6061 = sand.u32 %s460, 1
        %s6062 = smul.addr %s6061, 8
        %s6063 = scalar_lea.vmem [#allocation31], %s6062
        %s6064 = sand.u32 %s486, 1
        %s6065 = scalar_lea.sflag [#allocation33], %s6064
        %s6066 = sand.u32 %s486, 1
        %s6067 = scalar_lea.vmem [#allocation32], %s6066
        // Predicated region
        $region169: #{tpu_custom_call.1} parent=95 // pred_check
          %p6068 = pneg %p470
        $region170: #{tpu_custom_call.1} parent=95 // pred_check_branch
          %6070 = sbr.rel (%p6068) target = $region172
        $region171: #{tpu_custom_call.1} parent=95 // pred_region
          %s6072 = ssub.s32 128, 128
          %6073 = vsyncadd %s6060, %s6072
          %s6074 = smul.addr %s48, 8
          %s6075 = smul.addr %s6074, 16
          %s6076 = scalar_lea.hbm %s19, %s6075
          %s6078 = sshll.u32 %s6063, 4
          %s6079 = int_to_ptr.vmem [resolvable:$true] %s6078
          %6081 = dma.vmem_to_hbm [thread:$0]  %s6079, 128, %s6076, %s6060
        $region172: #{tpu_custom_call.1} parent=95 // pred_fallthru
          _
        // Predicated region
        $region173: #{tpu_custom_call.1} parent=95 // pred_check
          %p6082 = pneg %p496
        $region174: #{tpu_custom_call.1} parent=95 // pred_check_branch
          %6084 = sbr.rel (%p6082) target = $region176
        $region175: #{tpu_custom_call.1} parent=95 // pred_region
          %s6086 = ssub.s32 16, 16
          %6087 = vsyncadd %s6065, %s6086
          %s6088 = smul.addr %s48, 16
          %s6089 = scalar_lea.hbm %s20, %s6088
          %s6091 = sshll.u32 %s6067, 4
          %s6092 = int_to_ptr.vmem [resolvable:$true] %s6091
          %6094 = dma.vmem_to_hbm [thread:$0]  %s6092, 16, %s6089, %s6065
        $region176: #{tpu_custom_call.1} parent=95 // pred_fallthru
          _
      $region96: #{tpu_custom_call.1} parent=5 // pred_fallthru
        _
      %p6095 = scmp.le.s32.totalorder 2, %s43
      // Predicated region
      $region177: #{tpu_custom_call.1} parent=5 // pred_check
        %p6096 = pneg %p6095
      $region178: #{tpu_custom_call.1} parent=5 // pred_check_branch
        %6098 = sbr.rel (%p6096) target = $region180
      $region179: #{tpu_custom_call.1} parent=5 // pred_region
        %s6099 = ssub.s32 %s43, 2
        // Predicated region
        $region181: #{tpu_custom_call.1} parent=179 // pred_check
          %p6100 = pneg %p476
        $region182: #{tpu_custom_call.1} parent=179 // pred_check_branch
          %6102 = sbr.rel (%p6100) target = $region184
        $region183: #{tpu_custom_call.1} parent=179 // pred_region
          %s6103 = sand.u32 %s461, 1
          %s6104 = scalar_lea.sflag [#allocation4], %s6103
          %s6105 = sand.u32 %s461, 1
          %s6106 = smul.addr %s6105, 8
          %s6107 = scalar_lea.vmem [#allocation31], %s6106
          %6108 = dma.done %s6104, 128
        $region184: #{tpu_custom_call.1} parent=179 // pred_fallthru
          _
        // Predicated region
        $region185: #{tpu_custom_call.1} parent=179 // pred_check
          %p6109 = pneg %p502
        $region186: #{tpu_custom_call.1} parent=179 // pred_check_branch
          %6111 = sbr.rel (%p6109) target = $region188
        $region187: #{tpu_custom_call.1} parent=179 // pred_region
          %s6112 = sand.u32 %s487, 1
          %s6113 = scalar_lea.sflag [#allocation33], %s6112
          %s6114 = sand.u32 %s487, 1
          %s6115 = scalar_lea.vmem [#allocation32], %s6114
          %6116 = dma.done %s6113, 16
        $region188: #{tpu_custom_call.1} parent=179 // pred_fallthru
          _
      $region180: #{tpu_custom_call.1} parent=5 // pred_fallthru
        _
    $region6: #{tpu_custom_call.1} parent=1 // loop_footer
      %s47 = sadd.s32 1, %s43
    $region7: #{tpu_custom_call.1} parent=1 // loop_footer_branch
      %42 = sbr.rel target = $region3
    $region8: #{tpu_custom_call.1} parent=1 // loop_exit
      _
    %6117 = vsyncpa [#allocation3], 1
    %s6118 = scalar_lea.sflag [#allocation3], 1
    %6119 = vsyncpa %s6118, 1
    %6120 = vsyncpa [#allocation6], 1
    %6121 = vsyncpa [#allocation9], 1
    %6122 = vsyncpa [#allocation12], 1
    %6123 = vsyncpa [#allocation15], 1
    %6124 = vsyncpa [#allocation18], 1
    %6125 = vsyncpa [#allocation21], 1
    %6126 = vsyncpa [#allocation24], 1
    %6127 = vsyncpa [#allocation27], 1
    %6128 = vsyncpa [#allocation30], 1
    %6129 = vsyncpa [#allocation4], 1
    %s6130 = scalar_lea.sflag [#allocation4], 1
    %6131 = vsyncpa %s6130, 1
    %6132 = vsyncpa [#allocation33], 1
    %s6133 = scalar_lea.sflag [#allocation33], 1
    %6134 = vsyncpa %s6133, 1

</llo_original>
